<compile_context>
chip_gen: v7x
topology: tpu7x:2x2x1
jax: 0.10.0
libtpu: 0.0.40
codegen_flags: <defaults>
</compile_context>

<pallas_src>
import jax
import jax.numpy as jnp
import numpy as np
from jax.experimental import pallas as pl
from jax.experimental.pallas import tpu as pltpu

BN_EPS = 1e-5


def _double_conv_kernel(x_ref, w1_ref, g1_ref, be1_ref,
                        w2_ref, g2_ref, be2_ref,
                        o_ref, xpad_ref, mid_ref):
    """Fused (conv3x3 pad=1 -> BN(batch stats) -> ReLU) x 2.

    x_ref:   (N, H, W, Cin)        bf16 NHWC input
    w1_ref:  (9*Cin, Cp)           bf16 conv1 weights (tap-major, channel-minor rows)
    w2_ref:  (9*Cp,  Cp)           bf16 conv2 weights
    g/be:    (1, Cp)               f32 BN gamma / BN beta (zero-padded)
    o_ref:   (N, H, W, Cp)         f32 output (padded channels == 0)
    xpad_ref:(N, H+2, W+2, Cin)    bf16 VMEM scratch (padded conv1 input)
    mid_ref: (N, H+2, W+2, Cp)     bf16 VMEM scratch (padded conv2 input)
    """
    N, H, W, Cin = x_ref.shape
    Cp = o_ref.shape[-1]
    M = N * H * W

    # ---- pad=1 zero padding done entirely in VMEM (no HBM-side jnp.pad) ----
    # Scratch contents persist / may be stale: zero the halos every call.
    xpad_ref[...] = jnp.zeros(xpad_ref.shape, xpad_ref.dtype)
    mid_ref[...] = jnp.zeros(mid_ref.shape, mid_ref.dtype)
    xpad_ref[:, 1:H + 1, 1:W + 1, :] = x_ref[...].astype(xpad_ref.dtype)

    def im2col(src, c):
        # src: (N, H+2, W+2, c) bf16 -> (M, 9*c) patch matrix (tap-major rows).
        cols = [src[:, dy:dy + H, dx:dx + W, :]
                for dy in range(3) for dx in range(3)]
        return jnp.concatenate(cols, axis=-1).reshape(M, 9 * c)

    def bn_relu(acc, g, be):
        # acc: (M, Cp) f32 conv output (bias omitted: it cancels exactly under
        # training-mode BN mean subtraction).  Fold normalize + affine into a
        # single per-channel scale/shift, then one fused mul-add + ReLU pass.
        mean = jnp.mean(acc, axis=0, keepdims=True)                    # (1, Cp)
        var = jnp.mean(jnp.square(acc - mean), axis=0, keepdims=True)  # (1, Cp)
        scale = g * jax.lax.rsqrt(var + BN_EPS)                        # (1, Cp)
        shift = be - mean * scale                                      # (1, Cp)
        return jnp.maximum(acc * scale + shift, 0.0)

    # ---- block 1: single im2col matmul (bf16 in, f32 accumulate) ----
    p1 = im2col(xpad_ref[...], Cin)                                    # (M, 9*Cin) bf16
    acc1 = jnp.dot(p1, w1_ref[...], preferred_element_type=jnp.float32)
    h1 = bn_relu(acc1, g1_ref[...], be1_ref[...])                      # (M, Cp) f32
    mid_ref[:, 1:H + 1, 1:W + 1, :] = h1.reshape(N, H, W, Cp).astype(mid_ref.dtype)

    # ---- block 2: single im2col matmul over the VMEM-resident intermediate ----
    p2 = im2col(mid_ref[...], Cp)                                      # (M, 9*Cp) bf16
    acc2 = jnp.dot(p2, w2_ref[...], preferred_element_type=jnp.float32)
    h2 = bn_relu(acc2, g2_ref[...], be2_ref[...])                      # (M, Cp) f32

    # Lane-dense store (Cp is a multiple of 128).
    o_ref[...] = h2.reshape(N, H, W, Cp).astype(o_ref.dtype)


def _round_up(x, m):
    return ((x + m - 1) // m) * m


def _prep_block_params(w_oihw, g, be, cin_pad, cout_pad):
    """OIHW conv weights -> (9*cin_pad, cout_pad) bf16 im2col matrix (+ padded BN vectors)."""
    cout, cin = w_oihw.shape[0], w_oihw.shape[1]
    w = jnp.transpose(w_oihw, (2, 3, 1, 0))                      # (ky, kx, Cin, Cout)
    w = jnp.pad(w, ((0, 0), (0, 0), (0, cin_pad - cin), (0, cout_pad - cout)))
    w = w.reshape(9 * cin_pad, cout_pad).astype(jnp.bfloat16)
    pad1 = ((0, 0), (0, cout_pad - cout))
    g = jnp.pad(g.reshape(1, cout).astype(jnp.float32), pad1)    # padded gamma == 0
    be = jnp.pad(be.reshape(1, cout).astype(jnp.float32), pad1)  # padded beta  == 0
    return w, g, be


@jax.jit
def double_conv_forward(x_nchw, params):
    """DoubleConv forward. Input/output are NCHW f32 to match PyTorch."""
    N, Cin, H, W = x_nchw.shape
    Cout = params["w1"].shape[0]
    Cp = _round_up(Cout, 128)                                    # lane-dense channel dim

    # NCHW -> NHWC with the bf16 cast fused into the transpose (halves input DMA).
    x = jnp.transpose(x_nchw, (0, 2, 3, 1)).astype(jnp.bfloat16)
    w1, g1, be1 = _prep_block_params(params["w1"], params["g1"], params["be1"], Cin, Cp)
    w2, g2, be2 = _prep_block_params(params["w2"], params["g2"], params["be2"], Cp, Cp)
    # NOTE: conv biases b1/b2 are intentionally not passed -- they are exactly
    # cancelled by the training-mode BatchNorm mean subtraction.

    vmem = pl.BlockSpec(memory_space=pltpu.MemorySpace.VMEM)
    out_padded = pl.pallas_call(
        _double_conv_kernel,
        out_shape=jax.ShapeDtypeStruct((N, H, W, Cp), jnp.float32),
        in_specs=[vmem] * 7,
        out_specs=vmem,
        scratch_shapes=[
            pltpu.VMEM((N, H + 2, W + 2, Cin), jnp.bfloat16),    # padded conv1 input
            pltpu.VMEM((N, H + 2, W + 2, Cp), jnp.bfloat16),     # padded intermediate
        ],
    )(x, w1, g1, be1, w2, g2, be2)

    out = out_padded[..., :Cout]                                 # drop zero channel padding
    return jnp.transpose(out, (0, 3, 1, 2))                      # NHWC -> NCHW


def init_params(key, in_channels, out_channels, dtype=jnp.float32):
    """Deterministic parameter init (shapes match nn.Conv2d / nn.BatchNorm2d)."""
    k = jax.random.split(key, 6)
    bound1 = 1.0 / np.sqrt(in_channels * 9)
    bound2 = 1.0 / np.sqrt(out_channels * 9)
    return {
        "w1": jax.random.uniform(k[0], (out_channels, in_channels, 3, 3), dtype,
                                 -bound1, bound1),
        "b1": jax.random.uniform(k[1], (out_channels,), dtype, -bound1, bound1),
        "g1": jnp.ones((out_channels,), dtype)
              + 0.1 * jax.random.normal(k[2], (out_channels,), dtype),
        "be1": 0.1 * jax.random.normal(k[3], (out_channels,), dtype),
        "w2": jax.random.uniform(k[4], (out_channels, out_channels, 3, 3), dtype,
                                 -bound2, bound2),
        "b2": jax.random.uniform(k[5], (out_channels,), dtype, -bound2, bound2),
        "g2": jnp.ones((out_channels,), dtype),
        "be2": jnp.zeros((out_channels,), dtype),
    }


def _reference_double_conv(x_nchw, params):
    """Pure-JAX f32 reference (lax.conv + bias + batch-stat BN + ReLU) for validation."""
    def block(x, w, b, g, be):
        y = jax.lax.conv_general_dilated(
            x, w, window_strides=(1, 1), padding=((1, 1), (1, 1)),
            dimension_numbers=("NCHW", "OIHW", "NCHW"))
        y = y + b[None, :, None, None]
        mean = jnp.mean(y, axis=(0, 2, 3), keepdims=True)
        var = jnp.mean((y - mean) ** 2, axis=(0, 2, 3), keepdims=True)
        y = (y - mean) * jax.lax.rsqrt(var + BN_EPS)
        y = y * g[None, :, None, None] + be[None, :, None, None]
        return jnp.maximum(y, 0.0)

    x = block(x_nchw, params["w1"], params["b1"], params["g1"], params["be1"])
    x = block(x, params["w2"], params["b2"], params["g2"], params["be2"])
    return x


if __name__ == "__main__":
    key = jax.random.PRNGKey(0)
    k_x, k_p = jax.random.split(key)

    N, C_IN, C_OUT, H, W = 2, 4, 8, 16, 16
    x = jax.random.normal(k_x, (N, C_IN, H, W), jnp.float32)
    params = init_params(k_p, C_IN, C_OUT)

    out = jax.block_until_ready(double_conv_forward(x, params))
    ref = jax.block_until_ready(_reference_double_conv(x, params))

    assert out.shape == (N, C_OUT, H, W), out.shape
    # Tolerance relaxed vs the pure-f32 reference because the kernel uses bf16
    # MXU inputs (f32 accumulation / f32 BN statistics).
    np.testing.assert_allclose(np.asarray(out), np.asarray(ref), atol=1e-1, rtol=1e-1)

    print("KERNEL_OK")
</pallas_src>

<mosaic_0001>
module attributes {stable_mosaic.version = 11 : i64} {
  func.func @_double_conv_kernel(%arg0: memref<2x16x16x4xbf16, #tpu.memory_space<vmem>>, %arg1: memref<36x128xbf16, #tpu.memory_space<vmem>>, %arg2: memref<1x128xf32, #tpu.memory_space<vmem>>, %arg3: memref<1x128xf32, #tpu.memory_space<vmem>>, %arg4: memref<1152x128xbf16, #tpu.memory_space<vmem>>, %arg5: memref<1x128xf32, #tpu.memory_space<vmem>>, %arg6: memref<1x128xf32, #tpu.memory_space<vmem>>, %arg7: memref<2x16x16x128xf32, #tpu.memory_space<vmem>>, %arg8: memref<2x18x18x4xbf16, #tpu.memory_space<vmem>>, %arg9: memref<2x18x18x128xbf16, #tpu.memory_space<vmem>>) attributes {dimension_semantics = [], scalar_prefetch = 0 : i64, scratch_operands = 2 : i64, tpu.core_type = #tpu.core_type<tc>} {
    %cst = arith.constant 0.000000e+00 : bf16
    %0 = vector.broadcast %cst : bf16 to vector<2x18x18x4xbf16>
    %c0 = arith.constant 0 : index
    %c0_0 = arith.constant 0 : index
    %c0_1 = arith.constant 0 : index
    %c0_2 = arith.constant 0 : index
    %1 = vector.load %arg8[%c0, %c0_0, %c0_1, %c0_2] : memref<2x18x18x4xbf16, #tpu.memory_space<vmem>>, vector<2x18x18x4xbf16>
    tpu.vector_store %arg8[%c0, %c0_0, %c0_1, %c0_2], %0 {strides = array<i32>} : memref<2x18x18x4xbf16, #tpu.memory_space<vmem>>, vector<2x18x18x4xbf16>,
    %cst_3 = arith.constant 0.000000e+00 : bf16
    %2 = vector.broadcast %cst_3 : bf16 to vector<2x18x18x128xbf16>
    %c0_4 = arith.constant 0 : index
    %c0_5 = arith.constant 0 : index
    %c0_6 = arith.constant 0 : index
    %c0_7 = arith.constant 0 : index
    %3 = vector.load %arg9[%c0_4, %c0_5, %c0_6, %c0_7] : memref<2x18x18x128xbf16, #tpu.memory_space<vmem>>, vector<2x18x18x128xbf16>
    tpu.vector_store %arg9[%c0_4, %c0_5, %c0_6, %c0_7], %2 {strides = array<i32>} : memref<2x18x18x128xbf16, #tpu.memory_space<vmem>>, vector<2x18x18x128xbf16>,
    %c0_8 = arith.constant 0 : index
    %c0_9 = arith.constant 0 : index
    %c0_10 = arith.constant 0 : index
    %c0_11 = arith.constant 0 : index
    %4 = vector.load %arg0[%c0_8, %c0_9, %c0_10, %c0_11] : memref<2x16x16x4xbf16, #tpu.memory_space<vmem>>, vector<2x16x16x4xbf16>
    %c0_12 = arith.constant 0 : index
    %c1 = arith.constant 1 : index
    %c1_13 = arith.constant 1 : index
    %c0_14 = arith.constant 0 : index
    %5 = vector.load %arg8[%c0_12, %c1, %c1_13, %c0_14] : memref<2x18x18x4xbf16, #tpu.memory_space<vmem>>, vector<2x16x16x4xbf16>
    tpu.vector_store %arg8[%c0_12, %c1, %c1_13, %c0_14], %4 {strides = array<i32>} : memref<2x18x18x4xbf16, #tpu.memory_space<vmem>>, vector<2x16x16x4xbf16>,
    %c0_15 = arith.constant 0 : index
    %c0_16 = arith.constant 0 : index
    %c0_17 = arith.constant 0 : index
    %c0_18 = arith.constant 0 : index
    %6 = vector.load %arg8[%c0_15, %c0_16, %c0_17, %c0_18] : memref<2x18x18x4xbf16, #tpu.memory_space<vmem>>, vector<2x18x18x4xbf16>
    %7 = vector.extract_strided_slice %6 {offsets = [0, 0, 0, 0], sizes = [2, 16, 16, 4], strides = [1, 1, 1, 1]} : vector<2x18x18x4xbf16> to vector<2x16x16x4xbf16>
    %8 = vector.extract_strided_slice %6 {offsets = [0, 0, 1, 0], sizes = [2, 16, 16, 4], strides = [1, 1, 1, 1]} : vector<2x18x18x4xbf16> to vector<2x16x16x4xbf16>
    %9 = vector.extract_strided_slice %6 {offsets = [0, 0, 2, 0], sizes = [2, 16, 16, 4], strides = [1, 1, 1, 1]} : vector<2x18x18x4xbf16> to vector<2x16x16x4xbf16>
    %10 = vector.extract_strided_slice %6 {offsets = [0, 1, 0, 0], sizes = [2, 16, 16, 4], strides = [1, 1, 1, 1]} : vector<2x18x18x4xbf16> to vector<2x16x16x4xbf16>
    %11 = vector.extract_strided_slice %6 {offsets = [0, 1, 1, 0], sizes = [2, 16, 16, 4], strides = [1, 1, 1, 1]} : vector<2x18x18x4xbf16> to vector<2x16x16x4xbf16>
    %12 = vector.extract_strided_slice %6 {offsets = [0, 1, 2, 0], sizes = [2, 16, 16, 4], strides = [1, 1, 1, 1]} : vector<2x18x18x4xbf16> to vector<2x16x16x4xbf16>
    %13 = vector.extract_strided_slice %6 {offsets = [0, 2, 0, 0], sizes = [2, 16, 16, 4], strides = [1, 1, 1, 1]} : vector<2x18x18x4xbf16> to vector<2x16x16x4xbf16>
    %14 = vector.extract_strided_slice %6 {offsets = [0, 2, 1, 0], sizes = [2, 16, 16, 4], strides = [1, 1, 1, 1]} : vector<2x18x18x4xbf16> to vector<2x16x16x4xbf16>
    %15 = vector.extract_strided_slice %6 {offsets = [0, 2, 2, 0], sizes = [2, 16, 16, 4], strides = [1, 1, 1, 1]} : vector<2x18x18x4xbf16> to vector<2x16x16x4xbf16>
    %16 = tpu.concatenate %7, %8, %9, %10, %11, %12, %13, %14, %15 in 3 : vector<2x16x16x4xbf16>, vector<2x16x16x4xbf16>, vector<2x16x16x4xbf16>, vector<2x16x16x4xbf16>, vector<2x16x16x4xbf16>, vector<2x16x16x4xbf16>, vector<2x16x16x4xbf16>, vector<2x16x16x4xbf16>, vector<2x16x16x4xbf16> -> vector<2x16x16x36xbf16>
    %17 = vector.shape_cast %16 : vector<2x16x16x36xbf16> to vector<512x36xbf16>
    %c0_19 = arith.constant 0 : index
    %c0_20 = arith.constant 0 : index
    %18 = vector.load %arg1[%c0_19, %c0_20] : memref<36x128xbf16, #tpu.memory_space<vmem>>, vector<36x128xbf16>
    %cst_21 = arith.constant dense<0.000000e+00> : vector<512x128xf32>
    %19 = tpu.matmul %17, %18, %cst_21 {dimension_numbers = #tpu.dot_dimension_numbers<[1], [0], [0], [1], [0, 0, 1, 1], [], []>} : vector<512x36xbf16>, vector<36x128xbf16>, vector<512x128xf32> -> vector<512x128xf32>
    %c0_22 = arith.constant 0 : index
    %c0_23 = arith.constant 0 : index
    %20 = vector.load %arg2[%c0_22, %c0_23] : memref<1x128xf32, #tpu.memory_space<vmem>>, vector<1x128xf32>
    %c0_24 = arith.constant 0 : index
    %c0_25 = arith.constant 0 : index
    %21 = vector.load %arg3[%c0_24, %c0_25] : memref<1x128xf32, #tpu.memory_space<vmem>>, vector<1x128xf32>
    %cst_26 = arith.constant dense<0.000000e+00> : vector<128xf32>
    %22 = vector.multi_reduction <add>, %19, %cst_26 [0] : vector<512x128xf32> to vector<128xf32>
    %23 = vector.shape_cast %22 : vector<128xf32> to vector<1x128xf32>
    %cst_27 = arith.constant 5.120000e+02 : f32
    %24 = vector.broadcast %cst_27 : f32 to vector<1x128xf32>
    %25 = arith.divf %23, %24 : vector<1x128xf32>
    %26 = vector.broadcast %25 : vector<1x128xf32> to vector<512x128xf32>
    %27 = arith.subf %19, %26 : vector<512x128xf32>
    %28 = arith.mulf %27, %27 : vector<512x128xf32>
    %cst_28 = arith.constant dense<0.000000e+00> : vector<128xf32>
    %29 = vector.multi_reduction <add>, %28, %cst_28 [0] : vector<512x128xf32> to vector<128xf32>
    %30 = vector.shape_cast %29 : vector<128xf32> to vector<1x128xf32>
    %cst_29 = arith.constant 5.120000e+02 : f32
    %31 = vector.broadcast %cst_29 : f32 to vector<1x128xf32>
    %32 = arith.divf %30, %31 : vector<1x128xf32>
    %cst_30 = arith.constant 9.99999974E-6 : f32
    %33 = vector.broadcast %cst_30 : f32 to vector<1x128xf32>
    %34 = arith.addf %32, %33 : vector<1x128xf32>
    %35 = math.rsqrt %34 : vector<1x128xf32>
    %36 = arith.mulf %20, %35 : vector<1x128xf32>
    %37 = arith.mulf %25, %36 : vector<1x128xf32>
    %38 = arith.subf %21, %37 : vector<1x128xf32>
    %39 = vector.broadcast %36 : vector<1x128xf32> to vector<512x128xf32>
    %40 = arith.mulf %19, %39 : vector<512x128xf32>
    %41 = vector.broadcast %38 : vector<1x128xf32> to vector<512x128xf32>
    %42 = arith.addf %40, %41 : vector<512x128xf32>
    %cst_31 = arith.constant 0.000000e+00 : f32
    %43 = vector.broadcast %cst_31 : f32 to vector<512x128xf32>
    %44 = arith.maximumf %42, %43 : vector<512x128xf32>
    %45 = vector.shape_cast %44 : vector<512x128xf32> to vector<2x16x16x128xf32>
    %46 = arith.truncf %45 : vector<2x16x16x128xf32> to vector<2x16x16x128xbf16>
    %c0_32 = arith.constant 0 : index
    %c1_33 = arith.constant 1 : index
    %c1_34 = arith.constant 1 : index
    %c0_35 = arith.constant 0 : index
    %47 = vector.load %arg9[%c0_32, %c1_33, %c1_34, %c0_35] : memref<2x18x18x128xbf16, #tpu.memory_space<vmem>>, vector<2x16x16x128xbf16>
    tpu.vector_store %arg9[%c0_32, %c1_33, %c1_34, %c0_35], %46 {strides = array<i32>} : memref<2x18x18x128xbf16, #tpu.memory_space<vmem>>, vector<2x16x16x128xbf16>,
    %c0_36 = arith.constant 0 : index
    %c0_37 = arith.constant 0 : index
    %c0_38 = arith.constant 0 : index
    %c0_39 = arith.constant 0 : index
    %48 = vector.load %arg9[%c0_36, %c0_37, %c0_38, %c0_39] : memref<2x18x18x128xbf16, #tpu.memory_space<vmem>>, vector<2x18x18x128xbf16>
    %49 = vector.extract_strided_slice %48 {offsets = [0, 0, 0, 0], sizes = [2, 16, 16, 128], strides = [1, 1, 1, 1]} : vector<2x18x18x128xbf16> to vector<2x16x16x128xbf16>
    %50 = vector.extract_strided_slice %48 {offsets = [0, 0, 1, 0], sizes = [2, 16, 16, 128], strides = [1, 1, 1, 1]} : vector<2x18x18x128xbf16> to vector<2x16x16x128xbf16>
    %51 = vector.extract_strided_slice %48 {offsets = [0, 0, 2, 0], sizes = [2, 16, 16, 128], strides = [1, 1, 1, 1]} : vector<2x18x18x128xbf16> to vector<2x16x16x128xbf16>
    %52 = vector.extract_strided_slice %48 {offsets = [0, 1, 0, 0], sizes = [2, 16, 16, 128], strides = [1, 1, 1, 1]} : vector<2x18x18x128xbf16> to vector<2x16x16x128xbf16>
    %53 = vector.extract_strided_slice %48 {offsets = [0, 1, 1, 0], sizes = [2, 16, 16, 128], strides = [1, 1, 1, 1]} : vector<2x18x18x128xbf16> to vector<2x16x16x128xbf16>
    %54 = vector.extract_strided_slice %48 {offsets = [0, 1, 2, 0], sizes = [2, 16, 16, 128], strides = [1, 1, 1, 1]} : vector<2x18x18x128xbf16> to vector<2x16x16x128xbf16>
    %55 = vector.extract_strided_slice %48 {offsets = [0, 2, 0, 0], sizes = [2, 16, 16, 128], strides = [1, 1, 1, 1]} : vector<2x18x18x128xbf16> to vector<2x16x16x128xbf16>
    %56 = vector.extract_strided_slice %48 {offsets = [0, 2, 1, 0], sizes = [2, 16, 16, 128], strides = [1, 1, 1, 1]} : vector<2x18x18x128xbf16> to vector<2x16x16x128xbf16>
    %57 = vector.extract_strided_slice %48 {offsets = [0, 2, 2, 0], sizes = [2, 16, 16, 128], strides = [1, 1, 1, 1]} : vector<2x18x18x128xbf16> to vector<2x16x16x128xbf16>
    %58 = tpu.concatenate %49, %50, %51, %52, %53, %54, %55, %56, %57 in 3 : vector<2x16x16x128xbf16>, vector<2x16x16x128xbf16>, vector<2x16x16x128xbf16>, vector<2x16x16x128xbf16>, vector<2x16x16x128xbf16>, vector<2x16x16x128xbf16>, vector<2x16x16x128xbf16>, vector<2x16x16x128xbf16>, vector<2x16x16x128xbf16> -> vector<2x16x16x1152xbf16>
    %59 = vector.shape_cast %58 : vector<2x16x16x1152xbf16> to vector<512x1152xbf16>
    %c0_40 = arith.constant 0 : index
    %c0_41 = arith.constant 0 : index
    %60 = vector.load %arg4[%c0_40, %c0_41] : memref<1152x128xbf16, #tpu.memory_space<vmem>>, vector<1152x128xbf16>
    %cst_42 = arith.constant dense<0.000000e+00> : vector<512x128xf32>
    %61 = tpu.matmul %59, %60, %cst_42 {dimension_numbers = #tpu.dot_dimension_numbers<[1], [0], [0], [1], [0, 0, 1, 1], [], []>} : vector<512x1152xbf16>, vector<1152x128xbf16>, vector<512x128xf32> -> vector<512x128xf32>
    %c0_43 = arith.constant 0 : index
    %c0_44 = arith.constant 0 : index
    %62 = vector.load %arg5[%c0_43, %c0_44] : memref<1x128xf32, #tpu.memory_space<vmem>>, vector<1x128xf32>
    %c0_45 = arith.constant 0 : index
    %c0_46 = arith.constant 0 : index
    %63 = vector.load %arg6[%c0_45, %c0_46] : memref<1x128xf32, #tpu.memory_space<vmem>>, vector<1x128xf32>
    %cst_47 = arith.constant dense<0.000000e+00> : vector<128xf32>
    %64 = vector.multi_reduction <add>, %61, %cst_47 [0] : vector<512x128xf32> to vector<128xf32>
    %65 = vector.shape_cast %64 : vector<128xf32> to vector<1x128xf32>
    %cst_48 = arith.constant 5.120000e+02 : f32
    %66 = vector.broadcast %cst_48 : f32 to vector<1x128xf32>
    %67 = arith.divf %65, %66 : vector<1x128xf32>
    %68 = vector.broadcast %67 : vector<1x128xf32> to vector<512x128xf32>
    %69 = arith.subf %61, %68 : vector<512x128xf32>
    %70 = arith.mulf %69, %69 : vector<512x128xf32>
    %cst_49 = arith.constant dense<0.000000e+00> : vector<128xf32>
    %71 = vector.multi_reduction <add>, %70, %cst_49 [0] : vector<512x128xf32> to vector<128xf32>
    %72 = vector.shape_cast %71 : vector<128xf32> to vector<1x128xf32>
    %cst_50 = arith.constant 5.120000e+02 : f32
    %73 = vector.broadcast %cst_50 : f32 to vector<1x128xf32>
    %74 = arith.divf %72, %73 : vector<1x128xf32>
    %cst_51 = arith.constant 9.99999974E-6 : f32
    %75 = vector.broadcast %cst_51 : f32 to vector<1x128xf32>
    %76 = arith.addf %74, %75 : vector<1x128xf32>
    %77 = math.rsqrt %76 : vector<1x128xf32>
    %78 = arith.mulf %62, %77 : vector<1x128xf32>
    %79 = arith.mulf %67, %78 : vector<1x128xf32>
    %80 = arith.subf %63, %79 : vector<1x128xf32>
    %81 = vector.broadcast %78 : vector<1x128xf32> to vector<512x128xf32>
    %82 = arith.mulf %61, %81 : vector<512x128xf32>
    %83 = vector.broadcast %80 : vector<1x128xf32> to vector<512x128xf32>
    %84 = arith.addf %82, %83 : vector<512x128xf32>
    %cst_52 = arith.constant 0.000000e+00 : f32
    %85 = vector.broadcast %cst_52 : f32 to vector<512x128xf32>
    %86 = arith.maximumf %84, %85 : vector<512x128xf32>
    %87 = vector.shape_cast %86 : vector<512x128xf32> to vector<2x16x16x128xf32>
    %c0_53 = arith.constant 0 : index
    %c0_54 = arith.constant 0 : index
    %c0_55 = arith.constant 0 : index
    %c0_56 = arith.constant 0 : index
    %88 = vector.load %arg7[%c0_53, %c0_54, %c0_55, %c0_56] : memref<2x16x16x128xf32, #tpu.memory_space<vmem>>, vector<2x16x16x128xf32>
    tpu.vector_store %arg7[%c0_53, %c0_54, %c0_55, %c0_56], %87 {strides = array<i32>} : memref<2x16x16x128xf32, #tpu.memory_space<vmem>>, vector<2x16x16x128xf32>,
    return
  }
}

</mosaic_0001>

<llo_original>
// kernel: double_conv_forward.1
$region0: #{double_conv_forward.1}
  #allocation0 [shape = 'u32[]', space=smem, size = 0x4, offset = 0x4, fixed_abs, tag = 'smem constant byte address 0x4 - core index']
  #allocation1 [shape = 'u32[144,128]{1,0:T(1,128)}', space=vmem, size = 0x12000, scoped, tag = 'internal scratch']
  #allocation2 [shape = 'bf16[2,18,18,4]{3,2,1,0:T(8,128)(2,1)}', space=vmem, size = 0x36000, scoped, tag = 'scratch operand']
  #allocation3 [shape = 'bf16[2,18,18,128]{3,2,1,0:T(8,128)(2,1)}', space=vmem, size = 0x36000, scoped, tag = 'scratch operand']
  %s0 = inlined_call_operand.vmem [shape: bf16[2,16,16,4], index: 0, kind: input, shape index: {}]
  %s1 = inlined_call_operand.vmem [shape: bf16[36,128], index: 1, kind: input, shape index: {}]
  %s2 = inlined_call_operand.vmem [shape: f32[1,128], index: 2, kind: input, shape index: {}]
  %s3 = inlined_call_operand.vmem [shape: f32[1,128], index: 3, kind: input, shape index: {}]
  %s4 = inlined_call_operand.vmem [shape: bf16[1152,128], index: 4, kind: input, shape index: {}]
  %s5 = inlined_call_operand.vmem [shape: f32[1,128], index: 5, kind: input, shape index: {}]
  %s6 = inlined_call_operand.vmem [shape: f32[1,128], index: 6, kind: input, shape index: {}]
  %s7 = inlined_call_operand.vmem [shape: f32[2,16,16,128], index: 7, kind: output, shape index: {}]
  %s8 = sld [smem:[#allocation0]]
  $region38: #{double_conv_forward.1} parent=0
    _
  %s10 = ssub.s32 1, %s8
  %s11 = scalar_select 0, %s10, %s8
  // Predicated region
  $region2: #{double_conv_forward.1} parent=0 // pred_check
    _
  $region3: #{double_conv_forward.1} parent=0 // pred_check_branch
    %13 = sbr.rel (0) target = $region5
  $region4: #{double_conv_forward.1} parent=0 // pred_region
    _
  $region5: #{double_conv_forward.1} parent=0 // pred_fallthru
    _
  // Predicated region
  $region6: #{double_conv_forward.1} parent=0 // pred_check
    _
  $region7: #{double_conv_forward.1} parent=0 // pred_check_branch
    %15 = sbr.rel (0) target = $region9
  $region8: #{double_conv_forward.1} parent=0 // pred_region
    _
  $region9: #{double_conv_forward.1} parent=0 // pred_fallthru
    _
  // Predicated region
  $region10: #{double_conv_forward.1} parent=0 // pred_check
    _
  $region11: #{double_conv_forward.1} parent=0 // pred_check_branch
    %17 = sbr.rel (0) target = $region13
  $region12: #{double_conv_forward.1} parent=0 // pred_region
    _
  $region13: #{double_conv_forward.1} parent=0 // pred_fallthru
    _
  // Predicated region
  $region14: #{double_conv_forward.1} parent=0 // pred_check
    _
  $region15: #{double_conv_forward.1} parent=0 // pred_check_branch
    %19 = sbr.rel (0) target = $region17
  $region16: #{double_conv_forward.1} parent=0 // pred_region
    _
  $region17: #{double_conv_forward.1} parent=0 // pred_fallthru
    _
  // Predicated region
  $region18: #{double_conv_forward.1} parent=0 // pred_check
    _
  $region19: #{double_conv_forward.1} parent=0 // pred_check_branch
    %21 = sbr.rel (0) target = $region21
  $region20: #{double_conv_forward.1} parent=0 // pred_region
    _
  $region21: #{double_conv_forward.1} parent=0 // pred_fallthru
    _
  // Predicated region
  $region22: #{double_conv_forward.1} parent=0 // pred_check
    _
  $region23: #{double_conv_forward.1} parent=0 // pred_check_branch
    %23 = sbr.rel (0) target = $region25
  $region24: #{double_conv_forward.1} parent=0 // pred_region
    _
  $region25: #{double_conv_forward.1} parent=0 // pred_fallthru
    _
  // Predicated region
  $region26: #{double_conv_forward.1} parent=0 // pred_check
    _
  $region27: #{double_conv_forward.1} parent=0 // pred_check_branch
    %25 = sbr.rel (0) target = $region29
  $region28: #{double_conv_forward.1} parent=0 // pred_region
    _
  $region29: #{double_conv_forward.1} parent=0 // pred_fallthru
    _
  %vm27 = vcmask 27648
  %28 = vst.msk [vmem:[#allocation2] sm:$0xf] %vm27, 0
  %29 = vst.msk [vmem:[#allocation2 + $0x4] sm:$0xf] %vm27, 0
  %vm30 = vcmask 24576
  %31 = vst.msk [vmem:[#allocation2 + $0x8] sm:$0x1] %vm30, 0
  %32 = vst.msk [vmem:[#allocation2 + $0xc] sm:$0xf] %vm27, 0
  %33 = vst.msk [vmem:[#allocation2 + $0x10] sm:$0xf] %vm27, 0
  %34 = vst.msk [vmem:[#allocation2 + $0x14] sm:$0x1] %vm30, 0
  %35 = vst.msk [vmem:[#allocation2 + $0x18] sm:$0xf] %vm27, 0
  %36 = vst.msk [vmem:[#allocation2 + $0x1c] sm:$0xf] %vm27, 0
  %37 = vst.msk [vmem:[#allocation2 + $0x20] sm:$0x1] %vm30, 0
  %38 = vst.msk [vmem:[#allocation2 + $0x24] sm:$0xf] %vm27, 0
  %39 = vst.msk [vmem:[#allocation2 + $0x28] sm:$0xf] %vm27, 0
  %40 = vst.msk [vmem:[#allocation2 + $0x2c] sm:$0x1] %vm30, 0
  %41 = vst.msk [vmem:[#allocation2 + $0x30] sm:$0xf] %vm27, 0
  %42 = vst.msk [vmem:[#allocation2 + $0x34] sm:$0xf] %vm27, 0
  %43 = vst.msk [vmem:[#allocation2 + $0x38] sm:$0x1] %vm30, 0
  %44 = vst.msk [vmem:[#allocation2 + $0x3c] sm:$0xf] %vm27, 0
  %45 = vst.msk [vmem:[#allocation2 + $0x40] sm:$0xf] %vm27, 0
  %46 = vst.msk [vmem:[#allocation2 + $0x44] sm:$0x1] %vm30, 0
  %47 = vst.msk [vmem:[#allocation2 + $0x48] sm:$0xf] %vm27, 0
  %48 = vst.msk [vmem:[#allocation2 + $0x4c] sm:$0xf] %vm27, 0
  %49 = vst.msk [vmem:[#allocation2 + $0x50] sm:$0x1] %vm30, 0
  %50 = vst.msk [vmem:[#allocation2 + $0x54] sm:$0xf] %vm27, 0
  %51 = vst.msk [vmem:[#allocation2 + $0x58] sm:$0xf] %vm27, 0
  %52 = vst.msk [vmem:[#allocation2 + $0x5c] sm:$0x1] %vm30, 0
  %53 = vst.msk [vmem:[#allocation2 + $0x60] sm:$0xf] %vm27, 0
  %54 = vst.msk [vmem:[#allocation2 + $0x64] sm:$0xf] %vm27, 0
  %55 = vst.msk [vmem:[#allocation2 + $0x68] sm:$0x1] %vm30, 0
  %56 = vst.msk [vmem:[#allocation2 + $0x6c] sm:$0xf] %vm27, 0
  %57 = vst.msk [vmem:[#allocation2 + $0x70] sm:$0xf] %vm27, 0
  %58 = vst.msk [vmem:[#allocation2 + $0x74] sm:$0x1] %vm30, 0
  %59 = vst.msk [vmem:[#allocation2 + $0x78] sm:$0xf] %vm27, 0
  %60 = vst.msk [vmem:[#allocation2 + $0x7c] sm:$0xf] %vm27, 0
  %61 = vst.msk [vmem:[#allocation2 + $0x80] sm:$0x1] %vm30, 0
  %62 = vst.msk [vmem:[#allocation2 + $0x84] sm:$0xf] %vm27, 0
  %63 = vst.msk [vmem:[#allocation2 + $0x88] sm:$0xf] %vm27, 0
  %64 = vst.msk [vmem:[#allocation2 + $0x8c] sm:$0x1] %vm30, 0
  %65 = vst.msk [vmem:[#allocation2 + $0x90] sm:$0xf] %vm27, 0
  %66 = vst.msk [vmem:[#allocation2 + $0x94] sm:$0xf] %vm27, 0
  %67 = vst.msk [vmem:[#allocation2 + $0x98] sm:$0x1] %vm30, 0
  %68 = vst.msk [vmem:[#allocation2 + $0x9c] sm:$0xf] %vm27, 0
  %69 = vst.msk [vmem:[#allocation2 + $0xa0] sm:$0xf] %vm27, 0
  %70 = vst.msk [vmem:[#allocation2 + $0xa4] sm:$0x1] %vm30, 0
  %71 = vst.msk [vmem:[#allocation2 + $0xa8] sm:$0xf] %vm27, 0
  %72 = vst.msk [vmem:[#allocation2 + $0xac] sm:$0xf] %vm27, 0
  %73 = vst.msk [vmem:[#allocation2 + $0xb0] sm:$0x1] %vm30, 0
  %74 = vst.msk [vmem:[#allocation2 + $0xb4] sm:$0xf] %vm27, 0
  %75 = vst.msk [vmem:[#allocation2 + $0xb8] sm:$0xf] %vm27, 0
  %76 = vst.msk [vmem:[#allocation2 + $0xbc] sm:$0x1] %vm30, 0
  %77 = vst.msk [vmem:[#allocation2 + $0xc0] sm:$0xf] %vm27, 0
  %78 = vst.msk [vmem:[#allocation2 + $0xc4] sm:$0xf] %vm27, 0
  %79 = vst.msk [vmem:[#allocation2 + $0xc8] sm:$0x1] %vm30, 0
  %80 = vst.msk [vmem:[#allocation2 + $0xcc] sm:$0xf] %vm27, 0
  %81 = vst.msk [vmem:[#allocation2 + $0xd0] sm:$0xf] %vm27, 0
  %82 = vst.msk [vmem:[#allocation2 + $0xd4] sm:$0x1] %vm30, 0
  %83 = vst.msk [vmem:[#allocation2 + $0xd8] sm:$0xf] %vm27, 0
  %84 = vst.msk [vmem:[#allocation2 + $0xdc] sm:$0xf] %vm27, 0
  %85 = vst.msk [vmem:[#allocation2 + $0xe0] sm:$0x1] %vm30, 0
  %86 = vst.msk [vmem:[#allocation2 + $0xe4] sm:$0xf] %vm27, 0
  %87 = vst.msk [vmem:[#allocation2 + $0xe8] sm:$0xf] %vm27, 0
  %88 = vst.msk [vmem:[#allocation2 + $0xec] sm:$0x1] %vm30, 0
  %89 = vst.msk [vmem:[#allocation2 + $0xf0] sm:$0xf] %vm27, 0
  %90 = vst.msk [vmem:[#allocation2 + $0xf4] sm:$0xf] %vm27, 0
  %91 = vst.msk [vmem:[#allocation2 + $0xf8] sm:$0x1] %vm30, 0
  %92 = vst.msk [vmem:[#allocation2 + $0xfc] sm:$0xf] %vm27, 0
  %93 = vst.msk [vmem:[#allocation2 + $0x100] sm:$0xf] %vm27, 0
  %94 = vst.msk [vmem:[#allocation2 + $0x104] sm:$0x1] %vm30, 0
  %95 = vst.msk [vmem:[#allocation2 + $0x108] sm:$0xf] %vm27, 0
  %96 = vst.msk [vmem:[#allocation2 + $0x10c] sm:$0xf] %vm27, 0
  %97 = vst.msk [vmem:[#allocation2 + $0x110] sm:$0x1] %vm30, 0
  %98 = vst.msk [vmem:[#allocation2 + $0x114] sm:$0xf] %vm27, 0
  %99 = vst.msk [vmem:[#allocation2 + $0x118] sm:$0xf] %vm27, 0
  %100 = vst.msk [vmem:[#allocation2 + $0x11c] sm:$0x1] %vm30, 0
  %101 = vst.msk [vmem:[#allocation2 + $0x120] sm:$0xf] %vm27, 0
  %102 = vst.msk [vmem:[#allocation2 + $0x124] sm:$0xf] %vm27, 0
  %103 = vst.msk [vmem:[#allocation2 + $0x128] sm:$0x1] %vm30, 0
  %104 = vst.msk [vmem:[#allocation2 + $0x12c] sm:$0xf] %vm27, 0
  %105 = vst.msk [vmem:[#allocation2 + $0x130] sm:$0xf] %vm27, 0
  %106 = vst.msk [vmem:[#allocation2 + $0x134] sm:$0x1] %vm30, 0
  %107 = vst.msk [vmem:[#allocation2 + $0x138] sm:$0xf] %vm27, 0
  %108 = vst.msk [vmem:[#allocation2 + $0x13c] sm:$0xf] %vm27, 0
  %109 = vst.msk [vmem:[#allocation2 + $0x140] sm:$0x1] %vm30, 0
  %110 = vst.msk [vmem:[#allocation2 + $0x144] sm:$0xf] %vm27, 0
  %111 = vst.msk [vmem:[#allocation2 + $0x148] sm:$0xf] %vm27, 0
  %112 = vst.msk [vmem:[#allocation2 + $0x14c] sm:$0x1] %vm30, 0
  %113 = vst.msk [vmem:[#allocation2 + $0x150] sm:$0xf] %vm27, 0
  %114 = vst.msk [vmem:[#allocation2 + $0x154] sm:$0xf] %vm27, 0
  %115 = vst.msk [vmem:[#allocation2 + $0x158] sm:$0x1] %vm30, 0
  %116 = vst.msk [vmem:[#allocation2 + $0x15c] sm:$0xf] %vm27, 0
  %117 = vst.msk [vmem:[#allocation2 + $0x160] sm:$0xf] %vm27, 0
  %118 = vst.msk [vmem:[#allocation2 + $0x164] sm:$0x1] %vm30, 0
  %119 = vst.msk [vmem:[#allocation2 + $0x168] sm:$0xf] %vm27, 0
  %120 = vst.msk [vmem:[#allocation2 + $0x16c] sm:$0xf] %vm27, 0
  %121 = vst.msk [vmem:[#allocation2 + $0x170] sm:$0x1] %vm30, 0
  %122 = vst.msk [vmem:[#allocation2 + $0x174] sm:$0xf] %vm27, 0
  %123 = vst.msk [vmem:[#allocation2 + $0x178] sm:$0xf] %vm27, 0
  %124 = vst.msk [vmem:[#allocation2 + $0x17c] sm:$0x1] %vm30, 0
  %125 = vst.msk [vmem:[#allocation2 + $0x180] sm:$0xf] %vm27, 0
  %126 = vst.msk [vmem:[#allocation2 + $0x184] sm:$0xf] %vm27, 0
  %127 = vst.msk [vmem:[#allocation2 + $0x188] sm:$0x1] %vm30, 0
  %128 = vst.msk [vmem:[#allocation2 + $0x18c] sm:$0xf] %vm27, 0
  %129 = vst.msk [vmem:[#allocation2 + $0x190] sm:$0xf] %vm27, 0
  %130 = vst.msk [vmem:[#allocation2 + $0x194] sm:$0x1] %vm30, 0
  %131 = vst.msk [vmem:[#allocation2 + $0x198] sm:$0xf] %vm27, 0
  %132 = vst.msk [vmem:[#allocation2 + $0x19c] sm:$0xf] %vm27, 0
  %133 = vst.msk [vmem:[#allocation2 + $0x1a0] sm:$0x1] %vm30, 0
  %134 = vst.msk [vmem:[#allocation2 + $0x1a4] sm:$0xf] %vm27, 0
  %135 = vst.msk [vmem:[#allocation2 + $0x1a8] sm:$0xf] %vm27, 0
  %136 = vst.msk [vmem:[#allocation2 + $0x1ac] sm:$0x1] %vm30, 0
  %137 = vst [vmem:[#allocation3] sm:$0xf] 0
  %138 = vst [vmem:[#allocation3 + $0x4] sm:$0xf] 0
  %139 = vst [vmem:[#allocation3 + $0x8] sm:$0x1] 0
  %140 = vst [vmem:[#allocation3 + $0xc] sm:$0xf] 0
  %141 = vst [vmem:[#allocation3 + $0x10] sm:$0xf] 0
  %142 = vst [vmem:[#allocation3 + $0x14] sm:$0x1] 0
  %143 = vst [vmem:[#allocation3 + $0x18] sm:$0xf] 0
  %144 = vst [vmem:[#allocation3 + $0x1c] sm:$0xf] 0
  %145 = vst [vmem:[#allocation3 + $0x20] sm:$0x1] 0
  %146 = vst [vmem:[#allocation3 + $0x24] sm:$0xf] 0
  %147 = vst [vmem:[#allocation3 + $0x28] sm:$0xf] 0
  %148 = vst [vmem:[#allocation3 + $0x2c] sm:$0x1] 0
  %149 = vst [vmem:[#allocation3 + $0x30] sm:$0xf] 0
  %150 = vst [vmem:[#allocation3 + $0x34] sm:$0xf] 0
  %151 = vst [vmem:[#allocation3 + $0x38] sm:$0x1] 0
  %152 = vst [vmem:[#allocation3 + $0x3c] sm:$0xf] 0
  %153 = vst [vmem:[#allocation3 + $0x40] sm:$0xf] 0
  %154 = vst [vmem:[#allocation3 + $0x44] sm:$0x1] 0
  %155 = vst [vmem:[#allocation3 + $0x48] sm:$0xf] 0
  %156 = vst [vmem:[#allocation3 + $0x4c] sm:$0xf] 0
  %157 = vst [vmem:[#allocation3 + $0x50] sm:$0x1] 0
  %158 = vst [vmem:[#allocation3 + $0x54] sm:$0xf] 0
  %159 = vst [vmem:[#allocation3 + $0x58] sm:$0xf] 0
  %160 = vst [vmem:[#allocation3 + $0x5c] sm:$0x1] 0
  %161 = vst [vmem:[#allocation3 + $0x60] sm:$0xf] 0
  %162 = vst [vmem:[#allocation3 + $0x64] sm:$0xf] 0
  %163 = vst [vmem:[#allocation3 + $0x68] sm:$0x1] 0
  %164 = vst [vmem:[#allocation3 + $0x6c] sm:$0xf] 0
  %165 = vst [vmem:[#allocation3 + $0x70] sm:$0xf] 0
  %166 = vst [vmem:[#allocation3 + $0x74] sm:$0x1] 0
  %167 = vst [vmem:[#allocation3 + $0x78] sm:$0xf] 0
  %168 = vst [vmem:[#allocation3 + $0x7c] sm:$0xf] 0
  %169 = vst [vmem:[#allocation3 + $0x80] sm:$0x1] 0
  %170 = vst [vmem:[#allocation3 + $0x84] sm:$0xf] 0
  %171 = vst [vmem:[#allocation3 + $0x88] sm:$0xf] 0
  %172 = vst [vmem:[#allocation3 + $0x8c] sm:$0x1] 0
  %173 = vst [vmem:[#allocation3 + $0x90] sm:$0xf] 0
  %174 = vst [vmem:[#allocation3 + $0x94] sm:$0xf] 0
  %175 = vst [vmem:[#allocation3 + $0x98] sm:$0x1] 0
  %176 = vst [vmem:[#allocation3 + $0x9c] sm:$0xf] 0
  %177 = vst [vmem:[#allocation3 + $0xa0] sm:$0xf] 0
  %178 = vst [vmem:[#allocation3 + $0xa4] sm:$0x1] 0
  %179 = vst [vmem:[#allocation3 + $0xa8] sm:$0xf] 0
  %180 = vst [vmem:[#allocation3 + $0xac] sm:$0xf] 0
  %181 = vst [vmem:[#allocation3 + $0xb0] sm:$0x1] 0
  %182 = vst [vmem:[#allocation3 + $0xb4] sm:$0xf] 0
  %183 = vst [vmem:[#allocation3 + $0xb8] sm:$0xf] 0
  %184 = vst [vmem:[#allocation3 + $0xbc] sm:$0x1] 0
  %185 = vst [vmem:[#allocation3 + $0xc0] sm:$0xf] 0
  %186 = vst [vmem:[#allocation3 + $0xc4] sm:$0xf] 0
  %187 = vst [vmem:[#allocation3 + $0xc8] sm:$0x1] 0
  %188 = vst [vmem:[#allocation3 + $0xcc] sm:$0xf] 0
  %189 = vst [vmem:[#allocation3 + $0xd0] sm:$0xf] 0
  %190 = vst [vmem:[#allocation3 + $0xd4] sm:$0x1] 0
  %191 = vst [vmem:[#allocation3 + $0xd8] sm:$0xf] 0
  %192 = vst [vmem:[#allocation3 + $0xdc] sm:$0xf] 0
  %193 = vst [vmem:[#allocation3 + $0xe0] sm:$0x1] 0
  %194 = vst [vmem:[#allocation3 + $0xe4] sm:$0xf] 0
  %195 = vst [vmem:[#allocation3 + $0xe8] sm:$0xf] 0
  %196 = vst [vmem:[#allocation3 + $0xec] sm:$0x1] 0
  %197 = vst [vmem:[#allocation3 + $0xf0] sm:$0xf] 0
  %198 = vst [vmem:[#allocation3 + $0xf4] sm:$0xf] 0
  %199 = vst [vmem:[#allocation3 + $0xf8] sm:$0x1] 0
  %200 = vst [vmem:[#allocation3 + $0xfc] sm:$0xf] 0
  %201 = vst [vmem:[#allocation3 + $0x100] sm:$0xf] 0
  %202 = vst [vmem:[#allocation3 + $0x104] sm:$0x1] 0
  %203 = vst [vmem:[#allocation3 + $0x108] sm:$0xf] 0
  %204 = vst [vmem:[#allocation3 + $0x10c] sm:$0xf] 0
  %205 = vst [vmem:[#allocation3 + $0x110] sm:$0x1] 0
  %206 = vst [vmem:[#allocation3 + $0x114] sm:$0xf] 0
  %207 = vst [vmem:[#allocation3 + $0x118] sm:$0xf] 0
  %208 = vst [vmem:[#allocation3 + $0x11c] sm:$0x1] 0
  %209 = vst [vmem:[#allocation3 + $0x120] sm:$0xf] 0
  %210 = vst [vmem:[#allocation3 + $0x124] sm:$0xf] 0
  %211 = vst [vmem:[#allocation3 + $0x128] sm:$0x1] 0
  %212 = vst [vmem:[#allocation3 + $0x12c] sm:$0xf] 0
  %213 = vst [vmem:[#allocation3 + $0x130] sm:$0xf] 0
  %214 = vst [vmem:[#allocation3 + $0x134] sm:$0x1] 0
  %215 = vst [vmem:[#allocation3 + $0x138] sm:$0xf] 0
  %216 = vst [vmem:[#allocation3 + $0x13c] sm:$0xf] 0
  %217 = vst [vmem:[#allocation3 + $0x140] sm:$0x1] 0
  %218 = vst [vmem:[#allocation3 + $0x144] sm:$0xf] 0
  %219 = vst [vmem:[#allocation3 + $0x148] sm:$0xf] 0
  %220 = vst [vmem:[#allocation3 + $0x14c] sm:$0x1] 0
  %221 = vst [vmem:[#allocation3 + $0x150] sm:$0xf] 0
  %222 = vst [vmem:[#allocation3 + $0x154] sm:$0xf] 0
  %223 = vst [vmem:[#allocation3 + $0x158] sm:$0x1] 0
  %224 = vst [vmem:[#allocation3 + $0x15c] sm:$0xf] 0
  %225 = vst [vmem:[#allocation3 + $0x160] sm:$0xf] 0
  %226 = vst [vmem:[#allocation3 + $0x164] sm:$0x1] 0
  %227 = vst [vmem:[#allocation3 + $0x168] sm:$0xf] 0
  %228 = vst [vmem:[#allocation3 + $0x16c] sm:$0xf] 0
  %229 = vst [vmem:[#allocation3 + $0x170] sm:$0x1] 0
  %230 = vst [vmem:[#allocation3 + $0x174] sm:$0xf] 0
  %231 = vst [vmem:[#allocation3 + $0x178] sm:$0xf] 0
  %232 = vst [vmem:[#allocation3 + $0x17c] sm:$0x1] 0
  %233 = vst [vmem:[#allocation3 + $0x180] sm:$0xf] 0
  %234 = vst [vmem:[#allocation3 + $0x184] sm:$0xf] 0
  %235 = vst [vmem:[#allocation3 + $0x188] sm:$0x1] 0
  %236 = vst [vmem:[#allocation3 + $0x18c] sm:$0xf] 0
  %237 = vst [vmem:[#allocation3 + $0x190] sm:$0xf] 0
  %238 = vst [vmem:[#allocation3 + $0x194] sm:$0x1] 0
  %239 = vst [vmem:[#allocation3 + $0x198] sm:$0xf] 0
  %240 = vst [vmem:[#allocation3 + $0x19c] sm:$0xf] 0
  %241 = vst [vmem:[#allocation3 + $0x1a0] sm:$0x1] 0
  %242 = vst [vmem:[#allocation3 + $0x1a4] sm:$0xf] 0
  %243 = vst [vmem:[#allocation3 + $0x1a8] sm:$0xf] 0
  %244 = vst [vmem:[#allocation3 + $0x1ac] sm:$0x1] 0
  %v245 = vld [vmem:[%s0] sm:$0xf]
  %v246 = vld [vmem:[%s0 + $0x4] sm:$0xf]
  %v247 = vld [vmem:[%s0 + $0x8] sm:$0xf]
  %v248 = vld [vmem:[%s0 + $0xc] sm:$0xf]
  %v249 = vld [vmem:[%s0 + $0x10] sm:$0xf]
  %v250 = vld [vmem:[%s0 + $0x14] sm:$0xf]
  %v251 = vld [vmem:[%s0 + $0x18] sm:$0xf]
  %v252 = vld [vmem:[%s0 + $0x1c] sm:$0xf]
  %v253 = vld [vmem:[%s0 + $0x20] sm:$0xf]
  %v254 = vld [vmem:[%s0 + $0x24] sm:$0xf]
  %v255 = vld [vmem:[%s0 + $0x28] sm:$0xf]
  %v256 = vld [vmem:[%s0 + $0x2c] sm:$0xf]
  %v257 = vld [vmem:[%s0 + $0x30] sm:$0xf]
  %v258 = vld [vmem:[%s0 + $0x34] sm:$0xf]
  %v259 = vld [vmem:[%s0 + $0x38] sm:$0xf]
  %v260 = vld [vmem:[%s0 + $0x3c] sm:$0xf]
  %v261 = vld [vmem:[%s0 + $0x40] sm:$0xf]
  %v262 = vld [vmem:[%s0 + $0x44] sm:$0xf]
  %v263 = vld [vmem:[%s0 + $0x48] sm:$0xf]
  %v264 = vld [vmem:[%s0 + $0x4c] sm:$0xf]
  %v265 = vld [vmem:[%s0 + $0x50] sm:$0xf]
  %v266 = vld [vmem:[%s0 + $0x54] sm:$0xf]
  %v267 = vld [vmem:[%s0 + $0x58] sm:$0xf]
  %v268 = vld [vmem:[%s0 + $0x5c] sm:$0xf]
  %v269 = vld [vmem:[%s0 + $0x60] sm:$0xf]
  %v270 = vld [vmem:[%s0 + $0x64] sm:$0xf]
  %v271 = vld [vmem:[%s0 + $0x68] sm:$0xf]
  %v272 = vld [vmem:[%s0 + $0x6c] sm:$0xf]
  %v273 = vld [vmem:[%s0 + $0x70] sm:$0xf]
  %v274 = vld [vmem:[%s0 + $0x74] sm:$0xf]
  %v275 = vld [vmem:[%s0 + $0x78] sm:$0xf]
  %v276 = vld [vmem:[%s0 + $0x7c] sm:$0xf]
  %v277 = vld [vmem:[%s0 + $0x80] sm:$0xf]
  %v278 = vld [vmem:[%s0 + $0x84] sm:$0xf]
  %v279 = vld [vmem:[%s0 + $0x88] sm:$0xf]
  %v280 = vld [vmem:[%s0 + $0x8c] sm:$0xf]
  %v281 = vld [vmem:[%s0 + $0x90] sm:$0xf]
  %v282 = vld [vmem:[%s0 + $0x94] sm:$0xf]
  %v283 = vld [vmem:[%s0 + $0x98] sm:$0xf]
  %v284 = vld [vmem:[%s0 + $0x9c] sm:$0xf]
  %v285 = vld [vmem:[%s0 + $0xa0] sm:$0xf]
  %v286 = vld [vmem:[%s0 + $0xa4] sm:$0xf]
  %v287 = vld [vmem:[%s0 + $0xa8] sm:$0xf]
  %v288 = vld [vmem:[%s0 + $0xac] sm:$0xf]
  %v289 = vld [vmem:[%s0 + $0xb0] sm:$0xf]
  %v290 = vld [vmem:[%s0 + $0xb4] sm:$0xf]
  %v291 = vld [vmem:[%s0 + $0xb8] sm:$0xf]
  %v292 = vld [vmem:[%s0 + $0xbc] sm:$0xf]
  %v293 = vld [vmem:[%s0 + $0xc0] sm:$0xf]
  %v294 = vld [vmem:[%s0 + $0xc4] sm:$0xf]
  %v295 = vld [vmem:[%s0 + $0xc8] sm:$0xf]
  %v296 = vld [vmem:[%s0 + $0xcc] sm:$0xf]
  %v297 = vld [vmem:[%s0 + $0xd0] sm:$0xf]
  %v298 = vld [vmem:[%s0 + $0xd4] sm:$0xf]
  %v299 = vld [vmem:[%s0 + $0xd8] sm:$0xf]
  %v300 = vld [vmem:[%s0 + $0xdc] sm:$0xf]
  %v301 = vld [vmem:[%s0 + $0xe0] sm:$0xf]
  %v302 = vld [vmem:[%s0 + $0xe4] sm:$0xf]
  %v303 = vld [vmem:[%s0 + $0xe8] sm:$0xf]
  %v304 = vld [vmem:[%s0 + $0xec] sm:$0xf]
  %v305 = vld [vmem:[%s0 + $0xf0] sm:$0xf]
  %v306 = vld [vmem:[%s0 + $0xf4] sm:$0xf]
  %v307 = vld [vmem:[%s0 + $0xf8] sm:$0xf]
  %v308 = vld [vmem:[%s0 + $0xfc] sm:$0xf]
  %vm309 = vsmask.f32 256
  %vm310 = vsmask.f32 4368
  %vm311 = vmor %vm309, %vm310
  %v313 = vshrl.u32 %v245, 16
  %v315 = vrot.slane %v313, 7
  %v316 = vshll.u32 %v245, 16
  %v318 = vor.u32 %v315, %v316
  %v319 = vrot.slane %v315, 4
  %v321 = vshrl.u32 %v246, 16
  %v323 = vrot.slane %v321, 7
  %v324 = vshll.u32 %v246, 16
  %v326 = vor.u32 %v323, %v324
  %v327 = vsel %vm311, %v319, %v326
  %v328 = vrot.slane %v323, 4
  %v330 = vshrl.u32 %v247, 16
  %v332 = vrot.slane %v330, 7
  %v333 = vshll.u32 %v247, 16
  %v335 = vor.u32 %v332, %v333
  %v336 = vrot.slane %v332, 4
  %v338 = vshrl.u32 %v248, 16
  %v340 = vrot.slane %v338, 7
  %v341 = vshll.u32 %v248, 16
  %v343 = vor.u32 %v340, %v341
  %v344 = vsel %vm311, %v336, %v343
  %v345 = vrot.slane %v340, 4
  %v347 = vshrl.u32 %v249, 16
  %v349 = vrot.slane %v347, 7
  %v350 = vshll.u32 %v249, 16
  %v352 = vor.u32 %v349, %v350
  %v353 = vrot.slane %v349, 4
  %v355 = vshrl.u32 %v250, 16
  %v357 = vrot.slane %v355, 7
  %v358 = vshll.u32 %v250, 16
  %v360 = vor.u32 %v357, %v358
  %v361 = vsel %vm311, %v353, %v360
  %v362 = vrot.slane %v357, 4
  %v364 = vshrl.u32 %v251, 16
  %v366 = vrot.slane %v364, 7
  %v367 = vshll.u32 %v251, 16
  %v369 = vor.u32 %v366, %v367
  %v370 = vrot.slane %v366, 4
  %v372 = vshrl.u32 %v252, 16
  %v374 = vrot.slane %v372, 7
  %v375 = vshll.u32 %v252, 16
  %v377 = vor.u32 %v374, %v375
  %v378 = vsel %vm311, %v370, %v377
  %v379 = vrot.slane %v374, 4
  %v381 = vshrl.u32 %v253, 16
  %v383 = vrot.slane %v381, 7
  %v384 = vshll.u32 %v253, 16
  %v386 = vor.u32 %v383, %v384
  %v387 = vrot.slane %v383, 4
  %v389 = vshrl.u32 %v254, 16
  %v391 = vrot.slane %v389, 7
  %v392 = vshll.u32 %v254, 16
  %v394 = vor.u32 %v391, %v392
  %v395 = vsel %vm311, %v387, %v394
  %v396 = vrot.slane %v391, 4
  %v398 = vshrl.u32 %v255, 16
  %v400 = vrot.slane %v398, 7
  %v401 = vshll.u32 %v255, 16
  %v403 = vor.u32 %v400, %v401
  %v404 = vrot.slane %v400, 4
  %v406 = vshrl.u32 %v256, 16
  %v408 = vrot.slane %v406, 7
  %v409 = vshll.u32 %v256, 16
  %v411 = vor.u32 %v408, %v409
  %v412 = vsel %vm311, %v404, %v411
  %v413 = vrot.slane %v408, 4
  %v415 = vshrl.u32 %v257, 16
  %v417 = vrot.slane %v415, 7
  %v418 = vshll.u32 %v257, 16
  %v420 = vor.u32 %v417, %v418
  %v421 = vrot.slane %v417, 4
  %v423 = vshrl.u32 %v258, 16
  %v425 = vrot.slane %v423, 7
  %v426 = vshll.u32 %v258, 16
  %v428 = vor.u32 %v425, %v426
  %v429 = vsel %vm311, %v421, %v428
  %v430 = vrot.slane %v425, 4
  %v432 = vshrl.u32 %v259, 16
  %v434 = vrot.slane %v432, 7
  %v435 = vshll.u32 %v259, 16
  %v437 = vor.u32 %v434, %v435
  %v438 = vrot.slane %v434, 4
  %v440 = vshrl.u32 %v260, 16
  %v442 = vrot.slane %v440, 7
  %v443 = vshll.u32 %v260, 16
  %v445 = vor.u32 %v442, %v443
  %v446 = vsel %vm311, %v438, %v445
  %v447 = vrot.slane %v442, 4
  %v449 = vshrl.u32 %v261, 16
  %v451 = vrot.slane %v449, 7
  %v452 = vshll.u32 %v261, 16
  %v454 = vor.u32 %v451, %v452
  %v455 = vrot.slane %v451, 4
  %v457 = vshrl.u32 %v262, 16
  %v459 = vrot.slane %v457, 7
  %v460 = vshll.u32 %v262, 16
  %v462 = vor.u32 %v459, %v460
  %v463 = vsel %vm311, %v455, %v462
  %v464 = vrot.slane %v459, 4
  %v466 = vshrl.u32 %v263, 16
  %v468 = vrot.slane %v466, 7
  %v469 = vshll.u32 %v263, 16
  %v471 = vor.u32 %v468, %v469
  %v472 = vrot.slane %v468, 4
  %v474 = vshrl.u32 %v264, 16
  %v476 = vrot.slane %v474, 7
  %v477 = vshll.u32 %v264, 16
  %v479 = vor.u32 %v476, %v477
  %v480 = vsel %vm311, %v472, %v479
  %v481 = vrot.slane %v476, 4
  %v483 = vshrl.u32 %v265, 16
  %v485 = vrot.slane %v483, 7
  %v486 = vshll.u32 %v265, 16
  %v488 = vor.u32 %v485, %v486
  %v489 = vrot.slane %v485, 4
  %v491 = vshrl.u32 %v266, 16
  %v493 = vrot.slane %v491, 7
  %v494 = vshll.u32 %v266, 16
  %v496 = vor.u32 %v493, %v494
  %v497 = vsel %vm311, %v489, %v496
  %v498 = vrot.slane %v493, 4
  %v500 = vshrl.u32 %v267, 16
  %v502 = vrot.slane %v500, 7
  %v503 = vshll.u32 %v267, 16
  %v505 = vor.u32 %v502, %v503
  %v506 = vrot.slane %v502, 4
  %v508 = vshrl.u32 %v268, 16
  %v510 = vrot.slane %v508, 7
  %v511 = vshll.u32 %v268, 16
  %v513 = vor.u32 %v510, %v511
  %v514 = vsel %vm311, %v506, %v513
  %v515 = vrot.slane %v510, 4
  %v517 = vshrl.u32 %v269, 16
  %v519 = vrot.slane %v517, 7
  %v520 = vshll.u32 %v269, 16
  %v522 = vor.u32 %v519, %v520
  %v523 = vrot.slane %v519, 4
  %v525 = vshrl.u32 %v270, 16
  %v527 = vrot.slane %v525, 7
  %v528 = vshll.u32 %v270, 16
  %v530 = vor.u32 %v527, %v528
  %v531 = vsel %vm311, %v523, %v530
  %v532 = vrot.slane %v527, 4
  %v534 = vshrl.u32 %v271, 16
  %v536 = vrot.slane %v534, 7
  %v537 = vshll.u32 %v271, 16
  %v539 = vor.u32 %v536, %v537
  %v540 = vrot.slane %v536, 4
  %v542 = vshrl.u32 %v272, 16
  %v544 = vrot.slane %v542, 7
  %v545 = vshll.u32 %v272, 16
  %v547 = vor.u32 %v544, %v545
  %v548 = vsel %vm311, %v540, %v547
  %v549 = vrot.slane %v544, 4
  %v551 = vshrl.u32 %v273, 16
  %v553 = vrot.slane %v551, 7
  %v554 = vshll.u32 %v273, 16
  %v556 = vor.u32 %v553, %v554
  %v557 = vrot.slane %v553, 4
  %v559 = vshrl.u32 %v274, 16
  %v561 = vrot.slane %v559, 7
  %v562 = vshll.u32 %v274, 16
  %v564 = vor.u32 %v561, %v562
  %v565 = vsel %vm311, %v557, %v564
  %v566 = vrot.slane %v561, 4
  %v568 = vshrl.u32 %v275, 16
  %v570 = vrot.slane %v568, 7
  %v571 = vshll.u32 %v275, 16
  %v573 = vor.u32 %v570, %v571
  %v574 = vrot.slane %v570, 4
  %v576 = vshrl.u32 %v276, 16
  %v578 = vrot.slane %v576, 7
  %v579 = vshll.u32 %v276, 16
  %v581 = vor.u32 %v578, %v579
  %v582 = vsel %vm311, %v574, %v581
  %v583 = vrot.slane %v578, 4
  %v585 = vshrl.u32 %v277, 16
  %v587 = vrot.slane %v585, 7
  %v588 = vshll.u32 %v277, 16
  %v590 = vor.u32 %v587, %v588
  %v591 = vrot.slane %v587, 4
  %v593 = vshrl.u32 %v278, 16
  %v595 = vrot.slane %v593, 7
  %v596 = vshll.u32 %v278, 16
  %v598 = vor.u32 %v595, %v596
  %v599 = vsel %vm311, %v591, %v598
  %v600 = vrot.slane %v595, 4
  %v602 = vshrl.u32 %v279, 16
  %v604 = vrot.slane %v602, 7
  %v605 = vshll.u32 %v279, 16
  %v607 = vor.u32 %v604, %v605
  %v608 = vrot.slane %v604, 4
  %v610 = vshrl.u32 %v280, 16
  %v612 = vrot.slane %v610, 7
  %v613 = vshll.u32 %v280, 16
  %v615 = vor.u32 %v612, %v613
  %v616 = vsel %vm311, %v608, %v615
  %v617 = vrot.slane %v612, 4
  %v619 = vshrl.u32 %v281, 16
  %v621 = vrot.slane %v619, 7
  %v622 = vshll.u32 %v281, 16
  %v624 = vor.u32 %v621, %v622
  %v625 = vrot.slane %v621, 4
  %v627 = vshrl.u32 %v282, 16
  %v629 = vrot.slane %v627, 7
  %v630 = vshll.u32 %v282, 16
  %v632 = vor.u32 %v629, %v630
  %v633 = vsel %vm311, %v625, %v632
  %v634 = vrot.slane %v629, 4
  %v636 = vshrl.u32 %v283, 16
  %v638 = vrot.slane %v636, 7
  %v639 = vshll.u32 %v283, 16
  %v641 = vor.u32 %v638, %v639
  %v642 = vrot.slane %v638, 4
  %v644 = vshrl.u32 %v284, 16
  %v646 = vrot.slane %v644, 7
  %v647 = vshll.u32 %v284, 16
  %v649 = vor.u32 %v646, %v647
  %v650 = vsel %vm311, %v642, %v649
  %v651 = vrot.slane %v646, 4
  %v653 = vshrl.u32 %v285, 16
  %v655 = vrot.slane %v653, 7
  %v656 = vshll.u32 %v285, 16
  %v658 = vor.u32 %v655, %v656
  %v659 = vrot.slane %v655, 4
  %v661 = vshrl.u32 %v286, 16
  %v663 = vrot.slane %v661, 7
  %v664 = vshll.u32 %v286, 16
  %v666 = vor.u32 %v663, %v664
  %v667 = vsel %vm311, %v659, %v666
  %v668 = vrot.slane %v663, 4
  %v670 = vshrl.u32 %v287, 16
  %v672 = vrot.slane %v670, 7
  %v673 = vshll.u32 %v287, 16
  %v675 = vor.u32 %v672, %v673
  %v676 = vrot.slane %v672, 4
  %v678 = vshrl.u32 %v288, 16
  %v680 = vrot.slane %v678, 7
  %v681 = vshll.u32 %v288, 16
  %v683 = vor.u32 %v680, %v681
  %v684 = vsel %vm311, %v676, %v683
  %v685 = vrot.slane %v680, 4
  %v687 = vshrl.u32 %v289, 16
  %v689 = vrot.slane %v687, 7
  %v690 = vshll.u32 %v289, 16
  %v692 = vor.u32 %v689, %v690
  %v693 = vrot.slane %v689, 4
  %v695 = vshrl.u32 %v290, 16
  %v697 = vrot.slane %v695, 7
  %v698 = vshll.u32 %v290, 16
  %v700 = vor.u32 %v697, %v698
  %v701 = vsel %vm311, %v693, %v700
  %v702 = vrot.slane %v697, 4
  %v704 = vshrl.u32 %v291, 16
  %v706 = vrot.slane %v704, 7
  %v707 = vshll.u32 %v291, 16
  %v709 = vor.u32 %v706, %v707
  %v710 = vrot.slane %v706, 4
  %v712 = vshrl.u32 %v292, 16
  %v714 = vrot.slane %v712, 7
  %v715 = vshll.u32 %v292, 16
  %v717 = vor.u32 %v714, %v715
  %v718 = vsel %vm311, %v710, %v717
  %v719 = vrot.slane %v714, 4
  %v721 = vshrl.u32 %v293, 16
  %v723 = vrot.slane %v721, 7
  %v724 = vshll.u32 %v293, 16
  %v726 = vor.u32 %v723, %v724
  %v727 = vrot.slane %v723, 4
  %v729 = vshrl.u32 %v294, 16
  %v731 = vrot.slane %v729, 7
  %v732 = vshll.u32 %v294, 16
  %v734 = vor.u32 %v731, %v732
  %v735 = vsel %vm311, %v727, %v734
  %v736 = vrot.slane %v731, 4
  %v738 = vshrl.u32 %v295, 16
  %v740 = vrot.slane %v738, 7
  %v741 = vshll.u32 %v295, 16
  %v743 = vor.u32 %v740, %v741
  %v744 = vrot.slane %v740, 4
  %v746 = vshrl.u32 %v296, 16
  %v748 = vrot.slane %v746, 7
  %v749 = vshll.u32 %v296, 16
  %v751 = vor.u32 %v748, %v749
  %v752 = vsel %vm311, %v744, %v751
  %v753 = vrot.slane %v748, 4
  %v755 = vshrl.u32 %v297, 16
  %v757 = vrot.slane %v755, 7
  %v758 = vshll.u32 %v297, 16
  %v760 = vor.u32 %v757, %v758
  %v761 = vrot.slane %v757, 4
  %v763 = vshrl.u32 %v298, 16
  %v765 = vrot.slane %v763, 7
  %v766 = vshll.u32 %v298, 16
  %v768 = vor.u32 %v765, %v766
  %v769 = vsel %vm311, %v761, %v768
  %v770 = vrot.slane %v765, 4
  %v772 = vshrl.u32 %v299, 16
  %v774 = vrot.slane %v772, 7
  %v775 = vshll.u32 %v299, 16
  %v777 = vor.u32 %v774, %v775
  %v778 = vrot.slane %v774, 4
  %v780 = vshrl.u32 %v300, 16
  %v782 = vrot.slane %v780, 7
  %v783 = vshll.u32 %v300, 16
  %v785 = vor.u32 %v782, %v783
  %v786 = vsel %vm311, %v778, %v785
  %v787 = vrot.slane %v782, 4
  %v789 = vshrl.u32 %v301, 16
  %v791 = vrot.slane %v789, 7
  %v792 = vshll.u32 %v301, 16
  %v794 = vor.u32 %v791, %v792
  %v795 = vrot.slane %v791, 4
  %v797 = vshrl.u32 %v302, 16
  %v799 = vrot.slane %v797, 7
  %v800 = vshll.u32 %v302, 16
  %v802 = vor.u32 %v799, %v800
  %v803 = vsel %vm311, %v795, %v802
  %v804 = vrot.slane %v799, 4
  %v806 = vshrl.u32 %v303, 16
  %v808 = vrot.slane %v806, 7
  %v809 = vshll.u32 %v303, 16
  %v811 = vor.u32 %v808, %v809
  %v812 = vrot.slane %v808, 4
  %v814 = vshrl.u32 %v304, 16
  %v816 = vrot.slane %v814, 7
  %v817 = vshll.u32 %v304, 16
  %v819 = vor.u32 %v816, %v817
  %v820 = vsel %vm311, %v812, %v819
  %v821 = vrot.slane %v816, 4
  %v823 = vshrl.u32 %v305, 16
  %v825 = vrot.slane %v823, 7
  %v826 = vshll.u32 %v305, 16
  %v828 = vor.u32 %v825, %v826
  %v829 = vrot.slane %v825, 4
  %v831 = vshrl.u32 %v306, 16
  %v833 = vrot.slane %v831, 7
  %v834 = vshll.u32 %v306, 16
  %v836 = vor.u32 %v833, %v834
  %v837 = vsel %vm311, %v829, %v836
  %v838 = vrot.slane %v833, 4
  %v840 = vshrl.u32 %v307, 16
  %v842 = vrot.slane %v840, 7
  %v843 = vshll.u32 %v307, 16
  %v845 = vor.u32 %v842, %v843
  %v846 = vrot.slane %v842, 4
  %v848 = vshrl.u32 %v308, 16
  %v850 = vrot.slane %v848, 7
  %v851 = vshll.u32 %v308, 16
  %v853 = vor.u32 %v850, %v851
  %v854 = vsel %vm311, %v846, %v853
  %v855 = vrot.slane %v850, 4
  %s952 = scalar_lea.vmem [#allocation2], 12
  %vm953 = vcmask 27648
  %vm954 = vsmask.f32 7938
  %vm955 = vmand %vm953, %vm954
  %v956 = vld [vmem:[%s952] sm:$0xf]
  %v957 = vsel %vm955, %v318, %v956
  %958 = vst [vmem:[%s952] sm:$0xf] %v957
  %959 = vst.msk [vmem:[%s952 + $0x4] sm:$0xf] %vm27, %v327
  %vm960 = vcmask 24576
  %vm961 = vmand %vm960, %vm309
  %v962 = vld [vmem:[%s952 + $0x8] sm:$0x1]
  %v963 = vsel %vm961, %v328, %v962
  %964 = vst [vmem:[%s952 + $0x8] sm:$0x1] %v963
  %v965 = vld [vmem:[%s952 + $0xc] sm:$0xf]
  %v966 = vsel %vm955, %v335, %v965
  %967 = vst [vmem:[%s952 + $0xc] sm:$0xf] %v966
  %968 = vst.msk [vmem:[%s952 + $0x10] sm:$0xf] %vm27, %v344
  %v969 = vld [vmem:[%s952 + $0x14] sm:$0x1]
  %v970 = vsel %vm961, %v345, %v969
  %971 = vst [vmem:[%s952 + $0x14] sm:$0x1] %v970
  %v972 = vld [vmem:[%s952 + $0x18] sm:$0xf]
  %v973 = vsel %vm955, %v352, %v972
  %974 = vst [vmem:[%s952 + $0x18] sm:$0xf] %v973
  %975 = vst.msk [vmem:[%s952 + $0x1c] sm:$0xf] %vm27, %v361
  %v976 = vld [vmem:[%s952 + $0x20] sm:$0x1]
  %v977 = vsel %vm961, %v362, %v976
  %978 = vst [vmem:[%s952 + $0x20] sm:$0x1] %v977
  %v979 = vld [vmem:[%s952 + $0x24] sm:$0xf]
  %v980 = vsel %vm955, %v369, %v979
  %981 = vst [vmem:[%s952 + $0x24] sm:$0xf] %v980
  %982 = vst.msk [vmem:[%s952 + $0x28] sm:$0xf] %vm27, %v378
  %v983 = vld [vmem:[%s952 + $0x2c] sm:$0x1]
  %v984 = vsel %vm961, %v379, %v983
  %985 = vst [vmem:[%s952 + $0x2c] sm:$0x1] %v984
  %v986 = vld [vmem:[%s952 + $0x30] sm:$0xf]
  %v987 = vsel %vm955, %v386, %v986
  %988 = vst [vmem:[%s952 + $0x30] sm:$0xf] %v987
  %989 = vst.msk [vmem:[%s952 + $0x34] sm:$0xf] %vm27, %v395
  %v990 = vld [vmem:[%s952 + $0x38] sm:$0x1]
  %v991 = vsel %vm961, %v396, %v990
  %992 = vst [vmem:[%s952 + $0x38] sm:$0x1] %v991
  %v993 = vld [vmem:[%s952 + $0x3c] sm:$0xf]
  %v994 = vsel %vm955, %v403, %v993
  %995 = vst [vmem:[%s952 + $0x3c] sm:$0xf] %v994
  %996 = vst.msk [vmem:[%s952 + $0x40] sm:$0xf] %vm27, %v412
  %v997 = vld [vmem:[%s952 + $0x44] sm:$0x1]
  %v998 = vsel %vm961, %v413, %v997
  %999 = vst [vmem:[%s952 + $0x44] sm:$0x1] %v998
  %v1000 = vld [vmem:[%s952 + $0x48] sm:$0xf]
  %v1001 = vsel %vm955, %v420, %v1000
  %1002 = vst [vmem:[%s952 + $0x48] sm:$0xf] %v1001
  %1003 = vst.msk [vmem:[%s952 + $0x4c] sm:$0xf] %vm27, %v429
  %v1004 = vld [vmem:[%s952 + $0x50] sm:$0x1]
  %v1005 = vsel %vm961, %v430, %v1004
  %1006 = vst [vmem:[%s952 + $0x50] sm:$0x1] %v1005
  %v1007 = vld [vmem:[%s952 + $0x54] sm:$0xf]
  %v1008 = vsel %vm955, %v437, %v1007
  %1009 = vst [vmem:[%s952 + $0x54] sm:$0xf] %v1008
  %1010 = vst.msk [vmem:[%s952 + $0x58] sm:$0xf] %vm27, %v446
  %v1011 = vld [vmem:[%s952 + $0x5c] sm:$0x1]
  %v1012 = vsel %vm961, %v447, %v1011
  %1013 = vst [vmem:[%s952 + $0x5c] sm:$0x1] %v1012
  %v1014 = vld [vmem:[%s952 + $0x60] sm:$0xf]
  %v1015 = vsel %vm955, %v454, %v1014
  %1016 = vst [vmem:[%s952 + $0x60] sm:$0xf] %v1015
  %1017 = vst.msk [vmem:[%s952 + $0x64] sm:$0xf] %vm27, %v463
  %v1018 = vld [vmem:[%s952 + $0x68] sm:$0x1]
  %v1019 = vsel %vm961, %v464, %v1018
  %1020 = vst [vmem:[%s952 + $0x68] sm:$0x1] %v1019
  %v1021 = vld [vmem:[%s952 + $0x6c] sm:$0xf]
  %v1022 = vsel %vm955, %v471, %v1021
  %1023 = vst [vmem:[%s952 + $0x6c] sm:$0xf] %v1022
  %1024 = vst.msk [vmem:[%s952 + $0x70] sm:$0xf] %vm27, %v480
  %v1025 = vld [vmem:[%s952 + $0x74] sm:$0x1]
  %v1026 = vsel %vm961, %v481, %v1025
  %1027 = vst [vmem:[%s952 + $0x74] sm:$0x1] %v1026
  %v1028 = vld [vmem:[%s952 + $0x78] sm:$0xf]
  %v1029 = vsel %vm955, %v488, %v1028
  %1030 = vst [vmem:[%s952 + $0x78] sm:$0xf] %v1029
  %1031 = vst.msk [vmem:[%s952 + $0x7c] sm:$0xf] %vm27, %v497
  %v1032 = vld [vmem:[%s952 + $0x80] sm:$0x1]
  %v1033 = vsel %vm961, %v498, %v1032
  %1034 = vst [vmem:[%s952 + $0x80] sm:$0x1] %v1033
  %v1035 = vld [vmem:[%s952 + $0x84] sm:$0xf]
  %v1036 = vsel %vm955, %v505, %v1035
  %1037 = vst [vmem:[%s952 + $0x84] sm:$0xf] %v1036
  %1038 = vst.msk [vmem:[%s952 + $0x88] sm:$0xf] %vm27, %v514
  %v1039 = vld [vmem:[%s952 + $0x8c] sm:$0x1]
  %v1040 = vsel %vm961, %v515, %v1039
  %1041 = vst [vmem:[%s952 + $0x8c] sm:$0x1] %v1040
  %v1042 = vld [vmem:[%s952 + $0x90] sm:$0xf]
  %v1043 = vsel %vm955, %v522, %v1042
  %1044 = vst [vmem:[%s952 + $0x90] sm:$0xf] %v1043
  %1045 = vst.msk [vmem:[%s952 + $0x94] sm:$0xf] %vm27, %v531
  %v1046 = vld [vmem:[%s952 + $0x98] sm:$0x1]
  %v1047 = vsel %vm961, %v532, %v1046
  %1048 = vst [vmem:[%s952 + $0x98] sm:$0x1] %v1047
  %v1049 = vld [vmem:[%s952 + $0x9c] sm:$0xf]
  %v1050 = vsel %vm955, %v539, %v1049
  %1051 = vst [vmem:[%s952 + $0x9c] sm:$0xf] %v1050
  %1052 = vst.msk [vmem:[%s952 + $0xa0] sm:$0xf] %vm27, %v548
  %v1053 = vld [vmem:[%s952 + $0xa4] sm:$0x1]
  %v1054 = vsel %vm961, %v549, %v1053
  %1055 = vst [vmem:[%s952 + $0xa4] sm:$0x1] %v1054
  %v1056 = vld [vmem:[%s952 + $0xa8] sm:$0xf]
  %v1057 = vsel %vm955, %v556, %v1056
  %1058 = vst [vmem:[%s952 + $0xa8] sm:$0xf] %v1057
  %1059 = vst.msk [vmem:[%s952 + $0xac] sm:$0xf] %vm27, %v565
  %v1060 = vld [vmem:[%s952 + $0xb0] sm:$0x1]
  %v1061 = vsel %vm961, %v566, %v1060
  %1062 = vst [vmem:[%s952 + $0xb0] sm:$0x1] %v1061
  %v1063 = vld [vmem:[%s952 + $0xb4] sm:$0xf]
  %v1064 = vsel %vm955, %v573, %v1063
  %1065 = vst [vmem:[%s952 + $0xb4] sm:$0xf] %v1064
  %1066 = vst.msk [vmem:[%s952 + $0xb8] sm:$0xf] %vm27, %v582
  %v1067 = vld [vmem:[%s952 + $0xbc] sm:$0x1]
  %v1068 = vsel %vm961, %v583, %v1067
  %1069 = vst [vmem:[%s952 + $0xbc] sm:$0x1] %v1068
  %v1070 = vld [vmem:[%s952 + $0xd8] sm:$0xf]
  %v1071 = vsel %vm955, %v590, %v1070
  %1072 = vst [vmem:[%s952 + $0xd8] sm:$0xf] %v1071
  %1073 = vst.msk [vmem:[%s952 + $0xdc] sm:$0xf] %vm27, %v599
  %v1074 = vld [vmem:[%s952 + $0xe0] sm:$0x1]
  %v1075 = vsel %vm961, %v600, %v1074
  %1076 = vst [vmem:[%s952 + $0xe0] sm:$0x1] %v1075
  %v1077 = vld [vmem:[%s952 + $0xe4] sm:$0xf]
  %v1078 = vsel %vm955, %v607, %v1077
  %1079 = vst [vmem:[%s952 + $0xe4] sm:$0xf] %v1078
  %1080 = vst.msk [vmem:[%s952 + $0xe8] sm:$0xf] %vm27, %v616
  %v1081 = vld [vmem:[%s952 + $0xec] sm:$0x1]
  %v1082 = vsel %vm961, %v617, %v1081
  %1083 = vst [vmem:[%s952 + $0xec] sm:$0x1] %v1082
  %v1084 = vld [vmem:[%s952 + $0xf0] sm:$0xf]
  %v1085 = vsel %vm955, %v624, %v1084
  %1086 = vst [vmem:[%s952 + $0xf0] sm:$0xf] %v1085
  %1087 = vst.msk [vmem:[%s952 + $0xf4] sm:$0xf] %vm27, %v633
  %v1088 = vld [vmem:[%s952 + $0xf8] sm:$0x1]
  %v1089 = vsel %vm961, %v634, %v1088
  %1090 = vst [vmem:[%s952 + $0xf8] sm:$0x1] %v1089
  %v1091 = vld [vmem:[%s952 + $0xfc] sm:$0xf]
  %v1092 = vsel %vm955, %v641, %v1091
  %1093 = vst [vmem:[%s952 + $0xfc] sm:$0xf] %v1092
  %1094 = vst.msk [vmem:[%s952 + $0x100] sm:$0xf] %vm27, %v650
  %v1095 = vld [vmem:[%s952 + $0x104] sm:$0x1]
  %v1096 = vsel %vm961, %v651, %v1095
  %1097 = vst [vmem:[%s952 + $0x104] sm:$0x1] %v1096
  %v1098 = vld [vmem:[%s952 + $0x108] sm:$0xf]
  %v1099 = vsel %vm955, %v658, %v1098
  %1100 = vst [vmem:[%s952 + $0x108] sm:$0xf] %v1099
  %1101 = vst.msk [vmem:[%s952 + $0x10c] sm:$0xf] %vm27, %v667
  %v1102 = vld [vmem:[%s952 + $0x110] sm:$0x1]
  %v1103 = vsel %vm961, %v668, %v1102
  %1104 = vst [vmem:[%s952 + $0x110] sm:$0x1] %v1103
  %v1105 = vld [vmem:[%s952 + $0x114] sm:$0xf]
  %v1106 = vsel %vm955, %v675, %v1105
  %1107 = vst [vmem:[%s952 + $0x114] sm:$0xf] %v1106
  %1108 = vst.msk [vmem:[%s952 + $0x118] sm:$0xf] %vm27, %v684
  %v1109 = vld [vmem:[%s952 + $0x11c] sm:$0x1]
  %v1110 = vsel %vm961, %v685, %v1109
  %1111 = vst [vmem:[%s952 + $0x11c] sm:$0x1] %v1110
  %v1112 = vld [vmem:[%s952 + $0x120] sm:$0xf]
  %v1113 = vsel %vm955, %v692, %v1112
  %1114 = vst [vmem:[%s952 + $0x120] sm:$0xf] %v1113
  %1115 = vst.msk [vmem:[%s952 + $0x124] sm:$0xf] %vm27, %v701
  %v1116 = vld [vmem:[%s952 + $0x128] sm:$0x1]
  %v1117 = vsel %vm961, %v702, %v1116
  %1118 = vst [vmem:[%s952 + $0x128] sm:$0x1] %v1117
  %v1119 = vld [vmem:[%s952 + $0x12c] sm:$0xf]
  %v1120 = vsel %vm955, %v709, %v1119
  %1121 = vst [vmem:[%s952 + $0x12c] sm:$0xf] %v1120
  %1122 = vst.msk [vmem:[%s952 + $0x130] sm:$0xf] %vm27, %v718
  %v1123 = vld [vmem:[%s952 + $0x134] sm:$0x1]
  %v1124 = vsel %vm961, %v719, %v1123
  %1125 = vst [vmem:[%s952 + $0x134] sm:$0x1] %v1124
  %v1126 = vld [vmem:[%s952 + $0x138] sm:$0xf]
  %v1127 = vsel %vm955, %v726, %v1126
  %1128 = vst [vmem:[%s952 + $0x138] sm:$0xf] %v1127
  %1129 = vst.msk [vmem:[%s952 + $0x13c] sm:$0xf] %vm27, %v735
  %v1130 = vld [vmem:[%s952 + $0x140] sm:$0x1]
  %v1131 = vsel %vm961, %v736, %v1130
  %1132 = vst [vmem:[%s952 + $0x140] sm:$0x1] %v1131
  %v1133 = vld [vmem:[%s952 + $0x144] sm:$0xf]
  %v1134 = vsel %vm955, %v743, %v1133
  %1135 = vst [vmem:[%s952 + $0x144] sm:$0xf] %v1134
  %1136 = vst.msk [vmem:[%s952 + $0x148] sm:$0xf] %vm27, %v752
  %v1137 = vld [vmem:[%s952 + $0x14c] sm:$0x1]
  %v1138 = vsel %vm961, %v753, %v1137
  %1139 = vst [vmem:[%s952 + $0x14c] sm:$0x1] %v1138
  %v1140 = vld [vmem:[%s952 + $0x150] sm:$0xf]
  %v1141 = vsel %vm955, %v760, %v1140
  %1142 = vst [vmem:[%s952 + $0x150] sm:$0xf] %v1141
  %1143 = vst.msk [vmem:[%s952 + $0x154] sm:$0xf] %vm27, %v769
  %v1144 = vld [vmem:[%s952 + $0x158] sm:$0x1]
  %v1145 = vsel %vm961, %v770, %v1144
  %1146 = vst [vmem:[%s952 + $0x158] sm:$0x1] %v1145
  %v1147 = vld [vmem:[%s952 + $0x15c] sm:$0xf]
  %v1148 = vsel %vm955, %v777, %v1147
  %1149 = vst [vmem:[%s952 + $0x15c] sm:$0xf] %v1148
  %1150 = vst.msk [vmem:[%s952 + $0x160] sm:$0xf] %vm27, %v786
  %v1151 = vld [vmem:[%s952 + $0x164] sm:$0x1]
  %v1152 = vsel %vm961, %v787, %v1151
  %1153 = vst [vmem:[%s952 + $0x164] sm:$0x1] %v1152
  %v1154 = vld [vmem:[%s952 + $0x168] sm:$0xf]
  %v1155 = vsel %vm955, %v794, %v1154
  %1156 = vst [vmem:[%s952 + $0x168] sm:$0xf] %v1155
  %1157 = vst.msk [vmem:[%s952 + $0x16c] sm:$0xf] %vm27, %v803
  %v1158 = vld [vmem:[%s952 + $0x170] sm:$0x1]
  %v1159 = vsel %vm961, %v804, %v1158
  %1160 = vst [vmem:[%s952 + $0x170] sm:$0x1] %v1159
  %v1161 = vld [vmem:[%s952 + $0x174] sm:$0xf]
  %v1162 = vsel %vm955, %v811, %v1161
  %1163 = vst [vmem:[%s952 + $0x174] sm:$0xf] %v1162
  %1164 = vst.msk [vmem:[%s952 + $0x178] sm:$0xf] %vm27, %v820
  %v1165 = vld [vmem:[%s952 + $0x17c] sm:$0x1]
  %v1166 = vsel %vm961, %v821, %v1165
  %1167 = vst [vmem:[%s952 + $0x17c] sm:$0x1] %v1166
  %v1168 = vld [vmem:[%s952 + $0x180] sm:$0xf]
  %v1169 = vsel %vm955, %v828, %v1168
  %1170 = vst [vmem:[%s952 + $0x180] sm:$0xf] %v1169
  %1171 = vst.msk [vmem:[%s952 + $0x184] sm:$0xf] %vm27, %v837
  %v1172 = vld [vmem:[%s952 + $0x188] sm:$0x1]
  %v1173 = vsel %vm961, %v838, %v1172
  %1174 = vst [vmem:[%s952 + $0x188] sm:$0x1] %v1173
  %v1175 = vld [vmem:[%s952 + $0x18c] sm:$0xf]
  %v1176 = vsel %vm955, %v845, %v1175
  %1177 = vst [vmem:[%s952 + $0x18c] sm:$0xf] %v1176
  %1178 = vst.msk [vmem:[%s952 + $0x190] sm:$0xf] %vm27, %v854
  %v1179 = vld [vmem:[%s952 + $0x194] sm:$0x1]
  %v1180 = vsel %vm961, %v855, %v1179
  %1181 = vst [vmem:[%s952 + $0x194] sm:$0x1] %v1180
  %v1182 = vld [vmem:[#allocation2] sm:$0xf]
  %v1183 = vld [vmem:[#allocation2 + $0x4] sm:$0xf]
  %v1184 = vld [vmem:[#allocation2 + $0x8] sm:$0x1]
  %v1185 = vld [vmem:[#allocation2 + $0xc] sm:$0xf]
  %v1186 = vld [vmem:[#allocation2 + $0x10] sm:$0xf]
  %v1187 = vld [vmem:[#allocation2 + $0x14] sm:$0x1]
  %v1188 = vld [vmem:[#allocation2 + $0x18] sm:$0xf]
  %v1189 = vld [vmem:[#allocation2 + $0x1c] sm:$0xf]
  %v1190 = vld [vmem:[#allocation2 + $0x20] sm:$0x1]
  %v1191 = vld [vmem:[#allocation2 + $0x24] sm:$0xf]
  %v1192 = vld [vmem:[#allocation2 + $0x28] sm:$0xf]
  %v1193 = vld [vmem:[#allocation2 + $0x2c] sm:$0x1]
  %v1194 = vld [vmem:[#allocation2 + $0x30] sm:$0xf]
  %v1195 = vld [vmem:[#allocation2 + $0x34] sm:$0xf]
  %v1196 = vld [vmem:[#allocation2 + $0x38] sm:$0x1]
  %v1197 = vld [vmem:[#allocation2 + $0x3c] sm:$0xf]
  %v1198 = vld [vmem:[#allocation2 + $0x40] sm:$0xf]
  %v1199 = vld [vmem:[#allocation2 + $0x44] sm:$0x1]
  %v1200 = vld [vmem:[#allocation2 + $0x48] sm:$0xf]
  %v1201 = vld [vmem:[#allocation2 + $0x4c] sm:$0xf]
  %v1202 = vld [vmem:[#allocation2 + $0x50] sm:$0x1]
  %v1203 = vld [vmem:[#allocation2 + $0x54] sm:$0xf]
  %v1204 = vld [vmem:[#allocation2 + $0x58] sm:$0xf]
  %v1205 = vld [vmem:[#allocation2 + $0x5c] sm:$0x1]
  %v1206 = vld [vmem:[#allocation2 + $0x60] sm:$0xf]
  %v1207 = vld [vmem:[#allocation2 + $0x64] sm:$0xf]
  %v1208 = vld [vmem:[#allocation2 + $0x68] sm:$0x1]
  %v1209 = vld [vmem:[#allocation2 + $0x6c] sm:$0xf]
  %v1210 = vld [vmem:[#allocation2 + $0x70] sm:$0xf]
  %v1211 = vld [vmem:[#allocation2 + $0x74] sm:$0x1]
  %v1212 = vld [vmem:[#allocation2 + $0x78] sm:$0xf]
  %v1213 = vld [vmem:[#allocation2 + $0x7c] sm:$0xf]
  %v1214 = vld [vmem:[#allocation2 + $0x80] sm:$0x1]
  %v1215 = vld [vmem:[#allocation2 + $0x84] sm:$0xf]
  %v1216 = vld [vmem:[#allocation2 + $0x88] sm:$0xf]
  %v1217 = vld [vmem:[#allocation2 + $0x8c] sm:$0x1]
  %v1218 = vld [vmem:[#allocation2 + $0x90] sm:$0xf]
  %v1219 = vld [vmem:[#allocation2 + $0x94] sm:$0xf]
  %v1220 = vld [vmem:[#allocation2 + $0x98] sm:$0x1]
  %v1221 = vld [vmem:[#allocation2 + $0x9c] sm:$0xf]
  %v1222 = vld [vmem:[#allocation2 + $0xa0] sm:$0xf]
  %v1223 = vld [vmem:[#allocation2 + $0xa4] sm:$0x1]
  %v1224 = vld [vmem:[#allocation2 + $0xa8] sm:$0xf]
  %v1225 = vld [vmem:[#allocation2 + $0xac] sm:$0xf]
  %v1226 = vld [vmem:[#allocation2 + $0xb0] sm:$0x1]
  %v1227 = vld [vmem:[#allocation2 + $0xb4] sm:$0xf]
  %v1228 = vld [vmem:[#allocation2 + $0xb8] sm:$0xf]
  %v1229 = vld [vmem:[#allocation2 + $0xbc] sm:$0x1]
  %v1230 = vld [vmem:[#allocation2 + $0xc0] sm:$0xf]
  %v1231 = vld [vmem:[#allocation2 + $0xc4] sm:$0xf]
  %v1232 = vld [vmem:[#allocation2 + $0xc8] sm:$0x1]
  %v1233 = vld [vmem:[#allocation2 + $0xcc] sm:$0xf]
  %v1234 = vld [vmem:[#allocation2 + $0xd0] sm:$0xf]
  %v1235 = vld [vmem:[#allocation2 + $0xd4] sm:$0x1]
  %v1236 = vld [vmem:[#allocation2 + $0xd8] sm:$0xf]
  %v1237 = vld [vmem:[#allocation2 + $0xdc] sm:$0xf]
  %v1238 = vld [vmem:[#allocation2 + $0xe0] sm:$0x1]
  %v1239 = vld [vmem:[#allocation2 + $0xe4] sm:$0xf]
  %v1240 = vld [vmem:[#allocation2 + $0xe8] sm:$0xf]
  %v1241 = vld [vmem:[#allocation2 + $0xec] sm:$0x1]
  %v1242 = vld [vmem:[#allocation2 + $0xf0] sm:$0xf]
  %v1243 = vld [vmem:[#allocation2 + $0xf4] sm:$0xf]
  %v1244 = vld [vmem:[#allocation2 + $0xf8] sm:$0x1]
  %v1245 = vld [vmem:[#allocation2 + $0xfc] sm:$0xf]
  %v1246 = vld [vmem:[#allocation2 + $0x100] sm:$0xf]
  %v1247 = vld [vmem:[#allocation2 + $0x104] sm:$0x1]
  %v1248 = vld [vmem:[#allocation2 + $0x108] sm:$0xf]
  %v1249 = vld [vmem:[#allocation2 + $0x10c] sm:$0xf]
  %v1250 = vld [vmem:[#allocation2 + $0x110] sm:$0x1]
  %v1251 = vld [vmem:[#allocation2 + $0x114] sm:$0xf]
  %v1252 = vld [vmem:[#allocation2 + $0x118] sm:$0xf]
  %v1253 = vld [vmem:[#allocation2 + $0x11c] sm:$0x1]
  %v1254 = vld [vmem:[#allocation2 + $0x120] sm:$0xf]
  %v1255 = vld [vmem:[#allocation2 + $0x124] sm:$0xf]
  %v1256 = vld [vmem:[#allocation2 + $0x128] sm:$0x1]
  %v1257 = vld [vmem:[#allocation2 + $0x12c] sm:$0xf]
  %v1258 = vld [vmem:[#allocation2 + $0x130] sm:$0xf]
  %v1259 = vld [vmem:[#allocation2 + $0x134] sm:$0x1]
  %v1260 = vld [vmem:[#allocation2 + $0x138] sm:$0xf]
  %v1261 = vld [vmem:[#allocation2 + $0x13c] sm:$0xf]
  %v1262 = vld [vmem:[#allocation2 + $0x140] sm:$0x1]
  %v1263 = vld [vmem:[#allocation2 + $0x144] sm:$0xf]
  %v1264 = vld [vmem:[#allocation2 + $0x148] sm:$0xf]
  %v1265 = vld [vmem:[#allocation2 + $0x14c] sm:$0x1]
  %v1266 = vld [vmem:[#allocation2 + $0x150] sm:$0xf]
  %v1267 = vld [vmem:[#allocation2 + $0x154] sm:$0xf]
  %v1268 = vld [vmem:[#allocation2 + $0x158] sm:$0x1]
  %v1269 = vld [vmem:[#allocation2 + $0x15c] sm:$0xf]
  %v1270 = vld [vmem:[#allocation2 + $0x160] sm:$0xf]
  %v1271 = vld [vmem:[#allocation2 + $0x164] sm:$0x1]
  %v1272 = vld [vmem:[#allocation2 + $0x168] sm:$0xf]
  %v1273 = vld [vmem:[#allocation2 + $0x16c] sm:$0xf]
  %v1274 = vld [vmem:[#allocation2 + $0x170] sm:$0x1]
  %v1275 = vld [vmem:[#allocation2 + $0x174] sm:$0xf]
  %v1276 = vld [vmem:[#allocation2 + $0x178] sm:$0xf]
  %v1277 = vld [vmem:[#allocation2 + $0x17c] sm:$0x1]
  %v1278 = vld [vmem:[#allocation2 + $0x180] sm:$0xf]
  %v1279 = vld [vmem:[#allocation2 + $0x184] sm:$0xf]
  %v1280 = vld [vmem:[#allocation2 + $0x188] sm:$0x1]
  %v1281 = vld [vmem:[#allocation2 + $0x18c] sm:$0xf]
  %v1282 = vld [vmem:[#allocation2 + $0x190] sm:$0xf]
  %v1283 = vld [vmem:[#allocation2 + $0x194] sm:$0x1]
  %v1284 = vld [vmem:[#allocation2 + $0x198] sm:$0xf]
  %v1285 = vld [vmem:[#allocation2 + $0x19c] sm:$0xf]
  %v1286 = vld [vmem:[#allocation2 + $0x1a0] sm:$0x1]
  %v1287 = vld [vmem:[#allocation2 + $0x1a4] sm:$0xf]
  %v1288 = vld [vmem:[#allocation2 + $0x1a8] sm:$0xf]
  %v1289 = vld [vmem:[#allocation2 + $0x1ac] sm:$0x1]
  %v1354 = vunpack.c.l.b16 %v1182
  %v1355 = vunpack.c.l.b16 %v1183
  %v1356 = vunpack.c.l.b16 %v1185
  %v1357 = vunpack.c.l.b16 %v1186
  %v1358 = vunpack.c.l.b16 %v1188
  %v1359 = vunpack.c.l.b16 %v1189
  %v1360 = vunpack.c.l.b16 %v1191
  %v1361 = vunpack.c.l.b16 %v1192
  %v1362 = vunpack.c.l.b16 %v1194
  %v1363 = vunpack.c.l.b16 %v1195
  %v1364 = vunpack.c.l.b16 %v1197
  %v1365 = vunpack.c.l.b16 %v1198
  %v1366 = vunpack.c.l.b16 %v1200
  %v1367 = vunpack.c.l.b16 %v1201
  %v1368 = vunpack.c.l.b16 %v1203
  %v1369 = vunpack.c.l.b16 %v1204
  %v1370 = vunpack.c.l.b16 %v1206
  %v1371 = vunpack.c.l.b16 %v1207
  %v1372 = vunpack.c.l.b16 %v1209
  %v1373 = vunpack.c.l.b16 %v1210
  %v1374 = vunpack.c.l.b16 %v1212
  %v1375 = vunpack.c.l.b16 %v1213
  %v1376 = vunpack.c.l.b16 %v1215
  %v1377 = vunpack.c.l.b16 %v1216
  %v1378 = vunpack.c.l.b16 %v1218
  %v1379 = vunpack.c.l.b16 %v1219
  %v1380 = vunpack.c.l.b16 %v1221
  %v1381 = vunpack.c.l.b16 %v1222
  %v1382 = vunpack.c.l.b16 %v1224
  %v1383 = vunpack.c.l.b16 %v1225
  %v1384 = vunpack.c.l.b16 %v1227
  %v1385 = vunpack.c.l.b16 %v1228
  %v1386 = vunpack.c.l.b16 %v1236
  %v1387 = vunpack.c.l.b16 %v1237
  %v1388 = vunpack.c.l.b16 %v1239
  %v1389 = vunpack.c.l.b16 %v1240
  %v1390 = vunpack.c.l.b16 %v1242
  %v1391 = vunpack.c.l.b16 %v1243
  %v1392 = vunpack.c.l.b16 %v1245
  %v1393 = vunpack.c.l.b16 %v1246
  %v1394 = vunpack.c.l.b16 %v1248
  %v1395 = vunpack.c.l.b16 %v1249
  %v1396 = vunpack.c.l.b16 %v1251
  %v1397 = vunpack.c.l.b16 %v1252
  %v1398 = vunpack.c.l.b16 %v1254
  %v1399 = vunpack.c.l.b16 %v1255
  %v1400 = vunpack.c.l.b16 %v1257
  %v1401 = vunpack.c.l.b16 %v1258
  %v1402 = vunpack.c.l.b16 %v1260
  %v1403 = vunpack.c.l.b16 %v1261
  %v1404 = vunpack.c.l.b16 %v1263
  %v1405 = vunpack.c.l.b16 %v1264
  %v1406 = vunpack.c.l.b16 %v1266
  %v1407 = vunpack.c.l.b16 %v1267
  %v1408 = vunpack.c.l.b16 %v1269
  %v1409 = vunpack.c.l.b16 %v1270
  %v1410 = vunpack.c.l.b16 %v1272
  %v1411 = vunpack.c.l.b16 %v1273
  %v1412 = vunpack.c.l.b16 %v1275
  %v1413 = vunpack.c.l.b16 %v1276
  %v1414 = vunpack.c.l.b16 %v1278
  %v1415 = vunpack.c.l.b16 %v1279
  %v1416 = vunpack.c.l.b16 %v1281
  %v1417 = vunpack.c.l.b16 %v1282
  %v1418 = vpack.c.b16 %v1355, %v1354
  %v1419 = vpack.c.b16 %v1357, %v1356
  %v1420 = vpack.c.b16 %v1359, %v1358
  %v1421 = vpack.c.b16 %v1361, %v1360
  %v1422 = vpack.c.b16 %v1363, %v1362
  %v1423 = vpack.c.b16 %v1365, %v1364
  %v1424 = vpack.c.b16 %v1367, %v1366
  %v1425 = vpack.c.b16 %v1369, %v1368
  %v1426 = vpack.c.b16 %v1371, %v1370
  %v1427 = vpack.c.b16 %v1373, %v1372
  %v1428 = vpack.c.b16 %v1375, %v1374
  %v1429 = vpack.c.b16 %v1377, %v1376
  %v1430 = vpack.c.b16 %v1379, %v1378
  %v1431 = vpack.c.b16 %v1381, %v1380
  %v1432 = vpack.c.b16 %v1383, %v1382
  %v1433 = vpack.c.b16 %v1385, %v1384
  %v1434 = vpack.c.b16 %v1387, %v1386
  %v1435 = vpack.c.b16 %v1389, %v1388
  %v1436 = vpack.c.b16 %v1391, %v1390
  %v1437 = vpack.c.b16 %v1393, %v1392
  %v1438 = vpack.c.b16 %v1395, %v1394
  %v1439 = vpack.c.b16 %v1397, %v1396
  %v1440 = vpack.c.b16 %v1399, %v1398
  %v1441 = vpack.c.b16 %v1401, %v1400
  %v1442 = vpack.c.b16 %v1403, %v1402
  %v1443 = vpack.c.b16 %v1405, %v1404
  %v1444 = vpack.c.b16 %v1407, %v1406
  %v1445 = vpack.c.b16 %v1409, %v1408
  %v1446 = vpack.c.b16 %v1411, %v1410
  %v1447 = vpack.c.b16 %v1413, %v1412
  %v1448 = vpack.c.b16 %v1415, %v1414
  %v1449 = vpack.c.b16 %v1417, %v1416
  %v1482 = vunpack.c.l.b16 %v1184
  %v1483 = vunpack.c.l.b16 %v1187
  %v1484 = vunpack.c.l.b16 %v1190
  %v1485 = vunpack.c.l.b16 %v1193
  %v1486 = vunpack.c.l.b16 %v1196
  %v1487 = vunpack.c.l.b16 %v1199
  %v1488 = vunpack.c.l.b16 %v1202
  %v1489 = vunpack.c.l.b16 %v1205
  %v1490 = vunpack.c.l.b16 %v1208
  %v1491 = vunpack.c.l.b16 %v1211
  %v1492 = vunpack.c.l.b16 %v1214
  %v1493 = vunpack.c.l.b16 %v1217
  %v1494 = vunpack.c.l.b16 %v1220
  %v1495 = vunpack.c.l.b16 %v1223
  %v1496 = vunpack.c.l.b16 %v1226
  %v1497 = vunpack.c.l.b16 %v1229
  %v1498 = vunpack.c.l.b16 %v1238
  %v1499 = vunpack.c.l.b16 %v1241
  %v1500 = vunpack.c.l.b16 %v1244
  %v1501 = vunpack.c.l.b16 %v1247
  %v1502 = vunpack.c.l.b16 %v1250
  %v1503 = vunpack.c.l.b16 %v1253
  %v1504 = vunpack.c.l.b16 %v1256
  %v1505 = vunpack.c.l.b16 %v1259
  %v1506 = vunpack.c.l.b16 %v1262
  %v1507 = vunpack.c.l.b16 %v1265
  %v1508 = vunpack.c.l.b16 %v1268
  %v1509 = vunpack.c.l.b16 %v1271
  %v1510 = vunpack.c.l.b16 %v1274
  %v1511 = vunpack.c.l.b16 %v1277
  %v1512 = vunpack.c.l.b16 %v1280
  %v1513 = vunpack.c.l.b16 %v1283
  %v1514 = vpack.c.b16 %v1482, %v1482
  %v1515 = vpack.c.b16 %v1483, %v1483
  %v1516 = vpack.c.b16 %v1484, %v1484
  %v1517 = vpack.c.b16 %v1485, %v1485
  %v1518 = vpack.c.b16 %v1486, %v1486
  %v1519 = vpack.c.b16 %v1487, %v1487
  %v1520 = vpack.c.b16 %v1488, %v1488
  %v1521 = vpack.c.b16 %v1489, %v1489
  %v1522 = vpack.c.b16 %v1490, %v1490
  %v1523 = vpack.c.b16 %v1491, %v1491
  %v1524 = vpack.c.b16 %v1492, %v1492
  %v1525 = vpack.c.b16 %v1493, %v1493
  %v1526 = vpack.c.b16 %v1494, %v1494
  %v1527 = vpack.c.b16 %v1495, %v1495
  %v1528 = vpack.c.b16 %v1496, %v1496
  %v1529 = vpack.c.b16 %v1497, %v1497
  %v1530 = vpack.c.b16 %v1498, %v1498
  %v1531 = vpack.c.b16 %v1499, %v1499
  %v1532 = vpack.c.b16 %v1500, %v1500
  %v1533 = vpack.c.b16 %v1501, %v1501
  %v1534 = vpack.c.b16 %v1502, %v1502
  %v1535 = vpack.c.b16 %v1503, %v1503
  %v1536 = vpack.c.b16 %v1504, %v1504
  %v1537 = vpack.c.b16 %v1505, %v1505
  %v1538 = vpack.c.b16 %v1506, %v1506
  %v1539 = vpack.c.b16 %v1507, %v1507
  %v1540 = vpack.c.b16 %v1508, %v1508
  %v1541 = vpack.c.b16 %v1509, %v1509
  %v1542 = vpack.c.b16 %v1510, %v1510
  %v1543 = vpack.c.b16 %v1511, %v1511
  %v1544 = vpack.c.b16 %v1512, %v1512
  %v1545 = vpack.c.b16 %v1513, %v1513
  %vm1546 = vsmask.f32 7424
  %v1548 = vshrl.u32 %v1418, 16
  %v1550 = vshll.u32 %v1418, 16
  %v1552 = vrot.slane %v1550, 1
  %v1553 = vor.u32 %v1548, %v1552
  %v1555 = vshll.u32 %v1514, 16
  %v1557 = vrot.slane %v1555, 1
  %v1558 = vsel %vm1546, %v1553, %v1557
  %v1560 = vshrl.u32 %v1419, 16
  %v1562 = vshll.u32 %v1419, 16
  %v1564 = vrot.slane %v1562, 1
  %v1565 = vor.u32 %v1560, %v1564
  %v1567 = vshll.u32 %v1515, 16
  %v1569 = vrot.slane %v1567, 1
  %v1570 = vsel %vm1546, %v1565, %v1569
  %v1572 = vshrl.u32 %v1420, 16
  %v1574 = vshll.u32 %v1420, 16
  %v1576 = vrot.slane %v1574, 1
  %v1577 = vor.u32 %v1572, %v1576
  %v1579 = vshll.u32 %v1516, 16
  %v1581 = vrot.slane %v1579, 1
  %v1582 = vsel %vm1546, %v1577, %v1581
  %v1584 = vshrl.u32 %v1421, 16
  %v1586 = vshll.u32 %v1421, 16
  %v1588 = vrot.slane %v1586, 1
  %v1589 = vor.u32 %v1584, %v1588
  %v1591 = vshll.u32 %v1517, 16
  %v1593 = vrot.slane %v1591, 1
  %v1594 = vsel %vm1546, %v1589, %v1593
  %v1596 = vshrl.u32 %v1422, 16
  %v1598 = vshll.u32 %v1422, 16
  %v1600 = vrot.slane %v1598, 1
  %v1601 = vor.u32 %v1596, %v1600
  %v1603 = vshll.u32 %v1518, 16
  %v1605 = vrot.slane %v1603, 1
  %v1606 = vsel %vm1546, %v1601, %v1605
  %v1608 = vshrl.u32 %v1423, 16
  %v1610 = vshll.u32 %v1423, 16
  %v1612 = vrot.slane %v1610, 1
  %v1613 = vor.u32 %v1608, %v1612
  %v1615 = vshll.u32 %v1519, 16
  %v1617 = vrot.slane %v1615, 1
  %v1618 = vsel %vm1546, %v1613, %v1617
  %v1620 = vshrl.u32 %v1424, 16
  %v1622 = vshll.u32 %v1424, 16
  %v1624 = vrot.slane %v1622, 1
  %v1625 = vor.u32 %v1620, %v1624
  %v1627 = vshll.u32 %v1520, 16
  %v1629 = vrot.slane %v1627, 1
  %v1630 = vsel %vm1546, %v1625, %v1629
  %v1632 = vshrl.u32 %v1425, 16
  %v1634 = vshll.u32 %v1425, 16
  %v1636 = vrot.slane %v1634, 1
  %v1637 = vor.u32 %v1632, %v1636
  %v1639 = vshll.u32 %v1521, 16
  %v1641 = vrot.slane %v1639, 1
  %v1642 = vsel %vm1546, %v1637, %v1641
  %v1644 = vshrl.u32 %v1426, 16
  %v1646 = vshll.u32 %v1426, 16
  %v1648 = vrot.slane %v1646, 1
  %v1649 = vor.u32 %v1644, %v1648
  %v1651 = vshll.u32 %v1522, 16
  %v1653 = vrot.slane %v1651, 1
  %v1654 = vsel %vm1546, %v1649, %v1653
  %v1656 = vshrl.u32 %v1427, 16
  %v1658 = vshll.u32 %v1427, 16
  %v1660 = vrot.slane %v1658, 1
  %v1661 = vor.u32 %v1656, %v1660
  %v1663 = vshll.u32 %v1523, 16
  %v1665 = vrot.slane %v1663, 1
  %v1666 = vsel %vm1546, %v1661, %v1665
  %v1668 = vshrl.u32 %v1428, 16
  %v1670 = vshll.u32 %v1428, 16
  %v1672 = vrot.slane %v1670, 1
  %v1673 = vor.u32 %v1668, %v1672
  %v1675 = vshll.u32 %v1524, 16
  %v1677 = vrot.slane %v1675, 1
  %v1678 = vsel %vm1546, %v1673, %v1677
  %v1680 = vshrl.u32 %v1429, 16
  %v1682 = vshll.u32 %v1429, 16
  %v1684 = vrot.slane %v1682, 1
  %v1685 = vor.u32 %v1680, %v1684
  %v1687 = vshll.u32 %v1525, 16
  %v1689 = vrot.slane %v1687, 1
  %v1690 = vsel %vm1546, %v1685, %v1689
  %v1692 = vshrl.u32 %v1430, 16
  %v1694 = vshll.u32 %v1430, 16
  %v1696 = vrot.slane %v1694, 1
  %v1697 = vor.u32 %v1692, %v1696
  %v1699 = vshll.u32 %v1526, 16
  %v1701 = vrot.slane %v1699, 1
  %v1702 = vsel %vm1546, %v1697, %v1701
  %v1704 = vshrl.u32 %v1431, 16
  %v1706 = vshll.u32 %v1431, 16
  %v1708 = vrot.slane %v1706, 1
  %v1709 = vor.u32 %v1704, %v1708
  %v1711 = vshll.u32 %v1527, 16
  %v1713 = vrot.slane %v1711, 1
  %v1714 = vsel %vm1546, %v1709, %v1713
  %v1716 = vshrl.u32 %v1432, 16
  %v1718 = vshll.u32 %v1432, 16
  %v1720 = vrot.slane %v1718, 1
  %v1721 = vor.u32 %v1716, %v1720
  %v1723 = vshll.u32 %v1528, 16
  %v1725 = vrot.slane %v1723, 1
  %v1726 = vsel %vm1546, %v1721, %v1725
  %v1728 = vshrl.u32 %v1433, 16
  %v1730 = vshll.u32 %v1433, 16
  %v1732 = vrot.slane %v1730, 1
  %v1733 = vor.u32 %v1728, %v1732
  %v1735 = vshll.u32 %v1529, 16
  %v1737 = vrot.slane %v1735, 1
  %v1738 = vsel %vm1546, %v1733, %v1737
  %v1740 = vshrl.u32 %v1434, 16
  %v1742 = vshll.u32 %v1434, 16
  %v1744 = vrot.slane %v1742, 1
  %v1745 = vor.u32 %v1740, %v1744
  %v1747 = vshll.u32 %v1530, 16
  %v1749 = vrot.slane %v1747, 1
  %v1750 = vsel %vm1546, %v1745, %v1749
  %v1752 = vshrl.u32 %v1435, 16
  %v1754 = vshll.u32 %v1435, 16
  %v1756 = vrot.slane %v1754, 1
  %v1757 = vor.u32 %v1752, %v1756
  %v1759 = vshll.u32 %v1531, 16
  %v1761 = vrot.slane %v1759, 1
  %v1762 = vsel %vm1546, %v1757, %v1761
  %v1764 = vshrl.u32 %v1436, 16
  %v1766 = vshll.u32 %v1436, 16
  %v1768 = vrot.slane %v1766, 1
  %v1769 = vor.u32 %v1764, %v1768
  %v1771 = vshll.u32 %v1532, 16
  %v1773 = vrot.slane %v1771, 1
  %v1774 = vsel %vm1546, %v1769, %v1773
  %v1776 = vshrl.u32 %v1437, 16
  %v1778 = vshll.u32 %v1437, 16
  %v1780 = vrot.slane %v1778, 1
  %v1781 = vor.u32 %v1776, %v1780
  %v1783 = vshll.u32 %v1533, 16
  %v1785 = vrot.slane %v1783, 1
  %v1786 = vsel %vm1546, %v1781, %v1785
  %v1788 = vshrl.u32 %v1438, 16
  %v1790 = vshll.u32 %v1438, 16
  %v1792 = vrot.slane %v1790, 1
  %v1793 = vor.u32 %v1788, %v1792
  %v1795 = vshll.u32 %v1534, 16
  %v1797 = vrot.slane %v1795, 1
  %v1798 = vsel %vm1546, %v1793, %v1797
  %v1800 = vshrl.u32 %v1439, 16
  %v1802 = vshll.u32 %v1439, 16
  %v1804 = vrot.slane %v1802, 1
  %v1805 = vor.u32 %v1800, %v1804
  %v1807 = vshll.u32 %v1535, 16
  %v1809 = vrot.slane %v1807, 1
  %v1810 = vsel %vm1546, %v1805, %v1809
  %v1812 = vshrl.u32 %v1440, 16
  %v1814 = vshll.u32 %v1440, 16
  %v1816 = vrot.slane %v1814, 1
  %v1817 = vor.u32 %v1812, %v1816
  %v1819 = vshll.u32 %v1536, 16
  %v1821 = vrot.slane %v1819, 1
  %v1822 = vsel %vm1546, %v1817, %v1821
  %v1824 = vshrl.u32 %v1441, 16
  %v1826 = vshll.u32 %v1441, 16
  %v1828 = vrot.slane %v1826, 1
  %v1829 = vor.u32 %v1824, %v1828
  %v1831 = vshll.u32 %v1537, 16
  %v1833 = vrot.slane %v1831, 1
  %v1834 = vsel %vm1546, %v1829, %v1833
  %v1836 = vshrl.u32 %v1442, 16
  %v1838 = vshll.u32 %v1442, 16
  %v1840 = vrot.slane %v1838, 1
  %v1841 = vor.u32 %v1836, %v1840
  %v1843 = vshll.u32 %v1538, 16
  %v1845 = vrot.slane %v1843, 1
  %v1846 = vsel %vm1546, %v1841, %v1845
  %v1848 = vshrl.u32 %v1443, 16
  %v1850 = vshll.u32 %v1443, 16
  %v1852 = vrot.slane %v1850, 1
  %v1853 = vor.u32 %v1848, %v1852
  %v1855 = vshll.u32 %v1539, 16
  %v1857 = vrot.slane %v1855, 1
  %v1858 = vsel %vm1546, %v1853, %v1857
  %v1860 = vshrl.u32 %v1444, 16
  %v1862 = vshll.u32 %v1444, 16
  %v1864 = vrot.slane %v1862, 1
  %v1865 = vor.u32 %v1860, %v1864
  %v1867 = vshll.u32 %v1540, 16
  %v1869 = vrot.slane %v1867, 1
  %v1870 = vsel %vm1546, %v1865, %v1869
  %v1872 = vshrl.u32 %v1445, 16
  %v1874 = vshll.u32 %v1445, 16
  %v1876 = vrot.slane %v1874, 1
  %v1877 = vor.u32 %v1872, %v1876
  %v1879 = vshll.u32 %v1541, 16
  %v1881 = vrot.slane %v1879, 1
  %v1882 = vsel %vm1546, %v1877, %v1881
  %v1884 = vshrl.u32 %v1446, 16
  %v1886 = vshll.u32 %v1446, 16
  %v1888 = vrot.slane %v1886, 1
  %v1889 = vor.u32 %v1884, %v1888
  %v1891 = vshll.u32 %v1542, 16
  %v1893 = vrot.slane %v1891, 1
  %v1894 = vsel %vm1546, %v1889, %v1893
  %v1896 = vshrl.u32 %v1447, 16
  %v1898 = vshll.u32 %v1447, 16
  %v1900 = vrot.slane %v1898, 1
  %v1901 = vor.u32 %v1896, %v1900
  %v1903 = vshll.u32 %v1543, 16
  %v1905 = vrot.slane %v1903, 1
  %v1906 = vsel %vm1546, %v1901, %v1905
  %v1908 = vshrl.u32 %v1448, 16
  %v1910 = vshll.u32 %v1448, 16
  %v1912 = vrot.slane %v1910, 1
  %v1913 = vor.u32 %v1908, %v1912
  %v1915 = vshll.u32 %v1544, 16
  %v1917 = vrot.slane %v1915, 1
  %v1918 = vsel %vm1546, %v1913, %v1917
  %v1920 = vshrl.u32 %v1449, 16
  %v1922 = vshll.u32 %v1449, 16
  %v1924 = vrot.slane %v1922, 1
  %v1925 = vor.u32 %v1920, %v1924
  %v1927 = vshll.u32 %v1545, 16
  %v1929 = vrot.slane %v1927, 1
  %v1930 = vsel %vm1546, %v1925, %v1929
  %1931 = vrot.lane.b32.xlu0 %v1558, 4
  %v1932 = vpop.permute.xlu0 %1931
  %1933 = vrot.lane.b32.xlu0 %v1570, 4
  %v1934 = vpop.permute.xlu0 %1933
  %1935 = vrot.lane.b32.xlu0 %v1582, 4
  %v1936 = vpop.permute.xlu0 %1935
  %1937 = vrot.lane.b32.xlu0 %v1594, 4
  %v1938 = vpop.permute.xlu0 %1937
  %1939 = vrot.lane.b32.xlu0 %v1606, 4
  %v1940 = vpop.permute.xlu0 %1939
  %1941 = vrot.lane.b32.xlu0 %v1618, 4
  %v1942 = vpop.permute.xlu0 %1941
  %1943 = vrot.lane.b32.xlu0 %v1630, 4
  %v1944 = vpop.permute.xlu0 %1943
  %1945 = vrot.lane.b32.xlu0 %v1642, 4
  %v1946 = vpop.permute.xlu0 %1945
  %1947 = vrot.lane.b32.xlu0 %v1654, 4
  %v1948 = vpop.permute.xlu0 %1947
  %1949 = vrot.lane.b32.xlu0 %v1666, 4
  %v1950 = vpop.permute.xlu0 %1949
  %1951 = vrot.lane.b32.xlu0 %v1678, 4
  %v1952 = vpop.permute.xlu0 %1951
  %1953 = vrot.lane.b32.xlu0 %v1690, 4
  %v1954 = vpop.permute.xlu0 %1953
  %1955 = vrot.lane.b32.xlu0 %v1702, 4
  %v1956 = vpop.permute.xlu0 %1955
  %1957 = vrot.lane.b32.xlu0 %v1714, 4
  %v1958 = vpop.permute.xlu0 %1957
  %1959 = vrot.lane.b32.xlu0 %v1726, 4
  %v1960 = vpop.permute.xlu0 %1959
  %1961 = vrot.lane.b32.xlu0 %v1738, 4
  %v1962 = vpop.permute.xlu0 %1961
  %1963 = vrot.lane.b32.xlu0 %v1750, 4
  %v1964 = vpop.permute.xlu0 %1963
  %1965 = vrot.lane.b32.xlu0 %v1762, 4
  %v1966 = vpop.permute.xlu0 %1965
  %1967 = vrot.lane.b32.xlu0 %v1774, 4
  %v1968 = vpop.permute.xlu0 %1967
  %1969 = vrot.lane.b32.xlu0 %v1786, 4
  %v1970 = vpop.permute.xlu0 %1969
  %1971 = vrot.lane.b32.xlu0 %v1798, 4
  %v1972 = vpop.permute.xlu0 %1971
  %1973 = vrot.lane.b32.xlu0 %v1810, 4
  %v1974 = vpop.permute.xlu0 %1973
  %1975 = vrot.lane.b32.xlu0 %v1822, 4
  %v1976 = vpop.permute.xlu0 %1975
  %1977 = vrot.lane.b32.xlu0 %v1834, 4
  %v1978 = vpop.permute.xlu0 %1977
  %1979 = vrot.lane.b32.xlu0 %v1846, 4
  %v1980 = vpop.permute.xlu0 %1979
  %1981 = vrot.lane.b32.xlu0 %v1858, 4
  %v1982 = vpop.permute.xlu0 %1981
  %1983 = vrot.lane.b32.xlu0 %v1870, 4
  %v1984 = vpop.permute.xlu0 %1983
  %1985 = vrot.lane.b32.xlu0 %v1882, 4
  %v1986 = vpop.permute.xlu0 %1985
  %1987 = vrot.lane.b32.xlu0 %v1894, 4
  %v1988 = vpop.permute.xlu0 %1987
  %1989 = vrot.lane.b32.xlu0 %v1906, 4
  %v1990 = vpop.permute.xlu0 %1989
  %1991 = vrot.lane.b32.xlu0 %v1918, 4
  %v1992 = vpop.permute.xlu0 %1991
  %1993 = vrot.lane.b32.xlu0 %v1930, 4
  %v1994 = vpop.permute.xlu0 %1993
  %vm1995 = vcmask 1046528
  %v1996 = vrot.slane %v1418, 1
  %v1997 = vrot.slane %v1514, 1
  %v1998 = vsel %vm1995, %v1996, %v1997
  %v1999 = vrot.slane %v1419, 1
  %v2000 = vrot.slane %v1515, 1
  %v2001 = vsel %vm1995, %v1999, %v2000
  %v2002 = vrot.slane %v1420, 1
  %v2003 = vrot.slane %v1516, 1
  %v2004 = vsel %vm1995, %v2002, %v2003
  %v2005 = vrot.slane %v1421, 1
  %v2006 = vrot.slane %v1517, 1
  %v2007 = vsel %vm1995, %v2005, %v2006
  %v2008 = vrot.slane %v1422, 1
  %v2009 = vrot.slane %v1518, 1
  %v2010 = vsel %vm1995, %v2008, %v2009
  %v2011 = vrot.slane %v1423, 1
  %v2012 = vrot.slane %v1519, 1
  %v2013 = vsel %vm1995, %v2011, %v2012
  %v2014 = vrot.slane %v1424, 1
  %v2015 = vrot.slane %v1520, 1
  %v2016 = vsel %vm1995, %v2014, %v2015
  %v2017 = vrot.slane %v1425, 1
  %v2018 = vrot.slane %v1521, 1
  %v2019 = vsel %vm1995, %v2017, %v2018
  %v2020 = vrot.slane %v1426, 1
  %v2021 = vrot.slane %v1522, 1
  %v2022 = vsel %vm1995, %v2020, %v2021
  %v2023 = vrot.slane %v1427, 1
  %v2024 = vrot.slane %v1523, 1
  %v2025 = vsel %vm1995, %v2023, %v2024
  %v2026 = vrot.slane %v1428, 1
  %v2027 = vrot.slane %v1524, 1
  %v2028 = vsel %vm1995, %v2026, %v2027
  %v2029 = vrot.slane %v1429, 1
  %v2030 = vrot.slane %v1525, 1
  %v2031 = vsel %vm1995, %v2029, %v2030
  %v2032 = vrot.slane %v1430, 1
  %v2033 = vrot.slane %v1526, 1
  %v2034 = vsel %vm1995, %v2032, %v2033
  %v2035 = vrot.slane %v1431, 1
  %v2036 = vrot.slane %v1527, 1
  %v2037 = vsel %vm1995, %v2035, %v2036
  %v2038 = vrot.slane %v1432, 1
  %v2039 = vrot.slane %v1528, 1
  %v2040 = vsel %vm1995, %v2038, %v2039
  %v2041 = vrot.slane %v1433, 1
  %v2042 = vrot.slane %v1529, 1
  %v2043 = vsel %vm1995, %v2041, %v2042
  %v2044 = vrot.slane %v1434, 1
  %v2045 = vrot.slane %v1530, 1
  %v2046 = vsel %vm1995, %v2044, %v2045
  %v2047 = vrot.slane %v1435, 1
  %v2048 = vrot.slane %v1531, 1
  %v2049 = vsel %vm1995, %v2047, %v2048
  %v2050 = vrot.slane %v1436, 1
  %v2051 = vrot.slane %v1532, 1
  %v2052 = vsel %vm1995, %v2050, %v2051
  %v2053 = vrot.slane %v1437, 1
  %v2054 = vrot.slane %v1533, 1
  %v2055 = vsel %vm1995, %v2053, %v2054
  %v2056 = vrot.slane %v1438, 1
  %v2057 = vrot.slane %v1534, 1
  %v2058 = vsel %vm1995, %v2056, %v2057
  %v2059 = vrot.slane %v1439, 1
  %v2060 = vrot.slane %v1535, 1
  %v2061 = vsel %vm1995, %v2059, %v2060
  %v2062 = vrot.slane %v1440, 1
  %v2063 = vrot.slane %v1536, 1
  %v2064 = vsel %vm1995, %v2062, %v2063
  %v2065 = vrot.slane %v1441, 1
  %v2066 = vrot.slane %v1537, 1
  %v2067 = vsel %vm1995, %v2065, %v2066
  %v2068 = vrot.slane %v1442, 1
  %v2069 = vrot.slane %v1538, 1
  %v2070 = vsel %vm1995, %v2068, %v2069
  %v2071 = vrot.slane %v1443, 1
  %v2072 = vrot.slane %v1539, 1
  %v2073 = vsel %vm1995, %v2071, %v2072
  %v2074 = vrot.slane %v1444, 1
  %v2075 = vrot.slane %v1540, 1
  %v2076 = vsel %vm1995, %v2074, %v2075
  %v2077 = vrot.slane %v1445, 1
  %v2078 = vrot.slane %v1541, 1
  %v2079 = vsel %vm1995, %v2077, %v2078
  %v2080 = vrot.slane %v1446, 1
  %v2081 = vrot.slane %v1542, 1
  %v2082 = vsel %vm1995, %v2080, %v2081
  %v2083 = vrot.slane %v1447, 1
  %v2084 = vrot.slane %v1543, 1
  %v2085 = vsel %vm1995, %v2083, %v2084
  %v2086 = vrot.slane %v1448, 1
  %v2087 = vrot.slane %v1544, 1
  %v2088 = vsel %vm1995, %v2086, %v2087
  %v2089 = vrot.slane %v1449, 1
  %v2090 = vrot.slane %v1545, 1
  %v2091 = vsel %vm1995, %v2089, %v2090
  %2092 = vrot.lane.b32.xlu0 %v1998, 8
  %v2093 = vpop.permute.xlu0 %2092
  %2094 = vrot.lane.b32.xlu0 %v2001, 8
  %v2095 = vpop.permute.xlu0 %2094
  %2096 = vrot.lane.b32.xlu0 %v2004, 8
  %v2097 = vpop.permute.xlu0 %2096
  %2098 = vrot.lane.b32.xlu0 %v2007, 8
  %v2099 = vpop.permute.xlu0 %2098
  %2100 = vrot.lane.b32.xlu0 %v2010, 8
  %v2101 = vpop.permute.xlu0 %2100
  %2102 = vrot.lane.b32.xlu0 %v2013, 8
  %v2103 = vpop.permute.xlu0 %2102
  %2104 = vrot.lane.b32.xlu0 %v2016, 8
  %v2105 = vpop.permute.xlu0 %2104
  %2106 = vrot.lane.b32.xlu0 %v2019, 8
  %v2107 = vpop.permute.xlu0 %2106
  %2108 = vrot.lane.b32.xlu0 %v2022, 8
  %v2109 = vpop.permute.xlu0 %2108
  %2110 = vrot.lane.b32.xlu0 %v2025, 8
  %v2111 = vpop.permute.xlu0 %2110
  %2112 = vrot.lane.b32.xlu0 %v2028, 8
  %v2113 = vpop.permute.xlu0 %2112
  %2114 = vrot.lane.b32.xlu0 %v2031, 8
  %v2115 = vpop.permute.xlu0 %2114
  %2116 = vrot.lane.b32.xlu0 %v2034, 8
  %v2117 = vpop.permute.xlu0 %2116
  %2118 = vrot.lane.b32.xlu0 %v2037, 8
  %v2119 = vpop.permute.xlu0 %2118
  %2120 = vrot.lane.b32.xlu0 %v2040, 8
  %v2121 = vpop.permute.xlu0 %2120
  %2122 = vrot.lane.b32.xlu0 %v2043, 8
  %v2123 = vpop.permute.xlu0 %2122
  %2124 = vrot.lane.b32.xlu0 %v2046, 8
  %v2125 = vpop.permute.xlu0 %2124
  %2126 = vrot.lane.b32.xlu0 %v2049, 8
  %v2127 = vpop.permute.xlu0 %2126
  %2128 = vrot.lane.b32.xlu0 %v2052, 8
  %v2129 = vpop.permute.xlu0 %2128
  %2130 = vrot.lane.b32.xlu0 %v2055, 8
  %v2131 = vpop.permute.xlu0 %2130
  %2132 = vrot.lane.b32.xlu0 %v2058, 8
  %v2133 = vpop.permute.xlu0 %2132
  %2134 = vrot.lane.b32.xlu0 %v2061, 8
  %v2135 = vpop.permute.xlu0 %2134
  %2136 = vrot.lane.b32.xlu0 %v2064, 8
  %v2137 = vpop.permute.xlu0 %2136
  %2138 = vrot.lane.b32.xlu0 %v2067, 8
  %v2139 = vpop.permute.xlu0 %2138
  %2140 = vrot.lane.b32.xlu0 %v2070, 8
  %v2141 = vpop.permute.xlu0 %2140
  %2142 = vrot.lane.b32.xlu0 %v2073, 8
  %v2143 = vpop.permute.xlu0 %2142
  %2144 = vrot.lane.b32.xlu0 %v2076, 8
  %v2145 = vpop.permute.xlu0 %2144
  %2146 = vrot.lane.b32.xlu0 %v2079, 8
  %v2147 = vpop.permute.xlu0 %2146
  %2148 = vrot.lane.b32.xlu0 %v2082, 8
  %v2149 = vpop.permute.xlu0 %2148
  %2150 = vrot.lane.b32.xlu0 %v2085, 8
  %v2151 = vpop.permute.xlu0 %2150
  %2152 = vrot.lane.b32.xlu0 %v2088, 8
  %v2153 = vpop.permute.xlu0 %2152
  %2154 = vrot.lane.b32.xlu0 %v2091, 8
  %v2155 = vpop.permute.xlu0 %2154
  %v2160 = vunpack.c.l.b16 %v1230
  %v2161 = vunpack.c.l.b16 %v1231
  %v2162 = vunpack.c.l.b16 %v1284
  %v2163 = vunpack.c.l.b16 %v1285
  %v2164 = vpack.c.b16 %v2161, %v2160
  %v2165 = vpack.c.b16 %v2163, %v2162
  %2166 = vrot.lane.b32.xlu0 %v1419, 12
  %v2167 = vpop.permute.xlu0 %2166
  %2168 = vrot.lane.b32.xlu0 %v1420, 12
  %v2169 = vpop.permute.xlu0 %2168
  %2170 = vrot.lane.b32.xlu0 %v1421, 12
  %v2171 = vpop.permute.xlu0 %2170
  %2172 = vrot.lane.b32.xlu0 %v1422, 12
  %v2173 = vpop.permute.xlu0 %2172
  %2174 = vrot.lane.b32.xlu0 %v1423, 12
  %v2175 = vpop.permute.xlu0 %2174
  %2176 = vrot.lane.b32.xlu0 %v1424, 12
  %v2177 = vpop.permute.xlu0 %2176
  %2178 = vrot.lane.b32.xlu0 %v1425, 12
  %v2179 = vpop.permute.xlu0 %2178
  %2180 = vrot.lane.b32.xlu0 %v1426, 12
  %v2181 = vpop.permute.xlu0 %2180
  %2182 = vrot.lane.b32.xlu0 %v1427, 12
  %v2183 = vpop.permute.xlu0 %2182
  %2184 = vrot.lane.b32.xlu0 %v1428, 12
  %v2185 = vpop.permute.xlu0 %2184
  %2186 = vrot.lane.b32.xlu0 %v1429, 12
  %v2187 = vpop.permute.xlu0 %2186
  %2188 = vrot.lane.b32.xlu0 %v1430, 12
  %v2189 = vpop.permute.xlu0 %2188
  %2190 = vrot.lane.b32.xlu0 %v1431, 12
  %v2191 = vpop.permute.xlu0 %2190
  %2192 = vrot.lane.b32.xlu0 %v1432, 12
  %v2193 = vpop.permute.xlu0 %2192
  %2194 = vrot.lane.b32.xlu0 %v1433, 12
  %v2195 = vpop.permute.xlu0 %2194
  %2196 = vrot.lane.b32.xlu0 %v2164, 12
  %v2197 = vpop.permute.xlu0 %2196
  %2198 = vrot.lane.b32.xlu0 %v1435, 12
  %v2199 = vpop.permute.xlu0 %2198
  %2200 = vrot.lane.b32.xlu0 %v1436, 12
  %v2201 = vpop.permute.xlu0 %2200
  %2202 = vrot.lane.b32.xlu0 %v1437, 12
  %v2203 = vpop.permute.xlu0 %2202
  %2204 = vrot.lane.b32.xlu0 %v1438, 12
  %v2205 = vpop.permute.xlu0 %2204
  %2206 = vrot.lane.b32.xlu0 %v1439, 12
  %v2207 = vpop.permute.xlu0 %2206
  %2208 = vrot.lane.b32.xlu0 %v1440, 12
  %v2209 = vpop.permute.xlu0 %2208
  %2210 = vrot.lane.b32.xlu0 %v1441, 12
  %v2211 = vpop.permute.xlu0 %2210
  %2212 = vrot.lane.b32.xlu0 %v1442, 12
  %v2213 = vpop.permute.xlu0 %2212
  %2214 = vrot.lane.b32.xlu0 %v1443, 12
  %v2215 = vpop.permute.xlu0 %2214
  %2216 = vrot.lane.b32.xlu0 %v1444, 12
  %v2217 = vpop.permute.xlu0 %2216
  %2218 = vrot.lane.b32.xlu0 %v1445, 12
  %v2219 = vpop.permute.xlu0 %2218
  %2220 = vrot.lane.b32.xlu0 %v1446, 12
  %v2221 = vpop.permute.xlu0 %2220
  %2222 = vrot.lane.b32.xlu0 %v1447, 12
  %v2223 = vpop.permute.xlu0 %2222
  %2224 = vrot.lane.b32.xlu0 %v1448, 12
  %v2225 = vpop.permute.xlu0 %2224
  %2226 = vrot.lane.b32.xlu0 %v1449, 12
  %v2227 = vpop.permute.xlu0 %2226
  %2228 = vrot.lane.b32.xlu0 %v2165, 12
  %v2229 = vpop.permute.xlu0 %2228
  %v2232 = vunpack.c.l.b16 %v1232
  %v2233 = vunpack.c.l.b16 %v1286
  %v2234 = vpack.c.b16 %v2232, %v2232
  %v2235 = vpack.c.b16 %v2233, %v2233
  %v2237 = vshrl.u32 %v2164, 16
  %v2239 = vshll.u32 %v2164, 16
  %v2241 = vrot.slane %v2239, 1
  %v2242 = vor.u32 %v2237, %v2241
  %v2244 = vshll.u32 %v2234, 16
  %v2246 = vrot.slane %v2244, 1
  %v2247 = vsel %vm1546, %v2242, %v2246
  %v2249 = vshrl.u32 %v2165, 16
  %v2251 = vshll.u32 %v2165, 16
  %v2253 = vrot.slane %v2251, 1
  %v2254 = vor.u32 %v2249, %v2253
  %v2256 = vshll.u32 %v2235, 16
  %v2258 = vrot.slane %v2256, 1
  %v2259 = vsel %vm1546, %v2254, %v2258
  %2260 = vrot.lane.b32.xlu0 %v1570, 16
  %v2261 = vpop.permute.xlu0 %2260
  %2262 = vrot.lane.b32.xlu0 %v1582, 16
  %v2263 = vpop.permute.xlu0 %2262
  %2264 = vrot.lane.b32.xlu0 %v1594, 16
  %v2265 = vpop.permute.xlu0 %2264
  %2266 = vrot.lane.b32.xlu0 %v1606, 16
  %v2267 = vpop.permute.xlu0 %2266
  %2268 = vrot.lane.b32.xlu0 %v1618, 16
  %v2269 = vpop.permute.xlu0 %2268
  %2270 = vrot.lane.b32.xlu0 %v1630, 16
  %v2271 = vpop.permute.xlu0 %2270
  %2272 = vrot.lane.b32.xlu0 %v1642, 16
  %v2273 = vpop.permute.xlu0 %2272
  %2274 = vrot.lane.b32.xlu0 %v1654, 16
  %v2275 = vpop.permute.xlu0 %2274
  %2276 = vrot.lane.b32.xlu0 %v1666, 16
  %v2277 = vpop.permute.xlu0 %2276
  %2278 = vrot.lane.b32.xlu0 %v1678, 16
  %v2279 = vpop.permute.xlu0 %2278
  %2280 = vrot.lane.b32.xlu0 %v1690, 16
  %v2281 = vpop.permute.xlu0 %2280
  %2282 = vrot.lane.b32.xlu0 %v1702, 16
  %v2283 = vpop.permute.xlu0 %2282
  %2284 = vrot.lane.b32.xlu0 %v1714, 16
  %v2285 = vpop.permute.xlu0 %2284
  %2286 = vrot.lane.b32.xlu0 %v1726, 16
  %v2287 = vpop.permute.xlu0 %2286
  %2288 = vrot.lane.b32.xlu0 %v1738, 16
  %v2289 = vpop.permute.xlu0 %2288
  %2290 = vrot.lane.b32.xlu0 %v2247, 16
  %v2291 = vpop.permute.xlu0 %2290
  %2292 = vrot.lane.b32.xlu0 %v1762, 16
  %v2293 = vpop.permute.xlu0 %2292
  %2294 = vrot.lane.b32.xlu0 %v1774, 16
  %v2295 = vpop.permute.xlu0 %2294
  %2296 = vrot.lane.b32.xlu0 %v1786, 16
  %v2297 = vpop.permute.xlu0 %2296
  %2298 = vrot.lane.b32.xlu0 %v1798, 16
  %v2299 = vpop.permute.xlu0 %2298
  %2300 = vrot.lane.b32.xlu0 %v1810, 16
  %v2301 = vpop.permute.xlu0 %2300
  %2302 = vrot.lane.b32.xlu0 %v1822, 16
  %v2303 = vpop.permute.xlu0 %2302
  %2304 = vrot.lane.b32.xlu0 %v1834, 16
  %v2305 = vpop.permute.xlu0 %2304
  %2306 = vrot.lane.b32.xlu0 %v1846, 16
  %v2307 = vpop.permute.xlu0 %2306
  %2308 = vrot.lane.b32.xlu0 %v1858, 16
  %v2309 = vpop.permute.xlu0 %2308
  %2310 = vrot.lane.b32.xlu0 %v1870, 16
  %v2311 = vpop.permute.xlu0 %2310
  %2312 = vrot.lane.b32.xlu0 %v1882, 16
  %v2313 = vpop.permute.xlu0 %2312
  %2314 = vrot.lane.b32.xlu0 %v1894, 16
  %v2315 = vpop.permute.xlu0 %2314
  %2316 = vrot.lane.b32.xlu0 %v1906, 16
  %v2317 = vpop.permute.xlu0 %2316
  %2318 = vrot.lane.b32.xlu0 %v1918, 16
  %v2319 = vpop.permute.xlu0 %2318
  %2320 = vrot.lane.b32.xlu0 %v1930, 16
  %v2321 = vpop.permute.xlu0 %2320
  %2322 = vrot.lane.b32.xlu0 %v2259, 16
  %v2323 = vpop.permute.xlu0 %2322
  %v2324 = vrot.slane %v2164, 1
  %v2325 = vrot.slane %v2234, 1
  %v2326 = vsel %vm1995, %v2324, %v2325
  %v2327 = vrot.slane %v2165, 1
  %v2328 = vrot.slane %v2235, 1
  %v2329 = vsel %vm1995, %v2327, %v2328
  %2330 = vrot.lane.b32.xlu0 %v2001, 20
  %v2331 = vpop.permute.xlu0 %2330
  %2332 = vrot.lane.b32.xlu0 %v2004, 20
  %v2333 = vpop.permute.xlu0 %2332
  %2334 = vrot.lane.b32.xlu0 %v2007, 20
  %v2335 = vpop.permute.xlu0 %2334
  %2336 = vrot.lane.b32.xlu0 %v2010, 20
  %v2337 = vpop.permute.xlu0 %2336
  %2338 = vrot.lane.b32.xlu0 %v2013, 20
  %v2339 = vpop.permute.xlu0 %2338
  %2340 = vrot.lane.b32.xlu0 %v2016, 20
  %v2341 = vpop.permute.xlu0 %2340
  %2342 = vrot.lane.b32.xlu0 %v2019, 20
  %v2343 = vpop.permute.xlu0 %2342
  %2344 = vrot.lane.b32.xlu0 %v2022, 20
  %v2345 = vpop.permute.xlu0 %2344
  %2346 = vrot.lane.b32.xlu0 %v2025, 20
  %v2347 = vpop.permute.xlu0 %2346
  %2348 = vrot.lane.b32.xlu0 %v2028, 20
  %v2349 = vpop.permute.xlu0 %2348
  %2350 = vrot.lane.b32.xlu0 %v2031, 20
  %v2351 = vpop.permute.xlu0 %2350
  %2352 = vrot.lane.b32.xlu0 %v2034, 20
  %v2353 = vpop.permute.xlu0 %2352
  %2354 = vrot.lane.b32.xlu0 %v2037, 20
  %v2355 = vpop.permute.xlu0 %2354
  %2356 = vrot.lane.b32.xlu0 %v2040, 20
  %v2357 = vpop.permute.xlu0 %2356
  %2358 = vrot.lane.b32.xlu0 %v2043, 20
  %v2359 = vpop.permute.xlu0 %2358
  %2360 = vrot.lane.b32.xlu0 %v2326, 20
  %v2361 = vpop.permute.xlu0 %2360
  %2362 = vrot.lane.b32.xlu0 %v2049, 20
  %v2363 = vpop.permute.xlu0 %2362
  %2364 = vrot.lane.b32.xlu0 %v2052, 20
  %v2365 = vpop.permute.xlu0 %2364
  %2366 = vrot.lane.b32.xlu0 %v2055, 20
  %v2367 = vpop.permute.xlu0 %2366
  %2368 = vrot.lane.b32.xlu0 %v2058, 20
  %v2369 = vpop.permute.xlu0 %2368
  %2370 = vrot.lane.b32.xlu0 %v2061, 20
  %v2371 = vpop.permute.xlu0 %2370
  %2372 = vrot.lane.b32.xlu0 %v2064, 20
  %v2373 = vpop.permute.xlu0 %2372
  %2374 = vrot.lane.b32.xlu0 %v2067, 20
  %v2375 = vpop.permute.xlu0 %2374
  %2376 = vrot.lane.b32.xlu0 %v2070, 20
  %v2377 = vpop.permute.xlu0 %2376
  %2378 = vrot.lane.b32.xlu0 %v2073, 20
  %v2379 = vpop.permute.xlu0 %2378
  %2380 = vrot.lane.b32.xlu0 %v2076, 20
  %v2381 = vpop.permute.xlu0 %2380
  %2382 = vrot.lane.b32.xlu0 %v2079, 20
  %v2383 = vpop.permute.xlu0 %2382
  %2384 = vrot.lane.b32.xlu0 %v2082, 20
  %v2385 = vpop.permute.xlu0 %2384
  %2386 = vrot.lane.b32.xlu0 %v2085, 20
  %v2387 = vpop.permute.xlu0 %2386
  %2388 = vrot.lane.b32.xlu0 %v2088, 20
  %v2389 = vpop.permute.xlu0 %2388
  %2390 = vrot.lane.b32.xlu0 %v2091, 20
  %v2391 = vpop.permute.xlu0 %2390
  %2392 = vrot.lane.b32.xlu0 %v2329, 20
  %v2393 = vpop.permute.xlu0 %2392
  %v2398 = vunpack.c.l.b16 %v1233
  %v2399 = vunpack.c.l.b16 %v1234
  %v2400 = vunpack.c.l.b16 %v1287
  %v2401 = vunpack.c.l.b16 %v1288
  %v2402 = vpack.c.b16 %v2399, %v2398
  %v2403 = vpack.c.b16 %v2401, %v2400
  %2404 = vrot.lane.b32.xlu0 %v1420, 24
  %v2405 = vpop.permute.xlu0 %2404
  %2406 = vrot.lane.b32.xlu0 %v1421, 24
  %v2407 = vpop.permute.xlu0 %2406
  %2408 = vrot.lane.b32.xlu0 %v1422, 24
  %v2409 = vpop.permute.xlu0 %2408
  %2410 = vrot.lane.b32.xlu0 %v1423, 24
  %v2411 = vpop.permute.xlu0 %2410
  %2412 = vrot.lane.b32.xlu0 %v1424, 24
  %v2413 = vpop.permute.xlu0 %2412
  %2414 = vrot.lane.b32.xlu0 %v1425, 24
  %v2415 = vpop.permute.xlu0 %2414
  %2416 = vrot.lane.b32.xlu0 %v1426, 24
  %v2417 = vpop.permute.xlu0 %2416
  %2418 = vrot.lane.b32.xlu0 %v1427, 24
  %v2419 = vpop.permute.xlu0 %2418
  %2420 = vrot.lane.b32.xlu0 %v1428, 24
  %v2421 = vpop.permute.xlu0 %2420
  %2422 = vrot.lane.b32.xlu0 %v1429, 24
  %v2423 = vpop.permute.xlu0 %2422
  %2424 = vrot.lane.b32.xlu0 %v1430, 24
  %v2425 = vpop.permute.xlu0 %2424
  %2426 = vrot.lane.b32.xlu0 %v1431, 24
  %v2427 = vpop.permute.xlu0 %2426
  %2428 = vrot.lane.b32.xlu0 %v1432, 24
  %v2429 = vpop.permute.xlu0 %2428
  %2430 = vrot.lane.b32.xlu0 %v1433, 24
  %v2431 = vpop.permute.xlu0 %2430
  %2432 = vrot.lane.b32.xlu0 %v2164, 24
  %v2433 = vpop.permute.xlu0 %2432
  %2434 = vrot.lane.b32.xlu0 %v2402, 24
  %v2435 = vpop.permute.xlu0 %2434
  %2436 = vrot.lane.b32.xlu0 %v1436, 24
  %v2437 = vpop.permute.xlu0 %2436
  %2438 = vrot.lane.b32.xlu0 %v1437, 24
  %v2439 = vpop.permute.xlu0 %2438
  %2440 = vrot.lane.b32.xlu0 %v1438, 24
  %v2441 = vpop.permute.xlu0 %2440
  %2442 = vrot.lane.b32.xlu0 %v1439, 24
  %v2443 = vpop.permute.xlu0 %2442
  %2444 = vrot.lane.b32.xlu0 %v1440, 24
  %v2445 = vpop.permute.xlu0 %2444
  %2446 = vrot.lane.b32.xlu0 %v1441, 24
  %v2447 = vpop.permute.xlu0 %2446
  %2448 = vrot.lane.b32.xlu0 %v1442, 24
  %v2449 = vpop.permute.xlu0 %2448
  %2450 = vrot.lane.b32.xlu0 %v1443, 24
  %v2451 = vpop.permute.xlu0 %2450
  %2452 = vrot.lane.b32.xlu0 %v1444, 24
  %v2453 = vpop.permute.xlu0 %2452
  %2454 = vrot.lane.b32.xlu0 %v1445, 24
  %v2455 = vpop.permute.xlu0 %2454
  %2456 = vrot.lane.b32.xlu0 %v1446, 24
  %v2457 = vpop.permute.xlu0 %2456
  %2458 = vrot.lane.b32.xlu0 %v1447, 24
  %v2459 = vpop.permute.xlu0 %2458
  %2460 = vrot.lane.b32.xlu0 %v1448, 24
  %v2461 = vpop.permute.xlu0 %2460
  %2462 = vrot.lane.b32.xlu0 %v1449, 24
  %v2463 = vpop.permute.xlu0 %2462
  %2464 = vrot.lane.b32.xlu0 %v2165, 24
  %v2465 = vpop.permute.xlu0 %2464
  %2466 = vrot.lane.b32.xlu0 %v2403, 24
  %v2467 = vpop.permute.xlu0 %2466
  %v2470 = vunpack.c.l.b16 %v1235
  %v2471 = vunpack.c.l.b16 %v1289
  %v2472 = vpack.c.b16 %v2470, %v2470
  %v2473 = vpack.c.b16 %v2471, %v2471
  %v2475 = vshrl.u32 %v2402, 16
  %v2477 = vshll.u32 %v2402, 16
  %v2479 = vrot.slane %v2477, 1
  %v2480 = vor.u32 %v2475, %v2479
  %v2482 = vshll.u32 %v2472, 16
  %v2484 = vrot.slane %v2482, 1
  %v2485 = vsel %vm1546, %v2480, %v2484
  %v2487 = vshrl.u32 %v2403, 16
  %v2489 = vshll.u32 %v2403, 16
  %v2491 = vrot.slane %v2489, 1
  %v2492 = vor.u32 %v2487, %v2491
  %v2494 = vshll.u32 %v2473, 16
  %v2496 = vrot.slane %v2494, 1
  %v2497 = vsel %vm1546, %v2492, %v2496
  %2498 = vrot.lane.b32.xlu0 %v1582, 28
  %v2499 = vpop.permute.xlu0 %2498
  %2500 = vrot.lane.b32.xlu0 %v1594, 28
  %v2501 = vpop.permute.xlu0 %2500
  %2502 = vrot.lane.b32.xlu0 %v1606, 28
  %v2503 = vpop.permute.xlu0 %2502
  %2504 = vrot.lane.b32.xlu0 %v1618, 28
  %v2505 = vpop.permute.xlu0 %2504
  %2506 = vrot.lane.b32.xlu0 %v1630, 28
  %v2507 = vpop.permute.xlu0 %2506
  %2508 = vrot.lane.b32.xlu0 %v1642, 28
  %v2509 = vpop.permute.xlu0 %2508
  %2510 = vrot.lane.b32.xlu0 %v1654, 28
  %v2511 = vpop.permute.xlu0 %2510
  %2512 = vrot.lane.b32.xlu0 %v1666, 28
  %v2513 = vpop.permute.xlu0 %2512
  %2514 = vrot.lane.b32.xlu0 %v1678, 28
  %v2515 = vpop.permute.xlu0 %2514
  %2516 = vrot.lane.b32.xlu0 %v1690, 28
  %v2517 = vpop.permute.xlu0 %2516
  %2518 = vrot.lane.b32.xlu0 %v1702, 28
  %v2519 = vpop.permute.xlu0 %2518
  %2520 = vrot.lane.b32.xlu0 %v1714, 28
  %v2521 = vpop.permute.xlu0 %2520
  %2522 = vrot.lane.b32.xlu0 %v1726, 28
  %v2523 = vpop.permute.xlu0 %2522
  %2524 = vrot.lane.b32.xlu0 %v1738, 28
  %v2525 = vpop.permute.xlu0 %2524
  %2526 = vrot.lane.b32.xlu0 %v2247, 28
  %v2527 = vpop.permute.xlu0 %2526
  %2528 = vrot.lane.b32.xlu0 %v2485, 28
  %v2529 = vpop.permute.xlu0 %2528
  %2530 = vrot.lane.b32.xlu0 %v1774, 28
  %v2531 = vpop.permute.xlu0 %2530
  %2532 = vrot.lane.b32.xlu0 %v1786, 28
  %v2533 = vpop.permute.xlu0 %2532
  %2534 = vrot.lane.b32.xlu0 %v1798, 28
  %v2535 = vpop.permute.xlu0 %2534
  %2536 = vrot.lane.b32.xlu0 %v1810, 28
  %v2537 = vpop.permute.xlu0 %2536
  %2538 = vrot.lane.b32.xlu0 %v1822, 28
  %v2539 = vpop.permute.xlu0 %2538
  %2540 = vrot.lane.b32.xlu0 %v1834, 28
  %v2541 = vpop.permute.xlu0 %2540
  %2542 = vrot.lane.b32.xlu0 %v1846, 28
  %v2543 = vpop.permute.xlu0 %2542
  %2544 = vrot.lane.b32.xlu0 %v1858, 28
  %v2545 = vpop.permute.xlu0 %2544
  %2546 = vrot.lane.b32.xlu0 %v1870, 28
  %v2547 = vpop.permute.xlu0 %2546
  %2548 = vrot.lane.b32.xlu0 %v1882, 28
  %v2549 = vpop.permute.xlu0 %2548
  %2550 = vrot.lane.b32.xlu0 %v1894, 28
  %v2551 = vpop.permute.xlu0 %2550
  %2552 = vrot.lane.b32.xlu0 %v1906, 28
  %v2553 = vpop.permute.xlu0 %2552
  %2554 = vrot.lane.b32.xlu0 %v1918, 28
  %v2555 = vpop.permute.xlu0 %2554
  %2556 = vrot.lane.b32.xlu0 %v1930, 28
  %v2557 = vpop.permute.xlu0 %2556
  %2558 = vrot.lane.b32.xlu0 %v2259, 28
  %v2559 = vpop.permute.xlu0 %2558
  %2560 = vrot.lane.b32.xlu0 %v2497, 28
  %v2561 = vpop.permute.xlu0 %2560
  %v2562 = vrot.slane %v2402, 1
  %v2563 = vrot.slane %v2472, 1
  %v2564 = vsel %vm1995, %v2562, %v2563
  %v2565 = vrot.slane %v2403, 1
  %v2566 = vrot.slane %v2473, 1
  %v2567 = vsel %vm1995, %v2565, %v2566
  %2568 = vrot.lane.b32.xlu0 %v2004, 32
  %v2569 = vpop.permute.xlu0 %2568
  %2570 = vrot.lane.b32.xlu0 %v2007, 32
  %v2571 = vpop.permute.xlu0 %2570
  %2572 = vrot.lane.b32.xlu0 %v2010, 32
  %v2573 = vpop.permute.xlu0 %2572
  %2574 = vrot.lane.b32.xlu0 %v2013, 32
  %v2575 = vpop.permute.xlu0 %2574
  %2576 = vrot.lane.b32.xlu0 %v2016, 32
  %v2577 = vpop.permute.xlu0 %2576
  %2578 = vrot.lane.b32.xlu0 %v2019, 32
  %v2579 = vpop.permute.xlu0 %2578
  %2580 = vrot.lane.b32.xlu0 %v2022, 32
  %v2581 = vpop.permute.xlu0 %2580
  %2582 = vrot.lane.b32.xlu0 %v2025, 32
  %v2583 = vpop.permute.xlu0 %2582
  %2584 = vrot.lane.b32.xlu0 %v2028, 32
  %v2585 = vpop.permute.xlu0 %2584
  %2586 = vrot.lane.b32.xlu0 %v2031, 32
  %v2587 = vpop.permute.xlu0 %2586
  %2588 = vrot.lane.b32.xlu0 %v2034, 32
  %v2589 = vpop.permute.xlu0 %2588
  %2590 = vrot.lane.b32.xlu0 %v2037, 32
  %v2591 = vpop.permute.xlu0 %2590
  %2592 = vrot.lane.b32.xlu0 %v2040, 32
  %v2593 = vpop.permute.xlu0 %2592
  %2594 = vrot.lane.b32.xlu0 %v2043, 32
  %v2595 = vpop.permute.xlu0 %2594
  %2596 = vrot.lane.b32.xlu0 %v2326, 32
  %v2597 = vpop.permute.xlu0 %2596
  %2598 = vrot.lane.b32.xlu0 %v2564, 32
  %v2599 = vpop.permute.xlu0 %2598
  %2600 = vrot.lane.b32.xlu0 %v2052, 32
  %v2601 = vpop.permute.xlu0 %2600
  %2602 = vrot.lane.b32.xlu0 %v2055, 32
  %v2603 = vpop.permute.xlu0 %2602
  %2604 = vrot.lane.b32.xlu0 %v2058, 32
  %v2605 = vpop.permute.xlu0 %2604
  %2606 = vrot.lane.b32.xlu0 %v2061, 32
  %v2607 = vpop.permute.xlu0 %2606
  %2608 = vrot.lane.b32.xlu0 %v2064, 32
  %v2609 = vpop.permute.xlu0 %2608
  %2610 = vrot.lane.b32.xlu0 %v2067, 32
  %v2611 = vpop.permute.xlu0 %2610
  %2612 = vrot.lane.b32.xlu0 %v2070, 32
  %v2613 = vpop.permute.xlu0 %2612
  %2614 = vrot.lane.b32.xlu0 %v2073, 32
  %v2615 = vpop.permute.xlu0 %2614
  %2616 = vrot.lane.b32.xlu0 %v2076, 32
  %v2617 = vpop.permute.xlu0 %2616
  %2618 = vrot.lane.b32.xlu0 %v2079, 32
  %v2619 = vpop.permute.xlu0 %2618
  %2620 = vrot.lane.b32.xlu0 %v2082, 32
  %v2621 = vpop.permute.xlu0 %2620
  %2622 = vrot.lane.b32.xlu0 %v2085, 32
  %v2623 = vpop.permute.xlu0 %2622
  %2624 = vrot.lane.b32.xlu0 %v2088, 32
  %v2625 = vpop.permute.xlu0 %2624
  %2626 = vrot.lane.b32.xlu0 %v2091, 32
  %v2627 = vpop.permute.xlu0 %2626
  %2628 = vrot.lane.b32.xlu0 %v2329, 32
  %v2629 = vpop.permute.xlu0 %2628
  %2630 = vrot.lane.b32.xlu0 %v2567, 32
  %v2631 = vpop.permute.xlu0 %2630
  %vm2632 = vcmask 31744
  %v2634 = vsel %vm2632, %v1418, %v1932
  %v2636 = vsel %vm2632, %v1419, %v1934
  %v2638 = vsel %vm2632, %v1420, %v1936
  %v2640 = vsel %vm2632, %v1421, %v1938
  %v2642 = vsel %vm2632, %v1422, %v1940
  %v2644 = vsel %vm2632, %v1423, %v1942
  %v2646 = vsel %vm2632, %v1424, %v1944
  %v2648 = vsel %vm2632, %v1425, %v1946
  %v2650 = vsel %vm2632, %v1426, %v1948
  %v2652 = vsel %vm2632, %v1427, %v1950
  %v2654 = vsel %vm2632, %v1428, %v1952
  %v2656 = vsel %vm2632, %v1429, %v1954
  %v2658 = vsel %vm2632, %v1430, %v1956
  %v2660 = vsel %vm2632, %v1431, %v1958
  %v2662 = vsel %vm2632, %v1432, %v1960
  %v2664 = vsel %vm2632, %v1433, %v1962
  %v2666 = vsel %vm2632, %v1434, %v1964
  %v2668 = vsel %vm2632, %v1435, %v1966
  %v2670 = vsel %vm2632, %v1436, %v1968
  %v2672 = vsel %vm2632, %v1437, %v1970
  %v2674 = vsel %vm2632, %v1438, %v1972
  %v2676 = vsel %vm2632, %v1439, %v1974
  %v2678 = vsel %vm2632, %v1440, %v1976
  %v2680 = vsel %vm2632, %v1441, %v1978
  %v2682 = vsel %vm2632, %v1442, %v1980
  %v2684 = vsel %vm2632, %v1443, %v1982
  %v2686 = vsel %vm2632, %v1444, %v1984
  %v2688 = vsel %vm2632, %v1445, %v1986
  %v2690 = vsel %vm2632, %v1446, %v1988
  %v2692 = vsel %vm2632, %v1447, %v1990
  %v2694 = vsel %vm2632, %v1448, %v1992
  %v2696 = vsel %vm2632, %v1449, %v1994
  %vm2697 = vcmask 64512
  %v2699 = vsel %vm2697, %v2634, %v2093
  %v2701 = vsel %vm2697, %v2636, %v2095
  %v2703 = vsel %vm2697, %v2638, %v2097
  %v2705 = vsel %vm2697, %v2640, %v2099
  %v2707 = vsel %vm2697, %v2642, %v2101
  %v2709 = vsel %vm2697, %v2644, %v2103
  %v2711 = vsel %vm2697, %v2646, %v2105
  %v2713 = vsel %vm2697, %v2648, %v2107
  %v2715 = vsel %vm2697, %v2650, %v2109
  %v2717 = vsel %vm2697, %v2652, %v2111
  %v2719 = vsel %vm2697, %v2654, %v2113
  %v2721 = vsel %vm2697, %v2656, %v2115
  %v2723 = vsel %vm2697, %v2658, %v2117
  %v2725 = vsel %vm2697, %v2660, %v2119
  %v2727 = vsel %vm2697, %v2662, %v2121
  %v2729 = vsel %vm2697, %v2664, %v2123
  %v2731 = vsel %vm2697, %v2666, %v2125
  %v2733 = vsel %vm2697, %v2668, %v2127
  %v2735 = vsel %vm2697, %v2670, %v2129
  %v2737 = vsel %vm2697, %v2672, %v2131
  %v2739 = vsel %vm2697, %v2674, %v2133
  %v2741 = vsel %vm2697, %v2676, %v2135
  %v2743 = vsel %vm2697, %v2678, %v2137
  %v2745 = vsel %vm2697, %v2680, %v2139
  %v2747 = vsel %vm2697, %v2682, %v2141
  %v2749 = vsel %vm2697, %v2684, %v2143
  %v2751 = vsel %vm2697, %v2686, %v2145
  %v2753 = vsel %vm2697, %v2688, %v2147
  %v2755 = vsel %vm2697, %v2690, %v2149
  %v2757 = vsel %vm2697, %v2692, %v2151
  %v2759 = vsel %vm2697, %v2694, %v2153
  %v2761 = vsel %vm2697, %v2696, %v2155
  %vm2762 = vcmask 97280
  %v2764 = vsel %vm2762, %v2699, %v2167
  %v2766 = vsel %vm2762, %v2701, %v2169
  %v2768 = vsel %vm2762, %v2703, %v2171
  %v2770 = vsel %vm2762, %v2705, %v2173
  %v2772 = vsel %vm2762, %v2707, %v2175
  %v2774 = vsel %vm2762, %v2709, %v2177
  %v2776 = vsel %vm2762, %v2711, %v2179
  %v2778 = vsel %vm2762, %v2713, %v2181
  %v2780 = vsel %vm2762, %v2715, %v2183
  %v2782 = vsel %vm2762, %v2717, %v2185
  %v2784 = vsel %vm2762, %v2719, %v2187
  %v2786 = vsel %vm2762, %v2721, %v2189
  %v2788 = vsel %vm2762, %v2723, %v2191
  %v2790 = vsel %vm2762, %v2725, %v2193
  %v2792 = vsel %vm2762, %v2727, %v2195
  %v2794 = vsel %vm2762, %v2729, %v2197
  %v2796 = vsel %vm2762, %v2731, %v2199
  %v2798 = vsel %vm2762, %v2733, %v2201
  %v2800 = vsel %vm2762, %v2735, %v2203
  %v2802 = vsel %vm2762, %v2737, %v2205
  %v2804 = vsel %vm2762, %v2739, %v2207
  %v2806 = vsel %vm2762, %v2741, %v2209
  %v2808 = vsel %vm2762, %v2743, %v2211
  %v2810 = vsel %vm2762, %v2745, %v2213
  %v2812 = vsel %vm2762, %v2747, %v2215
  %v2814 = vsel %vm2762, %v2749, %v2217
  %v2816 = vsel %vm2762, %v2751, %v2219
  %v2818 = vsel %vm2762, %v2753, %v2221
  %v2820 = vsel %vm2762, %v2755, %v2223
  %v2822 = vsel %vm2762, %v2757, %v2225
  %v2824 = vsel %vm2762, %v2759, %v2227
  %v2826 = vsel %vm2762, %v2761, %v2229
  %vm2827 = vcmask 130048
  %v2829 = vsel %vm2827, %v2764, %v2261
  %v2831 = vsel %vm2827, %v2766, %v2263
  %v2833 = vsel %vm2827, %v2768, %v2265
  %v2835 = vsel %vm2827, %v2770, %v2267
  %v2837 = vsel %vm2827, %v2772, %v2269
  %v2839 = vsel %vm2827, %v2774, %v2271
  %v2841 = vsel %vm2827, %v2776, %v2273
  %v2843 = vsel %vm2827, %v2778, %v2275
  %v2845 = vsel %vm2827, %v2780, %v2277
  %v2847 = vsel %vm2827, %v2782, %v2279
  %v2849 = vsel %vm2827, %v2784, %v2281
  %v2851 = vsel %vm2827, %v2786, %v2283
  %v2853 = vsel %vm2827, %v2788, %v2285
  %v2855 = vsel %vm2827, %v2790, %v2287
  %v2857 = vsel %vm2827, %v2792, %v2289
  %v2859 = vsel %vm2827, %v2794, %v2291
  %v2861 = vsel %vm2827, %v2796, %v2293
  %v2863 = vsel %vm2827, %v2798, %v2295
  %v2865 = vsel %vm2827, %v2800, %v2297
  %v2867 = vsel %vm2827, %v2802, %v2299
  %v2869 = vsel %vm2827, %v2804, %v2301
  %v2871 = vsel %vm2827, %v2806, %v2303
  %v2873 = vsel %vm2827, %v2808, %v2305
  %v2875 = vsel %vm2827, %v2810, %v2307
  %v2877 = vsel %vm2827, %v2812, %v2309
  %v2879 = vsel %vm2827, %v2814, %v2311
  %v2881 = vsel %vm2827, %v2816, %v2313
  %v2883 = vsel %vm2827, %v2818, %v2315
  %v2885 = vsel %vm2827, %v2820, %v2317
  %v2887 = vsel %vm2827, %v2822, %v2319
  %v2889 = vsel %vm2827, %v2824, %v2321
  %v2891 = vsel %vm2827, %v2826, %v2323
  %vm2892 = vcmask 162816
  %v2894 = vsel %vm2892, %v2829, %v2331
  %v2896 = vsel %vm2892, %v2831, %v2333
  %v2898 = vsel %vm2892, %v2833, %v2335
  %v2900 = vsel %vm2892, %v2835, %v2337
  %v2902 = vsel %vm2892, %v2837, %v2339
  %v2904 = vsel %vm2892, %v2839, %v2341
  %v2906 = vsel %vm2892, %v2841, %v2343
  %v2908 = vsel %vm2892, %v2843, %v2345
  %v2910 = vsel %vm2892, %v2845, %v2347
  %v2912 = vsel %vm2892, %v2847, %v2349
  %v2914 = vsel %vm2892, %v2849, %v2351
  %v2916 = vsel %vm2892, %v2851, %v2353
  %v2918 = vsel %vm2892, %v2853, %v2355
  %v2920 = vsel %vm2892, %v2855, %v2357
  %v2922 = vsel %vm2892, %v2857, %v2359
  %v2924 = vsel %vm2892, %v2859, %v2361
  %v2926 = vsel %vm2892, %v2861, %v2363
  %v2928 = vsel %vm2892, %v2863, %v2365
  %v2930 = vsel %vm2892, %v2865, %v2367
  %v2932 = vsel %vm2892, %v2867, %v2369
  %v2934 = vsel %vm2892, %v2869, %v2371
  %v2936 = vsel %vm2892, %v2871, %v2373
  %v2938 = vsel %vm2892, %v2873, %v2375
  %v2940 = vsel %vm2892, %v2875, %v2377
  %v2942 = vsel %vm2892, %v2877, %v2379
  %v2944 = vsel %vm2892, %v2879, %v2381
  %v2946 = vsel %vm2892, %v2881, %v2383
  %v2948 = vsel %vm2892, %v2883, %v2385
  %v2950 = vsel %vm2892, %v2885, %v2387
  %v2952 = vsel %vm2892, %v2887, %v2389
  %v2954 = vsel %vm2892, %v2889, %v2391
  %v2956 = vsel %vm2892, %v2891, %v2393
  %vm2957 = vcmask 195584
  %v2959 = vsel %vm2957, %v2894, %v2405
  %v2961 = vsel %vm2957, %v2896, %v2407
  %v2963 = vsel %vm2957, %v2898, %v2409
  %v2965 = vsel %vm2957, %v2900, %v2411
  %v2967 = vsel %vm2957, %v2902, %v2413
  %v2969 = vsel %vm2957, %v2904, %v2415
  %v2971 = vsel %vm2957, %v2906, %v2417
  %v2973 = vsel %vm2957, %v2908, %v2419
  %v2975 = vsel %vm2957, %v2910, %v2421
  %v2977 = vsel %vm2957, %v2912, %v2423
  %v2979 = vsel %vm2957, %v2914, %v2425
  %v2981 = vsel %vm2957, %v2916, %v2427
  %v2983 = vsel %vm2957, %v2918, %v2429
  %v2985 = vsel %vm2957, %v2920, %v2431
  %v2987 = vsel %vm2957, %v2922, %v2433
  %v2989 = vsel %vm2957, %v2924, %v2435
  %v2991 = vsel %vm2957, %v2926, %v2437
  %v2993 = vsel %vm2957, %v2928, %v2439
  %v2995 = vsel %vm2957, %v2930, %v2441
  %v2997 = vsel %vm2957, %v2932, %v2443
  %v2999 = vsel %vm2957, %v2934, %v2445
  %v3001 = vsel %vm2957, %v2936, %v2447
  %v3003 = vsel %vm2957, %v2938, %v2449
  %v3005 = vsel %vm2957, %v2940, %v2451
  %v3007 = vsel %vm2957, %v2942, %v2453
  %v3009 = vsel %vm2957, %v2944, %v2455
  %v3011 = vsel %vm2957, %v2946, %v2457
  %v3013 = vsel %vm2957, %v2948, %v2459
  %v3015 = vsel %vm2957, %v2950, %v2461
  %v3017 = vsel %vm2957, %v2952, %v2463
  %v3019 = vsel %vm2957, %v2954, %v2465
  %v3021 = vsel %vm2957, %v2956, %v2467
  %vm3022 = vcmask 228352
  %v3024 = vsel %vm3022, %v2959, %v2499
  %v3026 = vsel %vm3022, %v2961, %v2501
  %v3028 = vsel %vm3022, %v2963, %v2503
  %v3030 = vsel %vm3022, %v2965, %v2505
  %v3032 = vsel %vm3022, %v2967, %v2507
  %v3034 = vsel %vm3022, %v2969, %v2509
  %v3036 = vsel %vm3022, %v2971, %v2511
  %v3038 = vsel %vm3022, %v2973, %v2513
  %v3040 = vsel %vm3022, %v2975, %v2515
  %v3042 = vsel %vm3022, %v2977, %v2517
  %v3044 = vsel %vm3022, %v2979, %v2519
  %v3046 = vsel %vm3022, %v2981, %v2521
  %v3048 = vsel %vm3022, %v2983, %v2523
  %v3050 = vsel %vm3022, %v2985, %v2525
  %v3052 = vsel %vm3022, %v2987, %v2527
  %v3054 = vsel %vm3022, %v2989, %v2529
  %v3056 = vsel %vm3022, %v2991, %v2531
  %v3058 = vsel %vm3022, %v2993, %v2533
  %v3060 = vsel %vm3022, %v2995, %v2535
  %v3062 = vsel %vm3022, %v2997, %v2537
  %v3064 = vsel %vm3022, %v2999, %v2539
  %v3066 = vsel %vm3022, %v3001, %v2541
  %v3068 = vsel %vm3022, %v3003, %v2543
  %v3070 = vsel %vm3022, %v3005, %v2545
  %v3072 = vsel %vm3022, %v3007, %v2547
  %v3074 = vsel %vm3022, %v3009, %v2549
  %v3076 = vsel %vm3022, %v3011, %v2551
  %v3078 = vsel %vm3022, %v3013, %v2553
  %v3080 = vsel %vm3022, %v3015, %v2555
  %v3082 = vsel %vm3022, %v3017, %v2557
  %v3084 = vsel %vm3022, %v3019, %v2559
  %v3086 = vsel %vm3022, %v3021, %v2561
  %vm3087 = vcmask 261120
  %v3089 = vsel %vm3087, %v3024, %v2569
  %v3091 = vsel %vm3087, %v3026, %v2571
  %v3093 = vsel %vm3087, %v3028, %v2573
  %v3095 = vsel %vm3087, %v3030, %v2575
  %v3097 = vsel %vm3087, %v3032, %v2577
  %v3099 = vsel %vm3087, %v3034, %v2579
  %v3101 = vsel %vm3087, %v3036, %v2581
  %v3103 = vsel %vm3087, %v3038, %v2583
  %v3105 = vsel %vm3087, %v3040, %v2585
  %v3107 = vsel %vm3087, %v3042, %v2587
  %v3109 = vsel %vm3087, %v3044, %v2589
  %v3111 = vsel %vm3087, %v3046, %v2591
  %v3113 = vsel %vm3087, %v3048, %v2593
  %v3115 = vsel %vm3087, %v3050, %v2595
  %v3117 = vsel %vm3087, %v3052, %v2597
  %v3119 = vsel %vm3087, %v3054, %v2599
  %v3121 = vsel %vm3087, %v3056, %v2601
  %v3123 = vsel %vm3087, %v3058, %v2603
  %v3125 = vsel %vm3087, %v3060, %v2605
  %v3127 = vsel %vm3087, %v3062, %v2607
  %v3129 = vsel %vm3087, %v3064, %v2609
  %v3131 = vsel %vm3087, %v3066, %v2611
  %v3133 = vsel %vm3087, %v3068, %v2613
  %v3135 = vsel %vm3087, %v3070, %v2615
  %v3137 = vsel %vm3087, %v3072, %v2617
  %v3139 = vsel %vm3087, %v3074, %v2619
  %v3141 = vsel %vm3087, %v3076, %v2621
  %v3143 = vsel %vm3087, %v3078, %v2623
  %v3145 = vsel %vm3087, %v3080, %v2625
  %v3147 = vsel %vm3087, %v3082, %v2627
  %v3149 = vsel %vm3087, %v3084, %v2629
  %v3151 = vsel %vm3087, %v3086, %v2631
  %v3152 = vld [vmem:[%s1] sm:$0xf]
  %v3153 = vld [vmem:[%s1 + $0x4] sm:$0xf]
  %v3154 = vld [vmem:[%s1 + $0x8] sm:$0xf]
  %v3155 = vld [vmem:[%s1 + $0xc] sm:$0xf]
  %v3156 = vld [vmem:[%s1 + $0x10] sm:$0x3]
  %v3162 = vunpack.c.l.b16 %v3152
  %v3163 = vunpack.c.l.b16 %v3153
  %v3164 = vunpack.c.l.b16 %v3154
  %v3165 = vunpack.c.l.b16 %v3155
  %v3166 = vunpack.c.l.b16 %v3156
  %v3167 = vpack.c.b16 %v3163, %v3162
  %v3168 = vpack.c.b16 %v3165, %v3164
  %v3169 = vpack.c.b16 %v3166, %v3166
  %vm3172 = vcmask 293888
  %v3173 = vsel %vm3172, %v3089, 0
  %v3175 = vsel %vm3172, %v3091, 0
  %v3177 = vsel %vm3172, %v3093, 0
  %v3179 = vsel %vm3172, %v3095, 0
  %v3181 = vsel %vm3172, %v3097, 0
  %v3183 = vsel %vm3172, %v3099, 0
  %v3185 = vsel %vm3172, %v3101, 0
  %v3187 = vsel %vm3172, %v3103, 0
  %v3189 = vsel %vm3172, %v3105, 0
  %v3191 = vsel %vm3172, %v3107, 0
  %v3193 = vsel %vm3172, %v3109, 0
  %v3195 = vsel %vm3172, %v3111, 0
  %v3197 = vsel %vm3172, %v3113, 0
  %v3199 = vsel %vm3172, %v3115, 0
  %v3201 = vsel %vm3172, %v3117, 0
  %v3203 = vsel %vm3172, %v3119, 0
  %v3205 = vsel %vm3172, %v3121, 0
  %v3207 = vsel %vm3172, %v3123, 0
  %v3209 = vsel %vm3172, %v3125, 0
  %v3211 = vsel %vm3172, %v3127, 0
  %v3213 = vsel %vm3172, %v3129, 0
  %v3215 = vsel %vm3172, %v3131, 0
  %v3217 = vsel %vm3172, %v3133, 0
  %v3219 = vsel %vm3172, %v3135, 0
  %v3221 = vsel %vm3172, %v3137, 0
  %v3223 = vsel %vm3172, %v3139, 0
  %v3225 = vsel %vm3172, %v3141, 0
  %v3227 = vsel %vm3172, %v3143, 0
  %v3229 = vsel %vm3172, %v3145, 0
  %v3231 = vsel %vm3172, %v3147, 0
  %v3233 = vsel %vm3172, %v3149, 0
  %v3235 = vsel %vm3172, %v3151, 0
  %vm3237 = vcmask 1041408
  %v3239 = vsel %vm3237, %v3169, 0
  %3241 = vmatprep.subr.bf16.mxu0 0
  %3242 = vmatpush1.bf16.msra.mxu0 %v3167
  %3243 = vmatprep.subr.bf16.mxu0 0
  %3244 = vmatpush1.bf16.msra.mxu0 %v3168
  %3245 = vmatprep.subr.bf16.mxu0 0
  %3246 = vmatpush1.bf16.msra.mxu0 %v3239
  %3247 = vmatprep.subr.bf16.mxu0 0
  %3248 = vmatpush1.bf16.msra.mxu0 0
  %3249 = vmatprep.subr.bf16.mxu0 0
  %3250 = vmatpush1.bf16.msra.mxu0 0
  %3251 = vmatprep.subr.bf16.mxu0 0
  %3252 = vmatpush1.bf16.msra.mxu0 0
  %3253 = vmatprep.subr.bf16.mxu0 0
  %3254 = vmatpush1.bf16.msra.mxu0 0
  %3255 = vmatprep.subr.bf16.mxu0 0
  %3256 = vmatpush1.bf16.msra.mxu0 0
  %3257 = vmatprep.subr.bf16.mxu0 0
  %3258 = vmatpush1.bf16.msra.mxu0 0
  %3259 = vmatprep.subr.bf16.mxu0 0
  %3260 = vmatpush1.bf16.msra.mxu0 0
  %3261 = vmatprep.subr.bf16.mxu0 0
  %3262 = vmatpush1.bf16.msra.mxu0 0
  %3263 = vmatprep.subr.bf16.mxu0 0
  %3264 = vmatpush1.bf16.msra.mxu0 0
  %3265 = vmatprep.subr.bf16.mxu0 0
  %3266 = vmatpush1.bf16.msra.mxu0 0
  %3267 = vmatprep.subr.bf16.mxu0 0
  %3268 = vmatpush1.bf16.msra.mxu0 0
  %3269 = vmatprep.subr.bf16.mxu0 0
  %3270 = vmatpush1.bf16.msra.mxu0 0
  %3271 = vmatprep.subr.bf16.mxu0 0
  %3272 = vmatpush1.bf16.msra.mxu0 0
  %3273 = vmatprep.mubr.bf16.mxu0 0
  %3274 = vmatmul.mubr.bf16.gmra.mrb[0].mxu0 %v3173
  %v3275 = vpop.f32.mrb[0].mxu0
  %v3276 = vadd.f32 0.0, %v3275
  %v3277 = vpop.f32.mrb[0].mxu0
  %v3278 = vpop.f32.mrb[0].mxu0
  %v3279 = vadd.f32 0.0, %v3278
  %v3280 = vpop.f32.mrb[0].mxu0
  %3281 = vmatprep.mubr.bf16.mxu0 0
  %3282 = vmatmul.mubr.bf16.gmra.mrb[0].mxu0 %v3175
  %v3283 = vpop.f32.mrb[0].mxu0
  %v3284 = vadd.f32 0.0, %v3283
  %v3285 = vpop.f32.mrb[0].mxu0
  %v3286 = vpop.f32.mrb[0].mxu0
  %v3287 = vadd.f32 0.0, %v3286
  %v3288 = vpop.f32.mrb[0].mxu0
  %3289 = vmatprep.mubr.bf16.mxu0 0
  %3290 = vmatmul.mubr.bf16.gmra.mrb[0].mxu0 %v3177
  %v3291 = vpop.f32.mrb[0].mxu0
  %v3292 = vadd.f32 0.0, %v3291
  %v3293 = vpop.f32.mrb[0].mxu0
  %v3294 = vpop.f32.mrb[0].mxu0
  %v3295 = vadd.f32 0.0, %v3294
  %v3296 = vpop.f32.mrb[0].mxu0
  %3297 = vmatprep.mubr.bf16.mxu0 0
  %3298 = vmatmul.mubr.bf16.gmra.mrb[0].mxu0 %v3179
  %v3299 = vpop.f32.mrb[0].mxu0
  %v3300 = vadd.f32 0.0, %v3299
  %v3301 = vpop.f32.mrb[0].mxu0
  %v3302 = vpop.f32.mrb[0].mxu0
  %v3303 = vadd.f32 0.0, %v3302
  %v3304 = vpop.f32.mrb[0].mxu0
  %3305 = vmatprep.mubr.bf16.mxu0 0
  %3306 = vmatmul.mubr.bf16.gmra.mrb[0].mxu0 %v3181
  %v3307 = vpop.f32.mrb[0].mxu0
  %v3308 = vadd.f32 0.0, %v3307
  %v3309 = vpop.f32.mrb[0].mxu0
  %v3310 = vpop.f32.mrb[0].mxu0
  %v3311 = vadd.f32 0.0, %v3310
  %v3312 = vpop.f32.mrb[0].mxu0
  %3313 = vmatprep.mubr.bf16.mxu0 0
  %3314 = vmatmul.mubr.bf16.gmra.mrb[0].mxu0 %v3183
  %v3315 = vpop.f32.mrb[0].mxu0
  %v3316 = vadd.f32 0.0, %v3315
  %v3317 = vpop.f32.mrb[0].mxu0
  %v3318 = vpop.f32.mrb[0].mxu0
  %v3319 = vadd.f32 0.0, %v3318
  %v3320 = vpop.f32.mrb[0].mxu0
  %3321 = vmatprep.mubr.bf16.mxu0 0
  %3322 = vmatmul.mubr.bf16.gmra.mrb[0].mxu0 %v3185
  %v3323 = vpop.f32.mrb[0].mxu0
  %v3324 = vadd.f32 0.0, %v3323
  %v3325 = vpop.f32.mrb[0].mxu0
  %v3326 = vpop.f32.mrb[0].mxu0
  %v3327 = vadd.f32 0.0, %v3326
  %v3328 = vpop.f32.mrb[0].mxu0
  %3329 = vmatprep.mubr.bf16.mxu0 0
  %3330 = vmatmul.mubr.bf16.gmra.mrb[0].mxu0 %v3187
  %v3331 = vpop.f32.mrb[0].mxu0
  %v3332 = vadd.f32 0.0, %v3331
  %v3333 = vpop.f32.mrb[0].mxu0
  %v3334 = vpop.f32.mrb[0].mxu0
  %v3335 = vadd.f32 0.0, %v3334
  %v3336 = vpop.f32.mrb[0].mxu0
  %3337 = vmatprep.mubr.bf16.mxu0 0
  %3338 = vmatmul.mubr.bf16.gmra.mrb[0].mxu0 %v3189
  %v3339 = vpop.f32.mrb[0].mxu0
  %v3340 = vadd.f32 0.0, %v3339
  %v3341 = vpop.f32.mrb[0].mxu0
  %v3342 = vpop.f32.mrb[0].mxu0
  %v3343 = vadd.f32 0.0, %v3342
  %v3344 = vpop.f32.mrb[0].mxu0
  %3345 = vmatprep.mubr.bf16.mxu0 0
  %3346 = vmatmul.mubr.bf16.gmra.mrb[0].mxu0 %v3191
  %v3347 = vpop.f32.mrb[0].mxu0
  %v3348 = vadd.f32 0.0, %v3347
  %v3349 = vpop.f32.mrb[0].mxu0
  %v3350 = vpop.f32.mrb[0].mxu0
  %v3351 = vadd.f32 0.0, %v3350
  %v3352 = vpop.f32.mrb[0].mxu0
  %3353 = vmatprep.mubr.bf16.mxu0 0
  %3354 = vmatmul.mubr.bf16.gmra.mrb[0].mxu0 %v3193
  %v3355 = vpop.f32.mrb[0].mxu0
  %v3356 = vadd.f32 0.0, %v3355
  %v3357 = vpop.f32.mrb[0].mxu0
  %v3358 = vpop.f32.mrb[0].mxu0
  %v3359 = vadd.f32 0.0, %v3358
  %v3360 = vpop.f32.mrb[0].mxu0
  %3361 = vmatprep.mubr.bf16.mxu0 0
  %3362 = vmatmul.mubr.bf16.gmra.mrb[0].mxu0 %v3195
  %v3363 = vpop.f32.mrb[0].mxu0
  %v3364 = vadd.f32 0.0, %v3363
  %v3365 = vpop.f32.mrb[0].mxu0
  %v3366 = vpop.f32.mrb[0].mxu0
  %v3367 = vadd.f32 0.0, %v3366
  %v3368 = vpop.f32.mrb[0].mxu0
  %3369 = vmatprep.mubr.bf16.mxu0 0
  %3370 = vmatmul.mubr.bf16.gmra.mrb[0].mxu0 %v3197
  %v3371 = vpop.f32.mrb[0].mxu0
  %v3372 = vadd.f32 0.0, %v3371
  %v3373 = vpop.f32.mrb[0].mxu0
  %v3374 = vpop.f32.mrb[0].mxu0
  %v3375 = vadd.f32 0.0, %v3374
  %v3376 = vpop.f32.mrb[0].mxu0
  %3377 = vmatprep.mubr.bf16.mxu0 0
  %3378 = vmatmul.mubr.bf16.gmra.mrb[0].mxu0 %v3199
  %v3379 = vpop.f32.mrb[0].mxu0
  %v3380 = vadd.f32 0.0, %v3379
  %v3381 = vpop.f32.mrb[0].mxu0
  %v3382 = vpop.f32.mrb[0].mxu0
  %v3383 = vadd.f32 0.0, %v3382
  %v3384 = vpop.f32.mrb[0].mxu0
  %3385 = vmatprep.mubr.bf16.mxu0 0
  %3386 = vmatmul.mubr.bf16.gmra.mrb[0].mxu0 %v3201
  %v3387 = vpop.f32.mrb[0].mxu0
  %v3388 = vadd.f32 0.0, %v3387
  %v3389 = vpop.f32.mrb[0].mxu0
  %v3390 = vpop.f32.mrb[0].mxu0
  %v3391 = vadd.f32 0.0, %v3390
  %v3392 = vpop.f32.mrb[0].mxu0
  %3393 = vmatprep.mubr.bf16.mxu0 0
  %3394 = vmatmul.mubr.bf16.gmra.mrb[0].mxu0 %v3203
  %v3395 = vpop.f32.mrb[0].mxu0
  %v3396 = vadd.f32 0.0, %v3395
  %v3397 = vpop.f32.mrb[0].mxu0
  %v3398 = vpop.f32.mrb[0].mxu0
  %v3399 = vadd.f32 0.0, %v3398
  %v3400 = vpop.f32.mrb[0].mxu0
  %3401 = vmatprep.mubr.bf16.mxu0 0
  %3402 = vmatmul.mubr.bf16.gmra.mrb[0].mxu0 %v3205
  %v3403 = vpop.f32.mrb[0].mxu0
  %v3404 = vadd.f32 0.0, %v3403
  %v3405 = vpop.f32.mrb[0].mxu0
  %v3406 = vpop.f32.mrb[0].mxu0
  %v3407 = vadd.f32 0.0, %v3406
  %v3408 = vpop.f32.mrb[0].mxu0
  %3409 = vmatprep.mubr.bf16.mxu0 0
  %3410 = vmatmul.mubr.bf16.gmra.mrb[0].mxu0 %v3207
  %v3411 = vpop.f32.mrb[0].mxu0
  %v3412 = vadd.f32 0.0, %v3411
  %v3413 = vpop.f32.mrb[0].mxu0
  %v3414 = vpop.f32.mrb[0].mxu0
  %v3415 = vadd.f32 0.0, %v3414
  %v3416 = vpop.f32.mrb[0].mxu0
  %3417 = vmatprep.mubr.bf16.mxu0 0
  %3418 = vmatmul.mubr.bf16.gmra.mrb[0].mxu0 %v3209
  %v3419 = vpop.f32.mrb[0].mxu0
  %v3420 = vadd.f32 0.0, %v3419
  %v3421 = vpop.f32.mrb[0].mxu0
  %v3422 = vpop.f32.mrb[0].mxu0
  %v3423 = vadd.f32 0.0, %v3422
  %v3424 = vpop.f32.mrb[0].mxu0
  %3425 = vmatprep.mubr.bf16.mxu0 0
  %3426 = vmatmul.mubr.bf16.gmra.mrb[0].mxu0 %v3211
  %v3427 = vpop.f32.mrb[0].mxu0
  %v3428 = vadd.f32 0.0, %v3427
  %v3429 = vpop.f32.mrb[0].mxu0
  %v3430 = vpop.f32.mrb[0].mxu0
  %v3431 = vadd.f32 0.0, %v3430
  %v3432 = vpop.f32.mrb[0].mxu0
  %3433 = vmatprep.mubr.bf16.mxu0 0
  %3434 = vmatmul.mubr.bf16.gmra.mrb[0].mxu0 %v3213
  %v3435 = vpop.f32.mrb[0].mxu0
  %v3436 = vadd.f32 0.0, %v3435
  %v3437 = vpop.f32.mrb[0].mxu0
  %v3438 = vpop.f32.mrb[0].mxu0
  %v3439 = vadd.f32 0.0, %v3438
  %v3440 = vpop.f32.mrb[0].mxu0
  %3441 = vmatprep.mubr.bf16.mxu0 0
  %3442 = vmatmul.mubr.bf16.gmra.mrb[0].mxu0 %v3215
  %v3443 = vpop.f32.mrb[0].mxu0
  %v3444 = vadd.f32 0.0, %v3443
  %v3445 = vpop.f32.mrb[0].mxu0
  %v3446 = vpop.f32.mrb[0].mxu0
  %v3447 = vadd.f32 0.0, %v3446
  %v3448 = vpop.f32.mrb[0].mxu0
  %3449 = vmatprep.mubr.bf16.mxu0 0
  %3450 = vmatmul.mubr.bf16.gmra.mrb[0].mxu0 %v3217
  %v3451 = vpop.f32.mrb[0].mxu0
  %v3452 = vadd.f32 0.0, %v3451
  %v3453 = vpop.f32.mrb[0].mxu0
  %v3454 = vpop.f32.mrb[0].mxu0
  %v3455 = vadd.f32 0.0, %v3454
  %v3456 = vpop.f32.mrb[0].mxu0
  %3457 = vmatprep.mubr.bf16.mxu0 0
  %3458 = vmatmul.mubr.bf16.gmra.mrb[0].mxu0 %v3219
  %v3459 = vpop.f32.mrb[0].mxu0
  %v3460 = vadd.f32 0.0, %v3459
  %v3461 = vpop.f32.mrb[0].mxu0
  %v3462 = vpop.f32.mrb[0].mxu0
  %v3463 = vadd.f32 0.0, %v3462
  %v3464 = vpop.f32.mrb[0].mxu0
  %3465 = vmatprep.mubr.bf16.mxu0 0
  %3466 = vmatmul.mubr.bf16.gmra.mrb[0].mxu0 %v3221
  %v3467 = vpop.f32.mrb[0].mxu0
  %v3468 = vadd.f32 0.0, %v3467
  %v3469 = vpop.f32.mrb[0].mxu0
  %v3470 = vpop.f32.mrb[0].mxu0
  %v3471 = vadd.f32 0.0, %v3470
  %v3472 = vpop.f32.mrb[0].mxu0
  %3473 = vmatprep.mubr.bf16.mxu0 0
  %3474 = vmatmul.mubr.bf16.gmra.mrb[0].mxu0 %v3223
  %v3475 = vpop.f32.mrb[0].mxu0
  %v3476 = vadd.f32 0.0, %v3475
  %v3477 = vpop.f32.mrb[0].mxu0
  %v3478 = vpop.f32.mrb[0].mxu0
  %v3479 = vadd.f32 0.0, %v3478
  %v3480 = vpop.f32.mrb[0].mxu0
  %3481 = vmatprep.mubr.bf16.mxu0 0
  %3482 = vmatmul.mubr.bf16.gmra.mrb[0].mxu0 %v3225
  %v3483 = vpop.f32.mrb[0].mxu0
  %v3484 = vadd.f32 0.0, %v3483
  %v3485 = vpop.f32.mrb[0].mxu0
  %v3486 = vpop.f32.mrb[0].mxu0
  %v3487 = vadd.f32 0.0, %v3486
  %v3488 = vpop.f32.mrb[0].mxu0
  %3489 = vmatprep.mubr.bf16.mxu0 0
  %3490 = vmatmul.mubr.bf16.gmra.mrb[0].mxu0 %v3227
  %v3491 = vpop.f32.mrb[0].mxu0
  %v3492 = vadd.f32 0.0, %v3491
  %v3493 = vpop.f32.mrb[0].mxu0
  %v3494 = vpop.f32.mrb[0].mxu0
  %v3495 = vadd.f32 0.0, %v3494
  %v3496 = vpop.f32.mrb[0].mxu0
  %3497 = vmatprep.mubr.bf16.mxu0 0
  %3498 = vmatmul.mubr.bf16.gmra.mrb[0].mxu0 %v3229
  %v3499 = vpop.f32.mrb[0].mxu0
  %v3500 = vadd.f32 0.0, %v3499
  %v3501 = vpop.f32.mrb[0].mxu0
  %v3502 = vpop.f32.mrb[0].mxu0
  %v3503 = vadd.f32 0.0, %v3502
  %v3504 = vpop.f32.mrb[0].mxu0
  %3505 = vmatprep.mubr.bf16.mxu0 0
  %3506 = vmatmul.mubr.bf16.gmra.mrb[0].mxu0 %v3231
  %v3507 = vpop.f32.mrb[0].mxu0
  %v3508 = vadd.f32 0.0, %v3507
  %v3509 = vpop.f32.mrb[0].mxu0
  %v3510 = vpop.f32.mrb[0].mxu0
  %v3511 = vadd.f32 0.0, %v3510
  %v3512 = vpop.f32.mrb[0].mxu0
  %3513 = vmatprep.mubr.bf16.mxu0 0
  %3514 = vmatmul.mubr.bf16.gmra.mrb[0].mxu0 %v3233
  %v3515 = vpop.f32.mrb[0].mxu0
  %v3516 = vadd.f32 0.0, %v3515
  %v3517 = vpop.f32.mrb[0].mxu0
  %v3518 = vpop.f32.mrb[0].mxu0
  %v3519 = vadd.f32 0.0, %v3518
  %v3520 = vpop.f32.mrb[0].mxu0
  %3521 = vmatprep.mubr.bf16.mxu0 0
  %3522 = vmatmul.mubr.bf16.gmra.mrb[0].mxu0 %v3235
  %v3523 = vpop.f32.mrb[0].mxu0
  %v3524 = vadd.f32 0.0, %v3523
  %v3525 = vpop.f32.mrb[0].mxu0
  %v3526 = vpop.f32.mrb[0].mxu0
  %v3527 = vadd.f32 0.0, %v3526
  %v3528 = vpop.f32.mrb[0].mxu0
  %3529 = vdwg.mxu0
  %v3530 = vld [vmem:[%s2] sm:$0x1]
  %v3531 = vld [vmem:[%s3] sm:$0x1]
  %v3532 = vadd.f32 %v3276, %v3279
  %v3533 = vadd.f32 %v3532, %v3284
  %v3534 = vadd.f32 %v3533, %v3287
  %v3535 = vadd.f32 %v3534, %v3292
  %v3536 = vadd.f32 %v3535, %v3295
  %v3537 = vadd.f32 %v3536, %v3300
  %v3538 = vadd.f32 %v3537, %v3303
  %v3539 = vadd.f32 %v3538, %v3308
  %v3540 = vadd.f32 %v3539, %v3311
  %v3541 = vadd.f32 %v3540, %v3316
  %v3542 = vadd.f32 %v3541, %v3319
  %v3543 = vadd.f32 %v3542, %v3324
  %v3544 = vadd.f32 %v3543, %v3327
  %v3545 = vadd.f32 %v3544, %v3332
  %v3546 = vadd.f32 %v3545, %v3335
  %v3547 = vadd.f32 %v3546, %v3340
  %v3548 = vadd.f32 %v3547, %v3343
  %v3549 = vadd.f32 %v3548, %v3348
  %v3550 = vadd.f32 %v3549, %v3351
  %v3551 = vadd.f32 %v3550, %v3356
  %v3552 = vadd.f32 %v3551, %v3359
  %v3553 = vadd.f32 %v3552, %v3364
  %v3554 = vadd.f32 %v3553, %v3367
  %v3555 = vadd.f32 %v3554, %v3372
  %v3556 = vadd.f32 %v3555, %v3375
  %v3557 = vadd.f32 %v3556, %v3380
  %v3558 = vadd.f32 %v3557, %v3383
  %v3559 = vadd.f32 %v3558, %v3388
  %v3560 = vadd.f32 %v3559, %v3391
  %v3561 = vadd.f32 %v3560, %v3396
  %v3562 = vadd.f32 %v3561, %v3399
  %v3563 = vadd.f32 %v3562, %v3404
  %v3564 = vadd.f32 %v3563, %v3407
  %v3565 = vadd.f32 %v3564, %v3412
  %v3566 = vadd.f32 %v3565, %v3415
  %v3567 = vadd.f32 %v3566, %v3420
  %v3568 = vadd.f32 %v3567, %v3423
  %v3569 = vadd.f32 %v3568, %v3428
  %v3570 = vadd.f32 %v3569, %v3431
  %v3571 = vadd.f32 %v3570, %v3436
  %v3572 = vadd.f32 %v3571, %v3439
  %v3573 = vadd.f32 %v3572, %v3444
  %v3574 = vadd.f32 %v3573, %v3447
  %v3575 = vadd.f32 %v3574, %v3452
  %v3576 = vadd.f32 %v3575, %v3455
  %v3577 = vadd.f32 %v3576, %v3460
  %v3578 = vadd.f32 %v3577, %v3463
  %v3579 = vadd.f32 %v3578, %v3468
  %v3580 = vadd.f32 %v3579, %v3471
  %v3581 = vadd.f32 %v3580, %v3476
  %v3582 = vadd.f32 %v3581, %v3479
  %v3583 = vadd.f32 %v3582, %v3484
  %v3584 = vadd.f32 %v3583, %v3487
  %v3585 = vadd.f32 %v3584, %v3492
  %v3586 = vadd.f32 %v3585, %v3495
  %v3587 = vadd.f32 %v3586, %v3500
  %v3588 = vadd.f32 %v3587, %v3503
  %v3589 = vadd.f32 %v3588, %v3508
  %v3590 = vadd.f32 %v3589, %v3511
  %v3591 = vadd.f32 %v3590, %v3516
  %v3592 = vadd.f32 %v3591, %v3519
  %v3593 = vadd.f32 %v3592, %v3524
  %v3594 = vadd.f32 %v3593, %v3527
  %v3595 = vrot.slane %v3594, 4
  %v3596 = vadd.f32 %v3594, %v3595
  %v3597 = vrot.slane %v3596, 2
  %v3598 = vadd.f32 %v3596, %v3597
  %v3599 = vrot.slane %v3598, 1
  %v3600 = vadd.f32 %v3598, %v3599
  %v3601 = vrcp.pop 512.0
  %v3602 = vmul.f32 %v3600, %v3601
  %v3603 = vsub.f32 %v3276, %v3602
  %v3604 = vsub.f32 %v3279, %v3602
  %v3605 = vsub.f32 %v3284, %v3602
  %v3606 = vsub.f32 %v3287, %v3602
  %v3607 = vsub.f32 %v3292, %v3602
  %v3608 = vsub.f32 %v3295, %v3602
  %v3609 = vsub.f32 %v3300, %v3602
  %v3610 = vsub.f32 %v3303, %v3602
  %v3611 = vsub.f32 %v3308, %v3602
  %v3612 = vsub.f32 %v3311, %v3602
  %v3613 = vsub.f32 %v3316, %v3602
  %v3614 = vsub.f32 %v3319, %v3602
  %v3615 = vsub.f32 %v3324, %v3602
  %v3616 = vsub.f32 %v3327, %v3602
  %v3617 = vsub.f32 %v3332, %v3602
  %v3618 = vsub.f32 %v3335, %v3602
  %v3619 = vsub.f32 %v3340, %v3602
  %v3620 = vsub.f32 %v3343, %v3602
  %v3621 = vsub.f32 %v3348, %v3602
  %v3622 = vsub.f32 %v3351, %v3602
  %v3623 = vsub.f32 %v3356, %v3602
  %v3624 = vsub.f32 %v3359, %v3602
  %v3625 = vsub.f32 %v3364, %v3602
  %v3626 = vsub.f32 %v3367, %v3602
  %v3627 = vsub.f32 %v3372, %v3602
  %v3628 = vsub.f32 %v3375, %v3602
  %v3629 = vsub.f32 %v3380, %v3602
  %v3630 = vsub.f32 %v3383, %v3602
  %v3631 = vsub.f32 %v3388, %v3602
  %v3632 = vsub.f32 %v3391, %v3602
  %v3633 = vsub.f32 %v3396, %v3602
  %v3634 = vsub.f32 %v3399, %v3602
  %v3635 = vsub.f32 %v3404, %v3602
  %v3636 = vsub.f32 %v3407, %v3602
  %v3637 = vsub.f32 %v3412, %v3602
  %v3638 = vsub.f32 %v3415, %v3602
  %v3639 = vsub.f32 %v3420, %v3602
  %v3640 = vsub.f32 %v3423, %v3602
  %v3641 = vsub.f32 %v3428, %v3602
  %v3642 = vsub.f32 %v3431, %v3602
  %v3643 = vsub.f32 %v3436, %v3602
  %v3644 = vsub.f32 %v3439, %v3602
  %v3645 = vsub.f32 %v3444, %v3602
  %v3646 = vsub.f32 %v3447, %v3602
  %v3647 = vsub.f32 %v3452, %v3602
  %v3648 = vsub.f32 %v3455, %v3602
  %v3649 = vsub.f32 %v3460, %v3602
  %v3650 = vsub.f32 %v3463, %v3602
  %v3651 = vsub.f32 %v3468, %v3602
  %v3652 = vsub.f32 %v3471, %v3602
  %v3653 = vsub.f32 %v3476, %v3602
  %v3654 = vsub.f32 %v3479, %v3602
  %v3655 = vsub.f32 %v3484, %v3602
  %v3656 = vsub.f32 %v3487, %v3602
  %v3657 = vsub.f32 %v3492, %v3602
  %v3658 = vsub.f32 %v3495, %v3602
  %v3659 = vsub.f32 %v3500, %v3602
  %v3660 = vsub.f32 %v3503, %v3602
  %v3661 = vsub.f32 %v3508, %v3602
  %v3662 = vsub.f32 %v3511, %v3602
  %v3663 = vsub.f32 %v3516, %v3602
  %v3664 = vsub.f32 %v3519, %v3602
  %v3665 = vsub.f32 %v3524, %v3602
  %v3666 = vsub.f32 %v3527, %v3602
  %v3667 = vmul.f32 %v3603, %v3603
  %v3668 = vmul.f32 %v3604, %v3604
  %v3669 = vmul.f32 %v3605, %v3605
  %v3670 = vmul.f32 %v3606, %v3606
  %v3671 = vmul.f32 %v3607, %v3607
  %v3672 = vmul.f32 %v3608, %v3608
  %v3673 = vmul.f32 %v3609, %v3609
  %v3674 = vmul.f32 %v3610, %v3610
  %v3675 = vmul.f32 %v3611, %v3611
  %v3676 = vmul.f32 %v3612, %v3612
  %v3677 = vmul.f32 %v3613, %v3613
  %v3678 = vmul.f32 %v3614, %v3614
  %v3679 = vmul.f32 %v3615, %v3615
  %v3680 = vmul.f32 %v3616, %v3616
  %v3681 = vmul.f32 %v3617, %v3617
  %v3682 = vmul.f32 %v3618, %v3618
  %v3683 = vmul.f32 %v3619, %v3619
  %v3684 = vmul.f32 %v3620, %v3620
  %v3685 = vmul.f32 %v3621, %v3621
  %v3686 = vmul.f32 %v3622, %v3622
  %v3687 = vmul.f32 %v3623, %v3623
  %v3688 = vmul.f32 %v3624, %v3624
  %v3689 = vmul.f32 %v3625, %v3625
  %v3690 = vmul.f32 %v3626, %v3626
  %v3691 = vmul.f32 %v3627, %v3627
  %v3692 = vmul.f32 %v3628, %v3628
  %v3693 = vmul.f32 %v3629, %v3629
  %v3694 = vmul.f32 %v3630, %v3630
  %v3695 = vmul.f32 %v3631, %v3631
  %v3696 = vmul.f32 %v3632, %v3632
  %v3697 = vmul.f32 %v3633, %v3633
  %v3698 = vmul.f32 %v3634, %v3634
  %v3699 = vmul.f32 %v3635, %v3635
  %v3700 = vmul.f32 %v3636, %v3636
  %v3701 = vmul.f32 %v3637, %v3637
  %v3702 = vmul.f32 %v3638, %v3638
  %v3703 = vmul.f32 %v3639, %v3639
  %v3704 = vmul.f32 %v3640, %v3640
  %v3705 = vmul.f32 %v3641, %v3641
  %v3706 = vmul.f32 %v3642, %v3642
  %v3707 = vmul.f32 %v3643, %v3643
  %v3708 = vmul.f32 %v3644, %v3644
  %v3709 = vmul.f32 %v3645, %v3645
  %v3710 = vmul.f32 %v3646, %v3646
  %v3711 = vmul.f32 %v3647, %v3647
  %v3712 = vmul.f32 %v3648, %v3648
  %v3713 = vmul.f32 %v3649, %v3649
  %v3714 = vmul.f32 %v3650, %v3650
  %v3715 = vmul.f32 %v3651, %v3651
  %v3716 = vmul.f32 %v3652, %v3652
  %v3717 = vmul.f32 %v3653, %v3653
  %v3718 = vmul.f32 %v3654, %v3654
  %v3719 = vmul.f32 %v3655, %v3655
  %v3720 = vmul.f32 %v3656, %v3656
  %v3721 = vmul.f32 %v3657, %v3657
  %v3722 = vmul.f32 %v3658, %v3658
  %v3723 = vmul.f32 %v3659, %v3659
  %v3724 = vmul.f32 %v3660, %v3660
  %v3725 = vmul.f32 %v3661, %v3661
  %v3726 = vmul.f32 %v3662, %v3662
  %v3727 = vmul.f32 %v3663, %v3663
  %v3728 = vmul.f32 %v3664, %v3664
  %v3729 = vmul.f32 %v3665, %v3665
  %v3730 = vmul.f32 %v3666, %v3666
  %v3731 = vadd.f32 %v3667, %v3668
  %v3732 = vadd.f32 %v3731, %v3669
  %v3733 = vadd.f32 %v3732, %v3670
  %v3734 = vadd.f32 %v3733, %v3671
  %v3735 = vadd.f32 %v3734, %v3672
  %v3736 = vadd.f32 %v3735, %v3673
  %v3737 = vadd.f32 %v3736, %v3674
  %v3738 = vadd.f32 %v3737, %v3675
  %v3739 = vadd.f32 %v3738, %v3676
  %v3740 = vadd.f32 %v3739, %v3677
  %v3741 = vadd.f32 %v3740, %v3678
  %v3742 = vadd.f32 %v3741, %v3679
  %v3743 = vadd.f32 %v3742, %v3680
  %v3744 = vadd.f32 %v3743, %v3681
  %v3745 = vadd.f32 %v3744, %v3682
  %v3746 = vadd.f32 %v3745, %v3683
  %v3747 = vadd.f32 %v3746, %v3684
  %v3748 = vadd.f32 %v3747, %v3685
  %v3749 = vadd.f32 %v3748, %v3686
  %v3750 = vadd.f32 %v3749, %v3687
  %v3751 = vadd.f32 %v3750, %v3688
  %v3752 = vadd.f32 %v3751, %v3689
  %v3753 = vadd.f32 %v3752, %v3690
  %v3754 = vadd.f32 %v3753, %v3691
  %v3755 = vadd.f32 %v3754, %v3692
  %v3756 = vadd.f32 %v3755, %v3693
  %v3757 = vadd.f32 %v3756, %v3694
  %v3758 = vadd.f32 %v3757, %v3695
  %v3759 = vadd.f32 %v3758, %v3696
  %v3760 = vadd.f32 %v3759, %v3697
  %v3761 = vadd.f32 %v3760, %v3698
  %v3762 = vadd.f32 %v3761, %v3699
  %v3763 = vadd.f32 %v3762, %v3700
  %v3764 = vadd.f32 %v3763, %v3701
  %v3765 = vadd.f32 %v3764, %v3702
  %v3766 = vadd.f32 %v3765, %v3703
  %v3767 = vadd.f32 %v3766, %v3704
  %v3768 = vadd.f32 %v3767, %v3705
  %v3769 = vadd.f32 %v3768, %v3706
  %v3770 = vadd.f32 %v3769, %v3707
  %v3771 = vadd.f32 %v3770, %v3708
  %v3772 = vadd.f32 %v3771, %v3709
  %v3773 = vadd.f32 %v3772, %v3710
  %v3774 = vadd.f32 %v3773, %v3711
  %v3775 = vadd.f32 %v3774, %v3712
  %v3776 = vadd.f32 %v3775, %v3713
  %v3777 = vadd.f32 %v3776, %v3714
  %v3778 = vadd.f32 %v3777, %v3715
  %v3779 = vadd.f32 %v3778, %v3716
  %v3780 = vadd.f32 %v3779, %v3717
  %v3781 = vadd.f32 %v3780, %v3718
  %v3782 = vadd.f32 %v3781, %v3719
  %v3783 = vadd.f32 %v3782, %v3720
  %v3784 = vadd.f32 %v3783, %v3721
  %v3785 = vadd.f32 %v3784, %v3722
  %v3786 = vadd.f32 %v3785, %v3723
  %v3787 = vadd.f32 %v3786, %v3724
  %v3788 = vadd.f32 %v3787, %v3725
  %v3789 = vadd.f32 %v3788, %v3726
  %v3790 = vadd.f32 %v3789, %v3727
  %v3791 = vadd.f32 %v3790, %v3728
  %v3792 = vadd.f32 %v3791, %v3729
  %v3793 = vadd.f32 %v3792, %v3730
  %v3794 = vrot.slane %v3793, 4
  %v3795 = vadd.f32 %v3793, %v3794
  %v3796 = vrot.slane %v3795, 2
  %v3797 = vadd.f32 %v3795, %v3796
  %v3798 = vrot.slane %v3797, 1
  %v3799 = vadd.f32 %v3797, %v3798
  %v3800 = vmul.f32 %v3799, %v3601
  %v3801 = vadd.f32 %v3800, 1e-05
  %v3802 = vrsqrt.pop %v3801
  %v3803 = vmul.f32 %v3530, %v3802
  %v3804 = vmul.f32 %v3602, %v3803
  %v3805 = vsub.f32 %v3531, %v3804
  %v3807 = vlaneseq
  %v3808 = vshrl.u32 %v3807, 7
  %v3809 = vsub.s32 0, %v3808
  %v3810 = vrot.slane %v3803, %v3809
  %v3812 = vmul.f32 %v3276, %v3810
  %v3813 = vmul.f32 %v3279, %v3810
  %v3814 = vmul.f32 %v3284, %v3810
  %v3815 = vmul.f32 %v3287, %v3810
  %v3816 = vmul.f32 %v3292, %v3810
  %v3817 = vmul.f32 %v3295, %v3810
  %v3818 = vmul.f32 %v3300, %v3810
  %v3819 = vmul.f32 %v3303, %v3810
  %v3820 = vmul.f32 %v3308, %v3810
  %v3821 = vmul.f32 %v3311, %v3810
  %v3822 = vmul.f32 %v3316, %v3810
  %v3823 = vmul.f32 %v3319, %v3810
  %v3824 = vmul.f32 %v3324, %v3810
  %v3825 = vmul.f32 %v3327, %v3810
  %v3826 = vmul.f32 %v3332, %v3810
  %v3827 = vmul.f32 %v3335, %v3810
  %v3828 = vmul.f32 %v3340, %v3810
  %v3829 = vmul.f32 %v3343, %v3810
  %v3830 = vmul.f32 %v3348, %v3810
  %v3831 = vmul.f32 %v3351, %v3810
  %v3832 = vmul.f32 %v3356, %v3810
  %v3833 = vmul.f32 %v3359, %v3810
  %v3834 = vmul.f32 %v3364, %v3810
  %v3835 = vmul.f32 %v3367, %v3810
  %v3836 = vmul.f32 %v3372, %v3810
  %v3837 = vmul.f32 %v3375, %v3810
  %v3838 = vmul.f32 %v3380, %v3810
  %v3839 = vmul.f32 %v3383, %v3810
  %v3840 = vmul.f32 %v3388, %v3810
  %v3841 = vmul.f32 %v3391, %v3810
  %v3842 = vmul.f32 %v3396, %v3810
  %v3843 = vmul.f32 %v3399, %v3810
  %v3844 = vmul.f32 %v3404, %v3810
  %v3845 = vmul.f32 %v3407, %v3810
  %v3846 = vmul.f32 %v3412, %v3810
  %v3847 = vmul.f32 %v3415, %v3810
  %v3848 = vmul.f32 %v3420, %v3810
  %v3849 = vmul.f32 %v3423, %v3810
  %v3850 = vmul.f32 %v3428, %v3810
  %v3851 = vmul.f32 %v3431, %v3810
  %v3852 = vmul.f32 %v3436, %v3810
  %v3853 = vmul.f32 %v3439, %v3810
  %v3854 = vmul.f32 %v3444, %v3810
  %v3855 = vmul.f32 %v3447, %v3810
  %v3856 = vmul.f32 %v3452, %v3810
  %v3857 = vmul.f32 %v3455, %v3810
  %v3858 = vmul.f32 %v3460, %v3810
  %v3859 = vmul.f32 %v3463, %v3810
  %v3860 = vmul.f32 %v3468, %v3810
  %v3861 = vmul.f32 %v3471, %v3810
  %v3862 = vmul.f32 %v3476, %v3810
  %v3863 = vmul.f32 %v3479, %v3810
  %v3864 = vmul.f32 %v3484, %v3810
  %v3865 = vmul.f32 %v3487, %v3810
  %v3866 = vmul.f32 %v3492, %v3810
  %v3867 = vmul.f32 %v3495, %v3810
  %v3868 = vmul.f32 %v3500, %v3810
  %v3869 = vmul.f32 %v3503, %v3810
  %v3870 = vmul.f32 %v3508, %v3810
  %v3871 = vmul.f32 %v3511, %v3810
  %v3872 = vmul.f32 %v3516, %v3810
  %v3873 = vmul.f32 %v3519, %v3810
  %v3874 = vmul.f32 %v3524, %v3810
  %v3875 = vmul.f32 %v3527, %v3810
  %v3877 = vlaneseq
  %v3878 = vshrl.u32 %v3877, 7
  %v3879 = vsub.s32 0, %v3878
  %v3880 = vrot.slane %v3805, %v3879
  %v3882 = vadd.f32 %v3812, %v3880
  %v3883 = vadd.f32 %v3813, %v3880
  %v3884 = vadd.f32 %v3814, %v3880
  %v3885 = vadd.f32 %v3815, %v3880
  %v3886 = vadd.f32 %v3816, %v3880
  %v3887 = vadd.f32 %v3817, %v3880
  %v3888 = vadd.f32 %v3818, %v3880
  %v3889 = vadd.f32 %v3819, %v3880
  %v3890 = vadd.f32 %v3820, %v3880
  %v3891 = vadd.f32 %v3821, %v3880
  %v3892 = vadd.f32 %v3822, %v3880
  %v3893 = vadd.f32 %v3823, %v3880
  %v3894 = vadd.f32 %v3824, %v3880
  %v3895 = vadd.f32 %v3825, %v3880
  %v3896 = vadd.f32 %v3826, %v3880
  %v3897 = vadd.f32 %v3827, %v3880
  %v3898 = vadd.f32 %v3828, %v3880
  %v3899 = vadd.f32 %v3829, %v3880
  %v3900 = vadd.f32 %v3830, %v3880
  %v3901 = vadd.f32 %v3831, %v3880
  %v3902 = vadd.f32 %v3832, %v3880
  %v3903 = vadd.f32 %v3833, %v3880
  %v3904 = vadd.f32 %v3834, %v3880
  %v3905 = vadd.f32 %v3835, %v3880
  %v3906 = vadd.f32 %v3836, %v3880
  %v3907 = vadd.f32 %v3837, %v3880
  %v3908 = vadd.f32 %v3838, %v3880
  %v3909 = vadd.f32 %v3839, %v3880
  %v3910 = vadd.f32 %v3840, %v3880
  %v3911 = vadd.f32 %v3841, %v3880
  %v3912 = vadd.f32 %v3842, %v3880
  %v3913 = vadd.f32 %v3843, %v3880
  %v3914 = vadd.f32 %v3844, %v3880
  %v3915 = vadd.f32 %v3845, %v3880
  %v3916 = vadd.f32 %v3846, %v3880
  %v3917 = vadd.f32 %v3847, %v3880
  %v3918 = vadd.f32 %v3848, %v3880
  %v3919 = vadd.f32 %v3849, %v3880
  %v3920 = vadd.f32 %v3850, %v3880
  %v3921 = vadd.f32 %v3851, %v3880
  %v3922 = vadd.f32 %v3852, %v3880
  %v3923 = vadd.f32 %v3853, %v3880
  %v3924 = vadd.f32 %v3854, %v3880
  %v3925 = vadd.f32 %v3855, %v3880
  %v3926 = vadd.f32 %v3856, %v3880
  %v3927 = vadd.f32 %v3857, %v3880
  %v3928 = vadd.f32 %v3858, %v3880
  %v3929 = vadd.f32 %v3859, %v3880
  %v3930 = vadd.f32 %v3860, %v3880
  %v3931 = vadd.f32 %v3861, %v3880
  %v3932 = vadd.f32 %v3862, %v3880
  %v3933 = vadd.f32 %v3863, %v3880
  %v3934 = vadd.f32 %v3864, %v3880
  %v3935 = vadd.f32 %v3865, %v3880
  %v3936 = vadd.f32 %v3866, %v3880
  %v3937 = vadd.f32 %v3867, %v3880
  %v3938 = vadd.f32 %v3868, %v3880
  %v3939 = vadd.f32 %v3869, %v3880
  %v3940 = vadd.f32 %v3870, %v3880
  %v3941 = vadd.f32 %v3871, %v3880
  %v3942 = vadd.f32 %v3872, %v3880
  %v3943 = vadd.f32 %v3873, %v3880
  %v3944 = vadd.f32 %v3874, %v3880
  %v3945 = vadd.f32 %v3875, %v3880
  %v3946 = vmax.f32 %v3882, 0.0
  %v3947 = vmax.f32 %v3883, 0.0
  %v3948 = vmax.f32 %v3884, 0.0
  %v3949 = vmax.f32 %v3885, 0.0
  %v3950 = vmax.f32 %v3886, 0.0
  %v3951 = vmax.f32 %v3887, 0.0
  %v3952 = vmax.f32 %v3888, 0.0
  %v3953 = vmax.f32 %v3889, 0.0
  %v3954 = vmax.f32 %v3890, 0.0
  %v3955 = vmax.f32 %v3891, 0.0
  %v3956 = vmax.f32 %v3892, 0.0
  %v3957 = vmax.f32 %v3893, 0.0
  %v3958 = vmax.f32 %v3894, 0.0
  %v3959 = vmax.f32 %v3895, 0.0
  %v3960 = vmax.f32 %v3896, 0.0
  %v3961 = vmax.f32 %v3897, 0.0
  %v3962 = vmax.f32 %v3898, 0.0
  %v3963 = vmax.f32 %v3899, 0.0
  %v3964 = vmax.f32 %v3900, 0.0
  %v3965 = vmax.f32 %v3901, 0.0
  %v3966 = vmax.f32 %v3902, 0.0
  %v3967 = vmax.f32 %v3903, 0.0
  %v3968 = vmax.f32 %v3904, 0.0
  %v3969 = vmax.f32 %v3905, 0.0
  %v3970 = vmax.f32 %v3906, 0.0
  %v3971 = vmax.f32 %v3907, 0.0
  %v3972 = vmax.f32 %v3908, 0.0
  %v3973 = vmax.f32 %v3909, 0.0
  %v3974 = vmax.f32 %v3910, 0.0
  %v3975 = vmax.f32 %v3911, 0.0
  %v3976 = vmax.f32 %v3912, 0.0
  %v3977 = vmax.f32 %v3913, 0.0
  %v3978 = vmax.f32 %v3914, 0.0
  %v3979 = vmax.f32 %v3915, 0.0
  %v3980 = vmax.f32 %v3916, 0.0
  %v3981 = vmax.f32 %v3917, 0.0
  %v3982 = vmax.f32 %v3918, 0.0
  %v3983 = vmax.f32 %v3919, 0.0
  %v3984 = vmax.f32 %v3920, 0.0
  %v3985 = vmax.f32 %v3921, 0.0
  %v3986 = vmax.f32 %v3922, 0.0
  %v3987 = vmax.f32 %v3923, 0.0
  %v3988 = vmax.f32 %v3924, 0.0
  %v3989 = vmax.f32 %v3925, 0.0
  %v3990 = vmax.f32 %v3926, 0.0
  %v3991 = vmax.f32 %v3927, 0.0
  %v3992 = vmax.f32 %v3928, 0.0
  %v3993 = vmax.f32 %v3929, 0.0
  %v3994 = vmax.f32 %v3930, 0.0
  %v3995 = vmax.f32 %v3931, 0.0
  %v3996 = vmax.f32 %v3932, 0.0
  %v3997 = vmax.f32 %v3933, 0.0
  %v3998 = vmax.f32 %v3934, 0.0
  %v3999 = vmax.f32 %v3935, 0.0
  %v4000 = vmax.f32 %v3936, 0.0
  %v4001 = vmax.f32 %v3937, 0.0
  %v4002 = vmax.f32 %v3938, 0.0
  %v4003 = vmax.f32 %v3939, 0.0
  %v4004 = vmax.f32 %v3940, 0.0
  %v4005 = vmax.f32 %v3941, 0.0
  %v4006 = vmax.f32 %v3942, 0.0
  %v4007 = vmax.f32 %v3943, 0.0
  %v4008 = vmax.f32 %v3944, 0.0
  %v4009 = vmax.f32 %v3945, 0.0
  %v4010 = vpack.c.bf16 %v3947, %v3946
  %v4011 = vpack.c.bf16 %v3949, %v3948
  %v4012 = vpack.c.bf16 %v3951, %v3950
  %v4013 = vpack.c.bf16 %v3953, %v3952
  %v4014 = vpack.c.bf16 %v3955, %v3954
  %v4015 = vpack.c.bf16 %v3957, %v3956
  %v4016 = vpack.c.bf16 %v3959, %v3958
  %v4017 = vpack.c.bf16 %v3961, %v3960
  %v4018 = vpack.c.bf16 %v3963, %v3962
  %v4019 = vpack.c.bf16 %v3965, %v3964
  %v4020 = vpack.c.bf16 %v3967, %v3966
  %v4021 = vpack.c.bf16 %v3969, %v3968
  %v4022 = vpack.c.bf16 %v3971, %v3970
  %v4023 = vpack.c.bf16 %v3973, %v3972
  %v4024 = vpack.c.bf16 %v3975, %v3974
  %v4025 = vpack.c.bf16 %v3977, %v3976
  %v4026 = vpack.c.bf16 %v3979, %v3978
  %v4027 = vpack.c.bf16 %v3981, %v3980
  %v4028 = vpack.c.bf16 %v3983, %v3982
  %v4029 = vpack.c.bf16 %v3985, %v3984
  %v4030 = vpack.c.bf16 %v3987, %v3986
  %v4031 = vpack.c.bf16 %v3989, %v3988
  %v4032 = vpack.c.bf16 %v3991, %v3990
  %v4033 = vpack.c.bf16 %v3993, %v3992
  %v4034 = vpack.c.bf16 %v3995, %v3994
  %v4035 = vpack.c.bf16 %v3997, %v3996
  %v4036 = vpack.c.bf16 %v3999, %v3998
  %v4037 = vpack.c.bf16 %v4001, %v4000
  %v4038 = vpack.c.bf16 %v4003, %v4002
  %v4039 = vpack.c.bf16 %v4005, %v4004
  %v4040 = vpack.c.bf16 %v4007, %v4006
  %v4041 = vpack.c.bf16 %v4009, %v4008
  %v4074 = vunpack.c.l.b16 %v4010
  %v4075 = vunpack.c.h.b16 %v4010
  %v4076 = vunpack.c.l.b16 %v4011
  %v4077 = vunpack.c.h.b16 %v4011
  %v4078 = vunpack.c.l.b16 %v4012
  %v4079 = vunpack.c.h.b16 %v4012
  %v4080 = vunpack.c.l.b16 %v4013
  %v4081 = vunpack.c.h.b16 %v4013
  %v4082 = vunpack.c.l.b16 %v4014
  %v4083 = vunpack.c.h.b16 %v4014
  %v4084 = vunpack.c.l.b16 %v4015
  %v4085 = vunpack.c.h.b16 %v4015
  %v4086 = vunpack.c.l.b16 %v4016
  %v4087 = vunpack.c.h.b16 %v4016
  %v4088 = vunpack.c.l.b16 %v4017
  %v4089 = vunpack.c.h.b16 %v4017
  %v4090 = vunpack.c.l.b16 %v4018
  %v4091 = vunpack.c.h.b16 %v4018
  %v4092 = vunpack.c.l.b16 %v4019
  %v4093 = vunpack.c.h.b16 %v4019
  %v4094 = vunpack.c.l.b16 %v4020
  %v4095 = vunpack.c.h.b16 %v4020
  %v4096 = vunpack.c.l.b16 %v4021
  %v4097 = vunpack.c.h.b16 %v4021
  %v4098 = vunpack.c.l.b16 %v4022
  %v4099 = vunpack.c.h.b16 %v4022
  %v4100 = vunpack.c.l.b16 %v4023
  %v4101 = vunpack.c.h.b16 %v4023
  %v4102 = vunpack.c.l.b16 %v4024
  %v4103 = vunpack.c.h.b16 %v4024
  %v4104 = vunpack.c.l.b16 %v4025
  %v4105 = vunpack.c.h.b16 %v4025
  %v4106 = vunpack.c.l.b16 %v4026
  %v4107 = vunpack.c.h.b16 %v4026
  %v4108 = vunpack.c.l.b16 %v4027
  %v4109 = vunpack.c.h.b16 %v4027
  %v4110 = vunpack.c.l.b16 %v4028
  %v4111 = vunpack.c.h.b16 %v4028
  %v4112 = vunpack.c.l.b16 %v4029
  %v4113 = vunpack.c.h.b16 %v4029
  %v4114 = vunpack.c.l.b16 %v4030
  %v4115 = vunpack.c.h.b16 %v4030
  %v4116 = vunpack.c.l.b16 %v4031
  %v4117 = vunpack.c.h.b16 %v4031
  %v4118 = vunpack.c.l.b16 %v4032
  %v4119 = vunpack.c.h.b16 %v4032
  %v4120 = vunpack.c.l.b16 %v4033
  %v4121 = vunpack.c.h.b16 %v4033
  %v4122 = vunpack.c.l.b16 %v4034
  %v4123 = vunpack.c.h.b16 %v4034
  %v4124 = vunpack.c.l.b16 %v4035
  %v4125 = vunpack.c.h.b16 %v4035
  %v4126 = vunpack.c.l.b16 %v4036
  %v4127 = vunpack.c.h.b16 %v4036
  %v4128 = vunpack.c.l.b16 %v4037
  %v4129 = vunpack.c.h.b16 %v4037
  %v4130 = vunpack.c.l.b16 %v4038
  %v4131 = vunpack.c.h.b16 %v4038
  %v4132 = vunpack.c.l.b16 %v4039
  %v4133 = vunpack.c.h.b16 %v4039
  %v4134 = vunpack.c.l.b16 %v4040
  %v4135 = vunpack.c.h.b16 %v4040
  %v4136 = vunpack.c.l.b16 %v4041
  %v4137 = vunpack.c.h.b16 %v4041
  %v4138 = vpack.c.b16 %v4074, %v4074
  %v4139 = vpack.c.b16 %v4075, %v4075
  %v4140 = vpack.c.b16 %v4076, %v4076
  %v4141 = vpack.c.b16 %v4077, %v4077
  %v4142 = vpack.c.b16 %v4078, %v4078
  %v4143 = vpack.c.b16 %v4079, %v4079
  %v4144 = vpack.c.b16 %v4080, %v4080
  %v4145 = vpack.c.b16 %v4081, %v4081
  %v4146 = vpack.c.b16 %v4082, %v4082
  %v4147 = vpack.c.b16 %v4083, %v4083
  %v4148 = vpack.c.b16 %v4084, %v4084
  %v4149 = vpack.c.b16 %v4085, %v4085
  %v4150 = vpack.c.b16 %v4086, %v4086
  %v4151 = vpack.c.b16 %v4087, %v4087
  %v4152 = vpack.c.b16 %v4088, %v4088
  %v4153 = vpack.c.b16 %v4089, %v4089
  %v4154 = vpack.c.b16 %v4090, %v4090
  %v4155 = vpack.c.b16 %v4091, %v4091
  %v4156 = vpack.c.b16 %v4092, %v4092
  %v4157 = vpack.c.b16 %v4093, %v4093
  %v4158 = vpack.c.b16 %v4094, %v4094
  %v4159 = vpack.c.b16 %v4095, %v4095
  %v4160 = vpack.c.b16 %v4096, %v4096
  %v4161 = vpack.c.b16 %v4097, %v4097
  %v4162 = vpack.c.b16 %v4098, %v4098
  %v4163 = vpack.c.b16 %v4099, %v4099
  %v4164 = vpack.c.b16 %v4100, %v4100
  %v4165 = vpack.c.b16 %v4101, %v4101
  %v4166 = vpack.c.b16 %v4102, %v4102
  %v4167 = vpack.c.b16 %v4103, %v4103
  %v4168 = vpack.c.b16 %v4104, %v4104
  %v4169 = vpack.c.b16 %v4105, %v4105
  %v4170 = vpack.c.b16 %v4106, %v4106
  %v4171 = vpack.c.b16 %v4107, %v4107
  %v4172 = vpack.c.b16 %v4108, %v4108
  %v4173 = vpack.c.b16 %v4109, %v4109
  %v4174 = vpack.c.b16 %v4110, %v4110
  %v4175 = vpack.c.b16 %v4111, %v4111
  %v4176 = vpack.c.b16 %v4112, %v4112
  %v4177 = vpack.c.b16 %v4113, %v4113
  %v4178 = vpack.c.b16 %v4114, %v4114
  %v4179 = vpack.c.b16 %v4115, %v4115
  %v4180 = vpack.c.b16 %v4116, %v4116
  %v4181 = vpack.c.b16 %v4117, %v4117
  %v4182 = vpack.c.b16 %v4118, %v4118
  %v4183 = vpack.c.b16 %v4119, %v4119
  %v4184 = vpack.c.b16 %v4120, %v4120
  %v4185 = vpack.c.b16 %v4121, %v4121
  %v4186 = vpack.c.b16 %v4122, %v4122
  %v4187 = vpack.c.b16 %v4123, %v4123
  %v4188 = vpack.c.b16 %v4124, %v4124
  %v4189 = vpack.c.b16 %v4125, %v4125
  %v4190 = vpack.c.b16 %v4126, %v4126
  %v4191 = vpack.c.b16 %v4127, %v4127
  %v4192 = vpack.c.b16 %v4128, %v4128
  %v4193 = vpack.c.b16 %v4129, %v4129
  %v4194 = vpack.c.b16 %v4130, %v4130
  %v4195 = vpack.c.b16 %v4131, %v4131
  %v4196 = vpack.c.b16 %v4132, %v4132
  %v4197 = vpack.c.b16 %v4133, %v4133
  %v4198 = vpack.c.b16 %v4134, %v4134
  %v4199 = vpack.c.b16 %v4135, %v4135
  %v4200 = vpack.c.b16 %v4136, %v4136
  %v4201 = vpack.c.b16 %v4137, %v4137
  %v4203 = vshrl.u32 %v4138, 16
  %v4205 = vrot.slane %v4203, 7
  %v4206 = vshll.u32 %v4138, 16
  %v4208 = vor.u32 %v4205, %v4206
  %v4209 = vrot.slane %v4205, 4
  %v4211 = vshrl.u32 %v4139, 16
  %v4213 = vrot.slane %v4211, 7
  %v4214 = vshll.u32 %v4139, 16
  %v4216 = vor.u32 %v4213, %v4214
  %v4217 = vsel %vm311, %v4209, %v4216
  %v4218 = vrot.slane %v4213, 4
  %v4220 = vshrl.u32 %v4140, 16
  %v4222 = vrot.slane %v4220, 7
  %v4223 = vshll.u32 %v4140, 16
  %v4225 = vor.u32 %v4222, %v4223
  %v4226 = vrot.slane %v4222, 4
  %v4228 = vshrl.u32 %v4141, 16
  %v4230 = vrot.slane %v4228, 7
  %v4231 = vshll.u32 %v4141, 16
  %v4233 = vor.u32 %v4230, %v4231
  %v4234 = vsel %vm311, %v4226, %v4233
  %v4235 = vrot.slane %v4230, 4
  %v4237 = vshrl.u32 %v4142, 16
  %v4239 = vrot.slane %v4237, 7
  %v4240 = vshll.u32 %v4142, 16
  %v4242 = vor.u32 %v4239, %v4240
  %v4243 = vrot.slane %v4239, 4
  %v4245 = vshrl.u32 %v4143, 16
  %v4247 = vrot.slane %v4245, 7
  %v4248 = vshll.u32 %v4143, 16
  %v4250 = vor.u32 %v4247, %v4248
  %v4251 = vsel %vm311, %v4243, %v4250
  %v4252 = vrot.slane %v4247, 4
  %v4254 = vshrl.u32 %v4144, 16
  %v4256 = vrot.slane %v4254, 7
  %v4257 = vshll.u32 %v4144, 16
  %v4259 = vor.u32 %v4256, %v4257
  %v4260 = vrot.slane %v4256, 4
  %v4262 = vshrl.u32 %v4145, 16
  %v4264 = vrot.slane %v4262, 7
  %v4265 = vshll.u32 %v4145, 16
  %v4267 = vor.u32 %v4264, %v4265
  %v4268 = vsel %vm311, %v4260, %v4267
  %v4269 = vrot.slane %v4264, 4
  %v4271 = vshrl.u32 %v4146, 16
  %v4273 = vrot.slane %v4271, 7
  %v4274 = vshll.u32 %v4146, 16
  %v4276 = vor.u32 %v4273, %v4274
  %v4277 = vrot.slane %v4273, 4
  %v4279 = vshrl.u32 %v4147, 16
  %v4281 = vrot.slane %v4279, 7
  %v4282 = vshll.u32 %v4147, 16
  %v4284 = vor.u32 %v4281, %v4282
  %v4285 = vsel %vm311, %v4277, %v4284
  %v4286 = vrot.slane %v4281, 4
  %v4288 = vshrl.u32 %v4148, 16
  %v4290 = vrot.slane %v4288, 7
  %v4291 = vshll.u32 %v4148, 16
  %v4293 = vor.u32 %v4290, %v4291
  %v4294 = vrot.slane %v4290, 4
  %v4296 = vshrl.u32 %v4149, 16
  %v4298 = vrot.slane %v4296, 7
  %v4299 = vshll.u32 %v4149, 16
  %v4301 = vor.u32 %v4298, %v4299
  %v4302 = vsel %vm311, %v4294, %v4301
  %v4303 = vrot.slane %v4298, 4
  %v4305 = vshrl.u32 %v4150, 16
  %v4307 = vrot.slane %v4305, 7
  %v4308 = vshll.u32 %v4150, 16
  %v4310 = vor.u32 %v4307, %v4308
  %v4311 = vrot.slane %v4307, 4
  %v4313 = vshrl.u32 %v4151, 16
  %v4315 = vrot.slane %v4313, 7
  %v4316 = vshll.u32 %v4151, 16
  %v4318 = vor.u32 %v4315, %v4316
  %v4319 = vsel %vm311, %v4311, %v4318
  %v4320 = vrot.slane %v4315, 4
  %v4322 = vshrl.u32 %v4152, 16
  %v4324 = vrot.slane %v4322, 7
  %v4325 = vshll.u32 %v4152, 16
  %v4327 = vor.u32 %v4324, %v4325
  %v4328 = vrot.slane %v4324, 4
  %v4330 = vshrl.u32 %v4153, 16
  %v4332 = vrot.slane %v4330, 7
  %v4333 = vshll.u32 %v4153, 16
  %v4335 = vor.u32 %v4332, %v4333
  %v4336 = vsel %vm311, %v4328, %v4335
  %v4337 = vrot.slane %v4332, 4
  %v4339 = vshrl.u32 %v4154, 16
  %v4341 = vrot.slane %v4339, 7
  %v4342 = vshll.u32 %v4154, 16
  %v4344 = vor.u32 %v4341, %v4342
  %v4345 = vrot.slane %v4341, 4
  %v4347 = vshrl.u32 %v4155, 16
  %v4349 = vrot.slane %v4347, 7
  %v4350 = vshll.u32 %v4155, 16
  %v4352 = vor.u32 %v4349, %v4350
  %v4353 = vsel %vm311, %v4345, %v4352
  %v4354 = vrot.slane %v4349, 4
  %v4356 = vshrl.u32 %v4156, 16
  %v4358 = vrot.slane %v4356, 7
  %v4359 = vshll.u32 %v4156, 16
  %v4361 = vor.u32 %v4358, %v4359
  %v4362 = vrot.slane %v4358, 4
  %v4364 = vshrl.u32 %v4157, 16
  %v4366 = vrot.slane %v4364, 7
  %v4367 = vshll.u32 %v4157, 16
  %v4369 = vor.u32 %v4366, %v4367
  %v4370 = vsel %vm311, %v4362, %v4369
  %v4371 = vrot.slane %v4366, 4
  %v4373 = vshrl.u32 %v4158, 16
  %v4375 = vrot.slane %v4373, 7
  %v4376 = vshll.u32 %v4158, 16
  %v4378 = vor.u32 %v4375, %v4376
  %v4379 = vrot.slane %v4375, 4
  %v4381 = vshrl.u32 %v4159, 16
  %v4383 = vrot.slane %v4381, 7
  %v4384 = vshll.u32 %v4159, 16
  %v4386 = vor.u32 %v4383, %v4384
  %v4387 = vsel %vm311, %v4379, %v4386
  %v4388 = vrot.slane %v4383, 4
  %v4390 = vshrl.u32 %v4160, 16
  %v4392 = vrot.slane %v4390, 7
  %v4393 = vshll.u32 %v4160, 16
  %v4395 = vor.u32 %v4392, %v4393
  %v4396 = vrot.slane %v4392, 4
  %v4398 = vshrl.u32 %v4161, 16
  %v4400 = vrot.slane %v4398, 7
  %v4401 = vshll.u32 %v4161, 16
  %v4403 = vor.u32 %v4400, %v4401
  %v4404 = vsel %vm311, %v4396, %v4403
  %v4405 = vrot.slane %v4400, 4
  %v4407 = vshrl.u32 %v4162, 16
  %v4409 = vrot.slane %v4407, 7
  %v4410 = vshll.u32 %v4162, 16
  %v4412 = vor.u32 %v4409, %v4410
  %v4413 = vrot.slane %v4409, 4
  %v4415 = vshrl.u32 %v4163, 16
  %v4417 = vrot.slane %v4415, 7
  %v4418 = vshll.u32 %v4163, 16
  %v4420 = vor.u32 %v4417, %v4418
  %v4421 = vsel %vm311, %v4413, %v4420
  %v4422 = vrot.slane %v4417, 4
  %v4424 = vshrl.u32 %v4164, 16
  %v4426 = vrot.slane %v4424, 7
  %v4427 = vshll.u32 %v4164, 16
  %v4429 = vor.u32 %v4426, %v4427
  %v4430 = vrot.slane %v4426, 4
  %v4432 = vshrl.u32 %v4165, 16
  %v4434 = vrot.slane %v4432, 7
  %v4435 = vshll.u32 %v4165, 16
  %v4437 = vor.u32 %v4434, %v4435
  %v4438 = vsel %vm311, %v4430, %v4437
  %v4439 = vrot.slane %v4434, 4
  %v4441 = vshrl.u32 %v4166, 16
  %v4443 = vrot.slane %v4441, 7
  %v4444 = vshll.u32 %v4166, 16
  %v4446 = vor.u32 %v4443, %v4444
  %v4447 = vrot.slane %v4443, 4
  %v4449 = vshrl.u32 %v4167, 16
  %v4451 = vrot.slane %v4449, 7
  %v4452 = vshll.u32 %v4167, 16
  %v4454 = vor.u32 %v4451, %v4452
  %v4455 = vsel %vm311, %v4447, %v4454
  %v4456 = vrot.slane %v4451, 4
  %v4458 = vshrl.u32 %v4168, 16
  %v4460 = vrot.slane %v4458, 7
  %v4461 = vshll.u32 %v4168, 16
  %v4463 = vor.u32 %v4460, %v4461
  %v4464 = vrot.slane %v4460, 4
  %v4466 = vshrl.u32 %v4169, 16
  %v4468 = vrot.slane %v4466, 7
  %v4469 = vshll.u32 %v4169, 16
  %v4471 = vor.u32 %v4468, %v4469
  %v4472 = vsel %vm311, %v4464, %v4471
  %v4473 = vrot.slane %v4468, 4
  %v4475 = vshrl.u32 %v4170, 16
  %v4477 = vrot.slane %v4475, 7
  %v4478 = vshll.u32 %v4170, 16
  %v4480 = vor.u32 %v4477, %v4478
  %v4481 = vrot.slane %v4477, 4
  %v4483 = vshrl.u32 %v4171, 16
  %v4485 = vrot.slane %v4483, 7
  %v4486 = vshll.u32 %v4171, 16
  %v4488 = vor.u32 %v4485, %v4486
  %v4489 = vsel %vm311, %v4481, %v4488
  %v4490 = vrot.slane %v4485, 4
  %v4492 = vshrl.u32 %v4172, 16
  %v4494 = vrot.slane %v4492, 7
  %v4495 = vshll.u32 %v4172, 16
  %v4497 = vor.u32 %v4494, %v4495
  %v4498 = vrot.slane %v4494, 4
  %v4500 = vshrl.u32 %v4173, 16
  %v4502 = vrot.slane %v4500, 7
  %v4503 = vshll.u32 %v4173, 16
  %v4505 = vor.u32 %v4502, %v4503
  %v4506 = vsel %vm311, %v4498, %v4505
  %v4507 = vrot.slane %v4502, 4
  %v4509 = vshrl.u32 %v4174, 16
  %v4511 = vrot.slane %v4509, 7
  %v4512 = vshll.u32 %v4174, 16
  %v4514 = vor.u32 %v4511, %v4512
  %v4515 = vrot.slane %v4511, 4
  %v4517 = vshrl.u32 %v4175, 16
  %v4519 = vrot.slane %v4517, 7
  %v4520 = vshll.u32 %v4175, 16
  %v4522 = vor.u32 %v4519, %v4520
  %v4523 = vsel %vm311, %v4515, %v4522
  %v4524 = vrot.slane %v4519, 4
  %v4526 = vshrl.u32 %v4176, 16
  %v4528 = vrot.slane %v4526, 7
  %v4529 = vshll.u32 %v4176, 16
  %v4531 = vor.u32 %v4528, %v4529
  %v4532 = vrot.slane %v4528, 4
  %v4534 = vshrl.u32 %v4177, 16
  %v4536 = vrot.slane %v4534, 7
  %v4537 = vshll.u32 %v4177, 16
  %v4539 = vor.u32 %v4536, %v4537
  %v4540 = vsel %vm311, %v4532, %v4539
  %v4541 = vrot.slane %v4536, 4
  %v4543 = vshrl.u32 %v4178, 16
  %v4545 = vrot.slane %v4543, 7
  %v4546 = vshll.u32 %v4178, 16
  %v4548 = vor.u32 %v4545, %v4546
  %v4549 = vrot.slane %v4545, 4
  %v4551 = vshrl.u32 %v4179, 16
  %v4553 = vrot.slane %v4551, 7
  %v4554 = vshll.u32 %v4179, 16
  %v4556 = vor.u32 %v4553, %v4554
  %v4557 = vsel %vm311, %v4549, %v4556
  %v4558 = vrot.slane %v4553, 4
  %v4560 = vshrl.u32 %v4180, 16
  %v4562 = vrot.slane %v4560, 7
  %v4563 = vshll.u32 %v4180, 16
  %v4565 = vor.u32 %v4562, %v4563
  %v4566 = vrot.slane %v4562, 4
  %v4568 = vshrl.u32 %v4181, 16
  %v4570 = vrot.slane %v4568, 7
  %v4571 = vshll.u32 %v4181, 16
  %v4573 = vor.u32 %v4570, %v4571
  %v4574 = vsel %vm311, %v4566, %v4573
  %v4575 = vrot.slane %v4570, 4
  %v4577 = vshrl.u32 %v4182, 16
  %v4579 = vrot.slane %v4577, 7
  %v4580 = vshll.u32 %v4182, 16
  %v4582 = vor.u32 %v4579, %v4580
  %v4583 = vrot.slane %v4579, 4
  %v4585 = vshrl.u32 %v4183, 16
  %v4587 = vrot.slane %v4585, 7
  %v4588 = vshll.u32 %v4183, 16
  %v4590 = vor.u32 %v4587, %v4588
  %v4591 = vsel %vm311, %v4583, %v4590
  %v4592 = vrot.slane %v4587, 4
  %v4594 = vshrl.u32 %v4184, 16
  %v4596 = vrot.slane %v4594, 7
  %v4597 = vshll.u32 %v4184, 16
  %v4599 = vor.u32 %v4596, %v4597
  %v4600 = vrot.slane %v4596, 4
  %v4602 = vshrl.u32 %v4185, 16
  %v4604 = vrot.slane %v4602, 7
  %v4605 = vshll.u32 %v4185, 16
  %v4607 = vor.u32 %v4604, %v4605
  %v4608 = vsel %vm311, %v4600, %v4607
  %v4609 = vrot.slane %v4604, 4
  %v4611 = vshrl.u32 %v4186, 16
  %v4613 = vrot.slane %v4611, 7
  %v4614 = vshll.u32 %v4186, 16
  %v4616 = vor.u32 %v4613, %v4614
  %v4617 = vrot.slane %v4613, 4
  %v4619 = vshrl.u32 %v4187, 16
  %v4621 = vrot.slane %v4619, 7
  %v4622 = vshll.u32 %v4187, 16
  %v4624 = vor.u32 %v4621, %v4622
  %v4625 = vsel %vm311, %v4617, %v4624
  %v4626 = vrot.slane %v4621, 4
  %v4628 = vshrl.u32 %v4188, 16
  %v4630 = vrot.slane %v4628, 7
  %v4631 = vshll.u32 %v4188, 16
  %v4633 = vor.u32 %v4630, %v4631
  %v4634 = vrot.slane %v4630, 4
  %v4636 = vshrl.u32 %v4189, 16
  %v4638 = vrot.slane %v4636, 7
  %v4639 = vshll.u32 %v4189, 16
  %v4641 = vor.u32 %v4638, %v4639
  %v4642 = vsel %vm311, %v4634, %v4641
  %v4643 = vrot.slane %v4638, 4
  %v4645 = vshrl.u32 %v4190, 16
  %v4647 = vrot.slane %v4645, 7
  %v4648 = vshll.u32 %v4190, 16
  %v4650 = vor.u32 %v4647, %v4648
  %v4651 = vrot.slane %v4647, 4
  %v4653 = vshrl.u32 %v4191, 16
  %v4655 = vrot.slane %v4653, 7
  %v4656 = vshll.u32 %v4191, 16
  %v4658 = vor.u32 %v4655, %v4656
  %v4659 = vsel %vm311, %v4651, %v4658
  %v4660 = vrot.slane %v4655, 4
  %v4662 = vshrl.u32 %v4192, 16
  %v4664 = vrot.slane %v4662, 7
  %v4665 = vshll.u32 %v4192, 16
  %v4667 = vor.u32 %v4664, %v4665
  %v4668 = vrot.slane %v4664, 4
  %v4670 = vshrl.u32 %v4193, 16
  %v4672 = vrot.slane %v4670, 7
  %v4673 = vshll.u32 %v4193, 16
  %v4675 = vor.u32 %v4672, %v4673
  %v4676 = vsel %vm311, %v4668, %v4675
  %v4677 = vrot.slane %v4672, 4
  %v4679 = vshrl.u32 %v4194, 16
  %v4681 = vrot.slane %v4679, 7
  %v4682 = vshll.u32 %v4194, 16
  %v4684 = vor.u32 %v4681, %v4682
  %v4685 = vrot.slane %v4681, 4
  %v4687 = vshrl.u32 %v4195, 16
  %v4689 = vrot.slane %v4687, 7
  %v4690 = vshll.u32 %v4195, 16
  %v4692 = vor.u32 %v4689, %v4690
  %v4693 = vsel %vm311, %v4685, %v4692
  %v4694 = vrot.slane %v4689, 4
  %v4696 = vshrl.u32 %v4196, 16
  %v4698 = vrot.slane %v4696, 7
  %v4699 = vshll.u32 %v4196, 16
  %v4701 = vor.u32 %v4698, %v4699
  %v4702 = vrot.slane %v4698, 4
  %v4704 = vshrl.u32 %v4197, 16
  %v4706 = vrot.slane %v4704, 7
  %v4707 = vshll.u32 %v4197, 16
  %v4709 = vor.u32 %v4706, %v4707
  %v4710 = vsel %vm311, %v4702, %v4709
  %v4711 = vrot.slane %v4706, 4
  %v4713 = vshrl.u32 %v4198, 16
  %v4715 = vrot.slane %v4713, 7
  %v4716 = vshll.u32 %v4198, 16
  %v4718 = vor.u32 %v4715, %v4716
  %v4719 = vrot.slane %v4715, 4
  %v4721 = vshrl.u32 %v4199, 16
  %v4723 = vrot.slane %v4721, 7
  %v4724 = vshll.u32 %v4199, 16
  %v4726 = vor.u32 %v4723, %v4724
  %v4727 = vsel %vm311, %v4719, %v4726
  %v4728 = vrot.slane %v4723, 4
  %v4730 = vshrl.u32 %v4200, 16
  %v4732 = vrot.slane %v4730, 7
  %v4733 = vshll.u32 %v4200, 16
  %v4735 = vor.u32 %v4732, %v4733
  %v4736 = vrot.slane %v4732, 4
  %v4738 = vshrl.u32 %v4201, 16
  %v4740 = vrot.slane %v4738, 7
  %v4741 = vshll.u32 %v4201, 16
  %v4743 = vor.u32 %v4740, %v4741
  %v4744 = vsel %vm311, %v4736, %v4743
  %v4745 = vrot.slane %v4740, 4
  %s4842 = scalar_lea.vmem [#allocation3], 12
  %vm4843 = vcmask 1043456
  %vm4844 = vmand %vm4843, %vm954
  %v4845 = vld [vmem:[%s4842] sm:$0xf]
  %v4846 = vsel %vm4844, %v4208, %v4845
  %4847 = vst [vmem:[%s4842] sm:$0xf] %v4846
  %4848 = vst [vmem:[%s4842 + $0x4] sm:$0xf] %v4217
  %vm4849 = vcmask 1040384
  %vm4850 = vmand %vm4849, %vm309
  %v4851 = vld [vmem:[%s4842 + $0x8] sm:$0x1]
  %v4852 = vsel %vm4850, %v4218, %v4851
  %4853 = vst [vmem:[%s4842 + $0x8] sm:$0x1] %v4852
  %v4854 = vld [vmem:[%s4842 + $0xc] sm:$0xf]
  %v4855 = vsel %vm4844, %v4225, %v4854
  %4856 = vst [vmem:[%s4842 + $0xc] sm:$0xf] %v4855
  %4857 = vst [vmem:[%s4842 + $0x10] sm:$0xf] %v4234
  %v4858 = vld [vmem:[%s4842 + $0x14] sm:$0x1]
  %v4859 = vsel %vm4850, %v4235, %v4858
  %4860 = vst [vmem:[%s4842 + $0x14] sm:$0x1] %v4859
  %v4861 = vld [vmem:[%s4842 + $0x18] sm:$0xf]
  %v4862 = vsel %vm4844, %v4242, %v4861
  %4863 = vst [vmem:[%s4842 + $0x18] sm:$0xf] %v4862
  %4864 = vst [vmem:[%s4842 + $0x1c] sm:$0xf] %v4251
  %v4865 = vld [vmem:[%s4842 + $0x20] sm:$0x1]
  %v4866 = vsel %vm4850, %v4252, %v4865
  %4867 = vst [vmem:[%s4842 + $0x20] sm:$0x1] %v4866
  %v4868 = vld [vmem:[%s4842 + $0x24] sm:$0xf]
  %v4869 = vsel %vm4844, %v4259, %v4868
  %4870 = vst [vmem:[%s4842 + $0x24] sm:$0xf] %v4869
  %4871 = vst [vmem:[%s4842 + $0x28] sm:$0xf] %v4268
  %v4872 = vld [vmem:[%s4842 + $0x2c] sm:$0x1]
  %v4873 = vsel %vm4850, %v4269, %v4872
  %4874 = vst [vmem:[%s4842 + $0x2c] sm:$0x1] %v4873
  %v4875 = vld [vmem:[%s4842 + $0x30] sm:$0xf]
  %v4876 = vsel %vm4844, %v4276, %v4875
  %4877 = vst [vmem:[%s4842 + $0x30] sm:$0xf] %v4876
  %4878 = vst [vmem:[%s4842 + $0x34] sm:$0xf] %v4285
  %v4879 = vld [vmem:[%s4842 + $0x38] sm:$0x1]
  %v4880 = vsel %vm4850, %v4286, %v4879
  %4881 = vst [vmem:[%s4842 + $0x38] sm:$0x1] %v4880
  %v4882 = vld [vmem:[%s4842 + $0x3c] sm:$0xf]
  %v4883 = vsel %vm4844, %v4293, %v4882
  %4884 = vst [vmem:[%s4842 + $0x3c] sm:$0xf] %v4883
  %4885 = vst [vmem:[%s4842 + $0x40] sm:$0xf] %v4302
  %v4886 = vld [vmem:[%s4842 + $0x44] sm:$0x1]
  %v4887 = vsel %vm4850, %v4303, %v4886
  %4888 = vst [vmem:[%s4842 + $0x44] sm:$0x1] %v4887
  %v4889 = vld [vmem:[%s4842 + $0x48] sm:$0xf]
  %v4890 = vsel %vm4844, %v4310, %v4889
  %4891 = vst [vmem:[%s4842 + $0x48] sm:$0xf] %v4890
  %4892 = vst [vmem:[%s4842 + $0x4c] sm:$0xf] %v4319
  %v4893 = vld [vmem:[%s4842 + $0x50] sm:$0x1]
  %v4894 = vsel %vm4850, %v4320, %v4893
  %4895 = vst [vmem:[%s4842 + $0x50] sm:$0x1] %v4894
  %v4896 = vld [vmem:[%s4842 + $0x54] sm:$0xf]
  %v4897 = vsel %vm4844, %v4327, %v4896
  %4898 = vst [vmem:[%s4842 + $0x54] sm:$0xf] %v4897
  %4899 = vst [vmem:[%s4842 + $0x58] sm:$0xf] %v4336
  %v4900 = vld [vmem:[%s4842 + $0x5c] sm:$0x1]
  %v4901 = vsel %vm4850, %v4337, %v4900
  %4902 = vst [vmem:[%s4842 + $0x5c] sm:$0x1] %v4901
  %v4903 = vld [vmem:[%s4842 + $0x60] sm:$0xf]
  %v4904 = vsel %vm4844, %v4344, %v4903
  %4905 = vst [vmem:[%s4842 + $0x60] sm:$0xf] %v4904
  %4906 = vst [vmem:[%s4842 + $0x64] sm:$0xf] %v4353
  %v4907 = vld [vmem:[%s4842 + $0x68] sm:$0x1]
  %v4908 = vsel %vm4850, %v4354, %v4907
  %4909 = vst [vmem:[%s4842 + $0x68] sm:$0x1] %v4908
  %v4910 = vld [vmem:[%s4842 + $0x6c] sm:$0xf]
  %v4911 = vsel %vm4844, %v4361, %v4910
  %4912 = vst [vmem:[%s4842 + $0x6c] sm:$0xf] %v4911
  %4913 = vst [vmem:[%s4842 + $0x70] sm:$0xf] %v4370
  %v4914 = vld [vmem:[%s4842 + $0x74] sm:$0x1]
  %v4915 = vsel %vm4850, %v4371, %v4914
  %4916 = vst [vmem:[%s4842 + $0x74] sm:$0x1] %v4915
  %v4917 = vld [vmem:[%s4842 + $0x78] sm:$0xf]
  %v4918 = vsel %vm4844, %v4378, %v4917
  %4919 = vst [vmem:[%s4842 + $0x78] sm:$0xf] %v4918
  %4920 = vst [vmem:[%s4842 + $0x7c] sm:$0xf] %v4387
  %v4921 = vld [vmem:[%s4842 + $0x80] sm:$0x1]
  %v4922 = vsel %vm4850, %v4388, %v4921
  %4923 = vst [vmem:[%s4842 + $0x80] sm:$0x1] %v4922
  %v4924 = vld [vmem:[%s4842 + $0x84] sm:$0xf]
  %v4925 = vsel %vm4844, %v4395, %v4924
  %4926 = vst [vmem:[%s4842 + $0x84] sm:$0xf] %v4925
  %4927 = vst [vmem:[%s4842 + $0x88] sm:$0xf] %v4404
  %v4928 = vld [vmem:[%s4842 + $0x8c] sm:$0x1]
  %v4929 = vsel %vm4850, %v4405, %v4928
  %4930 = vst [vmem:[%s4842 + $0x8c] sm:$0x1] %v4929
  %v4931 = vld [vmem:[%s4842 + $0x90] sm:$0xf]
  %v4932 = vsel %vm4844, %v4412, %v4931
  %4933 = vst [vmem:[%s4842 + $0x90] sm:$0xf] %v4932
  %4934 = vst [vmem:[%s4842 + $0x94] sm:$0xf] %v4421
  %v4935 = vld [vmem:[%s4842 + $0x98] sm:$0x1]
  %v4936 = vsel %vm4850, %v4422, %v4935
  %4937 = vst [vmem:[%s4842 + $0x98] sm:$0x1] %v4936
  %v4938 = vld [vmem:[%s4842 + $0x9c] sm:$0xf]
  %v4939 = vsel %vm4844, %v4429, %v4938
  %4940 = vst [vmem:[%s4842 + $0x9c] sm:$0xf] %v4939
  %4941 = vst [vmem:[%s4842 + $0xa0] sm:$0xf] %v4438
  %v4942 = vld [vmem:[%s4842 + $0xa4] sm:$0x1]
  %v4943 = vsel %vm4850, %v4439, %v4942
  %4944 = vst [vmem:[%s4842 + $0xa4] sm:$0x1] %v4943
  %v4945 = vld [vmem:[%s4842 + $0xa8] sm:$0xf]
  %v4946 = vsel %vm4844, %v4446, %v4945
  %4947 = vst [vmem:[%s4842 + $0xa8] sm:$0xf] %v4946
  %4948 = vst [vmem:[%s4842 + $0xac] sm:$0xf] %v4455
  %v4949 = vld [vmem:[%s4842 + $0xb0] sm:$0x1]
  %v4950 = vsel %vm4850, %v4456, %v4949
  %4951 = vst [vmem:[%s4842 + $0xb0] sm:$0x1] %v4950
  %v4952 = vld [vmem:[%s4842 + $0xb4] sm:$0xf]
  %v4953 = vsel %vm4844, %v4463, %v4952
  %4954 = vst [vmem:[%s4842 + $0xb4] sm:$0xf] %v4953
  %4955 = vst [vmem:[%s4842 + $0xb8] sm:$0xf] %v4472
  %v4956 = vld [vmem:[%s4842 + $0xbc] sm:$0x1]
  %v4957 = vsel %vm4850, %v4473, %v4956
  %4958 = vst [vmem:[%s4842 + $0xbc] sm:$0x1] %v4957
  %v4959 = vld [vmem:[%s4842 + $0xd8] sm:$0xf]
  %v4960 = vsel %vm4844, %v4480, %v4959
  %4961 = vst [vmem:[%s4842 + $0xd8] sm:$0xf] %v4960
  %4962 = vst [vmem:[%s4842 + $0xdc] sm:$0xf] %v4489
  %v4963 = vld [vmem:[%s4842 + $0xe0] sm:$0x1]
  %v4964 = vsel %vm4850, %v4490, %v4963
  %4965 = vst [vmem:[%s4842 + $0xe0] sm:$0x1] %v4964
  %v4966 = vld [vmem:[%s4842 + $0xe4] sm:$0xf]
  %v4967 = vsel %vm4844, %v4497, %v4966
  %4968 = vst [vmem:[%s4842 + $0xe4] sm:$0xf] %v4967
  %4969 = vst [vmem:[%s4842 + $0xe8] sm:$0xf] %v4506
  %v4970 = vld [vmem:[%s4842 + $0xec] sm:$0x1]
  %v4971 = vsel %vm4850, %v4507, %v4970
  %4972 = vst [vmem:[%s4842 + $0xec] sm:$0x1] %v4971
  %v4973 = vld [vmem:[%s4842 + $0xf0] sm:$0xf]
  %v4974 = vsel %vm4844, %v4514, %v4973
  %4975 = vst [vmem:[%s4842 + $0xf0] sm:$0xf] %v4974
  %4976 = vst [vmem:[%s4842 + $0xf4] sm:$0xf] %v4523
  %v4977 = vld [vmem:[%s4842 + $0xf8] sm:$0x1]
  %v4978 = vsel %vm4850, %v4524, %v4977
  %4979 = vst [vmem:[%s4842 + $0xf8] sm:$0x1] %v4978
  %v4980 = vld [vmem:[%s4842 + $0xfc] sm:$0xf]
  %v4981 = vsel %vm4844, %v4531, %v4980
  %4982 = vst [vmem:[%s4842 + $0xfc] sm:$0xf] %v4981
  %4983 = vst [vmem:[%s4842 + $0x100] sm:$0xf] %v4540
  %v4984 = vld [vmem:[%s4842 + $0x104] sm:$0x1]
  %v4985 = vsel %vm4850, %v4541, %v4984
  %4986 = vst [vmem:[%s4842 + $0x104] sm:$0x1] %v4985
  %v4987 = vld [vmem:[%s4842 + $0x108] sm:$0xf]
  %v4988 = vsel %vm4844, %v4548, %v4987
  %4989 = vst [vmem:[%s4842 + $0x108] sm:$0xf] %v4988
  %4990 = vst [vmem:[%s4842 + $0x10c] sm:$0xf] %v4557
  %v4991 = vld [vmem:[%s4842 + $0x110] sm:$0x1]
  %v4992 = vsel %vm4850, %v4558, %v4991
  %4993 = vst [vmem:[%s4842 + $0x110] sm:$0x1] %v4992
  %v4994 = vld [vmem:[%s4842 + $0x114] sm:$0xf]
  %v4995 = vsel %vm4844, %v4565, %v4994
  %4996 = vst [vmem:[%s4842 + $0x114] sm:$0xf] %v4995
  %4997 = vst [vmem:[%s4842 + $0x118] sm:$0xf] %v4574
  %v4998 = vld [vmem:[%s4842 + $0x11c] sm:$0x1]
  %v4999 = vsel %vm4850, %v4575, %v4998
  %5000 = vst [vmem:[%s4842 + $0x11c] sm:$0x1] %v4999
  %v5001 = vld [vmem:[%s4842 + $0x120] sm:$0xf]
  %v5002 = vsel %vm4844, %v4582, %v5001
  %5003 = vst [vmem:[%s4842 + $0x120] sm:$0xf] %v5002
  %5004 = vst [vmem:[%s4842 + $0x124] sm:$0xf] %v4591
  %v5005 = vld [vmem:[%s4842 + $0x128] sm:$0x1]
  %v5006 = vsel %vm4850, %v4592, %v5005
  %5007 = vst [vmem:[%s4842 + $0x128] sm:$0x1] %v5006
  %v5008 = vld [vmem:[%s4842 + $0x12c] sm:$0xf]
  %v5009 = vsel %vm4844, %v4599, %v5008
  %5010 = vst [vmem:[%s4842 + $0x12c] sm:$0xf] %v5009
  %5011 = vst [vmem:[%s4842 + $0x130] sm:$0xf] %v4608
  %v5012 = vld [vmem:[%s4842 + $0x134] sm:$0x1]
  %v5013 = vsel %vm4850, %v4609, %v5012
  %5014 = vst [vmem:[%s4842 + $0x134] sm:$0x1] %v5013
  %v5015 = vld [vmem:[%s4842 + $0x138] sm:$0xf]
  %v5016 = vsel %vm4844, %v4616, %v5015
  %5017 = vst [vmem:[%s4842 + $0x138] sm:$0xf] %v5016
  %5018 = vst [vmem:[%s4842 + $0x13c] sm:$0xf] %v4625
  %v5019 = vld [vmem:[%s4842 + $0x140] sm:$0x1]
  %v5020 = vsel %vm4850, %v4626, %v5019
  %5021 = vst [vmem:[%s4842 + $0x140] sm:$0x1] %v5020
  %v5022 = vld [vmem:[%s4842 + $0x144] sm:$0xf]
  %v5023 = vsel %vm4844, %v4633, %v5022
  %5024 = vst [vmem:[%s4842 + $0x144] sm:$0xf] %v5023
  %5025 = vst [vmem:[%s4842 + $0x148] sm:$0xf] %v4642
  %v5026 = vld [vmem:[%s4842 + $0x14c] sm:$0x1]
  %v5027 = vsel %vm4850, %v4643, %v5026
  %5028 = vst [vmem:[%s4842 + $0x14c] sm:$0x1] %v5027
  %v5029 = vld [vmem:[%s4842 + $0x150] sm:$0xf]
  %v5030 = vsel %vm4844, %v4650, %v5029
  %5031 = vst [vmem:[%s4842 + $0x150] sm:$0xf] %v5030
  %5032 = vst [vmem:[%s4842 + $0x154] sm:$0xf] %v4659
  %v5033 = vld [vmem:[%s4842 + $0x158] sm:$0x1]
  %v5034 = vsel %vm4850, %v4660, %v5033
  %5035 = vst [vmem:[%s4842 + $0x158] sm:$0x1] %v5034
  %v5036 = vld [vmem:[%s4842 + $0x15c] sm:$0xf]
  %v5037 = vsel %vm4844, %v4667, %v5036
  %5038 = vst [vmem:[%s4842 + $0x15c] sm:$0xf] %v5037
  %5039 = vst [vmem:[%s4842 + $0x160] sm:$0xf] %v4676
  %v5040 = vld [vmem:[%s4842 + $0x164] sm:$0x1]
  %v5041 = vsel %vm4850, %v4677, %v5040
  %5042 = vst [vmem:[%s4842 + $0x164] sm:$0x1] %v5041
  %v5043 = vld [vmem:[%s4842 + $0x168] sm:$0xf]
  %v5044 = vsel %vm4844, %v4684, %v5043
  %5045 = vst [vmem:[%s4842 + $0x168] sm:$0xf] %v5044
  %5046 = vst [vmem:[%s4842 + $0x16c] sm:$0xf] %v4693
  %v5047 = vld [vmem:[%s4842 + $0x170] sm:$0x1]
  %v5048 = vsel %vm4850, %v4694, %v5047
  %5049 = vst [vmem:[%s4842 + $0x170] sm:$0x1] %v5048
  %v5050 = vld [vmem:[%s4842 + $0x174] sm:$0xf]
  %v5051 = vsel %vm4844, %v4701, %v5050
  %5052 = vst [vmem:[%s4842 + $0x174] sm:$0xf] %v5051
  %5053 = vst [vmem:[%s4842 + $0x178] sm:$0xf] %v4710
  %v5054 = vld [vmem:[%s4842 + $0x17c] sm:$0x1]
  %v5055 = vsel %vm4850, %v4711, %v5054
  %5056 = vst [vmem:[%s4842 + $0x17c] sm:$0x1] %v5055
  %v5057 = vld [vmem:[%s4842 + $0x180] sm:$0xf]
  %v5058 = vsel %vm4844, %v4718, %v5057
  %5059 = vst [vmem:[%s4842 + $0x180] sm:$0xf] %v5058
  %5060 = vst [vmem:[%s4842 + $0x184] sm:$0xf] %v4727
  %v5061 = vld [vmem:[%s4842 + $0x188] sm:$0x1]
  %v5062 = vsel %vm4850, %v4728, %v5061
  %5063 = vst [vmem:[%s4842 + $0x188] sm:$0x1] %v5062
  %v5064 = vld [vmem:[%s4842 + $0x18c] sm:$0xf]
  %v5065 = vsel %vm4844, %v4735, %v5064
  %5066 = vst [vmem:[%s4842 + $0x18c] sm:$0xf] %v5065
  %5067 = vst [vmem:[%s4842 + $0x190] sm:$0xf] %v4744
  %v5068 = vld [vmem:[%s4842 + $0x194] sm:$0x1]
  %v5069 = vsel %vm4850, %v4745, %v5068
  %5070 = vst [vmem:[%s4842 + $0x194] sm:$0x1] %v5069
  %v5071 = vld [vmem:[#allocation3] sm:$0xf]
  %v5072 = vld [vmem:[#allocation3 + $0x4] sm:$0xf]
  %v5073 = vld [vmem:[#allocation3 + $0x8] sm:$0x1]
  %v5074 = vld [vmem:[#allocation3 + $0xc] sm:$0xf]
  %v5075 = vld [vmem:[#allocation3 + $0x10] sm:$0xf]
  %v5076 = vld [vmem:[#allocation3 + $0x14] sm:$0x1]
  %v5077 = vld [vmem:[#allocation3 + $0x18] sm:$0xf]
  %v5078 = vld [vmem:[#allocation3 + $0x1c] sm:$0xf]
  %v5079 = vld [vmem:[#allocation3 + $0x20] sm:$0x1]
  %v5080 = vld [vmem:[#allocation3 + $0x24] sm:$0xf]
  %v5081 = vld [vmem:[#allocation3 + $0x28] sm:$0xf]
  %v5082 = vld [vmem:[#allocation3 + $0x2c] sm:$0x1]
  %v5083 = vld [vmem:[#allocation3 + $0x30] sm:$0xf]
  %v5084 = vld [vmem:[#allocation3 + $0x34] sm:$0xf]
  %v5085 = vld [vmem:[#allocation3 + $0x38] sm:$0x1]
  %v5086 = vld [vmem:[#allocation3 + $0x3c] sm:$0xf]
  %v5087 = vld [vmem:[#allocation3 + $0x40] sm:$0xf]
  %v5088 = vld [vmem:[#allocation3 + $0x44] sm:$0x1]
  %v5089 = vld [vmem:[#allocation3 + $0x48] sm:$0xf]
  %v5090 = vld [vmem:[#allocation3 + $0x4c] sm:$0xf]
  %v5091 = vld [vmem:[#allocation3 + $0x50] sm:$0x1]
  %v5092 = vld [vmem:[#allocation3 + $0x54] sm:$0xf]
  %v5093 = vld [vmem:[#allocation3 + $0x58] sm:$0xf]
  %v5094 = vld [vmem:[#allocation3 + $0x5c] sm:$0x1]
  %v5095 = vld [vmem:[#allocation3 + $0x60] sm:$0xf]
  %v5096 = vld [vmem:[#allocation3 + $0x64] sm:$0xf]
  %v5097 = vld [vmem:[#allocation3 + $0x68] sm:$0x1]
  %v5098 = vld [vmem:[#allocation3 + $0x6c] sm:$0xf]
  %v5099 = vld [vmem:[#allocation3 + $0x70] sm:$0xf]
  %v5100 = vld [vmem:[#allocation3 + $0x74] sm:$0x1]
  %v5101 = vld [vmem:[#allocation3 + $0x78] sm:$0xf]
  %v5102 = vld [vmem:[#allocation3 + $0x7c] sm:$0xf]
  %v5103 = vld [vmem:[#allocation3 + $0x80] sm:$0x1]
  %v5104 = vld [vmem:[#allocation3 + $0x84] sm:$0xf]
  %v5105 = vld [vmem:[#allocation3 + $0x88] sm:$0xf]
  %v5106 = vld [vmem:[#allocation3 + $0x8c] sm:$0x1]
  %v5107 = vld [vmem:[#allocation3 + $0x90] sm:$0xf]
  %v5108 = vld [vmem:[#allocation3 + $0x94] sm:$0xf]
  %v5109 = vld [vmem:[#allocation3 + $0x98] sm:$0x1]
  %v5110 = vld [vmem:[#allocation3 + $0x9c] sm:$0xf]
  %v5111 = vld [vmem:[#allocation3 + $0xa0] sm:$0xf]
  %v5112 = vld [vmem:[#allocation3 + $0xa4] sm:$0x1]
  %v5113 = vld [vmem:[#allocation3 + $0xa8] sm:$0xf]
  %v5114 = vld [vmem:[#allocation3 + $0xac] sm:$0xf]
  %v5115 = vld [vmem:[#allocation3 + $0xb0] sm:$0x1]
  %v5116 = vld [vmem:[#allocation3 + $0xb4] sm:$0xf]
  %v5117 = vld [vmem:[#allocation3 + $0xb8] sm:$0xf]
  %v5118 = vld [vmem:[#allocation3 + $0xbc] sm:$0x1]
  %v5119 = vld [vmem:[#allocation3 + $0xc0] sm:$0xf]
  %v5120 = vld [vmem:[#allocation3 + $0xc4] sm:$0xf]
  %v5121 = vld [vmem:[#allocation3 + $0xc8] sm:$0x1]
  %v5122 = vld [vmem:[#allocation3 + $0xcc] sm:$0xf]
  %v5123 = vld [vmem:[#allocation3 + $0xd0] sm:$0xf]
  %v5124 = vld [vmem:[#allocation3 + $0xd4] sm:$0x1]
  %v5125 = vld [vmem:[#allocation3 + $0xd8] sm:$0xf]
  %v5126 = vld [vmem:[#allocation3 + $0xdc] sm:$0xf]
  %v5127 = vld [vmem:[#allocation3 + $0xe0] sm:$0x1]
  %v5128 = vld [vmem:[#allocation3 + $0xe4] sm:$0xf]
  %v5129 = vld [vmem:[#allocation3 + $0xe8] sm:$0xf]
  %v5130 = vld [vmem:[#allocation3 + $0xec] sm:$0x1]
  %v5131 = vld [vmem:[#allocation3 + $0xf0] sm:$0xf]
  %v5132 = vld [vmem:[#allocation3 + $0xf4] sm:$0xf]
  %v5133 = vld [vmem:[#allocation3 + $0xf8] sm:$0x1]
  %v5134 = vld [vmem:[#allocation3 + $0xfc] sm:$0xf]
  %v5135 = vld [vmem:[#allocation3 + $0x100] sm:$0xf]
  %v5136 = vld [vmem:[#allocation3 + $0x104] sm:$0x1]
  %v5137 = vld [vmem:[#allocation3 + $0x108] sm:$0xf]
  %v5138 = vld [vmem:[#allocation3 + $0x10c] sm:$0xf]
  %v5139 = vld [vmem:[#allocation3 + $0x110] sm:$0x1]
  %v5140 = vld [vmem:[#allocation3 + $0x114] sm:$0xf]
  %v5141 = vld [vmem:[#allocation3 + $0x118] sm:$0xf]
  %v5142 = vld [vmem:[#allocation3 + $0x11c] sm:$0x1]
  %v5143 = vld [vmem:[#allocation3 + $0x120] sm:$0xf]
  %v5144 = vld [vmem:[#allocation3 + $0x124] sm:$0xf]
  %v5145 = vld [vmem:[#allocation3 + $0x128] sm:$0x1]
  %v5146 = vld [vmem:[#allocation3 + $0x12c] sm:$0xf]
  %v5147 = vld [vmem:[#allocation3 + $0x130] sm:$0xf]
  %v5148 = vld [vmem:[#allocation3 + $0x134] sm:$0x1]
  %v5149 = vld [vmem:[#allocation3 + $0x138] sm:$0xf]
  %v5150 = vld [vmem:[#allocation3 + $0x13c] sm:$0xf]
  %v5151 = vld [vmem:[#allocation3 + $0x140] sm:$0x1]
  %v5152 = vld [vmem:[#allocation3 + $0x144] sm:$0xf]
  %v5153 = vld [vmem:[#allocation3 + $0x148] sm:$0xf]
  %v5154 = vld [vmem:[#allocation3 + $0x14c] sm:$0x1]
  %v5155 = vld [vmem:[#allocation3 + $0x150] sm:$0xf]
  %v5156 = vld [vmem:[#allocation3 + $0x154] sm:$0xf]
  %v5157 = vld [vmem:[#allocation3 + $0x158] sm:$0x1]
  %v5158 = vld [vmem:[#allocation3 + $0x15c] sm:$0xf]
  %v5159 = vld [vmem:[#allocation3 + $0x160] sm:$0xf]
  %v5160 = vld [vmem:[#allocation3 + $0x164] sm:$0x1]
  %v5161 = vld [vmem:[#allocation3 + $0x168] sm:$0xf]
  %v5162 = vld [vmem:[#allocation3 + $0x16c] sm:$0xf]
  %v5163 = vld [vmem:[#allocation3 + $0x170] sm:$0x1]
  %v5164 = vld [vmem:[#allocation3 + $0x174] sm:$0xf]
  %v5165 = vld [vmem:[#allocation3 + $0x178] sm:$0xf]
  %v5166 = vld [vmem:[#allocation3 + $0x17c] sm:$0x1]
  %v5167 = vld [vmem:[#allocation3 + $0x180] sm:$0xf]
  %v5168 = vld [vmem:[#allocation3 + $0x184] sm:$0xf]
  %v5169 = vld [vmem:[#allocation3 + $0x188] sm:$0x1]
  %v5170 = vld [vmem:[#allocation3 + $0x18c] sm:$0xf]
  %v5171 = vld [vmem:[#allocation3 + $0x190] sm:$0xf]
  %v5172 = vld [vmem:[#allocation3 + $0x194] sm:$0x1]
  %v5173 = vld [vmem:[#allocation3 + $0x198] sm:$0xf]
  %v5174 = vld [vmem:[#allocation3 + $0x19c] sm:$0xf]
  %v5175 = vld [vmem:[#allocation3 + $0x1a0] sm:$0x1]
  %v5176 = vld [vmem:[#allocation3 + $0x1a4] sm:$0xf]
  %v5177 = vld [vmem:[#allocation3 + $0x1a8] sm:$0xf]
  %v5178 = vld [vmem:[#allocation3 + $0x1ac] sm:$0x1]
  %v5243 = vunpack.c.l.b16 %v5071
  %v5244 = vunpack.c.l.b16 %v5072
  %v5245 = vunpack.c.l.b16 %v5074
  %v5246 = vunpack.c.l.b16 %v5075
  %v5247 = vunpack.c.l.b16 %v5077
  %v5248 = vunpack.c.l.b16 %v5078
  %v5249 = vunpack.c.l.b16 %v5080
  %v5250 = vunpack.c.l.b16 %v5081
  %v5251 = vunpack.c.l.b16 %v5083
  %v5252 = vunpack.c.l.b16 %v5084
  %v5253 = vunpack.c.l.b16 %v5086
  %v5254 = vunpack.c.l.b16 %v5087
  %v5255 = vunpack.c.l.b16 %v5089
  %v5256 = vunpack.c.l.b16 %v5090
  %v5257 = vunpack.c.l.b16 %v5092
  %v5258 = vunpack.c.l.b16 %v5093
  %v5259 = vunpack.c.l.b16 %v5095
  %v5260 = vunpack.c.l.b16 %v5096
  %v5261 = vunpack.c.l.b16 %v5098
  %v5262 = vunpack.c.l.b16 %v5099
  %v5263 = vunpack.c.l.b16 %v5101
  %v5264 = vunpack.c.l.b16 %v5102
  %v5265 = vunpack.c.l.b16 %v5104
  %v5266 = vunpack.c.l.b16 %v5105
  %v5267 = vunpack.c.l.b16 %v5107
  %v5268 = vunpack.c.l.b16 %v5108
  %v5269 = vunpack.c.l.b16 %v5110
  %v5270 = vunpack.c.l.b16 %v5111
  %v5271 = vunpack.c.l.b16 %v5113
  %v5272 = vunpack.c.l.b16 %v5114
  %v5273 = vunpack.c.l.b16 %v5116
  %v5274 = vunpack.c.l.b16 %v5117
  %v5275 = vunpack.c.l.b16 %v5125
  %v5276 = vunpack.c.l.b16 %v5126
  %v5277 = vunpack.c.l.b16 %v5128
  %v5278 = vunpack.c.l.b16 %v5129
  %v5279 = vunpack.c.l.b16 %v5131
  %v5280 = vunpack.c.l.b16 %v5132
  %v5281 = vunpack.c.l.b16 %v5134
  %v5282 = vunpack.c.l.b16 %v5135
  %v5283 = vunpack.c.l.b16 %v5137
  %v5284 = vunpack.c.l.b16 %v5138
  %v5285 = vunpack.c.l.b16 %v5140
  %v5286 = vunpack.c.l.b16 %v5141
  %v5287 = vunpack.c.l.b16 %v5143
  %v5288 = vunpack.c.l.b16 %v5144
  %v5289 = vunpack.c.l.b16 %v5146
  %v5290 = vunpack.c.l.b16 %v5147
  %v5291 = vunpack.c.l.b16 %v5149
  %v5292 = vunpack.c.l.b16 %v5150
  %v5293 = vunpack.c.l.b16 %v5152
  %v5294 = vunpack.c.l.b16 %v5153
  %v5295 = vunpack.c.l.b16 %v5155
  %v5296 = vunpack.c.l.b16 %v5156
  %v5297 = vunpack.c.l.b16 %v5158
  %v5298 = vunpack.c.l.b16 %v5159
  %v5299 = vunpack.c.l.b16 %v5161
  %v5300 = vunpack.c.l.b16 %v5162
  %v5301 = vunpack.c.l.b16 %v5164
  %v5302 = vunpack.c.l.b16 %v5165
  %v5303 = vunpack.c.l.b16 %v5167
  %v5304 = vunpack.c.l.b16 %v5168
  %v5305 = vunpack.c.l.b16 %v5170
  %v5306 = vunpack.c.l.b16 %v5171
  %v5307 = vpack.c.b16 %v5244, %v5243
  %v5308 = vpack.c.b16 %v5246, %v5245
  %v5309 = vpack.c.b16 %v5248, %v5247
  %v5310 = vpack.c.b16 %v5250, %v5249
  %v5311 = vpack.c.b16 %v5252, %v5251
  %v5312 = vpack.c.b16 %v5254, %v5253
  %v5313 = vpack.c.b16 %v5256, %v5255
  %v5314 = vpack.c.b16 %v5258, %v5257
  %v5315 = vpack.c.b16 %v5260, %v5259
  %v5316 = vpack.c.b16 %v5262, %v5261
  %v5317 = vpack.c.b16 %v5264, %v5263
  %v5318 = vpack.c.b16 %v5266, %v5265
  %v5319 = vpack.c.b16 %v5268, %v5267
  %v5320 = vpack.c.b16 %v5270, %v5269
  %v5321 = vpack.c.b16 %v5272, %v5271
  %v5322 = vpack.c.b16 %v5274, %v5273
  %v5323 = vpack.c.b16 %v5276, %v5275
  %v5324 = vpack.c.b16 %v5278, %v5277
  %v5325 = vpack.c.b16 %v5280, %v5279
  %v5326 = vpack.c.b16 %v5282, %v5281
  %v5327 = vpack.c.b16 %v5284, %v5283
  %v5328 = vpack.c.b16 %v5286, %v5285
  %v5329 = vpack.c.b16 %v5288, %v5287
  %v5330 = vpack.c.b16 %v5290, %v5289
  %v5331 = vpack.c.b16 %v5292, %v5291
  %v5332 = vpack.c.b16 %v5294, %v5293
  %v5333 = vpack.c.b16 %v5296, %v5295
  %v5334 = vpack.c.b16 %v5298, %v5297
  %v5335 = vpack.c.b16 %v5300, %v5299
  %v5336 = vpack.c.b16 %v5302, %v5301
  %v5337 = vpack.c.b16 %v5304, %v5303
  %v5338 = vpack.c.b16 %v5306, %v5305
  %v5403 = vunpack.c.l.b16 %v5073
  %v5404 = vunpack.c.l.b16 %v5076
  %v5405 = vunpack.c.l.b16 %v5079
  %v5406 = vunpack.c.l.b16 %v5082
  %v5407 = vunpack.c.l.b16 %v5085
  %v5408 = vunpack.c.l.b16 %v5088
  %v5409 = vunpack.c.l.b16 %v5091
  %v5410 = vunpack.c.l.b16 %v5094
  %v5411 = vunpack.c.l.b16 %v5097
  %v5412 = vunpack.c.l.b16 %v5100
  %v5413 = vunpack.c.l.b16 %v5103
  %v5414 = vunpack.c.l.b16 %v5106
  %v5415 = vunpack.c.l.b16 %v5109
  %v5416 = vunpack.c.l.b16 %v5112
  %v5417 = vunpack.c.l.b16 %v5115
  %v5418 = vunpack.c.l.b16 %v5118
  %v5419 = vunpack.c.l.b16 %v5127
  %v5420 = vunpack.c.l.b16 %v5130
  %v5421 = vunpack.c.l.b16 %v5133
  %v5422 = vunpack.c.l.b16 %v5136
  %v5423 = vunpack.c.l.b16 %v5139
  %v5424 = vunpack.c.l.b16 %v5142
  %v5425 = vunpack.c.l.b16 %v5145
  %v5426 = vunpack.c.l.b16 %v5148
  %v5427 = vunpack.c.l.b16 %v5151
  %v5428 = vunpack.c.l.b16 %v5154
  %v5429 = vunpack.c.l.b16 %v5157
  %v5430 = vunpack.c.l.b16 %v5160
  %v5431 = vunpack.c.l.b16 %v5163
  %v5432 = vunpack.c.l.b16 %v5166
  %v5433 = vunpack.c.l.b16 %v5169
  %v5434 = vunpack.c.l.b16 %v5172
  %v5435 = vpack.c.b16 %v5403, %v5403
  %v5436 = vpack.c.b16 %v5404, %v5404
  %v5437 = vpack.c.b16 %v5405, %v5405
  %v5438 = vpack.c.b16 %v5406, %v5406
  %v5439 = vpack.c.b16 %v5407, %v5407
  %v5440 = vpack.c.b16 %v5408, %v5408
  %v5441 = vpack.c.b16 %v5409, %v5409
  %v5442 = vpack.c.b16 %v5410, %v5410
  %v5443 = vpack.c.b16 %v5411, %v5411
  %v5444 = vpack.c.b16 %v5412, %v5412
  %v5445 = vpack.c.b16 %v5413, %v5413
  %v5446 = vpack.c.b16 %v5414, %v5414
  %v5447 = vpack.c.b16 %v5415, %v5415
  %v5448 = vpack.c.b16 %v5416, %v5416
  %v5449 = vpack.c.b16 %v5417, %v5417
  %v5450 = vpack.c.b16 %v5418, %v5418
  %v5451 = vpack.c.b16 %v5419, %v5419
  %v5452 = vpack.c.b16 %v5420, %v5420
  %v5453 = vpack.c.b16 %v5421, %v5421
  %v5454 = vpack.c.b16 %v5422, %v5422
  %v5455 = vpack.c.b16 %v5423, %v5423
  %v5456 = vpack.c.b16 %v5424, %v5424
  %v5457 = vpack.c.b16 %v5425, %v5425
  %v5458 = vpack.c.b16 %v5426, %v5426
  %v5459 = vpack.c.b16 %v5427, %v5427
  %v5460 = vpack.c.b16 %v5428, %v5428
  %v5461 = vpack.c.b16 %v5429, %v5429
  %v5462 = vpack.c.b16 %v5430, %v5430
  %v5463 = vpack.c.b16 %v5431, %v5431
  %v5464 = vpack.c.b16 %v5432, %v5432
  %v5465 = vpack.c.b16 %v5433, %v5433
  %v5466 = vpack.c.b16 %v5434, %v5434
  %v5468 = vshrl.u32 %v5307, 16
  %v5470 = vshll.u32 %v5307, 16
  %v5472 = vrot.slane %v5470, 1
  %v5473 = vor.u32 %v5468, %v5472
  %v5475 = vshll.u32 %v5435, 16
  %v5477 = vrot.slane %v5475, 1
  %v5478 = vsel %vm1546, %v5473, %v5477
  %v5480 = vshrl.u32 %v5308, 16
  %v5482 = vshll.u32 %v5308, 16
  %v5484 = vrot.slane %v5482, 1
  %v5485 = vor.u32 %v5480, %v5484
  %v5487 = vshll.u32 %v5436, 16
  %v5489 = vrot.slane %v5487, 1
  %v5490 = vsel %vm1546, %v5485, %v5489
  %v5492 = vshrl.u32 %v5309, 16
  %v5494 = vshll.u32 %v5309, 16
  %v5496 = vrot.slane %v5494, 1
  %v5497 = vor.u32 %v5492, %v5496
  %v5499 = vshll.u32 %v5437, 16
  %v5501 = vrot.slane %v5499, 1
  %v5502 = vsel %vm1546, %v5497, %v5501
  %v5504 = vshrl.u32 %v5310, 16
  %v5506 = vshll.u32 %v5310, 16
  %v5508 = vrot.slane %v5506, 1
  %v5509 = vor.u32 %v5504, %v5508
  %v5511 = vshll.u32 %v5438, 16
  %v5513 = vrot.slane %v5511, 1
  %v5514 = vsel %vm1546, %v5509, %v5513
  %v5516 = vshrl.u32 %v5311, 16
  %v5518 = vshll.u32 %v5311, 16
  %v5520 = vrot.slane %v5518, 1
  %v5521 = vor.u32 %v5516, %v5520
  %v5523 = vshll.u32 %v5439, 16
  %v5525 = vrot.slane %v5523, 1
  %v5526 = vsel %vm1546, %v5521, %v5525
  %v5528 = vshrl.u32 %v5312, 16
  %v5530 = vshll.u32 %v5312, 16
  %v5532 = vrot.slane %v5530, 1
  %v5533 = vor.u32 %v5528, %v5532
  %v5535 = vshll.u32 %v5440, 16
  %v5537 = vrot.slane %v5535, 1
  %v5538 = vsel %vm1546, %v5533, %v5537
  %v5540 = vshrl.u32 %v5313, 16
  %v5542 = vshll.u32 %v5313, 16
  %v5544 = vrot.slane %v5542, 1
  %v5545 = vor.u32 %v5540, %v5544
  %v5547 = vshll.u32 %v5441, 16
  %v5549 = vrot.slane %v5547, 1
  %v5550 = vsel %vm1546, %v5545, %v5549
  %v5552 = vshrl.u32 %v5314, 16
  %v5554 = vshll.u32 %v5314, 16
  %v5556 = vrot.slane %v5554, 1
  %v5557 = vor.u32 %v5552, %v5556
  %v5559 = vshll.u32 %v5442, 16
  %v5561 = vrot.slane %v5559, 1
  %v5562 = vsel %vm1546, %v5557, %v5561
  %v5564 = vshrl.u32 %v5315, 16
  %v5566 = vshll.u32 %v5315, 16
  %v5568 = vrot.slane %v5566, 1
  %v5569 = vor.u32 %v5564, %v5568
  %v5571 = vshll.u32 %v5443, 16
  %v5573 = vrot.slane %v5571, 1
  %v5574 = vsel %vm1546, %v5569, %v5573
  %v5576 = vshrl.u32 %v5316, 16
  %v5578 = vshll.u32 %v5316, 16
  %v5580 = vrot.slane %v5578, 1
  %v5581 = vor.u32 %v5576, %v5580
  %v5583 = vshll.u32 %v5444, 16
  %v5585 = vrot.slane %v5583, 1
  %v5586 = vsel %vm1546, %v5581, %v5585
  %v5588 = vshrl.u32 %v5317, 16
  %v5590 = vshll.u32 %v5317, 16
  %v5592 = vrot.slane %v5590, 1
  %v5593 = vor.u32 %v5588, %v5592
  %v5595 = vshll.u32 %v5445, 16
  %v5597 = vrot.slane %v5595, 1
  %v5598 = vsel %vm1546, %v5593, %v5597
  %v5600 = vshrl.u32 %v5318, 16
  %v5602 = vshll.u32 %v5318, 16
  %v5604 = vrot.slane %v5602, 1
  %v5605 = vor.u32 %v5600, %v5604
  %v5607 = vshll.u32 %v5446, 16
  %v5609 = vrot.slane %v5607, 1
  %v5610 = vsel %vm1546, %v5605, %v5609
  %v5612 = vshrl.u32 %v5319, 16
  %v5614 = vshll.u32 %v5319, 16
  %v5616 = vrot.slane %v5614, 1
  %v5617 = vor.u32 %v5612, %v5616
  %v5619 = vshll.u32 %v5447, 16
  %v5621 = vrot.slane %v5619, 1
  %v5622 = vsel %vm1546, %v5617, %v5621
  %v5624 = vshrl.u32 %v5320, 16
  %v5626 = vshll.u32 %v5320, 16
  %v5628 = vrot.slane %v5626, 1
  %v5629 = vor.u32 %v5624, %v5628
  %v5631 = vshll.u32 %v5448, 16
  %v5633 = vrot.slane %v5631, 1
  %v5634 = vsel %vm1546, %v5629, %v5633
  %v5636 = vshrl.u32 %v5321, 16
  %v5638 = vshll.u32 %v5321, 16
  %v5640 = vrot.slane %v5638, 1
  %v5641 = vor.u32 %v5636, %v5640
  %v5643 = vshll.u32 %v5449, 16
  %v5645 = vrot.slane %v5643, 1
  %v5646 = vsel %vm1546, %v5641, %v5645
  %v5648 = vshrl.u32 %v5322, 16
  %v5650 = vshll.u32 %v5322, 16
  %v5652 = vrot.slane %v5650, 1
  %v5653 = vor.u32 %v5648, %v5652
  %v5655 = vshll.u32 %v5450, 16
  %v5657 = vrot.slane %v5655, 1
  %v5658 = vsel %vm1546, %v5653, %v5657
  %v5660 = vshrl.u32 %v5323, 16
  %v5662 = vshll.u32 %v5323, 16
  %v5664 = vrot.slane %v5662, 1
  %v5665 = vor.u32 %v5660, %v5664
  %v5667 = vshll.u32 %v5451, 16
  %v5669 = vrot.slane %v5667, 1
  %v5670 = vsel %vm1546, %v5665, %v5669
  %v5672 = vshrl.u32 %v5324, 16
  %v5674 = vshll.u32 %v5324, 16
  %v5676 = vrot.slane %v5674, 1
  %v5677 = vor.u32 %v5672, %v5676
  %v5679 = vshll.u32 %v5452, 16
  %v5681 = vrot.slane %v5679, 1
  %v5682 = vsel %vm1546, %v5677, %v5681
  %v5684 = vshrl.u32 %v5325, 16
  %v5686 = vshll.u32 %v5325, 16
  %v5688 = vrot.slane %v5686, 1
  %v5689 = vor.u32 %v5684, %v5688
  %v5691 = vshll.u32 %v5453, 16
  %v5693 = vrot.slane %v5691, 1
  %v5694 = vsel %vm1546, %v5689, %v5693
  %v5696 = vshrl.u32 %v5326, 16
  %v5698 = vshll.u32 %v5326, 16
  %v5700 = vrot.slane %v5698, 1
  %v5701 = vor.u32 %v5696, %v5700
  %v5703 = vshll.u32 %v5454, 16
  %v5705 = vrot.slane %v5703, 1
  %v5706 = vsel %vm1546, %v5701, %v5705
  %v5708 = vshrl.u32 %v5327, 16
  %v5710 = vshll.u32 %v5327, 16
  %v5712 = vrot.slane %v5710, 1
  %v5713 = vor.u32 %v5708, %v5712
  %v5715 = vshll.u32 %v5455, 16
  %v5717 = vrot.slane %v5715, 1
  %v5718 = vsel %vm1546, %v5713, %v5717
  %v5720 = vshrl.u32 %v5328, 16
  %v5722 = vshll.u32 %v5328, 16
  %v5724 = vrot.slane %v5722, 1
  %v5725 = vor.u32 %v5720, %v5724
  %v5727 = vshll.u32 %v5456, 16
  %v5729 = vrot.slane %v5727, 1
  %v5730 = vsel %vm1546, %v5725, %v5729
  %v5732 = vshrl.u32 %v5329, 16
  %v5734 = vshll.u32 %v5329, 16
  %v5736 = vrot.slane %v5734, 1
  %v5737 = vor.u32 %v5732, %v5736
  %v5739 = vshll.u32 %v5457, 16
  %v5741 = vrot.slane %v5739, 1
  %v5742 = vsel %vm1546, %v5737, %v5741
  %v5744 = vshrl.u32 %v5330, 16
  %v5746 = vshll.u32 %v5330, 16
  %v5748 = vrot.slane %v5746, 1
  %v5749 = vor.u32 %v5744, %v5748
  %v5751 = vshll.u32 %v5458, 16
  %v5753 = vrot.slane %v5751, 1
  %v5754 = vsel %vm1546, %v5749, %v5753
  %v5756 = vshrl.u32 %v5331, 16
  %v5758 = vshll.u32 %v5331, 16
  %v5760 = vrot.slane %v5758, 1
  %v5761 = vor.u32 %v5756, %v5760
  %v5763 = vshll.u32 %v5459, 16
  %v5765 = vrot.slane %v5763, 1
  %v5766 = vsel %vm1546, %v5761, %v5765
  %v5768 = vshrl.u32 %v5332, 16
  %v5770 = vshll.u32 %v5332, 16
  %v5772 = vrot.slane %v5770, 1
  %v5773 = vor.u32 %v5768, %v5772
  %v5775 = vshll.u32 %v5460, 16
  %v5777 = vrot.slane %v5775, 1
  %v5778 = vsel %vm1546, %v5773, %v5777
  %v5780 = vshrl.u32 %v5333, 16
  %v5782 = vshll.u32 %v5333, 16
  %v5784 = vrot.slane %v5782, 1
  %v5785 = vor.u32 %v5780, %v5784
  %v5787 = vshll.u32 %v5461, 16
  %v5789 = vrot.slane %v5787, 1
  %v5790 = vsel %vm1546, %v5785, %v5789
  %v5792 = vshrl.u32 %v5334, 16
  %v5794 = vshll.u32 %v5334, 16
  %v5796 = vrot.slane %v5794, 1
  %v5797 = vor.u32 %v5792, %v5796
  %v5799 = vshll.u32 %v5462, 16
  %v5801 = vrot.slane %v5799, 1
  %v5802 = vsel %vm1546, %v5797, %v5801
  %v5804 = vshrl.u32 %v5335, 16
  %v5806 = vshll.u32 %v5335, 16
  %v5808 = vrot.slane %v5806, 1
  %v5809 = vor.u32 %v5804, %v5808
  %v5811 = vshll.u32 %v5463, 16
  %v5813 = vrot.slane %v5811, 1
  %v5814 = vsel %vm1546, %v5809, %v5813
  %v5816 = vshrl.u32 %v5336, 16
  %v5818 = vshll.u32 %v5336, 16
  %v5820 = vrot.slane %v5818, 1
  %v5821 = vor.u32 %v5816, %v5820
  %v5823 = vshll.u32 %v5464, 16
  %v5825 = vrot.slane %v5823, 1
  %v5826 = vsel %vm1546, %v5821, %v5825
  %v5828 = vshrl.u32 %v5337, 16
  %v5830 = vshll.u32 %v5337, 16
  %v5832 = vrot.slane %v5830, 1
  %v5833 = vor.u32 %v5828, %v5832
  %v5835 = vshll.u32 %v5465, 16
  %v5837 = vrot.slane %v5835, 1
  %v5838 = vsel %vm1546, %v5833, %v5837
  %v5840 = vshrl.u32 %v5338, 16
  %v5842 = vshll.u32 %v5338, 16
  %v5844 = vrot.slane %v5842, 1
  %v5845 = vor.u32 %v5840, %v5844
  %v5847 = vshll.u32 %v5466, 16
  %v5849 = vrot.slane %v5847, 1
  %v5850 = vsel %vm1546, %v5845, %v5849
  %v5883 = vrot.slane %v5307, 1
  %v5884 = vrot.slane %v5435, 1
  %v5885 = vsel %vm1995, %v5883, %v5884
  %v5886 = vrot.slane %v5308, 1
  %v5887 = vrot.slane %v5436, 1
  %v5888 = vsel %vm1995, %v5886, %v5887
  %v5889 = vrot.slane %v5309, 1
  %v5890 = vrot.slane %v5437, 1
  %v5891 = vsel %vm1995, %v5889, %v5890
  %v5892 = vrot.slane %v5310, 1
  %v5893 = vrot.slane %v5438, 1
  %v5894 = vsel %vm1995, %v5892, %v5893
  %v5895 = vrot.slane %v5311, 1
  %v5896 = vrot.slane %v5439, 1
  %v5897 = vsel %vm1995, %v5895, %v5896
  %v5898 = vrot.slane %v5312, 1
  %v5899 = vrot.slane %v5440, 1
  %v5900 = vsel %vm1995, %v5898, %v5899
  %v5901 = vrot.slane %v5313, 1
  %v5902 = vrot.slane %v5441, 1
  %v5903 = vsel %vm1995, %v5901, %v5902
  %v5904 = vrot.slane %v5314, 1
  %v5905 = vrot.slane %v5442, 1
  %v5906 = vsel %vm1995, %v5904, %v5905
  %v5907 = vrot.slane %v5315, 1
  %v5908 = vrot.slane %v5443, 1
  %v5909 = vsel %vm1995, %v5907, %v5908
  %v5910 = vrot.slane %v5316, 1
  %v5911 = vrot.slane %v5444, 1
  %v5912 = vsel %vm1995, %v5910, %v5911
  %v5913 = vrot.slane %v5317, 1
  %v5914 = vrot.slane %v5445, 1
  %v5915 = vsel %vm1995, %v5913, %v5914
  %v5916 = vrot.slane %v5318, 1
  %v5917 = vrot.slane %v5446, 1
  %v5918 = vsel %vm1995, %v5916, %v5917
  %v5919 = vrot.slane %v5319, 1
  %v5920 = vrot.slane %v5447, 1
  %v5921 = vsel %vm1995, %v5919, %v5920
  %v5922 = vrot.slane %v5320, 1
  %v5923 = vrot.slane %v5448, 1
  %v5924 = vsel %vm1995, %v5922, %v5923
  %v5925 = vrot.slane %v5321, 1
  %v5926 = vrot.slane %v5449, 1
  %v5927 = vsel %vm1995, %v5925, %v5926
  %v5928 = vrot.slane %v5322, 1
  %v5929 = vrot.slane %v5450, 1
  %v5930 = vsel %vm1995, %v5928, %v5929
  %v5931 = vrot.slane %v5323, 1
  %v5932 = vrot.slane %v5451, 1
  %v5933 = vsel %vm1995, %v5931, %v5932
  %v5934 = vrot.slane %v5324, 1
  %v5935 = vrot.slane %v5452, 1
  %v5936 = vsel %vm1995, %v5934, %v5935
  %v5937 = vrot.slane %v5325, 1
  %v5938 = vrot.slane %v5453, 1
  %v5939 = vsel %vm1995, %v5937, %v5938
  %v5940 = vrot.slane %v5326, 1
  %v5941 = vrot.slane %v5454, 1
  %v5942 = vsel %vm1995, %v5940, %v5941
  %v5943 = vrot.slane %v5327, 1
  %v5944 = vrot.slane %v5455, 1
  %v5945 = vsel %vm1995, %v5943, %v5944
  %v5946 = vrot.slane %v5328, 1
  %v5947 = vrot.slane %v5456, 1
  %v5948 = vsel %vm1995, %v5946, %v5947
  %v5949 = vrot.slane %v5329, 1
  %v5950 = vrot.slane %v5457, 1
  %v5951 = vsel %vm1995, %v5949, %v5950
  %v5952 = vrot.slane %v5330, 1
  %v5953 = vrot.slane %v5458, 1
  %v5954 = vsel %vm1995, %v5952, %v5953
  %v5955 = vrot.slane %v5331, 1
  %v5956 = vrot.slane %v5459, 1
  %v5957 = vsel %vm1995, %v5955, %v5956
  %v5958 = vrot.slane %v5332, 1
  %v5959 = vrot.slane %v5460, 1
  %v5960 = vsel %vm1995, %v5958, %v5959
  %v5961 = vrot.slane %v5333, 1
  %v5962 = vrot.slane %v5461, 1
  %v5963 = vsel %vm1995, %v5961, %v5962
  %v5964 = vrot.slane %v5334, 1
  %v5965 = vrot.slane %v5462, 1
  %v5966 = vsel %vm1995, %v5964, %v5965
  %v5967 = vrot.slane %v5335, 1
  %v5968 = vrot.slane %v5463, 1
  %v5969 = vsel %vm1995, %v5967, %v5968
  %v5970 = vrot.slane %v5336, 1
  %v5971 = vrot.slane %v5464, 1
  %v5972 = vsel %vm1995, %v5970, %v5971
  %v5973 = vrot.slane %v5337, 1
  %v5974 = vrot.slane %v5465, 1
  %v5975 = vsel %vm1995, %v5973, %v5974
  %v5976 = vrot.slane %v5338, 1
  %v5977 = vrot.slane %v5466, 1
  %v5978 = vsel %vm1995, %v5976, %v5977
  %v6015 = vunpack.c.l.b16 %v5119
  %v6016 = vunpack.c.l.b16 %v5120
  %v6017 = vunpack.c.l.b16 %v5173
  %v6018 = vunpack.c.l.b16 %v5174
  %v6019 = vpack.c.b16 %v6016, %v6015
  %v6020 = vpack.c.b16 %v6018, %v6017
  %v6025 = vunpack.c.l.b16 %v5121
  %v6026 = vunpack.c.l.b16 %v5175
  %v6027 = vpack.c.b16 %v6025, %v6025
  %v6028 = vpack.c.b16 %v6026, %v6026
  %v6030 = vshrl.u32 %v6019, 16
  %v6032 = vshll.u32 %v6019, 16
  %v6034 = vrot.slane %v6032, 1
  %v6035 = vor.u32 %v6030, %v6034
  %v6037 = vshll.u32 %v6027, 16
  %v6039 = vrot.slane %v6037, 1
  %v6040 = vsel %vm1546, %v6035, %v6039
  %v6042 = vshrl.u32 %v6020, 16
  %v6044 = vshll.u32 %v6020, 16
  %v6046 = vrot.slane %v6044, 1
  %v6047 = vor.u32 %v6042, %v6046
  %v6049 = vshll.u32 %v6028, 16
  %v6051 = vrot.slane %v6049, 1
  %v6052 = vsel %vm1546, %v6047, %v6051
  %v6055 = vrot.slane %v6019, 1
  %v6056 = vrot.slane %v6027, 1
  %v6057 = vsel %vm1995, %v6055, %v6056
  %v6058 = vrot.slane %v6020, 1
  %v6059 = vrot.slane %v6028, 1
  %v6060 = vsel %vm1995, %v6058, %v6059
  %v6067 = vunpack.c.l.b16 %v5122
  %v6068 = vunpack.c.l.b16 %v5123
  %v6069 = vunpack.c.l.b16 %v5176
  %v6070 = vunpack.c.l.b16 %v5177
  %v6071 = vpack.c.b16 %v6068, %v6067
  %v6072 = vpack.c.b16 %v6070, %v6069
  %v6077 = vunpack.c.l.b16 %v5124
  %v6078 = vunpack.c.l.b16 %v5178
  %v6079 = vpack.c.b16 %v6077, %v6077
  %v6080 = vpack.c.b16 %v6078, %v6078
  %v6082 = vshrl.u32 %v6071, 16
  %v6084 = vshll.u32 %v6071, 16
  %v6086 = vrot.slane %v6084, 1
  %v6087 = vor.u32 %v6082, %v6086
  %v6089 = vshll.u32 %v6079, 16
  %v6091 = vrot.slane %v6089, 1
  %v6092 = vsel %vm1546, %v6087, %v6091
  %v6094 = vshrl.u32 %v6072, 16
  %v6096 = vshll.u32 %v6072, 16
  %v6098 = vrot.slane %v6096, 1
  %v6099 = vor.u32 %v6094, %v6098
  %v6101 = vshll.u32 %v6080, 16
  %v6103 = vrot.slane %v6101, 1
  %v6104 = vsel %vm1546, %v6099, %v6103
  %v6107 = vrot.slane %v6071, 1
  %v6108 = vrot.slane %v6079, 1
  %v6109 = vsel %vm1995, %v6107, %v6108
  %v6110 = vrot.slane %v6072, 1
  %v6111 = vrot.slane %v6080, 1
  %v6112 = vsel %vm1995, %v6110, %v6111
  %v6115 = vld [vmem:[%s4] sm:$0xf]
  %v6116 = vld [vmem:[%s4 + $0x4] sm:$0xf]
  %v6117 = vld [vmem:[%s4 + $0x8] sm:$0xf]
  %v6118 = vld [vmem:[%s4 + $0xc] sm:$0xf]
  %v6119 = vld [vmem:[%s4 + $0x10] sm:$0xf]
  %v6120 = vld [vmem:[%s4 + $0x14] sm:$0xf]
  %v6121 = vld [vmem:[%s4 + $0x18] sm:$0xf]
  %v6122 = vld [vmem:[%s4 + $0x1c] sm:$0xf]
  %v6123 = vld [vmem:[%s4 + $0x20] sm:$0xf]
  %v6124 = vld [vmem:[%s4 + $0x24] sm:$0xf]
  %v6125 = vld [vmem:[%s4 + $0x28] sm:$0xf]
  %v6126 = vld [vmem:[%s4 + $0x2c] sm:$0xf]
  %v6127 = vld [vmem:[%s4 + $0x30] sm:$0xf]
  %v6128 = vld [vmem:[%s4 + $0x34] sm:$0xf]
  %v6129 = vld [vmem:[%s4 + $0x38] sm:$0xf]
  %v6130 = vld [vmem:[%s4 + $0x3c] sm:$0xf]
  %v6131 = vld [vmem:[%s4 + $0x40] sm:$0xf]
  %v6132 = vld [vmem:[%s4 + $0x44] sm:$0xf]
  %v6133 = vld [vmem:[%s4 + $0x48] sm:$0xf]
  %v6134 = vld [vmem:[%s4 + $0x4c] sm:$0xf]
  %v6135 = vld [vmem:[%s4 + $0x50] sm:$0xf]
  %v6136 = vld [vmem:[%s4 + $0x54] sm:$0xf]
  %v6137 = vld [vmem:[%s4 + $0x58] sm:$0xf]
  %v6138 = vld [vmem:[%s4 + $0x5c] sm:$0xf]
  %v6139 = vld [vmem:[%s4 + $0x60] sm:$0xf]
  %v6140 = vld [vmem:[%s4 + $0x64] sm:$0xf]
  %v6141 = vld [vmem:[%s4 + $0x68] sm:$0xf]
  %v6142 = vld [vmem:[%s4 + $0x6c] sm:$0xf]
  %v6143 = vld [vmem:[%s4 + $0x70] sm:$0xf]
  %v6144 = vld [vmem:[%s4 + $0x74] sm:$0xf]
  %v6145 = vld [vmem:[%s4 + $0x78] sm:$0xf]
  %v6146 = vld [vmem:[%s4 + $0x7c] sm:$0xf]
  %v6147 = vld [vmem:[%s4 + $0x80] sm:$0xf]
  %v6148 = vld [vmem:[%s4 + $0x84] sm:$0xf]
  %v6149 = vld [vmem:[%s4 + $0x88] sm:$0xf]
  %v6150 = vld [vmem:[%s4 + $0x8c] sm:$0xf]
  %v6151 = vld [vmem:[%s4 + $0x90] sm:$0xf]
  %v6152 = vld [vmem:[%s4 + $0x94] sm:$0xf]
  %v6153 = vld [vmem:[%s4 + $0x98] sm:$0xf]
  %v6154 = vld [vmem:[%s4 + $0x9c] sm:$0xf]
  %v6155 = vld [vmem:[%s4 + $0xa0] sm:$0xf]
  %v6156 = vld [vmem:[%s4 + $0xa4] sm:$0xf]
  %v6157 = vld [vmem:[%s4 + $0xa8] sm:$0xf]
  %v6158 = vld [vmem:[%s4 + $0xac] sm:$0xf]
  %v6159 = vld [vmem:[%s4 + $0xb0] sm:$0xf]
  %v6160 = vld [vmem:[%s4 + $0xb4] sm:$0xf]
  %v6161 = vld [vmem:[%s4 + $0xb8] sm:$0xf]
  %v6162 = vld [vmem:[%s4 + $0xbc] sm:$0xf]
  %v6163 = vld [vmem:[%s4 + $0xc0] sm:$0xf]
  %v6164 = vld [vmem:[%s4 + $0xc4] sm:$0xf]
  %v6165 = vld [vmem:[%s4 + $0xc8] sm:$0xf]
  %v6166 = vld [vmem:[%s4 + $0xcc] sm:$0xf]
  %v6167 = vld [vmem:[%s4 + $0xd0] sm:$0xf]
  %v6168 = vld [vmem:[%s4 + $0xd4] sm:$0xf]
  %v6169 = vld [vmem:[%s4 + $0xd8] sm:$0xf]
  %v6170 = vld [vmem:[%s4 + $0xdc] sm:$0xf]
  %v6171 = vld [vmem:[%s4 + $0xe0] sm:$0xf]
  %v6172 = vld [vmem:[%s4 + $0xe4] sm:$0xf]
  %v6173 = vld [vmem:[%s4 + $0xe8] sm:$0xf]
  %v6174 = vld [vmem:[%s4 + $0xec] sm:$0xf]
  %v6175 = vld [vmem:[%s4 + $0xf0] sm:$0xf]
  %v6176 = vld [vmem:[%s4 + $0xf4] sm:$0xf]
  %v6177 = vld [vmem:[%s4 + $0xf8] sm:$0xf]
  %v6178 = vld [vmem:[%s4 + $0xfc] sm:$0xf]
  %v6179 = vld [vmem:[%s4 + $0x100] sm:$0xf]
  %v6180 = vld [vmem:[%s4 + $0x104] sm:$0xf]
  %v6181 = vld [vmem:[%s4 + $0x108] sm:$0xf]
  %v6182 = vld [vmem:[%s4 + $0x10c] sm:$0xf]
  %v6183 = vld [vmem:[%s4 + $0x110] sm:$0xf]
  %v6184 = vld [vmem:[%s4 + $0x114] sm:$0xf]
  %v6185 = vld [vmem:[%s4 + $0x118] sm:$0xf]
  %v6186 = vld [vmem:[%s4 + $0x11c] sm:$0xf]
  %v6187 = vld [vmem:[%s4 + $0x120] sm:$0xf]
  %v6188 = vld [vmem:[%s4 + $0x124] sm:$0xf]
  %v6189 = vld [vmem:[%s4 + $0x128] sm:$0xf]
  %v6190 = vld [vmem:[%s4 + $0x12c] sm:$0xf]
  %v6191 = vld [vmem:[%s4 + $0x130] sm:$0xf]
  %v6192 = vld [vmem:[%s4 + $0x134] sm:$0xf]
  %v6193 = vld [vmem:[%s4 + $0x138] sm:$0xf]
  %v6194 = vld [vmem:[%s4 + $0x13c] sm:$0xf]
  %v6195 = vld [vmem:[%s4 + $0x140] sm:$0xf]
  %v6196 = vld [vmem:[%s4 + $0x144] sm:$0xf]
  %v6197 = vld [vmem:[%s4 + $0x148] sm:$0xf]
  %v6198 = vld [vmem:[%s4 + $0x14c] sm:$0xf]
  %v6199 = vld [vmem:[%s4 + $0x150] sm:$0xf]
  %v6200 = vld [vmem:[%s4 + $0x154] sm:$0xf]
  %v6201 = vld [vmem:[%s4 + $0x158] sm:$0xf]
  %v6202 = vld [vmem:[%s4 + $0x15c] sm:$0xf]
  %v6203 = vld [vmem:[%s4 + $0x160] sm:$0xf]
  %v6204 = vld [vmem:[%s4 + $0x164] sm:$0xf]
  %v6205 = vld [vmem:[%s4 + $0x168] sm:$0xf]
  %v6206 = vld [vmem:[%s4 + $0x16c] sm:$0xf]
  %v6207 = vld [vmem:[%s4 + $0x170] sm:$0xf]
  %v6208 = vld [vmem:[%s4 + $0x174] sm:$0xf]
  %v6209 = vld [vmem:[%s4 + $0x178] sm:$0xf]
  %v6210 = vld [vmem:[%s4 + $0x17c] sm:$0xf]
  %v6211 = vld [vmem:[%s4 + $0x180] sm:$0xf]
  %v6212 = vld [vmem:[%s4 + $0x184] sm:$0xf]
  %v6213 = vld [vmem:[%s4 + $0x188] sm:$0xf]
  %v6214 = vld [vmem:[%s4 + $0x18c] sm:$0xf]
  %v6215 = vld [vmem:[%s4 + $0x190] sm:$0xf]
  %v6216 = vld [vmem:[%s4 + $0x194] sm:$0xf]
  %v6217 = vld [vmem:[%s4 + $0x198] sm:$0xf]
  %v6218 = vld [vmem:[%s4 + $0x19c] sm:$0xf]
  %v6219 = vld [vmem:[%s4 + $0x1a0] sm:$0xf]
  %v6220 = vld [vmem:[%s4 + $0x1a4] sm:$0xf]
  %v6221 = vld [vmem:[%s4 + $0x1a8] sm:$0xf]
  %v6222 = vld [vmem:[%s4 + $0x1ac] sm:$0xf]
  %v6223 = vld [vmem:[%s4 + $0x1b0] sm:$0xf]
  %v6224 = vld [vmem:[%s4 + $0x1b4] sm:$0xf]
  %v6225 = vld [vmem:[%s4 + $0x1b8] sm:$0xf]
  %v6226 = vld [vmem:[%s4 + $0x1bc] sm:$0xf]
  %v6227 = vld [vmem:[%s4 + $0x1c0] sm:$0xf]
  %v6228 = vld [vmem:[%s4 + $0x1c4] sm:$0xf]
  %v6229 = vld [vmem:[%s4 + $0x1c8] sm:$0xf]
  %v6230 = vld [vmem:[%s4 + $0x1cc] sm:$0xf]
  %v6231 = vld [vmem:[%s4 + $0x1d0] sm:$0xf]
  %v6232 = vld [vmem:[%s4 + $0x1d4] sm:$0xf]
  %v6233 = vld [vmem:[%s4 + $0x1d8] sm:$0xf]
  %v6234 = vld [vmem:[%s4 + $0x1dc] sm:$0xf]
  %v6235 = vld [vmem:[%s4 + $0x1e0] sm:$0xf]
  %v6236 = vld [vmem:[%s4 + $0x1e4] sm:$0xf]
  %v6237 = vld [vmem:[%s4 + $0x1e8] sm:$0xf]
  %v6238 = vld [vmem:[%s4 + $0x1ec] sm:$0xf]
  %v6239 = vld [vmem:[%s4 + $0x1f0] sm:$0xf]
  %v6240 = vld [vmem:[%s4 + $0x1f4] sm:$0xf]
  %v6241 = vld [vmem:[%s4 + $0x1f8] sm:$0xf]
  %v6242 = vld [vmem:[%s4 + $0x1fc] sm:$0xf]
  %v6243 = vld [vmem:[%s4 + $0x200] sm:$0xf]
  %v6244 = vld [vmem:[%s4 + $0x204] sm:$0xf]
  %v6245 = vld [vmem:[%s4 + $0x208] sm:$0xf]
  %v6246 = vld [vmem:[%s4 + $0x20c] sm:$0xf]
  %v6247 = vld [vmem:[%s4 + $0x210] sm:$0xf]
  %v6248 = vld [vmem:[%s4 + $0x214] sm:$0xf]
  %v6249 = vld [vmem:[%s4 + $0x218] sm:$0xf]
  %v6250 = vld [vmem:[%s4 + $0x21c] sm:$0xf]
  %v6251 = vld [vmem:[%s4 + $0x220] sm:$0xf]
  %v6252 = vld [vmem:[%s4 + $0x224] sm:$0xf]
  %v6253 = vld [vmem:[%s4 + $0x228] sm:$0xf]
  %v6254 = vld [vmem:[%s4 + $0x22c] sm:$0xf]
  %v6255 = vld [vmem:[%s4 + $0x230] sm:$0xf]
  %v6256 = vld [vmem:[%s4 + $0x234] sm:$0xf]
  %v6257 = vld [vmem:[%s4 + $0x238] sm:$0xf]
  %v6258 = vld [vmem:[%s4 + $0x23c] sm:$0xf]
  %v6403 = vunpack.c.l.b16 %v6115
  %v6404 = vunpack.c.l.b16 %v6116
  %v6405 = vunpack.c.l.b16 %v6117
  %v6406 = vunpack.c.l.b16 %v6118
  %v6407 = vunpack.c.l.b16 %v6119
  %v6408 = vunpack.c.l.b16 %v6120
  %v6409 = vunpack.c.l.b16 %v6121
  %v6410 = vunpack.c.l.b16 %v6122
  %v6411 = vunpack.c.l.b16 %v6123
  %v6412 = vunpack.c.l.b16 %v6124
  %v6413 = vunpack.c.l.b16 %v6125
  %v6414 = vunpack.c.l.b16 %v6126
  %v6415 = vunpack.c.l.b16 %v6127
  %v6416 = vunpack.c.l.b16 %v6128
  %v6417 = vunpack.c.l.b16 %v6129
  %v6418 = vunpack.c.l.b16 %v6130
  %v6419 = vunpack.c.l.b16 %v6131
  %v6420 = vunpack.c.l.b16 %v6132
  %v6421 = vunpack.c.l.b16 %v6133
  %v6422 = vunpack.c.l.b16 %v6134
  %v6423 = vunpack.c.l.b16 %v6135
  %v6424 = vunpack.c.l.b16 %v6136
  %v6425 = vunpack.c.l.b16 %v6137
  %v6426 = vunpack.c.l.b16 %v6138
  %v6427 = vunpack.c.l.b16 %v6139
  %v6428 = vunpack.c.l.b16 %v6140
  %v6429 = vunpack.c.l.b16 %v6141
  %v6430 = vunpack.c.l.b16 %v6142
  %v6431 = vunpack.c.l.b16 %v6143
  %v6432 = vunpack.c.l.b16 %v6144
  %v6433 = vunpack.c.l.b16 %v6145
  %v6434 = vunpack.c.l.b16 %v6146
  %v6435 = vunpack.c.l.b16 %v6147
  %v6436 = vunpack.c.l.b16 %v6148
  %v6437 = vunpack.c.l.b16 %v6149
  %v6438 = vunpack.c.l.b16 %v6150
  %v6439 = vunpack.c.l.b16 %v6151
  %v6440 = vunpack.c.l.b16 %v6152
  %v6441 = vunpack.c.l.b16 %v6153
  %v6442 = vunpack.c.l.b16 %v6154
  %v6443 = vunpack.c.l.b16 %v6155
  %v6444 = vunpack.c.l.b16 %v6156
  %v6445 = vunpack.c.l.b16 %v6157
  %v6446 = vunpack.c.l.b16 %v6158
  %v6447 = vunpack.c.l.b16 %v6159
  %v6448 = vunpack.c.l.b16 %v6160
  %v6449 = vunpack.c.l.b16 %v6161
  %v6450 = vunpack.c.l.b16 %v6162
  %v6451 = vunpack.c.l.b16 %v6163
  %v6452 = vunpack.c.l.b16 %v6164
  %v6453 = vunpack.c.l.b16 %v6165
  %v6454 = vunpack.c.l.b16 %v6166
  %v6455 = vunpack.c.l.b16 %v6167
  %v6456 = vunpack.c.l.b16 %v6168
  %v6457 = vunpack.c.l.b16 %v6169
  %v6458 = vunpack.c.l.b16 %v6170
  %v6459 = vunpack.c.l.b16 %v6171
  %v6460 = vunpack.c.l.b16 %v6172
  %v6461 = vunpack.c.l.b16 %v6173
  %v6462 = vunpack.c.l.b16 %v6174
  %v6463 = vunpack.c.l.b16 %v6175
  %v6464 = vunpack.c.l.b16 %v6176
  %v6465 = vunpack.c.l.b16 %v6177
  %v6466 = vunpack.c.l.b16 %v6178
  %v6467 = vunpack.c.l.b16 %v6179
  %v6468 = vunpack.c.l.b16 %v6180
  %v6469 = vunpack.c.l.b16 %v6181
  %v6470 = vunpack.c.l.b16 %v6182
  %v6471 = vunpack.c.l.b16 %v6183
  %v6472 = vunpack.c.l.b16 %v6184
  %v6473 = vunpack.c.l.b16 %v6185
  %v6474 = vunpack.c.l.b16 %v6186
  %v6475 = vunpack.c.l.b16 %v6187
  %v6476 = vunpack.c.l.b16 %v6188
  %v6477 = vunpack.c.l.b16 %v6189
  %v6478 = vunpack.c.l.b16 %v6190
  %v6479 = vunpack.c.l.b16 %v6191
  %v6480 = vunpack.c.l.b16 %v6192
  %v6481 = vunpack.c.l.b16 %v6193
  %v6482 = vunpack.c.l.b16 %v6194
  %v6483 = vunpack.c.l.b16 %v6195
  %v6484 = vunpack.c.l.b16 %v6196
  %v6485 = vunpack.c.l.b16 %v6197
  %v6486 = vunpack.c.l.b16 %v6198
  %v6487 = vunpack.c.l.b16 %v6199
  %v6488 = vunpack.c.l.b16 %v6200
  %v6489 = vunpack.c.l.b16 %v6201
  %v6490 = vunpack.c.l.b16 %v6202
  %v6491 = vunpack.c.l.b16 %v6203
  %v6492 = vunpack.c.l.b16 %v6204
  %v6493 = vunpack.c.l.b16 %v6205
  %v6494 = vunpack.c.l.b16 %v6206
  %v6495 = vunpack.c.l.b16 %v6207
  %v6496 = vunpack.c.l.b16 %v6208
  %v6497 = vunpack.c.l.b16 %v6209
  %v6498 = vunpack.c.l.b16 %v6210
  %v6499 = vunpack.c.l.b16 %v6211
  %v6500 = vunpack.c.l.b16 %v6212
  %v6501 = vunpack.c.l.b16 %v6213
  %v6502 = vunpack.c.l.b16 %v6214
  %v6503 = vunpack.c.l.b16 %v6215
  %v6504 = vunpack.c.l.b16 %v6216
  %v6505 = vunpack.c.l.b16 %v6217
  %v6506 = vunpack.c.l.b16 %v6218
  %v6507 = vunpack.c.l.b16 %v6219
  %v6508 = vunpack.c.l.b16 %v6220
  %v6509 = vunpack.c.l.b16 %v6221
  %v6510 = vunpack.c.l.b16 %v6222
  %v6511 = vunpack.c.l.b16 %v6223
  %v6512 = vunpack.c.l.b16 %v6224
  %v6513 = vunpack.c.l.b16 %v6225
  %v6514 = vunpack.c.l.b16 %v6226
  %v6515 = vunpack.c.l.b16 %v6227
  %v6516 = vunpack.c.l.b16 %v6228
  %v6517 = vunpack.c.l.b16 %v6229
  %v6518 = vunpack.c.l.b16 %v6230
  %v6519 = vunpack.c.l.b16 %v6231
  %v6520 = vunpack.c.l.b16 %v6232
  %v6521 = vunpack.c.l.b16 %v6233
  %v6522 = vunpack.c.l.b16 %v6234
  %v6523 = vunpack.c.l.b16 %v6235
  %v6524 = vunpack.c.l.b16 %v6236
  %v6525 = vunpack.c.l.b16 %v6237
  %v6526 = vunpack.c.l.b16 %v6238
  %v6527 = vunpack.c.l.b16 %v6239
  %v6528 = vunpack.c.l.b16 %v6240
  %v6529 = vunpack.c.l.b16 %v6241
  %v6530 = vunpack.c.l.b16 %v6242
  %v6531 = vunpack.c.l.b16 %v6243
  %v6532 = vunpack.c.l.b16 %v6244
  %v6533 = vunpack.c.l.b16 %v6245
  %v6534 = vunpack.c.l.b16 %v6246
  %v6535 = vunpack.c.l.b16 %v6247
  %v6536 = vunpack.c.l.b16 %v6248
  %v6537 = vunpack.c.l.b16 %v6249
  %v6538 = vunpack.c.l.b16 %v6250
  %v6539 = vunpack.c.l.b16 %v6251
  %v6540 = vunpack.c.l.b16 %v6252
  %v6541 = vunpack.c.l.b16 %v6253
  %v6542 = vunpack.c.l.b16 %v6254
  %v6543 = vunpack.c.l.b16 %v6255
  %v6544 = vunpack.c.l.b16 %v6256
  %v6545 = vunpack.c.l.b16 %v6257
  %v6546 = vunpack.c.l.b16 %v6258
  %v6547 = vpack.c.b16 %v6404, %v6403
  %v6548 = vpack.c.b16 %v6406, %v6405
  %v6549 = vpack.c.b16 %v6408, %v6407
  %v6550 = vpack.c.b16 %v6410, %v6409
  %v6551 = vpack.c.b16 %v6412, %v6411
  %v6552 = vpack.c.b16 %v6414, %v6413
  %v6553 = vpack.c.b16 %v6416, %v6415
  %v6554 = vpack.c.b16 %v6418, %v6417
  %v6555 = vpack.c.b16 %v6420, %v6419
  %v6556 = vpack.c.b16 %v6422, %v6421
  %v6557 = vpack.c.b16 %v6424, %v6423
  %v6558 = vpack.c.b16 %v6426, %v6425
  %v6559 = vpack.c.b16 %v6428, %v6427
  %v6560 = vpack.c.b16 %v6430, %v6429
  %v6561 = vpack.c.b16 %v6432, %v6431
  %v6562 = vpack.c.b16 %v6434, %v6433
  %v6563 = vpack.c.b16 %v6436, %v6435
  %v6564 = vpack.c.b16 %v6438, %v6437
  %v6565 = vpack.c.b16 %v6440, %v6439
  %v6566 = vpack.c.b16 %v6442, %v6441
  %v6567 = vpack.c.b16 %v6444, %v6443
  %v6568 = vpack.c.b16 %v6446, %v6445
  %v6569 = vpack.c.b16 %v6448, %v6447
  %v6570 = vpack.c.b16 %v6450, %v6449
  %v6571 = vpack.c.b16 %v6452, %v6451
  %v6572 = vpack.c.b16 %v6454, %v6453
  %v6573 = vpack.c.b16 %v6456, %v6455
  %v6574 = vpack.c.b16 %v6458, %v6457
  %v6575 = vpack.c.b16 %v6460, %v6459
  %v6576 = vpack.c.b16 %v6462, %v6461
  %v6577 = vpack.c.b16 %v6464, %v6463
  %v6578 = vpack.c.b16 %v6466, %v6465
  %v6579 = vpack.c.b16 %v6468, %v6467
  %v6580 = vpack.c.b16 %v6470, %v6469
  %v6581 = vpack.c.b16 %v6472, %v6471
  %v6582 = vpack.c.b16 %v6474, %v6473
  %v6583 = vpack.c.b16 %v6476, %v6475
  %v6584 = vpack.c.b16 %v6478, %v6477
  %v6585 = vpack.c.b16 %v6480, %v6479
  %v6586 = vpack.c.b16 %v6482, %v6481
  %v6587 = vpack.c.b16 %v6484, %v6483
  %v6588 = vpack.c.b16 %v6486, %v6485
  %v6589 = vpack.c.b16 %v6488, %v6487
  %v6590 = vpack.c.b16 %v6490, %v6489
  %v6591 = vpack.c.b16 %v6492, %v6491
  %v6592 = vpack.c.b16 %v6494, %v6493
  %v6593 = vpack.c.b16 %v6496, %v6495
  %v6594 = vpack.c.b16 %v6498, %v6497
  %v6595 = vpack.c.b16 %v6500, %v6499
  %v6596 = vpack.c.b16 %v6502, %v6501
  %v6597 = vpack.c.b16 %v6504, %v6503
  %v6598 = vpack.c.b16 %v6506, %v6505
  %v6599 = vpack.c.b16 %v6508, %v6507
  %v6600 = vpack.c.b16 %v6510, %v6509
  %v6601 = vpack.c.b16 %v6512, %v6511
  %v6602 = vpack.c.b16 %v6514, %v6513
  %v6603 = vpack.c.b16 %v6516, %v6515
  %v6604 = vpack.c.b16 %v6518, %v6517
  %v6605 = vpack.c.b16 %v6520, %v6519
  %v6606 = vpack.c.b16 %v6522, %v6521
  %v6607 = vpack.c.b16 %v6524, %v6523
  %v6608 = vpack.c.b16 %v6526, %v6525
  %v6609 = vpack.c.b16 %v6528, %v6527
  %v6610 = vpack.c.b16 %v6530, %v6529
  %v6611 = vpack.c.b16 %v6532, %v6531
  %v6612 = vpack.c.b16 %v6534, %v6533
  %v6613 = vpack.c.b16 %v6536, %v6535
  %v6614 = vpack.c.b16 %v6538, %v6537
  %v6615 = vpack.c.b16 %v6540, %v6539
  %v6616 = vpack.c.b16 %v6542, %v6541
  %v6617 = vpack.c.b16 %v6544, %v6543
  %v6618 = vpack.c.b16 %v6546, %v6545
  %6691 = vmatprep.subr.bf16.mxu0 0
  %6692 = vmatpush1.bf16.msra.mxu0 %v6547
  %6693 = vmatprep.subr.bf16.mxu0 0
  %6694 = vmatpush1.bf16.msra.mxu0 %v6548
  %6695 = vmatprep.subr.bf16.mxu0 0
  %6696 = vmatpush1.bf16.msra.mxu0 %v6549
  %6697 = vmatprep.subr.bf16.mxu0 0
  %6698 = vmatpush1.bf16.msra.mxu0 %v6550
  %6699 = vmatprep.subr.bf16.mxu0 0
  %6700 = vmatpush1.bf16.msra.mxu0 %v6551
  %6701 = vmatprep.subr.bf16.mxu0 0
  %6702 = vmatpush1.bf16.msra.mxu0 %v6552
  %6703 = vmatprep.subr.bf16.mxu0 0
  %6704 = vmatpush1.bf16.msra.mxu0 %v6553
  %6705 = vmatprep.subr.bf16.mxu0 0
  %6706 = vmatpush1.bf16.msra.mxu0 %v6554
  %6707 = vmatprep.subr.bf16.mxu0 0
  %6708 = vmatpush1.bf16.msra.mxu0 %v6555
  %6709 = vmatprep.subr.bf16.mxu0 0
  %6710 = vmatpush1.bf16.msra.mxu0 %v6556
  %6711 = vmatprep.subr.bf16.mxu0 0
  %6712 = vmatpush1.bf16.msra.mxu0 %v6557
  %6713 = vmatprep.subr.bf16.mxu0 0
  %6714 = vmatpush1.bf16.msra.mxu0 %v6558
  %6715 = vmatprep.subr.bf16.mxu0 0
  %6716 = vmatpush1.bf16.msra.mxu0 %v6559
  %6717 = vmatprep.subr.bf16.mxu0 0
  %6718 = vmatpush1.bf16.msra.mxu0 %v6560
  %6719 = vmatprep.subr.bf16.mxu0 0
  %6720 = vmatpush1.bf16.msra.mxu0 %v6561
  %6721 = vmatprep.subr.bf16.mxu0 0
  %6722 = vmatpush1.bf16.msra.mxu0 %v6562
  %6723 = vmatprep.mubr.bf16.mxu0 %v5478
  %6724 = vmatmul.mubr.bf16.gmra.mrb[0].mxu0 %v5307
  %v6725 = vpop.f32.mrb[0].mxu0
  %v6726 = vadd.f32 0.0, %v6725
  %v6727 = vpop.f32.mrb[0].mxu0
  %v6728 = vpop.f32.mrb[0].mxu0
  %v6729 = vadd.f32 0.0, %v6728
  %v6730 = vpop.f32.mrb[0].mxu0
  %6731 = vmatprep.mubr.bf16.mxu0 %v5490
  %6732 = vmatmul.mubr.bf16.gmra.mrb[0].mxu0 %v5308
  %v6733 = vpop.f32.mrb[0].mxu0
  %v6734 = vadd.f32 0.0, %v6733
  %v6735 = vpop.f32.mrb[0].mxu0
  %v6736 = vpop.f32.mrb[0].mxu0
  %v6737 = vadd.f32 0.0, %v6736
  %v6738 = vpop.f32.mrb[0].mxu0
  %6739 = vmatprep.mubr.bf16.mxu0 %v5502
  %6740 = vmatmul.mubr.bf16.gmra.mrb[0].mxu0 %v5309
  %v6741 = vpop.f32.mrb[0].mxu0
  %v6742 = vadd.f32 0.0, %v6741
  %v6743 = vpop.f32.mrb[0].mxu0
  %v6744 = vpop.f32.mrb[0].mxu0
  %v6745 = vadd.f32 0.0, %v6744
  %v6746 = vpop.f32.mrb[0].mxu0
  %6747 = vmatprep.mubr.bf16.mxu0 %v5514
  %6748 = vmatmul.mubr.bf16.gmra.mrb[0].mxu0 %v5310
  %v6749 = vpop.f32.mrb[0].mxu0
  %v6750 = vadd.f32 0.0, %v6749
  %v6751 = vpop.f32.mrb[0].mxu0
  %v6752 = vpop.f32.mrb[0].mxu0
  %v6753 = vadd.f32 0.0, %v6752
  %v6754 = vpop.f32.mrb[0].mxu0
  %6755 = vmatprep.mubr.bf16.mxu0 %v5526
  %6756 = vmatmul.mubr.bf16.gmra.mrb[0].mxu0 %v5311
  %v6757 = vpop.f32.mrb[0].mxu0
  %v6758 = vadd.f32 0.0, %v6757
  %v6759 = vpop.f32.mrb[0].mxu0
  %v6760 = vpop.f32.mrb[0].mxu0
  %v6761 = vadd.f32 0.0, %v6760
  %v6762 = vpop.f32.mrb[0].mxu0
  %6763 = vmatprep.mubr.bf16.mxu0 %v5538
  %6764 = vmatmul.mubr.bf16.gmra.mrb[0].mxu0 %v5312
  %v6765 = vpop.f32.mrb[0].mxu0
  %v6766 = vadd.f32 0.0, %v6765
  %v6767 = vpop.f32.mrb[0].mxu0
  %v6768 = vpop.f32.mrb[0].mxu0
  %v6769 = vadd.f32 0.0, %v6768
  %v6770 = vpop.f32.mrb[0].mxu0
  %6771 = vmatprep.mubr.bf16.mxu0 %v5550
  %6772 = vmatmul.mubr.bf16.gmra.mrb[0].mxu0 %v5313
  %v6773 = vpop.f32.mrb[0].mxu0
  %v6774 = vadd.f32 0.0, %v6773
  %v6775 = vpop.f32.mrb[0].mxu0
  %v6776 = vpop.f32.mrb[0].mxu0
  %v6777 = vadd.f32 0.0, %v6776
  %v6778 = vpop.f32.mrb[0].mxu0
  %6779 = vmatprep.mubr.bf16.mxu0 %v5562
  %6780 = vmatmul.mubr.bf16.gmra.mrb[0].mxu0 %v5314
  %v6781 = vpop.f32.mrb[0].mxu0
  %v6782 = vadd.f32 0.0, %v6781
  %v6783 = vpop.f32.mrb[0].mxu0
  %v6784 = vpop.f32.mrb[0].mxu0
  %v6785 = vadd.f32 0.0, %v6784
  %v6786 = vpop.f32.mrb[0].mxu0
  %6787 = vmatprep.mubr.bf16.mxu0 %v5574
  %6788 = vmatmul.mubr.bf16.gmra.mrb[0].mxu0 %v5315
  %v6789 = vpop.f32.mrb[0].mxu0
  %v6790 = vadd.f32 0.0, %v6789
  %v6791 = vpop.f32.mrb[0].mxu0
  %v6792 = vpop.f32.mrb[0].mxu0
  %v6793 = vadd.f32 0.0, %v6792
  %v6794 = vpop.f32.mrb[0].mxu0
  %6795 = vmatprep.mubr.bf16.mxu0 %v5586
  %6796 = vmatmul.mubr.bf16.gmra.mrb[0].mxu0 %v5316
  %v6797 = vpop.f32.mrb[0].mxu0
  %v6798 = vadd.f32 0.0, %v6797
  %v6799 = vpop.f32.mrb[0].mxu0
  %v6800 = vpop.f32.mrb[0].mxu0
  %v6801 = vadd.f32 0.0, %v6800
  %v6802 = vpop.f32.mrb[0].mxu0
  %6803 = vmatprep.mubr.bf16.mxu0 %v5598
  %6804 = vmatmul.mubr.bf16.gmra.mrb[0].mxu0 %v5317
  %v6805 = vpop.f32.mrb[0].mxu0
  %v6806 = vadd.f32 0.0, %v6805
  %v6807 = vpop.f32.mrb[0].mxu0
  %v6808 = vpop.f32.mrb[0].mxu0
  %v6809 = vadd.f32 0.0, %v6808
  %v6810 = vpop.f32.mrb[0].mxu0
  %6811 = vmatprep.mubr.bf16.mxu0 %v5610
  %6812 = vmatmul.mubr.bf16.gmra.mrb[0].mxu0 %v5318
  %v6813 = vpop.f32.mrb[0].mxu0
  %v6814 = vadd.f32 0.0, %v6813
  %v6815 = vpop.f32.mrb[0].mxu0
  %v6816 = vpop.f32.mrb[0].mxu0
  %v6817 = vadd.f32 0.0, %v6816
  %v6818 = vpop.f32.mrb[0].mxu0
  %6819 = vmatprep.mubr.bf16.mxu0 %v5622
  %6820 = vmatmul.mubr.bf16.gmra.mrb[0].mxu0 %v5319
  %v6821 = vpop.f32.mrb[0].mxu0
  %v6822 = vadd.f32 0.0, %v6821
  %v6823 = vpop.f32.mrb[0].mxu0
  %v6824 = vpop.f32.mrb[0].mxu0
  %v6825 = vadd.f32 0.0, %v6824
  %v6826 = vpop.f32.mrb[0].mxu0
  %6827 = vmatprep.mubr.bf16.mxu0 %v5634
  %6828 = vmatmul.mubr.bf16.gmra.mrb[0].mxu0 %v5320
  %v6829 = vpop.f32.mrb[0].mxu0
  %v6830 = vadd.f32 0.0, %v6829
  %v6831 = vpop.f32.mrb[0].mxu0
  %v6832 = vpop.f32.mrb[0].mxu0
  %v6833 = vadd.f32 0.0, %v6832
  %v6834 = vpop.f32.mrb[0].mxu0
  %6835 = vmatprep.mubr.bf16.mxu0 %v5646
  %6836 = vmatmul.mubr.bf16.gmra.mrb[0].mxu0 %v5321
  %v6837 = vpop.f32.mrb[0].mxu0
  %v6838 = vadd.f32 0.0, %v6837
  %v6839 = vpop.f32.mrb[0].mxu0
  %v6840 = vpop.f32.mrb[0].mxu0
  %v6841 = vadd.f32 0.0, %v6840
  %v6842 = vpop.f32.mrb[0].mxu0
  %6843 = vmatprep.mubr.bf16.mxu0 %v5658
  %6844 = vmatmul.mubr.bf16.gmra.mrb[0].mxu0 %v5322
  %v6845 = vpop.f32.mrb[0].mxu0
  %v6846 = vadd.f32 0.0, %v6845
  %v6847 = vpop.f32.mrb[0].mxu0
  %v6848 = vpop.f32.mrb[0].mxu0
  %v6849 = vadd.f32 0.0, %v6848
  %v6850 = vpop.f32.mrb[0].mxu0
  %6851 = vmatprep.mubr.bf16.mxu0 %v5670
  %6852 = vmatmul.mubr.bf16.gmra.mrb[0].mxu0 %v5323
  %v6853 = vpop.f32.mrb[0].mxu0
  %v6854 = vadd.f32 0.0, %v6853
  %v6855 = vpop.f32.mrb[0].mxu0
  %v6856 = vpop.f32.mrb[0].mxu0
  %v6857 = vadd.f32 0.0, %v6856
  %v6858 = vpop.f32.mrb[0].mxu0
  %6859 = vmatprep.mubr.bf16.mxu0 %v5682
  %6860 = vmatmul.mubr.bf16.gmra.mrb[0].mxu0 %v5324
  %v6861 = vpop.f32.mrb[0].mxu0
  %v6862 = vadd.f32 0.0, %v6861
  %v6863 = vpop.f32.mrb[0].mxu0
  %v6864 = vpop.f32.mrb[0].mxu0
  %v6865 = vadd.f32 0.0, %v6864
  %v6866 = vpop.f32.mrb[0].mxu0
  %6867 = vmatprep.mubr.bf16.mxu0 %v5694
  %6868 = vmatmul.mubr.bf16.gmra.mrb[0].mxu0 %v5325
  %v6869 = vpop.f32.mrb[0].mxu0
  %v6870 = vadd.f32 0.0, %v6869
  %v6871 = vpop.f32.mrb[0].mxu0
  %v6872 = vpop.f32.mrb[0].mxu0
  %v6873 = vadd.f32 0.0, %v6872
  %v6874 = vpop.f32.mrb[0].mxu0
  %6875 = vmatprep.mubr.bf16.mxu0 %v5706
  %6876 = vmatmul.mubr.bf16.gmra.mrb[0].mxu0 %v5326
  %v6877 = vpop.f32.mrb[0].mxu0
  %v6878 = vadd.f32 0.0, %v6877
  %v6879 = vpop.f32.mrb[0].mxu0
  %v6880 = vpop.f32.mrb[0].mxu0
  %v6881 = vadd.f32 0.0, %v6880
  %v6882 = vpop.f32.mrb[0].mxu0
  %6883 = vmatprep.mubr.bf16.mxu0 %v5718
  %6884 = vmatmul.mubr.bf16.gmra.mrb[0].mxu0 %v5327
  %v6885 = vpop.f32.mrb[0].mxu0
  %v6886 = vadd.f32 0.0, %v6885
  %v6887 = vpop.f32.mrb[0].mxu0
  %v6888 = vpop.f32.mrb[0].mxu0
  %v6889 = vadd.f32 0.0, %v6888
  %v6890 = vpop.f32.mrb[0].mxu0
  %6891 = vmatprep.mubr.bf16.mxu0 %v5730
  %6892 = vmatmul.mubr.bf16.gmra.mrb[0].mxu0 %v5328
  %v6893 = vpop.f32.mrb[0].mxu0
  %v6894 = vadd.f32 0.0, %v6893
  %v6895 = vpop.f32.mrb[0].mxu0
  %v6896 = vpop.f32.mrb[0].mxu0
  %v6897 = vadd.f32 0.0, %v6896
  %v6898 = vpop.f32.mrb[0].mxu0
  %6899 = vmatprep.mubr.bf16.mxu0 %v5742
  %6900 = vmatmul.mubr.bf16.gmra.mrb[0].mxu0 %v5329
  %v6901 = vpop.f32.mrb[0].mxu0
  %v6902 = vadd.f32 0.0, %v6901
  %v6903 = vpop.f32.mrb[0].mxu0
  %v6904 = vpop.f32.mrb[0].mxu0
  %v6905 = vadd.f32 0.0, %v6904
  %v6906 = vpop.f32.mrb[0].mxu0
  %6907 = vmatprep.mubr.bf16.mxu0 %v5754
  %6908 = vmatmul.mubr.bf16.gmra.mrb[0].mxu0 %v5330
  %v6909 = vpop.f32.mrb[0].mxu0
  %v6910 = vadd.f32 0.0, %v6909
  %v6911 = vpop.f32.mrb[0].mxu0
  %v6912 = vpop.f32.mrb[0].mxu0
  %v6913 = vadd.f32 0.0, %v6912
  %v6914 = vpop.f32.mrb[0].mxu0
  %6915 = vmatprep.mubr.bf16.mxu0 %v5766
  %6916 = vmatmul.mubr.bf16.gmra.mrb[0].mxu0 %v5331
  %v6917 = vpop.f32.mrb[0].mxu0
  %v6918 = vadd.f32 0.0, %v6917
  %v6919 = vpop.f32.mrb[0].mxu0
  %v6920 = vpop.f32.mrb[0].mxu0
  %v6921 = vadd.f32 0.0, %v6920
  %v6922 = vpop.f32.mrb[0].mxu0
  %6923 = vmatprep.mubr.bf16.mxu0 %v5778
  %6924 = vmatmul.mubr.bf16.gmra.mrb[0].mxu0 %v5332
  %v6925 = vpop.f32.mrb[0].mxu0
  %v6926 = vadd.f32 0.0, %v6925
  %v6927 = vpop.f32.mrb[0].mxu0
  %v6928 = vpop.f32.mrb[0].mxu0
  %v6929 = vadd.f32 0.0, %v6928
  %v6930 = vpop.f32.mrb[0].mxu0
  %6931 = vmatprep.mubr.bf16.mxu0 %v5790
  %6932 = vmatmul.mubr.bf16.gmra.mrb[0].mxu0 %v5333
  %v6933 = vpop.f32.mrb[0].mxu0
  %v6934 = vadd.f32 0.0, %v6933
  %v6935 = vpop.f32.mrb[0].mxu0
  %v6936 = vpop.f32.mrb[0].mxu0
  %v6937 = vadd.f32 0.0, %v6936
  %v6938 = vpop.f32.mrb[0].mxu0
  %6939 = vmatprep.mubr.bf16.mxu0 %v5802
  %6940 = vmatmul.mubr.bf16.gmra.mrb[0].mxu0 %v5334
  %v6941 = vpop.f32.mrb[0].mxu0
  %v6942 = vadd.f32 0.0, %v6941
  %v6943 = vpop.f32.mrb[0].mxu0
  %v6944 = vpop.f32.mrb[0].mxu0
  %v6945 = vadd.f32 0.0, %v6944
  %v6946 = vpop.f32.mrb[0].mxu0
  %6947 = vmatprep.mubr.bf16.mxu0 %v5814
  %6948 = vmatmul.mubr.bf16.gmra.mrb[0].mxu0 %v5335
  %v6949 = vpop.f32.mrb[0].mxu0
  %v6950 = vadd.f32 0.0, %v6949
  %v6951 = vpop.f32.mrb[0].mxu0
  %v6952 = vpop.f32.mrb[0].mxu0
  %v6953 = vadd.f32 0.0, %v6952
  %v6954 = vpop.f32.mrb[0].mxu0
  %6955 = vmatprep.mubr.bf16.mxu0 %v5826
  %6956 = vmatmul.mubr.bf16.gmra.mrb[0].mxu0 %v5336
  %v6957 = vpop.f32.mrb[0].mxu0
  %v6958 = vadd.f32 0.0, %v6957
  %v6959 = vpop.f32.mrb[0].mxu0
  %v6960 = vpop.f32.mrb[0].mxu0
  %v6961 = vadd.f32 0.0, %v6960
  %v6962 = vpop.f32.mrb[0].mxu0
  %6963 = vmatprep.mubr.bf16.mxu0 %v5838
  %6964 = vmatmul.mubr.bf16.gmra.mrb[0].mxu0 %v5337
  %v6965 = vpop.f32.mrb[0].mxu0
  %v6966 = vadd.f32 0.0, %v6965
  %v6967 = vpop.f32.mrb[0].mxu0
  %v6968 = vpop.f32.mrb[0].mxu0
  %v6969 = vadd.f32 0.0, %v6968
  %v6970 = vpop.f32.mrb[0].mxu0
  %6971 = vmatprep.mubr.bf16.mxu0 %v5850
  %6972 = vmatmul.mubr.bf16.gmra.mrb[0].mxu0 %v5338
  %v6973 = vpop.f32.mrb[0].mxu0
  %v6974 = vadd.f32 0.0, %v6973
  %v6975 = vpop.f32.mrb[0].mxu0
  %v6976 = vpop.f32.mrb[0].mxu0
  %v6977 = vadd.f32 0.0, %v6976
  %v6978 = vpop.f32.mrb[0].mxu0
  %6979 = vdwg.mxu0
  %6980 = vmatprep.subr.bf16.mxu0 0
  %6981 = vmatpush1.bf16.msra.mxu0 %v6563
  %6982 = vmatprep.subr.bf16.mxu0 0
  %6983 = vmatpush1.bf16.msra.mxu0 %v6564
  %6984 = vmatprep.subr.bf16.mxu0 0
  %6985 = vmatpush1.bf16.msra.mxu0 %v6565
  %6986 = vmatprep.subr.bf16.mxu0 0
  %6987 = vmatpush1.bf16.msra.mxu0 %v6566
  %6988 = vmatprep.subr.bf16.mxu0 0
  %6989 = vmatpush1.bf16.msra.mxu0 %v6567
  %6990 = vmatprep.subr.bf16.mxu0 0
  %6991 = vmatpush1.bf16.msra.mxu0 %v6568
  %6992 = vmatprep.subr.bf16.mxu0 0
  %6993 = vmatpush1.bf16.msra.mxu0 %v6569
  %6994 = vmatprep.subr.bf16.mxu0 0
  %6995 = vmatpush1.bf16.msra.mxu0 %v6570
  %6996 = vmatprep.subr.bf16.mxu0 0
  %6997 = vmatpush1.bf16.msra.mxu0 %v6571
  %6998 = vmatprep.subr.bf16.mxu0 0
  %6999 = vmatpush1.bf16.msra.mxu0 %v6572
  %7000 = vmatprep.subr.bf16.mxu0 0
  %7001 = vmatpush1.bf16.msra.mxu0 %v6573
  %7002 = vmatprep.subr.bf16.mxu0 0
  %7003 = vmatpush1.bf16.msra.mxu0 %v6574
  %7004 = vmatprep.subr.bf16.mxu0 0
  %7005 = vmatpush1.bf16.msra.mxu0 %v6575
  %7006 = vmatprep.subr.bf16.mxu0 0
  %7007 = vmatpush1.bf16.msra.mxu0 %v6576
  %7008 = vmatprep.subr.bf16.mxu0 0
  %7009 = vmatpush1.bf16.msra.mxu0 %v6577
  %7010 = vmatprep.subr.bf16.mxu0 0
  %7011 = vmatpush1.bf16.msra.mxu0 %v6578
  %7012 = vmatprep.mubr.bf16.mxu0 %v5308
  %7013 = vmatmul.mubr.bf16.gmra.mrb[0].mxu0 %v5885
  %v7014 = vpop.f32.mrb[0].mxu0
  %v7015 = vadd.f32 %v6726, %v7014
  %v7016 = vpop.f32.mrb[0].mxu0
  %v7017 = vpop.f32.mrb[0].mxu0
  %v7018 = vadd.f32 %v6729, %v7017
  %v7019 = vpop.f32.mrb[0].mxu0
  %7020 = vmatprep.mubr.bf16.mxu0 %v5309
  %7021 = vmatmul.mubr.bf16.gmra.mrb[0].mxu0 %v5888
  %v7022 = vpop.f32.mrb[0].mxu0
  %v7023 = vadd.f32 %v6734, %v7022
  %v7024 = vpop.f32.mrb[0].mxu0
  %v7025 = vpop.f32.mrb[0].mxu0
  %v7026 = vadd.f32 %v6737, %v7025
  %v7027 = vpop.f32.mrb[0].mxu0
  %7028 = vmatprep.mubr.bf16.mxu0 %v5310
  %7029 = vmatmul.mubr.bf16.gmra.mrb[0].mxu0 %v5891
  %v7030 = vpop.f32.mrb[0].mxu0
  %v7031 = vadd.f32 %v6742, %v7030
  %v7032 = vpop.f32.mrb[0].mxu0
  %v7033 = vpop.f32.mrb[0].mxu0
  %v7034 = vadd.f32 %v6745, %v7033
  %v7035 = vpop.f32.mrb[0].mxu0
  %7036 = vmatprep.mubr.bf16.mxu0 %v5311
  %7037 = vmatmul.mubr.bf16.gmra.mrb[0].mxu0 %v5894
  %v7038 = vpop.f32.mrb[0].mxu0
  %v7039 = vadd.f32 %v6750, %v7038
  %v7040 = vpop.f32.mrb[0].mxu0
  %v7041 = vpop.f32.mrb[0].mxu0
  %v7042 = vadd.f32 %v6753, %v7041
  %v7043 = vpop.f32.mrb[0].mxu0
  %7044 = vmatprep.mubr.bf16.mxu0 %v5312
  %7045 = vmatmul.mubr.bf16.gmra.mrb[0].mxu0 %v5897
  %v7046 = vpop.f32.mrb[0].mxu0
  %v7047 = vadd.f32 %v6758, %v7046
  %v7048 = vpop.f32.mrb[0].mxu0
  %v7049 = vpop.f32.mrb[0].mxu0
  %v7050 = vadd.f32 %v6761, %v7049
  %v7051 = vpop.f32.mrb[0].mxu0
  %7052 = vmatprep.mubr.bf16.mxu0 %v5313
  %7053 = vmatmul.mubr.bf16.gmra.mrb[0].mxu0 %v5900
  %v7054 = vpop.f32.mrb[0].mxu0
  %v7055 = vadd.f32 %v6766, %v7054
  %v7056 = vpop.f32.mrb[0].mxu0
  %v7057 = vpop.f32.mrb[0].mxu0
  %v7058 = vadd.f32 %v6769, %v7057
  %v7059 = vpop.f32.mrb[0].mxu0
  %7060 = vmatprep.mubr.bf16.mxu0 %v5314
  %7061 = vmatmul.mubr.bf16.gmra.mrb[0].mxu0 %v5903
  %v7062 = vpop.f32.mrb[0].mxu0
  %v7063 = vadd.f32 %v6774, %v7062
  %v7064 = vpop.f32.mrb[0].mxu0
  %v7065 = vpop.f32.mrb[0].mxu0
  %v7066 = vadd.f32 %v6777, %v7065
  %v7067 = vpop.f32.mrb[0].mxu0
  %7068 = vmatprep.mubr.bf16.mxu0 %v5315
  %7069 = vmatmul.mubr.bf16.gmra.mrb[0].mxu0 %v5906
  %v7070 = vpop.f32.mrb[0].mxu0
  %v7071 = vadd.f32 %v6782, %v7070
  %v7072 = vpop.f32.mrb[0].mxu0
  %v7073 = vpop.f32.mrb[0].mxu0
  %v7074 = vadd.f32 %v6785, %v7073
  %v7075 = vpop.f32.mrb[0].mxu0
  %7076 = vmatprep.mubr.bf16.mxu0 %v5316
  %7077 = vmatmul.mubr.bf16.gmra.mrb[0].mxu0 %v5909
  %v7078 = vpop.f32.mrb[0].mxu0
  %v7079 = vadd.f32 %v6790, %v7078
  %v7080 = vpop.f32.mrb[0].mxu0
  %v7081 = vpop.f32.mrb[0].mxu0
  %v7082 = vadd.f32 %v6793, %v7081
  %v7083 = vpop.f32.mrb[0].mxu0
  %7084 = vmatprep.mubr.bf16.mxu0 %v5317
  %7085 = vmatmul.mubr.bf16.gmra.mrb[0].mxu0 %v5912
  %v7086 = vpop.f32.mrb[0].mxu0
  %v7087 = vadd.f32 %v6798, %v7086
  %v7088 = vpop.f32.mrb[0].mxu0
  %v7089 = vpop.f32.mrb[0].mxu0
  %v7090 = vadd.f32 %v6801, %v7089
  %v7091 = vpop.f32.mrb[0].mxu0
  %7092 = vmatprep.mubr.bf16.mxu0 %v5318
  %7093 = vmatmul.mubr.bf16.gmra.mrb[0].mxu0 %v5915
  %v7094 = vpop.f32.mrb[0].mxu0
  %v7095 = vadd.f32 %v6806, %v7094
  %v7096 = vpop.f32.mrb[0].mxu0
  %v7097 = vpop.f32.mrb[0].mxu0
  %v7098 = vadd.f32 %v6809, %v7097
  %v7099 = vpop.f32.mrb[0].mxu0
  %7100 = vmatprep.mubr.bf16.mxu0 %v5319
  %7101 = vmatmul.mubr.bf16.gmra.mrb[0].mxu0 %v5918
  %v7102 = vpop.f32.mrb[0].mxu0
  %v7103 = vadd.f32 %v6814, %v7102
  %v7104 = vpop.f32.mrb[0].mxu0
  %v7105 = vpop.f32.mrb[0].mxu0
  %v7106 = vadd.f32 %v6817, %v7105
  %v7107 = vpop.f32.mrb[0].mxu0
  %7108 = vmatprep.mubr.bf16.mxu0 %v5320
  %7109 = vmatmul.mubr.bf16.gmra.mrb[0].mxu0 %v5921
  %v7110 = vpop.f32.mrb[0].mxu0
  %v7111 = vadd.f32 %v6822, %v7110
  %v7112 = vpop.f32.mrb[0].mxu0
  %v7113 = vpop.f32.mrb[0].mxu0
  %v7114 = vadd.f32 %v6825, %v7113
  %v7115 = vpop.f32.mrb[0].mxu0
  %7116 = vmatprep.mubr.bf16.mxu0 %v5321
  %7117 = vmatmul.mubr.bf16.gmra.mrb[0].mxu0 %v5924
  %v7118 = vpop.f32.mrb[0].mxu0
  %v7119 = vadd.f32 %v6830, %v7118
  %v7120 = vpop.f32.mrb[0].mxu0
  %v7121 = vpop.f32.mrb[0].mxu0
  %v7122 = vadd.f32 %v6833, %v7121
  %v7123 = vpop.f32.mrb[0].mxu0
  %7124 = vmatprep.mubr.bf16.mxu0 %v5322
  %7125 = vmatmul.mubr.bf16.gmra.mrb[0].mxu0 %v5927
  %v7126 = vpop.f32.mrb[0].mxu0
  %v7127 = vadd.f32 %v6838, %v7126
  %v7128 = vpop.f32.mrb[0].mxu0
  %v7129 = vpop.f32.mrb[0].mxu0
  %v7130 = vadd.f32 %v6841, %v7129
  %v7131 = vpop.f32.mrb[0].mxu0
  %7132 = vmatprep.mubr.bf16.mxu0 %v6019
  %7133 = vmatmul.mubr.bf16.gmra.mrb[0].mxu0 %v5930
  %v7134 = vpop.f32.mrb[0].mxu0
  %v7135 = vadd.f32 %v6846, %v7134
  %v7136 = vpop.f32.mrb[0].mxu0
  %v7137 = vpop.f32.mrb[0].mxu0
  %v7138 = vadd.f32 %v6849, %v7137
  %v7139 = vpop.f32.mrb[0].mxu0
  %7140 = vmatprep.mubr.bf16.mxu0 %v5324
  %7141 = vmatmul.mubr.bf16.gmra.mrb[0].mxu0 %v5933
  %v7142 = vpop.f32.mrb[0].mxu0
  %v7143 = vadd.f32 %v6854, %v7142
  %v7144 = vpop.f32.mrb[0].mxu0
  %v7145 = vpop.f32.mrb[0].mxu0
  %v7146 = vadd.f32 %v6857, %v7145
  %v7147 = vpop.f32.mrb[0].mxu0
  %7148 = vmatprep.mubr.bf16.mxu0 %v5325
  %7149 = vmatmul.mubr.bf16.gmra.mrb[0].mxu0 %v5936
  %v7150 = vpop.f32.mrb[0].mxu0
  %v7151 = vadd.f32 %v6862, %v7150
  %v7152 = vpop.f32.mrb[0].mxu0
  %v7153 = vpop.f32.mrb[0].mxu0
  %v7154 = vadd.f32 %v6865, %v7153
  %v7155 = vpop.f32.mrb[0].mxu0
  %7156 = vmatprep.mubr.bf16.mxu0 %v5326
  %7157 = vmatmul.mubr.bf16.gmra.mrb[0].mxu0 %v5939
  %v7158 = vpop.f32.mrb[0].mxu0
  %v7159 = vadd.f32 %v6870, %v7158
  %v7160 = vpop.f32.mrb[0].mxu0
  %v7161 = vpop.f32.mrb[0].mxu0
  %v7162 = vadd.f32 %v6873, %v7161
  %v7163 = vpop.f32.mrb[0].mxu0
  %7164 = vmatprep.mubr.bf16.mxu0 %v5327
  %7165 = vmatmul.mubr.bf16.gmra.mrb[0].mxu0 %v5942
  %v7166 = vpop.f32.mrb[0].mxu0
  %v7167 = vadd.f32 %v6878, %v7166
  %v7168 = vpop.f32.mrb[0].mxu0
  %v7169 = vpop.f32.mrb[0].mxu0
  %v7170 = vadd.f32 %v6881, %v7169
  %v7171 = vpop.f32.mrb[0].mxu0
  %7172 = vmatprep.mubr.bf16.mxu0 %v5328
  %7173 = vmatmul.mubr.bf16.gmra.mrb[0].mxu0 %v5945
  %v7174 = vpop.f32.mrb[0].mxu0
  %v7175 = vadd.f32 %v6886, %v7174
  %v7176 = vpop.f32.mrb[0].mxu0
  %v7177 = vpop.f32.mrb[0].mxu0
  %v7178 = vadd.f32 %v6889, %v7177
  %v7179 = vpop.f32.mrb[0].mxu0
  %7180 = vmatprep.mubr.bf16.mxu0 %v5329
  %7181 = vmatmul.mubr.bf16.gmra.mrb[0].mxu0 %v5948
  %v7182 = vpop.f32.mrb[0].mxu0
  %v7183 = vadd.f32 %v6894, %v7182
  %v7184 = vpop.f32.mrb[0].mxu0
  %v7185 = vpop.f32.mrb[0].mxu0
  %v7186 = vadd.f32 %v6897, %v7185
  %v7187 = vpop.f32.mrb[0].mxu0
  %7188 = vmatprep.mubr.bf16.mxu0 %v5330
  %7189 = vmatmul.mubr.bf16.gmra.mrb[0].mxu0 %v5951
  %v7190 = vpop.f32.mrb[0].mxu0
  %v7191 = vadd.f32 %v6902, %v7190
  %v7192 = vpop.f32.mrb[0].mxu0
  %v7193 = vpop.f32.mrb[0].mxu0
  %v7194 = vadd.f32 %v6905, %v7193
  %v7195 = vpop.f32.mrb[0].mxu0
  %7196 = vmatprep.mubr.bf16.mxu0 %v5331
  %7197 = vmatmul.mubr.bf16.gmra.mrb[0].mxu0 %v5954
  %v7198 = vpop.f32.mrb[0].mxu0
  %v7199 = vadd.f32 %v6910, %v7198
  %v7200 = vpop.f32.mrb[0].mxu0
  %v7201 = vpop.f32.mrb[0].mxu0
  %v7202 = vadd.f32 %v6913, %v7201
  %v7203 = vpop.f32.mrb[0].mxu0
  %7204 = vmatprep.mubr.bf16.mxu0 %v5332
  %7205 = vmatmul.mubr.bf16.gmra.mrb[0].mxu0 %v5957
  %v7206 = vpop.f32.mrb[0].mxu0
  %v7207 = vadd.f32 %v6918, %v7206
  %v7208 = vpop.f32.mrb[0].mxu0
  %v7209 = vpop.f32.mrb[0].mxu0
  %v7210 = vadd.f32 %v6921, %v7209
  %v7211 = vpop.f32.mrb[0].mxu0
  %7212 = vmatprep.mubr.bf16.mxu0 %v5333
  %7213 = vmatmul.mubr.bf16.gmra.mrb[0].mxu0 %v5960
  %v7214 = vpop.f32.mrb[0].mxu0
  %v7215 = vadd.f32 %v6926, %v7214
  %v7216 = vpop.f32.mrb[0].mxu0
  %v7217 = vpop.f32.mrb[0].mxu0
  %v7218 = vadd.f32 %v6929, %v7217
  %v7219 = vpop.f32.mrb[0].mxu0
  %7220 = vmatprep.mubr.bf16.mxu0 %v5334
  %7221 = vmatmul.mubr.bf16.gmra.mrb[0].mxu0 %v5963
  %v7222 = vpop.f32.mrb[0].mxu0
  %v7223 = vadd.f32 %v6934, %v7222
  %v7224 = vpop.f32.mrb[0].mxu0
  %v7225 = vpop.f32.mrb[0].mxu0
  %v7226 = vadd.f32 %v6937, %v7225
  %v7227 = vpop.f32.mrb[0].mxu0
  %7228 = vmatprep.mubr.bf16.mxu0 %v5335
  %7229 = vmatmul.mubr.bf16.gmra.mrb[0].mxu0 %v5966
  %v7230 = vpop.f32.mrb[0].mxu0
  %v7231 = vadd.f32 %v6942, %v7230
  %v7232 = vpop.f32.mrb[0].mxu0
  %v7233 = vpop.f32.mrb[0].mxu0
  %v7234 = vadd.f32 %v6945, %v7233
  %v7235 = vpop.f32.mrb[0].mxu0
  %7236 = vmatprep.mubr.bf16.mxu0 %v5336
  %7237 = vmatmul.mubr.bf16.gmra.mrb[0].mxu0 %v5969
  %v7238 = vpop.f32.mrb[0].mxu0
  %v7239 = vadd.f32 %v6950, %v7238
  %v7240 = vpop.f32.mrb[0].mxu0
  %v7241 = vpop.f32.mrb[0].mxu0
  %v7242 = vadd.f32 %v6953, %v7241
  %v7243 = vpop.f32.mrb[0].mxu0
  %7244 = vmatprep.mubr.bf16.mxu0 %v5337
  %7245 = vmatmul.mubr.bf16.gmra.mrb[0].mxu0 %v5972
  %v7246 = vpop.f32.mrb[0].mxu0
  %v7247 = vadd.f32 %v6958, %v7246
  %v7248 = vpop.f32.mrb[0].mxu0
  %v7249 = vpop.f32.mrb[0].mxu0
  %v7250 = vadd.f32 %v6961, %v7249
  %v7251 = vpop.f32.mrb[0].mxu0
  %7252 = vmatprep.mubr.bf16.mxu0 %v5338
  %7253 = vmatmul.mubr.bf16.gmra.mrb[0].mxu0 %v5975
  %v7254 = vpop.f32.mrb[0].mxu0
  %v7255 = vadd.f32 %v6966, %v7254
  %v7256 = vpop.f32.mrb[0].mxu0
  %v7257 = vpop.f32.mrb[0].mxu0
  %v7258 = vadd.f32 %v6969, %v7257
  %v7259 = vpop.f32.mrb[0].mxu0
  %7260 = vmatprep.mubr.bf16.mxu0 %v6020
  %7261 = vmatmul.mubr.bf16.gmra.mrb[0].mxu0 %v5978
  %v7262 = vpop.f32.mrb[0].mxu0
  %v7263 = vadd.f32 %v6974, %v7262
  %v7264 = vpop.f32.mrb[0].mxu0
  %v7265 = vpop.f32.mrb[0].mxu0
  %v7266 = vadd.f32 %v6977, %v7265
  %v7267 = vpop.f32.mrb[0].mxu0
  %7268 = vdwg.mxu0
  %7269 = vmatprep.subr.bf16.mxu0 0
  %7270 = vmatpush1.bf16.msra.mxu0 %v6579
  %7271 = vmatprep.subr.bf16.mxu0 0
  %7272 = vmatpush1.bf16.msra.mxu0 %v6580
  %7273 = vmatprep.subr.bf16.mxu0 0
  %7274 = vmatpush1.bf16.msra.mxu0 %v6581
  %7275 = vmatprep.subr.bf16.mxu0 0
  %7276 = vmatpush1.bf16.msra.mxu0 %v6582
  %7277 = vmatprep.subr.bf16.mxu0 0
  %7278 = vmatpush1.bf16.msra.mxu0 %v6583
  %7279 = vmatprep.subr.bf16.mxu0 0
  %7280 = vmatpush1.bf16.msra.mxu0 %v6584
  %7281 = vmatprep.subr.bf16.mxu0 0
  %7282 = vmatpush1.bf16.msra.mxu0 %v6585
  %7283 = vmatprep.subr.bf16.mxu0 0
  %7284 = vmatpush1.bf16.msra.mxu0 %v6586
  %7285 = vmatprep.subr.bf16.mxu0 0
  %7286 = vmatpush1.bf16.msra.mxu0 %v6587
  %7287 = vmatprep.subr.bf16.mxu0 0
  %7288 = vmatpush1.bf16.msra.mxu0 %v6588
  %7289 = vmatprep.subr.bf16.mxu0 0
  %7290 = vmatpush1.bf16.msra.mxu0 %v6589
  %7291 = vmatprep.subr.bf16.mxu0 0
  %7292 = vmatpush1.bf16.msra.mxu0 %v6590
  %7293 = vmatprep.subr.bf16.mxu0 0
  %7294 = vmatpush1.bf16.msra.mxu0 %v6591
  %7295 = vmatprep.subr.bf16.mxu0 0
  %7296 = vmatpush1.bf16.msra.mxu0 %v6592
  %7297 = vmatprep.subr.bf16.mxu0 0
  %7298 = vmatpush1.bf16.msra.mxu0 %v6593
  %7299 = vmatprep.subr.bf16.mxu0 0
  %7300 = vmatpush1.bf16.msra.mxu0 %v6594
  %7301 = vmatprep.mubr.bf16.mxu0 %v5888
  %7302 = vmatmul.mubr.bf16.gmra.mrb[0].mxu0 %v5490
  %v7303 = vpop.f32.mrb[0].mxu0
  %v7304 = vadd.f32 %v7015, %v7303
  %v7305 = vpop.f32.mrb[0].mxu0
  %v7306 = vpop.f32.mrb[0].mxu0
  %v7307 = vadd.f32 %v7018, %v7306
  %v7308 = vpop.f32.mrb[0].mxu0
  %7309 = vmatprep.mubr.bf16.mxu0 %v5891
  %7310 = vmatmul.mubr.bf16.gmra.mrb[0].mxu0 %v5502
  %v7311 = vpop.f32.mrb[0].mxu0
  %v7312 = vadd.f32 %v7023, %v7311
  %v7313 = vpop.f32.mrb[0].mxu0
  %v7314 = vpop.f32.mrb[0].mxu0
  %v7315 = vadd.f32 %v7026, %v7314
  %v7316 = vpop.f32.mrb[0].mxu0
  %7317 = vmatprep.mubr.bf16.mxu0 %v5894
  %7318 = vmatmul.mubr.bf16.gmra.mrb[0].mxu0 %v5514
  %v7319 = vpop.f32.mrb[0].mxu0
  %v7320 = vadd.f32 %v7031, %v7319
  %v7321 = vpop.f32.mrb[0].mxu0
  %v7322 = vpop.f32.mrb[0].mxu0
  %v7323 = vadd.f32 %v7034, %v7322
  %v7324 = vpop.f32.mrb[0].mxu0
  %7325 = vmatprep.mubr.bf16.mxu0 %v5897
  %7326 = vmatmul.mubr.bf16.gmra.mrb[0].mxu0 %v5526
  %v7327 = vpop.f32.mrb[0].mxu0
  %v7328 = vadd.f32 %v7039, %v7327
  %v7329 = vpop.f32.mrb[0].mxu0
  %v7330 = vpop.f32.mrb[0].mxu0
  %v7331 = vadd.f32 %v7042, %v7330
  %v7332 = vpop.f32.mrb[0].mxu0
  %7333 = vmatprep.mubr.bf16.mxu0 %v5900
  %7334 = vmatmul.mubr.bf16.gmra.mrb[0].mxu0 %v5538
  %v7335 = vpop.f32.mrb[0].mxu0
  %v7336 = vadd.f32 %v7047, %v7335
  %v7337 = vpop.f32.mrb[0].mxu0
  %v7338 = vpop.f32.mrb[0].mxu0
  %v7339 = vadd.f32 %v7050, %v7338
  %v7340 = vpop.f32.mrb[0].mxu0
  %7341 = vmatprep.mubr.bf16.mxu0 %v5903
  %7342 = vmatmul.mubr.bf16.gmra.mrb[0].mxu0 %v5550
  %v7343 = vpop.f32.mrb[0].mxu0
  %v7344 = vadd.f32 %v7055, %v7343
  %v7345 = vpop.f32.mrb[0].mxu0
  %v7346 = vpop.f32.mrb[0].mxu0
  %v7347 = vadd.f32 %v7058, %v7346
  %v7348 = vpop.f32.mrb[0].mxu0
  %7349 = vmatprep.mubr.bf16.mxu0 %v5906
  %7350 = vmatmul.mubr.bf16.gmra.mrb[0].mxu0 %v5562
  %v7351 = vpop.f32.mrb[0].mxu0
  %v7352 = vadd.f32 %v7063, %v7351
  %v7353 = vpop.f32.mrb[0].mxu0
  %v7354 = vpop.f32.mrb[0].mxu0
  %v7355 = vadd.f32 %v7066, %v7354
  %v7356 = vpop.f32.mrb[0].mxu0
  %7357 = vmatprep.mubr.bf16.mxu0 %v5909
  %7358 = vmatmul.mubr.bf16.gmra.mrb[0].mxu0 %v5574
  %v7359 = vpop.f32.mrb[0].mxu0
  %v7360 = vadd.f32 %v7071, %v7359
  %v7361 = vpop.f32.mrb[0].mxu0
  %v7362 = vpop.f32.mrb[0].mxu0
  %v7363 = vadd.f32 %v7074, %v7362
  %v7364 = vpop.f32.mrb[0].mxu0
  %7365 = vmatprep.mubr.bf16.mxu0 %v5912
  %7366 = vmatmul.mubr.bf16.gmra.mrb[0].mxu0 %v5586
  %v7367 = vpop.f32.mrb[0].mxu0
  %v7368 = vadd.f32 %v7079, %v7367
  %v7369 = vpop.f32.mrb[0].mxu0
  %v7370 = vpop.f32.mrb[0].mxu0
  %v7371 = vadd.f32 %v7082, %v7370
  %v7372 = vpop.f32.mrb[0].mxu0
  %7373 = vmatprep.mubr.bf16.mxu0 %v5915
  %7374 = vmatmul.mubr.bf16.gmra.mrb[0].mxu0 %v5598
  %v7375 = vpop.f32.mrb[0].mxu0
  %v7376 = vadd.f32 %v7087, %v7375
  %v7377 = vpop.f32.mrb[0].mxu0
  %v7378 = vpop.f32.mrb[0].mxu0
  %v7379 = vadd.f32 %v7090, %v7378
  %v7380 = vpop.f32.mrb[0].mxu0
  %7381 = vmatprep.mubr.bf16.mxu0 %v5918
  %7382 = vmatmul.mubr.bf16.gmra.mrb[0].mxu0 %v5610
  %v7383 = vpop.f32.mrb[0].mxu0
  %v7384 = vadd.f32 %v7095, %v7383
  %v7385 = vpop.f32.mrb[0].mxu0
  %v7386 = vpop.f32.mrb[0].mxu0
  %v7387 = vadd.f32 %v7098, %v7386
  %v7388 = vpop.f32.mrb[0].mxu0
  %7389 = vmatprep.mubr.bf16.mxu0 %v5921
  %7390 = vmatmul.mubr.bf16.gmra.mrb[0].mxu0 %v5622
  %v7391 = vpop.f32.mrb[0].mxu0
  %v7392 = vadd.f32 %v7103, %v7391
  %v7393 = vpop.f32.mrb[0].mxu0
  %v7394 = vpop.f32.mrb[0].mxu0
  %v7395 = vadd.f32 %v7106, %v7394
  %v7396 = vpop.f32.mrb[0].mxu0
  %7397 = vmatprep.mubr.bf16.mxu0 %v5924
  %7398 = vmatmul.mubr.bf16.gmra.mrb[0].mxu0 %v5634
  %v7399 = vpop.f32.mrb[0].mxu0
  %v7400 = vadd.f32 %v7111, %v7399
  %v7401 = vpop.f32.mrb[0].mxu0
  %v7402 = vpop.f32.mrb[0].mxu0
  %v7403 = vadd.f32 %v7114, %v7402
  %v7404 = vpop.f32.mrb[0].mxu0
  %7405 = vmatprep.mubr.bf16.mxu0 %v5927
  %7406 = vmatmul.mubr.bf16.gmra.mrb[0].mxu0 %v5646
  %v7407 = vpop.f32.mrb[0].mxu0
  %v7408 = vadd.f32 %v7119, %v7407
  %v7409 = vpop.f32.mrb[0].mxu0
  %v7410 = vpop.f32.mrb[0].mxu0
  %v7411 = vadd.f32 %v7122, %v7410
  %v7412 = vpop.f32.mrb[0].mxu0
  %7413 = vmatprep.mubr.bf16.mxu0 %v5930
  %7414 = vmatmul.mubr.bf16.gmra.mrb[0].mxu0 %v5658
  %v7415 = vpop.f32.mrb[0].mxu0
  %v7416 = vadd.f32 %v7127, %v7415
  %v7417 = vpop.f32.mrb[0].mxu0
  %v7418 = vpop.f32.mrb[0].mxu0
  %v7419 = vadd.f32 %v7130, %v7418
  %v7420 = vpop.f32.mrb[0].mxu0
  %7421 = vmatprep.mubr.bf16.mxu0 %v6057
  %7422 = vmatmul.mubr.bf16.gmra.mrb[0].mxu0 %v6040
  %v7423 = vpop.f32.mrb[0].mxu0
  %v7424 = vadd.f32 %v7135, %v7423
  %v7425 = vpop.f32.mrb[0].mxu0
  %v7426 = vpop.f32.mrb[0].mxu0
  %v7427 = vadd.f32 %v7138, %v7426
  %v7428 = vpop.f32.mrb[0].mxu0
  %7429 = vmatprep.mubr.bf16.mxu0 %v5936
  %7430 = vmatmul.mubr.bf16.gmra.mrb[0].mxu0 %v5682
  %v7431 = vpop.f32.mrb[0].mxu0
  %v7432 = vadd.f32 %v7143, %v7431
  %v7433 = vpop.f32.mrb[0].mxu0
  %v7434 = vpop.f32.mrb[0].mxu0
  %v7435 = vadd.f32 %v7146, %v7434
  %v7436 = vpop.f32.mrb[0].mxu0
  %7437 = vmatprep.mubr.bf16.mxu0 %v5939
  %7438 = vmatmul.mubr.bf16.gmra.mrb[0].mxu0 %v5694
  %v7439 = vpop.f32.mrb[0].mxu0
  %v7440 = vadd.f32 %v7151, %v7439
  %v7441 = vpop.f32.mrb[0].mxu0
  %v7442 = vpop.f32.mrb[0].mxu0
  %v7443 = vadd.f32 %v7154, %v7442
  %v7444 = vpop.f32.mrb[0].mxu0
  %7445 = vmatprep.mubr.bf16.mxu0 %v5942
  %7446 = vmatmul.mubr.bf16.gmra.mrb[0].mxu0 %v5706
  %v7447 = vpop.f32.mrb[0].mxu0
  %v7448 = vadd.f32 %v7159, %v7447
  %v7449 = vpop.f32.mrb[0].mxu0
  %v7450 = vpop.f32.mrb[0].mxu0
  %v7451 = vadd.f32 %v7162, %v7450
  %v7452 = vpop.f32.mrb[0].mxu0
  %7453 = vmatprep.mubr.bf16.mxu0 %v5945
  %7454 = vmatmul.mubr.bf16.gmra.mrb[0].mxu0 %v5718
  %v7455 = vpop.f32.mrb[0].mxu0
  %v7456 = vadd.f32 %v7167, %v7455
  %v7457 = vpop.f32.mrb[0].mxu0
  %v7458 = vpop.f32.mrb[0].mxu0
  %v7459 = vadd.f32 %v7170, %v7458
  %v7460 = vpop.f32.mrb[0].mxu0
  %7461 = vmatprep.mubr.bf16.mxu0 %v5948
  %7462 = vmatmul.mubr.bf16.gmra.mrb[0].mxu0 %v5730
  %v7463 = vpop.f32.mrb[0].mxu0
  %v7464 = vadd.f32 %v7175, %v7463
  %v7465 = vpop.f32.mrb[0].mxu0
  %v7466 = vpop.f32.mrb[0].mxu0
  %v7467 = vadd.f32 %v7178, %v7466
  %v7468 = vpop.f32.mrb[0].mxu0
  %7469 = vmatprep.mubr.bf16.mxu0 %v5951
  %7470 = vmatmul.mubr.bf16.gmra.mrb[0].mxu0 %v5742
  %v7471 = vpop.f32.mrb[0].mxu0
  %v7472 = vadd.f32 %v7183, %v7471
  %v7473 = vpop.f32.mrb[0].mxu0
  %v7474 = vpop.f32.mrb[0].mxu0
  %v7475 = vadd.f32 %v7186, %v7474
  %v7476 = vpop.f32.mrb[0].mxu0
  %7477 = vmatprep.mubr.bf16.mxu0 %v5954
  %7478 = vmatmul.mubr.bf16.gmra.mrb[0].mxu0 %v5754
  %v7479 = vpop.f32.mrb[0].mxu0
  %v7480 = vadd.f32 %v7191, %v7479
  %v7481 = vpop.f32.mrb[0].mxu0
  %v7482 = vpop.f32.mrb[0].mxu0
  %v7483 = vadd.f32 %v7194, %v7482
  %v7484 = vpop.f32.mrb[0].mxu0
  %7485 = vmatprep.mubr.bf16.mxu0 %v5957
  %7486 = vmatmul.mubr.bf16.gmra.mrb[0].mxu0 %v5766
  %v7487 = vpop.f32.mrb[0].mxu0
  %v7488 = vadd.f32 %v7199, %v7487
  %v7489 = vpop.f32.mrb[0].mxu0
  %v7490 = vpop.f32.mrb[0].mxu0
  %v7491 = vadd.f32 %v7202, %v7490
  %v7492 = vpop.f32.mrb[0].mxu0
  %7493 = vmatprep.mubr.bf16.mxu0 %v5960
  %7494 = vmatmul.mubr.bf16.gmra.mrb[0].mxu0 %v5778
  %v7495 = vpop.f32.mrb[0].mxu0
  %v7496 = vadd.f32 %v7207, %v7495
  %v7497 = vpop.f32.mrb[0].mxu0
  %v7498 = vpop.f32.mrb[0].mxu0
  %v7499 = vadd.f32 %v7210, %v7498
  %v7500 = vpop.f32.mrb[0].mxu0
  %7501 = vmatprep.mubr.bf16.mxu0 %v5963
  %7502 = vmatmul.mubr.bf16.gmra.mrb[0].mxu0 %v5790
  %v7503 = vpop.f32.mrb[0].mxu0
  %v7504 = vadd.f32 %v7215, %v7503
  %v7505 = vpop.f32.mrb[0].mxu0
  %v7506 = vpop.f32.mrb[0].mxu0
  %v7507 = vadd.f32 %v7218, %v7506
  %v7508 = vpop.f32.mrb[0].mxu0
  %7509 = vmatprep.mubr.bf16.mxu0 %v5966
  %7510 = vmatmul.mubr.bf16.gmra.mrb[0].mxu0 %v5802
  %v7511 = vpop.f32.mrb[0].mxu0
  %v7512 = vadd.f32 %v7223, %v7511
  %v7513 = vpop.f32.mrb[0].mxu0
  %v7514 = vpop.f32.mrb[0].mxu0
  %v7515 = vadd.f32 %v7226, %v7514
  %v7516 = vpop.f32.mrb[0].mxu0
  %7517 = vmatprep.mubr.bf16.mxu0 %v5969
  %7518 = vmatmul.mubr.bf16.gmra.mrb[0].mxu0 %v5814
  %v7519 = vpop.f32.mrb[0].mxu0
  %v7520 = vadd.f32 %v7231, %v7519
  %v7521 = vpop.f32.mrb[0].mxu0
  %v7522 = vpop.f32.mrb[0].mxu0
  %v7523 = vadd.f32 %v7234, %v7522
  %v7524 = vpop.f32.mrb[0].mxu0
  %7525 = vmatprep.mubr.bf16.mxu0 %v5972
  %7526 = vmatmul.mubr.bf16.gmra.mrb[0].mxu0 %v5826
  %v7527 = vpop.f32.mrb[0].mxu0
  %v7528 = vadd.f32 %v7239, %v7527
  %v7529 = vpop.f32.mrb[0].mxu0
  %v7530 = vpop.f32.mrb[0].mxu0
  %v7531 = vadd.f32 %v7242, %v7530
  %v7532 = vpop.f32.mrb[0].mxu0
  %7533 = vmatprep.mubr.bf16.mxu0 %v5975
  %7534 = vmatmul.mubr.bf16.gmra.mrb[0].mxu0 %v5838
  %v7535 = vpop.f32.mrb[0].mxu0
  %v7536 = vadd.f32 %v7247, %v7535
  %v7537 = vpop.f32.mrb[0].mxu0
  %v7538 = vpop.f32.mrb[0].mxu0
  %v7539 = vadd.f32 %v7250, %v7538
  %v7540 = vpop.f32.mrb[0].mxu0
  %7541 = vmatprep.mubr.bf16.mxu0 %v5978
  %7542 = vmatmul.mubr.bf16.gmra.mrb[0].mxu0 %v5850
  %v7543 = vpop.f32.mrb[0].mxu0
  %v7544 = vadd.f32 %v7255, %v7543
  %v7545 = vpop.f32.mrb[0].mxu0
  %v7546 = vpop.f32.mrb[0].mxu0
  %v7547 = vadd.f32 %v7258, %v7546
  %v7548 = vpop.f32.mrb[0].mxu0
  %7549 = vmatprep.mubr.bf16.mxu0 %v6060
  %7550 = vmatmul.mubr.bf16.gmra.mrb[0].mxu0 %v6052
  %v7551 = vpop.f32.mrb[0].mxu0
  %v7552 = vadd.f32 %v7263, %v7551
  %v7553 = vpop.f32.mrb[0].mxu0
  %v7554 = vpop.f32.mrb[0].mxu0
  %v7555 = vadd.f32 %v7266, %v7554
  %v7556 = vpop.f32.mrb[0].mxu0
  %7557 = vdwg.mxu0
  %7558 = vmatprep.subr.bf16.mxu0 0
  %7559 = vmatpush1.bf16.msra.mxu0 %v6595
  %7560 = vmatprep.subr.bf16.mxu0 0
  %7561 = vmatpush1.bf16.msra.mxu0 %v6596
  %7562 = vmatprep.subr.bf16.mxu0 0
  %7563 = vmatpush1.bf16.msra.mxu0 %v6597
  %7564 = vmatprep.subr.bf16.mxu0 0
  %7565 = vmatpush1.bf16.msra.mxu0 %v6598
  %7566 = vmatprep.subr.bf16.mxu0 0
  %7567 = vmatpush1.bf16.msra.mxu0 %v6599
  %7568 = vmatprep.subr.bf16.mxu0 0
  %7569 = vmatpush1.bf16.msra.mxu0 %v6600
  %7570 = vmatprep.subr.bf16.mxu0 0
  %7571 = vmatpush1.bf16.msra.mxu0 %v6601
  %7572 = vmatprep.subr.bf16.mxu0 0
  %7573 = vmatpush1.bf16.msra.mxu0 %v6602
  %7574 = vmatprep.subr.bf16.mxu0 0
  %7575 = vmatpush1.bf16.msra.mxu0 %v6603
  %7576 = vmatprep.subr.bf16.mxu0 0
  %7577 = vmatpush1.bf16.msra.mxu0 %v6604
  %7578 = vmatprep.subr.bf16.mxu0 0
  %7579 = vmatpush1.bf16.msra.mxu0 %v6605
  %7580 = vmatprep.subr.bf16.mxu0 0
  %7581 = vmatpush1.bf16.msra.mxu0 %v6606
  %7582 = vmatprep.subr.bf16.mxu0 0
  %7583 = vmatpush1.bf16.msra.mxu0 %v6607
  %7584 = vmatprep.subr.bf16.mxu0 0
  %7585 = vmatpush1.bf16.msra.mxu0 %v6608
  %7586 = vmatprep.subr.bf16.mxu0 0
  %7587 = vmatpush1.bf16.msra.mxu0 %v6609
  %7588 = vmatprep.subr.bf16.mxu0 0
  %7589 = vmatpush1.bf16.msra.mxu0 %v6610
  %7590 = vmatprep.mubr.bf16.mxu0 %v5502
  %7591 = vmatmul.mubr.bf16.gmra.mrb[0].mxu0 %v5309
  %v7592 = vpop.f32.mrb[0].mxu0
  %v7593 = vadd.f32 %v7304, %v7592
  %v7594 = vpop.f32.mrb[0].mxu0
  %v7595 = vpop.f32.mrb[0].mxu0
  %v7596 = vadd.f32 %v7307, %v7595
  %v7597 = vpop.f32.mrb[0].mxu0
  %7598 = vmatprep.mubr.bf16.mxu0 %v5514
  %7599 = vmatmul.mubr.bf16.gmra.mrb[0].mxu0 %v5310
  %v7600 = vpop.f32.mrb[0].mxu0
  %v7601 = vadd.f32 %v7312, %v7600
  %v7602 = vpop.f32.mrb[0].mxu0
  %v7603 = vpop.f32.mrb[0].mxu0
  %v7604 = vadd.f32 %v7315, %v7603
  %v7605 = vpop.f32.mrb[0].mxu0
  %7606 = vmatprep.mubr.bf16.mxu0 %v5526
  %7607 = vmatmul.mubr.bf16.gmra.mrb[0].mxu0 %v5311
  %v7608 = vpop.f32.mrb[0].mxu0
  %v7609 = vadd.f32 %v7320, %v7608
  %v7610 = vpop.f32.mrb[0].mxu0
  %v7611 = vpop.f32.mrb[0].mxu0
  %v7612 = vadd.f32 %v7323, %v7611
  %v7613 = vpop.f32.mrb[0].mxu0
  %7614 = vmatprep.mubr.bf16.mxu0 %v5538
  %7615 = vmatmul.mubr.bf16.gmra.mrb[0].mxu0 %v5312
  %v7616 = vpop.f32.mrb[0].mxu0
  %v7617 = vadd.f32 %v7328, %v7616
  %v7618 = vpop.f32.mrb[0].mxu0
  %v7619 = vpop.f32.mrb[0].mxu0
  %v7620 = vadd.f32 %v7331, %v7619
  %v7621 = vpop.f32.mrb[0].mxu0
  %7622 = vmatprep.mubr.bf16.mxu0 %v5550
  %7623 = vmatmul.mubr.bf16.gmra.mrb[0].mxu0 %v5313
  %v7624 = vpop.f32.mrb[0].mxu0
  %v7625 = vadd.f32 %v7336, %v7624
  %v7626 = vpop.f32.mrb[0].mxu0
  %v7627 = vpop.f32.mrb[0].mxu0
  %v7628 = vadd.f32 %v7339, %v7627
  %v7629 = vpop.f32.mrb[0].mxu0
  %7630 = vmatprep.mubr.bf16.mxu0 %v5562
  %7631 = vmatmul.mubr.bf16.gmra.mrb[0].mxu0 %v5314
  %v7632 = vpop.f32.mrb[0].mxu0
  %v7633 = vadd.f32 %v7344, %v7632
  %v7634 = vpop.f32.mrb[0].mxu0
  %v7635 = vpop.f32.mrb[0].mxu0
  %v7636 = vadd.f32 %v7347, %v7635
  %v7637 = vpop.f32.mrb[0].mxu0
  %7638 = vmatprep.mubr.bf16.mxu0 %v5574
  %7639 = vmatmul.mubr.bf16.gmra.mrb[0].mxu0 %v5315
  %v7640 = vpop.f32.mrb[0].mxu0
  %v7641 = vadd.f32 %v7352, %v7640
  %v7642 = vpop.f32.mrb[0].mxu0
  %v7643 = vpop.f32.mrb[0].mxu0
  %v7644 = vadd.f32 %v7355, %v7643
  %v7645 = vpop.f32.mrb[0].mxu0
  %7646 = vmatprep.mubr.bf16.mxu0 %v5586
  %7647 = vmatmul.mubr.bf16.gmra.mrb[0].mxu0 %v5316
  %v7648 = vpop.f32.mrb[0].mxu0
  %v7649 = vadd.f32 %v7360, %v7648
  %v7650 = vpop.f32.mrb[0].mxu0
  %v7651 = vpop.f32.mrb[0].mxu0
  %v7652 = vadd.f32 %v7363, %v7651
  %v7653 = vpop.f32.mrb[0].mxu0
  %7654 = vmatprep.mubr.bf16.mxu0 %v5598
  %7655 = vmatmul.mubr.bf16.gmra.mrb[0].mxu0 %v5317
  %v7656 = vpop.f32.mrb[0].mxu0
  %v7657 = vadd.f32 %v7368, %v7656
  %v7658 = vpop.f32.mrb[0].mxu0
  %v7659 = vpop.f32.mrb[0].mxu0
  %v7660 = vadd.f32 %v7371, %v7659
  %v7661 = vpop.f32.mrb[0].mxu0
  %7662 = vmatprep.mubr.bf16.mxu0 %v5610
  %7663 = vmatmul.mubr.bf16.gmra.mrb[0].mxu0 %v5318
  %v7664 = vpop.f32.mrb[0].mxu0
  %v7665 = vadd.f32 %v7376, %v7664
  %v7666 = vpop.f32.mrb[0].mxu0
  %v7667 = vpop.f32.mrb[0].mxu0
  %v7668 = vadd.f32 %v7379, %v7667
  %v7669 = vpop.f32.mrb[0].mxu0
  %7670 = vmatprep.mubr.bf16.mxu0 %v5622
  %7671 = vmatmul.mubr.bf16.gmra.mrb[0].mxu0 %v5319
  %v7672 = vpop.f32.mrb[0].mxu0
  %v7673 = vadd.f32 %v7384, %v7672
  %v7674 = vpop.f32.mrb[0].mxu0
  %v7675 = vpop.f32.mrb[0].mxu0
  %v7676 = vadd.f32 %v7387, %v7675
  %v7677 = vpop.f32.mrb[0].mxu0
  %7678 = vmatprep.mubr.bf16.mxu0 %v5634
  %7679 = vmatmul.mubr.bf16.gmra.mrb[0].mxu0 %v5320
  %v7680 = vpop.f32.mrb[0].mxu0
  %v7681 = vadd.f32 %v7392, %v7680
  %v7682 = vpop.f32.mrb[0].mxu0
  %v7683 = vpop.f32.mrb[0].mxu0
  %v7684 = vadd.f32 %v7395, %v7683
  %v7685 = vpop.f32.mrb[0].mxu0
  %7686 = vmatprep.mubr.bf16.mxu0 %v5646
  %7687 = vmatmul.mubr.bf16.gmra.mrb[0].mxu0 %v5321
  %v7688 = vpop.f32.mrb[0].mxu0
  %v7689 = vadd.f32 %v7400, %v7688
  %v7690 = vpop.f32.mrb[0].mxu0
  %v7691 = vpop.f32.mrb[0].mxu0
  %v7692 = vadd.f32 %v7403, %v7691
  %v7693 = vpop.f32.mrb[0].mxu0
  %7694 = vmatprep.mubr.bf16.mxu0 %v5658
  %7695 = vmatmul.mubr.bf16.gmra.mrb[0].mxu0 %v5322
  %v7696 = vpop.f32.mrb[0].mxu0
  %v7697 = vadd.f32 %v7408, %v7696
  %v7698 = vpop.f32.mrb[0].mxu0
  %v7699 = vpop.f32.mrb[0].mxu0
  %v7700 = vadd.f32 %v7411, %v7699
  %v7701 = vpop.f32.mrb[0].mxu0
  %7702 = vmatprep.mubr.bf16.mxu0 %v6040
  %7703 = vmatmul.mubr.bf16.gmra.mrb[0].mxu0 %v6019
  %v7704 = vpop.f32.mrb[0].mxu0
  %v7705 = vadd.f32 %v7416, %v7704
  %v7706 = vpop.f32.mrb[0].mxu0
  %v7707 = vpop.f32.mrb[0].mxu0
  %v7708 = vadd.f32 %v7419, %v7707
  %v7709 = vpop.f32.mrb[0].mxu0
  %7710 = vmatprep.mubr.bf16.mxu0 %v6092
  %7711 = vmatmul.mubr.bf16.gmra.mrb[0].mxu0 %v6071
  %v7712 = vpop.f32.mrb[0].mxu0
  %v7713 = vadd.f32 %v7424, %v7712
  %v7714 = vpop.f32.mrb[0].mxu0
  %v7715 = vpop.f32.mrb[0].mxu0
  %v7716 = vadd.f32 %v7427, %v7715
  %v7717 = vpop.f32.mrb[0].mxu0
  %7718 = vmatprep.mubr.bf16.mxu0 %v5694
  %7719 = vmatmul.mubr.bf16.gmra.mrb[0].mxu0 %v5325
  %v7720 = vpop.f32.mrb[0].mxu0
  %v7721 = vadd.f32 %v7432, %v7720
  %v7722 = vpop.f32.mrb[0].mxu0
  %v7723 = vpop.f32.mrb[0].mxu0
  %v7724 = vadd.f32 %v7435, %v7723
  %v7725 = vpop.f32.mrb[0].mxu0
  %7726 = vmatprep.mubr.bf16.mxu0 %v5706
  %7727 = vmatmul.mubr.bf16.gmra.mrb[0].mxu0 %v5326
  %v7728 = vpop.f32.mrb[0].mxu0
  %v7729 = vadd.f32 %v7440, %v7728
  %v7730 = vpop.f32.mrb[0].mxu0
  %v7731 = vpop.f32.mrb[0].mxu0
  %v7732 = vadd.f32 %v7443, %v7731
  %v7733 = vpop.f32.mrb[0].mxu0
  %7734 = vmatprep.mubr.bf16.mxu0 %v5718
  %7735 = vmatmul.mubr.bf16.gmra.mrb[0].mxu0 %v5327
  %v7736 = vpop.f32.mrb[0].mxu0
  %v7737 = vadd.f32 %v7448, %v7736
  %v7738 = vpop.f32.mrb[0].mxu0
  %v7739 = vpop.f32.mrb[0].mxu0
  %v7740 = vadd.f32 %v7451, %v7739
  %v7741 = vpop.f32.mrb[0].mxu0
  %7742 = vmatprep.mubr.bf16.mxu0 %v5730
  %7743 = vmatmul.mubr.bf16.gmra.mrb[0].mxu0 %v5328
  %v7744 = vpop.f32.mrb[0].mxu0
  %v7745 = vadd.f32 %v7456, %v7744
  %v7746 = vpop.f32.mrb[0].mxu0
  %v7747 = vpop.f32.mrb[0].mxu0
  %v7748 = vadd.f32 %v7459, %v7747
  %v7749 = vpop.f32.mrb[0].mxu0
  %7750 = vmatprep.mubr.bf16.mxu0 %v5742
  %7751 = vmatmul.mubr.bf16.gmra.mrb[0].mxu0 %v5329
  %v7752 = vpop.f32.mrb[0].mxu0
  %v7753 = vadd.f32 %v7464, %v7752
  %v7754 = vpop.f32.mrb[0].mxu0
  %v7755 = vpop.f32.mrb[0].mxu0
  %v7756 = vadd.f32 %v7467, %v7755
  %v7757 = vpop.f32.mrb[0].mxu0
  %7758 = vmatprep.mubr.bf16.mxu0 %v5754
  %7759 = vmatmul.mubr.bf16.gmra.mrb[0].mxu0 %v5330
  %v7760 = vpop.f32.mrb[0].mxu0
  %v7761 = vadd.f32 %v7472, %v7760
  %v7762 = vpop.f32.mrb[0].mxu0
  %v7763 = vpop.f32.mrb[0].mxu0
  %v7764 = vadd.f32 %v7475, %v7763
  %v7765 = vpop.f32.mrb[0].mxu0
  %7766 = vmatprep.mubr.bf16.mxu0 %v5766
  %7767 = vmatmul.mubr.bf16.gmra.mrb[0].mxu0 %v5331
  %v7768 = vpop.f32.mrb[0].mxu0
  %v7769 = vadd.f32 %v7480, %v7768
  %v7770 = vpop.f32.mrb[0].mxu0
  %v7771 = vpop.f32.mrb[0].mxu0
  %v7772 = vadd.f32 %v7483, %v7771
  %v7773 = vpop.f32.mrb[0].mxu0
  %7774 = vmatprep.mubr.bf16.mxu0 %v5778
  %7775 = vmatmul.mubr.bf16.gmra.mrb[0].mxu0 %v5332
  %v7776 = vpop.f32.mrb[0].mxu0
  %v7777 = vadd.f32 %v7488, %v7776
  %v7778 = vpop.f32.mrb[0].mxu0
  %v7779 = vpop.f32.mrb[0].mxu0
  %v7780 = vadd.f32 %v7491, %v7779
  %v7781 = vpop.f32.mrb[0].mxu0
  %7782 = vmatprep.mubr.bf16.mxu0 %v5790
  %7783 = vmatmul.mubr.bf16.gmra.mrb[0].mxu0 %v5333
  %v7784 = vpop.f32.mrb[0].mxu0
  %v7785 = vadd.f32 %v7496, %v7784
  %v7786 = vpop.f32.mrb[0].mxu0
  %v7787 = vpop.f32.mrb[0].mxu0
  %v7788 = vadd.f32 %v7499, %v7787
  %v7789 = vpop.f32.mrb[0].mxu0
  %7790 = vmatprep.mubr.bf16.mxu0 %v5802
  %7791 = vmatmul.mubr.bf16.gmra.mrb[0].mxu0 %v5334
  %v7792 = vpop.f32.mrb[0].mxu0
  %v7793 = vadd.f32 %v7504, %v7792
  %v7794 = vpop.f32.mrb[0].mxu0
  %v7795 = vpop.f32.mrb[0].mxu0
  %v7796 = vadd.f32 %v7507, %v7795
  %v7797 = vpop.f32.mrb[0].mxu0
  %7798 = vmatprep.mubr.bf16.mxu0 %v5814
  %7799 = vmatmul.mubr.bf16.gmra.mrb[0].mxu0 %v5335
  %v7800 = vpop.f32.mrb[0].mxu0
  %v7801 = vadd.f32 %v7512, %v7800
  %v7802 = vpop.f32.mrb[0].mxu0
  %v7803 = vpop.f32.mrb[0].mxu0
  %v7804 = vadd.f32 %v7515, %v7803
  %v7805 = vpop.f32.mrb[0].mxu0
  %7806 = vmatprep.mubr.bf16.mxu0 %v5826
  %7807 = vmatmul.mubr.bf16.gmra.mrb[0].mxu0 %v5336
  %v7808 = vpop.f32.mrb[0].mxu0
  %v7809 = vadd.f32 %v7520, %v7808
  %v7810 = vpop.f32.mrb[0].mxu0
  %v7811 = vpop.f32.mrb[0].mxu0
  %v7812 = vadd.f32 %v7523, %v7811
  %v7813 = vpop.f32.mrb[0].mxu0
  %7814 = vmatprep.mubr.bf16.mxu0 %v5838
  %7815 = vmatmul.mubr.bf16.gmra.mrb[0].mxu0 %v5337
  %v7816 = vpop.f32.mrb[0].mxu0
  %v7817 = vadd.f32 %v7528, %v7816
  %v7818 = vpop.f32.mrb[0].mxu0
  %v7819 = vpop.f32.mrb[0].mxu0
  %v7820 = vadd.f32 %v7531, %v7819
  %v7821 = vpop.f32.mrb[0].mxu0
  %7822 = vmatprep.mubr.bf16.mxu0 %v5850
  %7823 = vmatmul.mubr.bf16.gmra.mrb[0].mxu0 %v5338
  %v7824 = vpop.f32.mrb[0].mxu0
  %v7825 = vadd.f32 %v7536, %v7824
  %v7826 = vpop.f32.mrb[0].mxu0
  %v7827 = vpop.f32.mrb[0].mxu0
  %v7828 = vadd.f32 %v7539, %v7827
  %v7829 = vpop.f32.mrb[0].mxu0
  %7830 = vmatprep.mubr.bf16.mxu0 %v6052
  %7831 = vmatmul.mubr.bf16.gmra.mrb[0].mxu0 %v6020
  %v7832 = vpop.f32.mrb[0].mxu0
  %v7833 = vadd.f32 %v7544, %v7832
  %v7834 = vpop.f32.mrb[0].mxu0
  %v7835 = vpop.f32.mrb[0].mxu0
  %v7836 = vadd.f32 %v7547, %v7835
  %v7837 = vpop.f32.mrb[0].mxu0
  %7838 = vmatprep.mubr.bf16.mxu0 %v6104
  %7839 = vmatmul.mubr.bf16.gmra.mrb[0].mxu0 %v6072
  %v7840 = vpop.f32.mrb[0].mxu0
  %v7841 = vadd.f32 %v7552, %v7840
  %v7842 = vpop.f32.mrb[0].mxu0
  %v7843 = vpop.f32.mrb[0].mxu0
  %v7844 = vadd.f32 %v7555, %v7843
  %v7845 = vpop.f32.mrb[0].mxu0
  %7846 = vdwg.mxu0
  %7847 = vmatprep.subr.bf16.mxu0 0
  %7848 = vmatpush1.bf16.msra.mxu0 %v6611
  %7849 = vmatprep.subr.bf16.mxu0 0
  %7850 = vmatpush1.bf16.msra.mxu0 %v6612
  %7851 = vmatprep.subr.bf16.mxu0 0
  %7852 = vmatpush1.bf16.msra.mxu0 %v6613
  %7853 = vmatprep.subr.bf16.mxu0 0
  %7854 = vmatpush1.bf16.msra.mxu0 %v6614
  %7855 = vmatprep.subr.bf16.mxu0 0
  %7856 = vmatpush1.bf16.msra.mxu0 %v6615
  %7857 = vmatprep.subr.bf16.mxu0 0
  %7858 = vmatpush1.bf16.msra.mxu0 %v6616
  %7859 = vmatprep.subr.bf16.mxu0 0
  %7860 = vmatpush1.bf16.msra.mxu0 %v6617
  %7861 = vmatprep.subr.bf16.mxu0 0
  %7862 = vmatpush1.bf16.msra.mxu0 %v6618
  %7863 = vmatprep.subr.bf16.mxu0 0
  %7864 = vmatpush1.bf16.msra.mxu0 0
  %7865 = vmatprep.subr.bf16.mxu0 0
  %7866 = vmatpush1.bf16.msra.mxu0 0
  %7867 = vmatprep.subr.bf16.mxu0 0
  %7868 = vmatpush1.bf16.msra.mxu0 0
  %7869 = vmatprep.subr.bf16.mxu0 0
  %7870 = vmatpush1.bf16.msra.mxu0 0
  %7871 = vmatprep.subr.bf16.mxu0 0
  %7872 = vmatpush1.bf16.msra.mxu0 0
  %7873 = vmatprep.subr.bf16.mxu0 0
  %7874 = vmatpush1.bf16.msra.mxu0 0
  %7875 = vmatprep.subr.bf16.mxu0 0
  %7876 = vmatpush1.bf16.msra.mxu0 0
  %7877 = vmatprep.subr.bf16.mxu0 0
  %7878 = vmatpush1.bf16.msra.mxu0 0
  %7879 = vmatprep.mubr.bf16.mxu0 0
  %7880 = vmatmul.mubr.bf16.gmra.mrb[0].mxu0 %v5891
  %v7881 = vpop.f32.mrb[0].mxu0
  %v7882 = vadd.f32 %v7593, %v7881
  %v7883 = vpop.f32.mrb[0].mxu0
  %v7884 = vpop.f32.mrb[0].mxu0
  %v7885 = vadd.f32 %v7596, %v7884
  %v7886 = vpop.f32.mrb[0].mxu0
  %7887 = vmatprep.mubr.bf16.mxu0 0
  %7888 = vmatmul.mubr.bf16.gmra.mrb[0].mxu0 %v5894
  %v7889 = vpop.f32.mrb[0].mxu0
  %v7890 = vadd.f32 %v7601, %v7889
  %v7891 = vpop.f32.mrb[0].mxu0
  %v7892 = vpop.f32.mrb[0].mxu0
  %v7893 = vadd.f32 %v7604, %v7892
  %v7894 = vpop.f32.mrb[0].mxu0
  %7895 = vmatprep.mubr.bf16.mxu0 0
  %7896 = vmatmul.mubr.bf16.gmra.mrb[0].mxu0 %v5897
  %v7897 = vpop.f32.mrb[0].mxu0
  %v7898 = vadd.f32 %v7609, %v7897
  %v7899 = vpop.f32.mrb[0].mxu0
  %v7900 = vpop.f32.mrb[0].mxu0
  %v7901 = vadd.f32 %v7612, %v7900
  %v7902 = vpop.f32.mrb[0].mxu0
  %7903 = vmatprep.mubr.bf16.mxu0 0
  %7904 = vmatmul.mubr.bf16.gmra.mrb[0].mxu0 %v5900
  %v7905 = vpop.f32.mrb[0].mxu0
  %v7906 = vadd.f32 %v7617, %v7905
  %v7907 = vpop.f32.mrb[0].mxu0
  %v7908 = vpop.f32.mrb[0].mxu0
  %v7909 = vadd.f32 %v7620, %v7908
  %v7910 = vpop.f32.mrb[0].mxu0
  %7911 = vmatprep.mubr.bf16.mxu0 0
  %7912 = vmatmul.mubr.bf16.gmra.mrb[0].mxu0 %v5903
  %v7913 = vpop.f32.mrb[0].mxu0
  %v7914 = vadd.f32 %v7625, %v7913
  %v7915 = vpop.f32.mrb[0].mxu0
  %v7916 = vpop.f32.mrb[0].mxu0
  %v7917 = vadd.f32 %v7628, %v7916
  %v7918 = vpop.f32.mrb[0].mxu0
  %7919 = vmatprep.mubr.bf16.mxu0 0
  %7920 = vmatmul.mubr.bf16.gmra.mrb[0].mxu0 %v5906
  %v7921 = vpop.f32.mrb[0].mxu0
  %v7922 = vadd.f32 %v7633, %v7921
  %v7923 = vpop.f32.mrb[0].mxu0
  %v7924 = vpop.f32.mrb[0].mxu0
  %v7925 = vadd.f32 %v7636, %v7924
  %v7926 = vpop.f32.mrb[0].mxu0
  %7927 = vmatprep.mubr.bf16.mxu0 0
  %7928 = vmatmul.mubr.bf16.gmra.mrb[0].mxu0 %v5909
  %v7929 = vpop.f32.mrb[0].mxu0
  %v7930 = vadd.f32 %v7641, %v7929
  %v7931 = vpop.f32.mrb[0].mxu0
  %v7932 = vpop.f32.mrb[0].mxu0
  %v7933 = vadd.f32 %v7644, %v7932
  %v7934 = vpop.f32.mrb[0].mxu0
  %7935 = vmatprep.mubr.bf16.mxu0 0
  %7936 = vmatmul.mubr.bf16.gmra.mrb[0].mxu0 %v5912
  %v7937 = vpop.f32.mrb[0].mxu0
  %v7938 = vadd.f32 %v7649, %v7937
  %v7939 = vpop.f32.mrb[0].mxu0
  %v7940 = vpop.f32.mrb[0].mxu0
  %v7941 = vadd.f32 %v7652, %v7940
  %v7942 = vpop.f32.mrb[0].mxu0
  %7943 = vmatprep.mubr.bf16.mxu0 0
  %7944 = vmatmul.mubr.bf16.gmra.mrb[0].mxu0 %v5915
  %v7945 = vpop.f32.mrb[0].mxu0
  %v7946 = vadd.f32 %v7657, %v7945
  %v7947 = vpop.f32.mrb[0].mxu0
  %v7948 = vpop.f32.mrb[0].mxu0
  %v7949 = vadd.f32 %v7660, %v7948
  %v7950 = vpop.f32.mrb[0].mxu0
  %7951 = vmatprep.mubr.bf16.mxu0 0
  %7952 = vmatmul.mubr.bf16.gmra.mrb[0].mxu0 %v5918
  %v7953 = vpop.f32.mrb[0].mxu0
  %v7954 = vadd.f32 %v7665, %v7953
  %v7955 = vpop.f32.mrb[0].mxu0
  %v7956 = vpop.f32.mrb[0].mxu0
  %v7957 = vadd.f32 %v7668, %v7956
  %v7958 = vpop.f32.mrb[0].mxu0
  %7959 = vmatprep.mubr.bf16.mxu0 0
  %7960 = vmatmul.mubr.bf16.gmra.mrb[0].mxu0 %v5921
  %v7961 = vpop.f32.mrb[0].mxu0
  %v7962 = vadd.f32 %v7673, %v7961
  %v7963 = vpop.f32.mrb[0].mxu0
  %v7964 = vpop.f32.mrb[0].mxu0
  %v7965 = vadd.f32 %v7676, %v7964
  %v7966 = vpop.f32.mrb[0].mxu0
  %7967 = vmatprep.mubr.bf16.mxu0 0
  %7968 = vmatmul.mubr.bf16.gmra.mrb[0].mxu0 %v5924
  %v7969 = vpop.f32.mrb[0].mxu0
  %v7970 = vadd.f32 %v7681, %v7969
  %v7971 = vpop.f32.mrb[0].mxu0
  %v7972 = vpop.f32.mrb[0].mxu0
  %v7973 = vadd.f32 %v7684, %v7972
  %v7974 = vpop.f32.mrb[0].mxu0
  %7975 = vmatprep.mubr.bf16.mxu0 0
  %7976 = vmatmul.mubr.bf16.gmra.mrb[0].mxu0 %v5927
  %v7977 = vpop.f32.mrb[0].mxu0
  %v7978 = vadd.f32 %v7689, %v7977
  %v7979 = vpop.f32.mrb[0].mxu0
  %v7980 = vpop.f32.mrb[0].mxu0
  %v7981 = vadd.f32 %v7692, %v7980
  %v7982 = vpop.f32.mrb[0].mxu0
  %7983 = vmatprep.mubr.bf16.mxu0 0
  %7984 = vmatmul.mubr.bf16.gmra.mrb[0].mxu0 %v5930
  %v7985 = vpop.f32.mrb[0].mxu0
  %v7986 = vadd.f32 %v7697, %v7985
  %v7987 = vpop.f32.mrb[0].mxu0
  %v7988 = vpop.f32.mrb[0].mxu0
  %v7989 = vadd.f32 %v7700, %v7988
  %v7990 = vpop.f32.mrb[0].mxu0
  %7991 = vmatprep.mubr.bf16.mxu0 0
  %7992 = vmatmul.mubr.bf16.gmra.mrb[0].mxu0 %v6057
  %v7993 = vpop.f32.mrb[0].mxu0
  %v7994 = vadd.f32 %v7705, %v7993
  %v7995 = vpop.f32.mrb[0].mxu0
  %v7996 = vpop.f32.mrb[0].mxu0
  %v7997 = vadd.f32 %v7708, %v7996
  %v7998 = vpop.f32.mrb[0].mxu0
  %7999 = vmatprep.mubr.bf16.mxu0 0
  %8000 = vmatmul.mubr.bf16.gmra.mrb[0].mxu0 %v6109
  %v8001 = vpop.f32.mrb[0].mxu0
  %v8002 = vadd.f32 %v7713, %v8001
  %v8003 = vpop.f32.mrb[0].mxu0
  %v8004 = vpop.f32.mrb[0].mxu0
  %v8005 = vadd.f32 %v7716, %v8004
  %v8006 = vpop.f32.mrb[0].mxu0
  %8007 = vmatprep.mubr.bf16.mxu0 0
  %8008 = vmatmul.mubr.bf16.gmra.mrb[0].mxu0 %v5939
  %v8009 = vpop.f32.mrb[0].mxu0
  %v8010 = vadd.f32 %v7721, %v8009
  %v8011 = vpop.f32.mrb[0].mxu0
  %v8012 = vpop.f32.mrb[0].mxu0
  %v8013 = vadd.f32 %v7724, %v8012
  %v8014 = vpop.f32.mrb[0].mxu0
  %8015 = vmatprep.mubr.bf16.mxu0 0
  %8016 = vmatmul.mubr.bf16.gmra.mrb[0].mxu0 %v5942
  %v8017 = vpop.f32.mrb[0].mxu0
  %v8018 = vadd.f32 %v7729, %v8017
  %v8019 = vpop.f32.mrb[0].mxu0
  %v8020 = vpop.f32.mrb[0].mxu0
  %v8021 = vadd.f32 %v7732, %v8020
  %v8022 = vpop.f32.mrb[0].mxu0
  %8023 = vmatprep.mubr.bf16.mxu0 0
  %8024 = vmatmul.mubr.bf16.gmra.mrb[0].mxu0 %v5945
  %v8025 = vpop.f32.mrb[0].mxu0
  %v8026 = vadd.f32 %v7737, %v8025
  %v8027 = vpop.f32.mrb[0].mxu0
  %v8028 = vpop.f32.mrb[0].mxu0
  %v8029 = vadd.f32 %v7740, %v8028
  %v8030 = vpop.f32.mrb[0].mxu0
  %8031 = vmatprep.mubr.bf16.mxu0 0
  %8032 = vmatmul.mubr.bf16.gmra.mrb[0].mxu0 %v5948
  %v8033 = vpop.f32.mrb[0].mxu0
  %v8034 = vadd.f32 %v7745, %v8033
  %v8035 = vpop.f32.mrb[0].mxu0
  %v8036 = vpop.f32.mrb[0].mxu0
  %v8037 = vadd.f32 %v7748, %v8036
  %v8038 = vpop.f32.mrb[0].mxu0
  %8039 = vmatprep.mubr.bf16.mxu0 0
  %8040 = vmatmul.mubr.bf16.gmra.mrb[0].mxu0 %v5951
  %v8041 = vpop.f32.mrb[0].mxu0
  %v8042 = vadd.f32 %v7753, %v8041
  %v8043 = vpop.f32.mrb[0].mxu0
  %v8044 = vpop.f32.mrb[0].mxu0
  %v8045 = vadd.f32 %v7756, %v8044
  %v8046 = vpop.f32.mrb[0].mxu0
  %8047 = vmatprep.mubr.bf16.mxu0 0
  %8048 = vmatmul.mubr.bf16.gmra.mrb[0].mxu0 %v5954
  %v8049 = vpop.f32.mrb[0].mxu0
  %v8050 = vadd.f32 %v7761, %v8049
  %v8051 = vpop.f32.mrb[0].mxu0
  %v8052 = vpop.f32.mrb[0].mxu0
  %v8053 = vadd.f32 %v7764, %v8052
  %v8054 = vpop.f32.mrb[0].mxu0
  %8055 = vmatprep.mubr.bf16.mxu0 0
  %8056 = vmatmul.mubr.bf16.gmra.mrb[0].mxu0 %v5957
  %v8057 = vpop.f32.mrb[0].mxu0
  %v8058 = vadd.f32 %v7769, %v8057
  %v8059 = vpop.f32.mrb[0].mxu0
  %v8060 = vpop.f32.mrb[0].mxu0
  %v8061 = vadd.f32 %v7772, %v8060
  %v8062 = vpop.f32.mrb[0].mxu0
  %8063 = vmatprep.mubr.bf16.mxu0 0
  %8064 = vmatmul.mubr.bf16.gmra.mrb[0].mxu0 %v5960
  %v8065 = vpop.f32.mrb[0].mxu0
  %v8066 = vadd.f32 %v7777, %v8065
  %v8067 = vpop.f32.mrb[0].mxu0
  %v8068 = vpop.f32.mrb[0].mxu0
  %v8069 = vadd.f32 %v7780, %v8068
  %v8070 = vpop.f32.mrb[0].mxu0
  %8071 = vmatprep.mubr.bf16.mxu0 0
  %8072 = vmatmul.mubr.bf16.gmra.mrb[0].mxu0 %v5963
  %v8073 = vpop.f32.mrb[0].mxu0
  %v8074 = vadd.f32 %v7785, %v8073
  %v8075 = vpop.f32.mrb[0].mxu0
  %v8076 = vpop.f32.mrb[0].mxu0
  %v8077 = vadd.f32 %v7788, %v8076
  %v8078 = vpop.f32.mrb[0].mxu0
  %8079 = vmatprep.mubr.bf16.mxu0 0
  %8080 = vmatmul.mubr.bf16.gmra.mrb[0].mxu0 %v5966
  %v8081 = vpop.f32.mrb[0].mxu0
  %v8082 = vadd.f32 %v7793, %v8081
  %v8083 = vpop.f32.mrb[0].mxu0
  %v8084 = vpop.f32.mrb[0].mxu0
  %v8085 = vadd.f32 %v7796, %v8084
  %v8086 = vpop.f32.mrb[0].mxu0
  %8087 = vmatprep.mubr.bf16.mxu0 0
  %8088 = vmatmul.mubr.bf16.gmra.mrb[0].mxu0 %v5969
  %v8089 = vpop.f32.mrb[0].mxu0
  %v8090 = vadd.f32 %v7801, %v8089
  %v8091 = vpop.f32.mrb[0].mxu0
  %v8092 = vpop.f32.mrb[0].mxu0
  %v8093 = vadd.f32 %v7804, %v8092
  %v8094 = vpop.f32.mrb[0].mxu0
  %8095 = vmatprep.mubr.bf16.mxu0 0
  %8096 = vmatmul.mubr.bf16.gmra.mrb[0].mxu0 %v5972
  %v8097 = vpop.f32.mrb[0].mxu0
  %v8098 = vadd.f32 %v7809, %v8097
  %v8099 = vpop.f32.mrb[0].mxu0
  %v8100 = vpop.f32.mrb[0].mxu0
  %v8101 = vadd.f32 %v7812, %v8100
  %v8102 = vpop.f32.mrb[0].mxu0
  %8103 = vmatprep.mubr.bf16.mxu0 0
  %8104 = vmatmul.mubr.bf16.gmra.mrb[0].mxu0 %v5975
  %v8105 = vpop.f32.mrb[0].mxu0
  %v8106 = vadd.f32 %v7817, %v8105
  %v8107 = vpop.f32.mrb[0].mxu0
  %v8108 = vpop.f32.mrb[0].mxu0
  %v8109 = vadd.f32 %v7820, %v8108
  %v8110 = vpop.f32.mrb[0].mxu0
  %8111 = vmatprep.mubr.bf16.mxu0 0
  %8112 = vmatmul.mubr.bf16.gmra.mrb[0].mxu0 %v5978
  %v8113 = vpop.f32.mrb[0].mxu0
  %v8114 = vadd.f32 %v7825, %v8113
  %v8115 = vpop.f32.mrb[0].mxu0
  %v8116 = vpop.f32.mrb[0].mxu0
  %v8117 = vadd.f32 %v7828, %v8116
  %v8118 = vpop.f32.mrb[0].mxu0
  %8119 = vmatprep.mubr.bf16.mxu0 0
  %8120 = vmatmul.mubr.bf16.gmra.mrb[0].mxu0 %v6060
  %v8121 = vpop.f32.mrb[0].mxu0
  %v8122 = vadd.f32 %v7833, %v8121
  %v8123 = vpop.f32.mrb[0].mxu0
  %v8124 = vpop.f32.mrb[0].mxu0
  %v8125 = vadd.f32 %v7836, %v8124
  %v8126 = vpop.f32.mrb[0].mxu0
  %8127 = vmatprep.mubr.bf16.mxu0 0
  %8128 = vmatmul.mubr.bf16.gmra.mrb[0].mxu0 %v6112
  %v8129 = vpop.f32.mrb[0].mxu0
  %v8130 = vadd.f32 %v7841, %v8129
  %v8131 = vpop.f32.mrb[0].mxu0
  %v8132 = vpop.f32.mrb[0].mxu0
  %v8133 = vadd.f32 %v7844, %v8132
  %v8134 = vpop.f32.mrb[0].mxu0
  %8135 = vdwg.mxu0
  %v8136 = vld [vmem:[%s5] sm:$0x1]
  %v8137 = vld [vmem:[%s6] sm:$0x1]
  %v8138 = vadd.f32 %v7882, %v7885
  %v8139 = vadd.f32 %v8138, %v7890
  %v8140 = vadd.f32 %v8139, %v7893
  %v8141 = vadd.f32 %v8140, %v7898
  %v8142 = vadd.f32 %v8141, %v7901
  %v8143 = vadd.f32 %v8142, %v7906
  %v8144 = vadd.f32 %v8143, %v7909
  %v8145 = vadd.f32 %v8144, %v7914
  %v8146 = vadd.f32 %v8145, %v7917
  %v8147 = vadd.f32 %v8146, %v7922
  %v8148 = vadd.f32 %v8147, %v7925
  %v8149 = vadd.f32 %v8148, %v7930
  %v8150 = vadd.f32 %v8149, %v7933
  %v8151 = vadd.f32 %v8150, %v7938
  %v8152 = vadd.f32 %v8151, %v7941
  %v8153 = vadd.f32 %v8152, %v7946
  %v8154 = vadd.f32 %v8153, %v7949
  %v8155 = vadd.f32 %v8154, %v7954
  %v8156 = vadd.f32 %v8155, %v7957
  %v8157 = vadd.f32 %v8156, %v7962
  %v8158 = vadd.f32 %v8157, %v7965
  %v8159 = vadd.f32 %v8158, %v7970
  %v8160 = vadd.f32 %v8159, %v7973
  %v8161 = vadd.f32 %v8160, %v7978
  %v8162 = vadd.f32 %v8161, %v7981
  %v8163 = vadd.f32 %v8162, %v7986
  %v8164 = vadd.f32 %v8163, %v7989
  %v8165 = vadd.f32 %v8164, %v7994
  %v8166 = vadd.f32 %v8165, %v7997
  %v8167 = vadd.f32 %v8166, %v8002
  %v8168 = vadd.f32 %v8167, %v8005
  %v8169 = vadd.f32 %v8168, %v8010
  %v8170 = vadd.f32 %v8169, %v8013
  %v8171 = vadd.f32 %v8170, %v8018
  %v8172 = vadd.f32 %v8171, %v8021
  %v8173 = vadd.f32 %v8172, %v8026
  %v8174 = vadd.f32 %v8173, %v8029
  %v8175 = vadd.f32 %v8174, %v8034
  %v8176 = vadd.f32 %v8175, %v8037
  %v8177 = vadd.f32 %v8176, %v8042
  %v8178 = vadd.f32 %v8177, %v8045
  %v8179 = vadd.f32 %v8178, %v8050
  %v8180 = vadd.f32 %v8179, %v8053
  %v8181 = vadd.f32 %v8180, %v8058
  %v8182 = vadd.f32 %v8181, %v8061
  %v8183 = vadd.f32 %v8182, %v8066
  %v8184 = vadd.f32 %v8183, %v8069
  %v8185 = vadd.f32 %v8184, %v8074
  %v8186 = vadd.f32 %v8185, %v8077
  %v8187 = vadd.f32 %v8186, %v8082
  %v8188 = vadd.f32 %v8187, %v8085
  %v8189 = vadd.f32 %v8188, %v8090
  %v8190 = vadd.f32 %v8189, %v8093
  %v8191 = vadd.f32 %v8190, %v8098
  %v8192 = vadd.f32 %v8191, %v8101
  %v8193 = vadd.f32 %v8192, %v8106
  %v8194 = vadd.f32 %v8193, %v8109
  %v8195 = vadd.f32 %v8194, %v8114
  %v8196 = vadd.f32 %v8195, %v8117
  %v8197 = vadd.f32 %v8196, %v8122
  %v8198 = vadd.f32 %v8197, %v8125
  %v8199 = vadd.f32 %v8198, %v8130
  %v8200 = vadd.f32 %v8199, %v8133
  %v8201 = vrot.slane %v8200, 4
  %v8202 = vadd.f32 %v8200, %v8201
  %v8203 = vrot.slane %v8202, 2
  %v8204 = vadd.f32 %v8202, %v8203
  %v8205 = vrot.slane %v8204, 1
  %v8206 = vadd.f32 %v8204, %v8205
  %v8207 = vmul.f32 %v8206, %v3601
  %v8208 = vsub.f32 %v7882, %v8207
  %v8209 = vsub.f32 %v7885, %v8207
  %v8210 = vsub.f32 %v7890, %v8207
  %v8211 = vsub.f32 %v7893, %v8207
  %v8212 = vsub.f32 %v7898, %v8207
  %v8213 = vsub.f32 %v7901, %v8207
  %v8214 = vsub.f32 %v7906, %v8207
  %v8215 = vsub.f32 %v7909, %v8207
  %v8216 = vsub.f32 %v7914, %v8207
  %v8217 = vsub.f32 %v7917, %v8207
  %v8218 = vsub.f32 %v7922, %v8207
  %v8219 = vsub.f32 %v7925, %v8207
  %v8220 = vsub.f32 %v7930, %v8207
  %v8221 = vsub.f32 %v7933, %v8207
  %v8222 = vsub.f32 %v7938, %v8207
  %v8223 = vsub.f32 %v7941, %v8207
  %v8224 = vsub.f32 %v7946, %v8207
  %v8225 = vsub.f32 %v7949, %v8207
  %v8226 = vsub.f32 %v7954, %v8207
  %v8227 = vsub.f32 %v7957, %v8207
  %v8228 = vsub.f32 %v7962, %v8207
  %v8229 = vsub.f32 %v7965, %v8207
  %v8230 = vsub.f32 %v7970, %v8207
  %v8231 = vsub.f32 %v7973, %v8207
  %v8232 = vsub.f32 %v7978, %v8207
  %v8233 = vsub.f32 %v7981, %v8207
  %v8234 = vsub.f32 %v7986, %v8207
  %v8235 = vsub.f32 %v7989, %v8207
  %v8236 = vsub.f32 %v7994, %v8207
  %v8237 = vsub.f32 %v7997, %v8207
  %v8238 = vsub.f32 %v8002, %v8207
  %v8239 = vsub.f32 %v8005, %v8207
  %v8240 = vsub.f32 %v8010, %v8207
  %v8241 = vsub.f32 %v8013, %v8207
  %v8242 = vsub.f32 %v8018, %v8207
  %v8243 = vsub.f32 %v8021, %v8207
  %v8244 = vsub.f32 %v8026, %v8207
  %v8245 = vsub.f32 %v8029, %v8207
  %v8246 = vsub.f32 %v8034, %v8207
  %v8247 = vsub.f32 %v8037, %v8207
  %v8248 = vsub.f32 %v8042, %v8207
  %v8249 = vsub.f32 %v8045, %v8207
  %v8250 = vsub.f32 %v8050, %v8207
  %v8251 = vsub.f32 %v8053, %v8207
  %v8252 = vsub.f32 %v8058, %v8207
  %v8253 = vsub.f32 %v8061, %v8207
  %v8254 = vsub.f32 %v8066, %v8207
  %v8255 = vsub.f32 %v8069, %v8207
  %v8256 = vsub.f32 %v8074, %v8207
  %v8257 = vsub.f32 %v8077, %v8207
  %v8258 = vsub.f32 %v8082, %v8207
  %v8259 = vsub.f32 %v8085, %v8207
  %v8260 = vsub.f32 %v8090, %v8207
  %v8261 = vsub.f32 %v8093, %v8207
  %v8262 = vsub.f32 %v8098, %v8207
  %v8263 = vsub.f32 %v8101, %v8207
  %v8264 = vsub.f32 %v8106, %v8207
  %v8265 = vsub.f32 %v8109, %v8207
  %v8266 = vsub.f32 %v8114, %v8207
  %v8267 = vsub.f32 %v8117, %v8207
  %v8268 = vsub.f32 %v8122, %v8207
  %v8269 = vsub.f32 %v8125, %v8207
  %v8270 = vsub.f32 %v8130, %v8207
  %v8271 = vsub.f32 %v8133, %v8207
  %v8272 = vmul.f32 %v8208, %v8208
  %v8273 = vmul.f32 %v8209, %v8209
  %v8274 = vmul.f32 %v8210, %v8210
  %v8275 = vmul.f32 %v8211, %v8211
  %v8276 = vmul.f32 %v8212, %v8212
  %v8277 = vmul.f32 %v8213, %v8213
  %v8278 = vmul.f32 %v8214, %v8214
  %v8279 = vmul.f32 %v8215, %v8215
  %v8280 = vmul.f32 %v8216, %v8216
  %v8281 = vmul.f32 %v8217, %v8217
  %v8282 = vmul.f32 %v8218, %v8218
  %v8283 = vmul.f32 %v8219, %v8219
  %v8284 = vmul.f32 %v8220, %v8220
  %v8285 = vmul.f32 %v8221, %v8221
  %v8286 = vmul.f32 %v8222, %v8222
  %v8287 = vmul.f32 %v8223, %v8223
  %v8288 = vmul.f32 %v8224, %v8224
  %v8289 = vmul.f32 %v8225, %v8225
  %v8290 = vmul.f32 %v8226, %v8226
  %v8291 = vmul.f32 %v8227, %v8227
  %v8292 = vmul.f32 %v8228, %v8228
  %v8293 = vmul.f32 %v8229, %v8229
  %v8294 = vmul.f32 %v8230, %v8230
  %v8295 = vmul.f32 %v8231, %v8231
  %v8296 = vmul.f32 %v8232, %v8232
  %v8297 = vmul.f32 %v8233, %v8233
  %v8298 = vmul.f32 %v8234, %v8234
  %v8299 = vmul.f32 %v8235, %v8235
  %v8300 = vmul.f32 %v8236, %v8236
  %v8301 = vmul.f32 %v8237, %v8237
  %v8302 = vmul.f32 %v8238, %v8238
  %v8303 = vmul.f32 %v8239, %v8239
  %v8304 = vmul.f32 %v8240, %v8240
  %v8305 = vmul.f32 %v8241, %v8241
  %v8306 = vmul.f32 %v8242, %v8242
  %v8307 = vmul.f32 %v8243, %v8243
  %v8308 = vmul.f32 %v8244, %v8244
  %v8309 = vmul.f32 %v8245, %v8245
  %v8310 = vmul.f32 %v8246, %v8246
  %v8311 = vmul.f32 %v8247, %v8247
  %v8312 = vmul.f32 %v8248, %v8248
  %v8313 = vmul.f32 %v8249, %v8249
  %v8314 = vmul.f32 %v8250, %v8250
  %v8315 = vmul.f32 %v8251, %v8251
  %v8316 = vmul.f32 %v8252, %v8252
  %v8317 = vmul.f32 %v8253, %v8253
  %v8318 = vmul.f32 %v8254, %v8254
  %v8319 = vmul.f32 %v8255, %v8255
  %v8320 = vmul.f32 %v8256, %v8256
  %v8321 = vmul.f32 %v8257, %v8257
  %v8322 = vmul.f32 %v8258, %v8258
  %v8323 = vmul.f32 %v8259, %v8259
  %v8324 = vmul.f32 %v8260, %v8260
  %v8325 = vmul.f32 %v8261, %v8261
  %v8326 = vmul.f32 %v8262, %v8262
  %v8327 = vmul.f32 %v8263, %v8263
  %v8328 = vmul.f32 %v8264, %v8264
  %v8329 = vmul.f32 %v8265, %v8265
  %v8330 = vmul.f32 %v8266, %v8266
  %v8331 = vmul.f32 %v8267, %v8267
  %v8332 = vmul.f32 %v8268, %v8268
  %v8333 = vmul.f32 %v8269, %v8269
  %v8334 = vmul.f32 %v8270, %v8270
  %v8335 = vmul.f32 %v8271, %v8271
  %v8336 = vadd.f32 %v8272, %v8273
  %v8337 = vadd.f32 %v8336, %v8274
  %v8338 = vadd.f32 %v8337, %v8275
  %v8339 = vadd.f32 %v8338, %v8276
  %v8340 = vadd.f32 %v8339, %v8277
  %v8341 = vadd.f32 %v8340, %v8278
  %v8342 = vadd.f32 %v8341, %v8279
  %v8343 = vadd.f32 %v8342, %v8280
  %v8344 = vadd.f32 %v8343, %v8281
  %v8345 = vadd.f32 %v8344, %v8282
  %v8346 = vadd.f32 %v8345, %v8283
  %v8347 = vadd.f32 %v8346, %v8284
  %v8348 = vadd.f32 %v8347, %v8285
  %v8349 = vadd.f32 %v8348, %v8286
  %v8350 = vadd.f32 %v8349, %v8287
  %v8351 = vadd.f32 %v8350, %v8288
  %v8352 = vadd.f32 %v8351, %v8289
  %v8353 = vadd.f32 %v8352, %v8290
  %v8354 = vadd.f32 %v8353, %v8291
  %v8355 = vadd.f32 %v8354, %v8292
  %v8356 = vadd.f32 %v8355, %v8293
  %v8357 = vadd.f32 %v8356, %v8294
  %v8358 = vadd.f32 %v8357, %v8295
  %v8359 = vadd.f32 %v8358, %v8296
  %v8360 = vadd.f32 %v8359, %v8297
  %v8361 = vadd.f32 %v8360, %v8298
  %v8362 = vadd.f32 %v8361, %v8299
  %v8363 = vadd.f32 %v8362, %v8300
  %v8364 = vadd.f32 %v8363, %v8301
  %v8365 = vadd.f32 %v8364, %v8302
  %v8366 = vadd.f32 %v8365, %v8303
  %v8367 = vadd.f32 %v8366, %v8304
  %v8368 = vadd.f32 %v8367, %v8305
  %v8369 = vadd.f32 %v8368, %v8306
  %v8370 = vadd.f32 %v8369, %v8307
  %v8371 = vadd.f32 %v8370, %v8308
  %v8372 = vadd.f32 %v8371, %v8309
  %v8373 = vadd.f32 %v8372, %v8310
  %v8374 = vadd.f32 %v8373, %v8311
  %v8375 = vadd.f32 %v8374, %v8312
  %v8376 = vadd.f32 %v8375, %v8313
  %v8377 = vadd.f32 %v8376, %v8314
  %v8378 = vadd.f32 %v8377, %v8315
  %v8379 = vadd.f32 %v8378, %v8316
  %v8380 = vadd.f32 %v8379, %v8317
  %v8381 = vadd.f32 %v8380, %v8318
  %v8382 = vadd.f32 %v8381, %v8319
  %v8383 = vadd.f32 %v8382, %v8320
  %v8384 = vadd.f32 %v8383, %v8321
  %v8385 = vadd.f32 %v8384, %v8322
  %v8386 = vadd.f32 %v8385, %v8323
  %v8387 = vadd.f32 %v8386, %v8324
  %v8388 = vadd.f32 %v8387, %v8325
  %v8389 = vadd.f32 %v8388, %v8326
  %v8390 = vadd.f32 %v8389, %v8327
  %v8391 = vadd.f32 %v8390, %v8328
  %v8392 = vadd.f32 %v8391, %v8329
  %v8393 = vadd.f32 %v8392, %v8330
  %v8394 = vadd.f32 %v8393, %v8331
  %v8395 = vadd.f32 %v8394, %v8332
  %v8396 = vadd.f32 %v8395, %v8333
  %v8397 = vadd.f32 %v8396, %v8334
  %v8398 = vadd.f32 %v8397, %v8335
  %v8399 = vrot.slane %v8398, 4
  %v8400 = vadd.f32 %v8398, %v8399
  %v8401 = vrot.slane %v8400, 2
  %v8402 = vadd.f32 %v8400, %v8401
  %v8403 = vrot.slane %v8402, 1
  %v8404 = vadd.f32 %v8402, %v8403
  %v8405 = vmul.f32 %v8404, %v3601
  %v8406 = vadd.f32 %v8405, 1e-05
  %v8407 = vrsqrt.pop %v8406
  %v8408 = vmul.f32 %v8136, %v8407
  %v8409 = vmul.f32 %v8207, %v8408
  %v8410 = vsub.f32 %v8137, %v8409
  %v8412 = vlaneseq
  %v8413 = vshrl.u32 %v8412, 7
  %v8414 = vsub.s32 0, %v8413
  %v8415 = vrot.slane %v8408, %v8414
  %v8417 = vmul.f32 %v7882, %v8415
  %v8418 = vmul.f32 %v7885, %v8415
  %v8419 = vmul.f32 %v7890, %v8415
  %v8420 = vmul.f32 %v7893, %v8415
  %v8421 = vmul.f32 %v7898, %v8415
  %v8422 = vmul.f32 %v7901, %v8415
  %v8423 = vmul.f32 %v7906, %v8415
  %v8424 = vmul.f32 %v7909, %v8415
  %v8425 = vmul.f32 %v7914, %v8415
  %v8426 = vmul.f32 %v7917, %v8415
  %v8427 = vmul.f32 %v7922, %v8415
  %v8428 = vmul.f32 %v7925, %v8415
  %v8429 = vmul.f32 %v7930, %v8415
  %v8430 = vmul.f32 %v7933, %v8415
  %v8431 = vmul.f32 %v7938, %v8415
  %v8432 = vmul.f32 %v7941, %v8415
  %v8433 = vmul.f32 %v7946, %v8415
  %v8434 = vmul.f32 %v7949, %v8415
  %v8435 = vmul.f32 %v7954, %v8415
  %v8436 = vmul.f32 %v7957, %v8415
  %v8437 = vmul.f32 %v7962, %v8415
  %v8438 = vmul.f32 %v7965, %v8415
  %v8439 = vmul.f32 %v7970, %v8415
  %v8440 = vmul.f32 %v7973, %v8415
  %v8441 = vmul.f32 %v7978, %v8415
  %v8442 = vmul.f32 %v7981, %v8415
  %v8443 = vmul.f32 %v7986, %v8415
  %v8444 = vmul.f32 %v7989, %v8415
  %v8445 = vmul.f32 %v7994, %v8415
  %v8446 = vmul.f32 %v7997, %v8415
  %v8447 = vmul.f32 %v8002, %v8415
  %v8448 = vmul.f32 %v8005, %v8415
  %v8449 = vmul.f32 %v8010, %v8415
  %v8450 = vmul.f32 %v8013, %v8415
  %v8451 = vmul.f32 %v8018, %v8415
  %v8452 = vmul.f32 %v8021, %v8415
  %v8453 = vmul.f32 %v8026, %v8415
  %v8454 = vmul.f32 %v8029, %v8415
  %v8455 = vmul.f32 %v8034, %v8415
  %v8456 = vmul.f32 %v8037, %v8415
  %v8457 = vmul.f32 %v8042, %v8415
  %v8458 = vmul.f32 %v8045, %v8415
  %v8459 = vmul.f32 %v8050, %v8415
  %v8460 = vmul.f32 %v8053, %v8415
  %v8461 = vmul.f32 %v8058, %v8415
  %v8462 = vmul.f32 %v8061, %v8415
  %v8463 = vmul.f32 %v8066, %v8415
  %v8464 = vmul.f32 %v8069, %v8415
  %v8465 = vmul.f32 %v8074, %v8415
  %v8466 = vmul.f32 %v8077, %v8415
  %v8467 = vmul.f32 %v8082, %v8415
  %v8468 = vmul.f32 %v8085, %v8415
  %v8469 = vmul.f32 %v8090, %v8415
  %v8470 = vmul.f32 %v8093, %v8415
  %v8471 = vmul.f32 %v8098, %v8415
  %v8472 = vmul.f32 %v8101, %v8415
  %v8473 = vmul.f32 %v8106, %v8415
  %v8474 = vmul.f32 %v8109, %v8415
  %v8475 = vmul.f32 %v8114, %v8415
  %v8476 = vmul.f32 %v8117, %v8415
  %v8477 = vmul.f32 %v8122, %v8415
  %v8478 = vmul.f32 %v8125, %v8415
  %v8479 = vmul.f32 %v8130, %v8415
  %v8480 = vmul.f32 %v8133, %v8415
  %v8482 = vlaneseq
  %v8483 = vshrl.u32 %v8482, 7
  %v8484 = vsub.s32 0, %v8483
  %v8485 = vrot.slane %v8410, %v8484
  %v8487 = vadd.f32 %v8417, %v8485
  %v8488 = vadd.f32 %v8418, %v8485
  %v8489 = vadd.f32 %v8419, %v8485
  %v8490 = vadd.f32 %v8420, %v8485
  %v8491 = vadd.f32 %v8421, %v8485
  %v8492 = vadd.f32 %v8422, %v8485
  %v8493 = vadd.f32 %v8423, %v8485
  %v8494 = vadd.f32 %v8424, %v8485
  %v8495 = vadd.f32 %v8425, %v8485
  %v8496 = vadd.f32 %v8426, %v8485
  %v8497 = vadd.f32 %v8427, %v8485
  %v8498 = vadd.f32 %v8428, %v8485
  %v8499 = vadd.f32 %v8429, %v8485
  %v8500 = vadd.f32 %v8430, %v8485
  %v8501 = vadd.f32 %v8431, %v8485
  %v8502 = vadd.f32 %v8432, %v8485
  %v8503 = vadd.f32 %v8433, %v8485
  %v8504 = vadd.f32 %v8434, %v8485
  %v8505 = vadd.f32 %v8435, %v8485
  %v8506 = vadd.f32 %v8436, %v8485
  %v8507 = vadd.f32 %v8437, %v8485
  %v8508 = vadd.f32 %v8438, %v8485
  %v8509 = vadd.f32 %v8439, %v8485
  %v8510 = vadd.f32 %v8440, %v8485
  %v8511 = vadd.f32 %v8441, %v8485
  %v8512 = vadd.f32 %v8442, %v8485
  %v8513 = vadd.f32 %v8443, %v8485
  %v8514 = vadd.f32 %v8444, %v8485
  %v8515 = vadd.f32 %v8445, %v8485
  %v8516 = vadd.f32 %v8446, %v8485
  %v8517 = vadd.f32 %v8447, %v8485
  %v8518 = vadd.f32 %v8448, %v8485
  %v8519 = vadd.f32 %v8449, %v8485
  %v8520 = vadd.f32 %v8450, %v8485
  %v8521 = vadd.f32 %v8451, %v8485
  %v8522 = vadd.f32 %v8452, %v8485
  %v8523 = vadd.f32 %v8453, %v8485
  %v8524 = vadd.f32 %v8454, %v8485
  %v8525 = vadd.f32 %v8455, %v8485
  %v8526 = vadd.f32 %v8456, %v8485
  %v8527 = vadd.f32 %v8457, %v8485
  %v8528 = vadd.f32 %v8458, %v8485
  %v8529 = vadd.f32 %v8459, %v8485
  %v8530 = vadd.f32 %v8460, %v8485
  %v8531 = vadd.f32 %v8461, %v8485
  %v8532 = vadd.f32 %v8462, %v8485
  %v8533 = vadd.f32 %v8463, %v8485
  %v8534 = vadd.f32 %v8464, %v8485
  %v8535 = vadd.f32 %v8465, %v8485
  %v8536 = vadd.f32 %v8466, %v8485
  %v8537 = vadd.f32 %v8467, %v8485
  %v8538 = vadd.f32 %v8468, %v8485
  %v8539 = vadd.f32 %v8469, %v8485
  %v8540 = vadd.f32 %v8470, %v8485
  %v8541 = vadd.f32 %v8471, %v8485
  %v8542 = vadd.f32 %v8472, %v8485
  %v8543 = vadd.f32 %v8473, %v8485
  %v8544 = vadd.f32 %v8474, %v8485
  %v8545 = vadd.f32 %v8475, %v8485
  %v8546 = vadd.f32 %v8476, %v8485
  %v8547 = vadd.f32 %v8477, %v8485
  %v8548 = vadd.f32 %v8478, %v8485
  %v8549 = vadd.f32 %v8479, %v8485
  %v8550 = vadd.f32 %v8480, %v8485
  %v8551 = vmax.f32 %v8487, 0.0
  %v8552 = vmax.f32 %v8488, 0.0
  %v8553 = vmax.f32 %v8489, 0.0
  %v8554 = vmax.f32 %v8490, 0.0
  %v8555 = vmax.f32 %v8491, 0.0
  %v8556 = vmax.f32 %v8492, 0.0
  %v8557 = vmax.f32 %v8493, 0.0
  %v8558 = vmax.f32 %v8494, 0.0
  %v8559 = vmax.f32 %v8495, 0.0
  %v8560 = vmax.f32 %v8496, 0.0
  %v8561 = vmax.f32 %v8497, 0.0
  %v8562 = vmax.f32 %v8498, 0.0
  %v8563 = vmax.f32 %v8499, 0.0
  %v8564 = vmax.f32 %v8500, 0.0
  %v8565 = vmax.f32 %v8501, 0.0
  %v8566 = vmax.f32 %v8502, 0.0
  %v8567 = vmax.f32 %v8503, 0.0
  %v8568 = vmax.f32 %v8504, 0.0
  %v8569 = vmax.f32 %v8505, 0.0
  %v8570 = vmax.f32 %v8506, 0.0
  %v8571 = vmax.f32 %v8507, 0.0
  %v8572 = vmax.f32 %v8508, 0.0
  %v8573 = vmax.f32 %v8509, 0.0
  %v8574 = vmax.f32 %v8510, 0.0
  %v8575 = vmax.f32 %v8511, 0.0
  %v8576 = vmax.f32 %v8512, 0.0
  %v8577 = vmax.f32 %v8513, 0.0
  %v8578 = vmax.f32 %v8514, 0.0
  %v8579 = vmax.f32 %v8515, 0.0
  %v8580 = vmax.f32 %v8516, 0.0
  %v8581 = vmax.f32 %v8517, 0.0
  %v8582 = vmax.f32 %v8518, 0.0
  %v8583 = vmax.f32 %v8519, 0.0
  %v8584 = vmax.f32 %v8520, 0.0
  %v8585 = vmax.f32 %v8521, 0.0
  %v8586 = vmax.f32 %v8522, 0.0
  %v8587 = vmax.f32 %v8523, 0.0
  %v8588 = vmax.f32 %v8524, 0.0
  %v8589 = vmax.f32 %v8525, 0.0
  %v8590 = vmax.f32 %v8526, 0.0
  %v8591 = vmax.f32 %v8527, 0.0
  %v8592 = vmax.f32 %v8528, 0.0
  %v8593 = vmax.f32 %v8529, 0.0
  %v8594 = vmax.f32 %v8530, 0.0
  %v8595 = vmax.f32 %v8531, 0.0
  %v8596 = vmax.f32 %v8532, 0.0
  %v8597 = vmax.f32 %v8533, 0.0
  %v8598 = vmax.f32 %v8534, 0.0
  %v8599 = vmax.f32 %v8535, 0.0
  %v8600 = vmax.f32 %v8536, 0.0
  %v8601 = vmax.f32 %v8537, 0.0
  %v8602 = vmax.f32 %v8538, 0.0
  %v8603 = vmax.f32 %v8539, 0.0
  %v8604 = vmax.f32 %v8540, 0.0
  %v8605 = vmax.f32 %v8541, 0.0
  %v8606 = vmax.f32 %v8542, 0.0
  %v8607 = vmax.f32 %v8543, 0.0
  %v8608 = vmax.f32 %v8544, 0.0
  %v8609 = vmax.f32 %v8545, 0.0
  %v8610 = vmax.f32 %v8546, 0.0
  %v8611 = vmax.f32 %v8547, 0.0
  %v8612 = vmax.f32 %v8548, 0.0
  %v8613 = vmax.f32 %v8549, 0.0
  %v8614 = vmax.f32 %v8550, 0.0
  %8615 = vst [vmem:[%s7] sm:$0xff] %v8551
  %8616 = vst [vmem:[%s7 + $0x8] sm:$0xff] %v8552
  %8617 = vst [vmem:[%s7 + $0x10] sm:$0xff] %v8553
  %8618 = vst [vmem:[%s7 + $0x18] sm:$0xff] %v8554
  %8619 = vst [vmem:[%s7 + $0x20] sm:$0xff] %v8555
  %8620 = vst [vmem:[%s7 + $0x28] sm:$0xff] %v8556
  %8621 = vst [vmem:[%s7 + $0x30] sm:$0xff] %v8557
  %8622 = vst [vmem:[%s7 + $0x38] sm:$0xff] %v8558
  %8623 = vst [vmem:[%s7 + $0x40] sm:$0xff] %v8559
  %8624 = vst [vmem:[%s7 + $0x48] sm:$0xff] %v8560
  %8625 = vst [vmem:[%s7 + $0x50] sm:$0xff] %v8561
  %8626 = vst [vmem:[%s7 + $0x58] sm:$0xff] %v8562
  %8627 = vst [vmem:[%s7 + $0x60] sm:$0xff] %v8563
  %8628 = vst [vmem:[%s7 + $0x68] sm:$0xff] %v8564
  %8629 = vst [vmem:[%s7 + $0x70] sm:$0xff] %v8565
  %8630 = vst [vmem:[%s7 + $0x78] sm:$0xff] %v8566
  %8631 = vst [vmem:[%s7 + $0x80] sm:$0xff] %v8567
  %8632 = vst [vmem:[%s7 + $0x88] sm:$0xff] %v8568
  %8633 = vst [vmem:[%s7 + $0x90] sm:$0xff] %v8569
  %8634 = vst [vmem:[%s7 + $0x98] sm:$0xff] %v8570
  %8635 = vst [vmem:[%s7 + $0xa0] sm:$0xff] %v8571
  %8636 = vst [vmem:[%s7 + $0xa8] sm:$0xff] %v8572
  %8637 = vst [vmem:[%s7 + $0xb0] sm:$0xff] %v8573
  %8638 = vst [vmem:[%s7 + $0xb8] sm:$0xff] %v8574
  %8639 = vst [vmem:[%s7 + $0xc0] sm:$0xff] %v8575
  %8640 = vst [vmem:[%s7 + $0xc8] sm:$0xff] %v8576
  %8641 = vst [vmem:[%s7 + $0xd0] sm:$0xff] %v8577
  %8642 = vst [vmem:[%s7 + $0xd8] sm:$0xff] %v8578
  %8643 = vst [vmem:[%s7 + $0xe0] sm:$0xff] %v8579
  %8644 = vst [vmem:[%s7 + $0xe8] sm:$0xff] %v8580
  %8645 = vst [vmem:[%s7 + $0xf0] sm:$0xff] %v8581
  %8646 = vst [vmem:[%s7 + $0xf8] sm:$0xff] %v8582
  %8647 = vst [vmem:[%s7 + $0x100] sm:$0xff] %v8583
  %8648 = vst [vmem:[%s7 + $0x108] sm:$0xff] %v8584
  %8649 = vst [vmem:[%s7 + $0x110] sm:$0xff] %v8585
  %8650 = vst [vmem:[%s7 + $0x118] sm:$0xff] %v8586
  %8651 = vst [vmem:[%s7 + $0x120] sm:$0xff] %v8587
  %8652 = vst [vmem:[%s7 + $0x128] sm:$0xff] %v8588
  %8653 = vst [vmem:[%s7 + $0x130] sm:$0xff] %v8589
  %8654 = vst [vmem:[%s7 + $0x138] sm:$0xff] %v8590
  %8655 = vst [vmem:[%s7 + $0x140] sm:$0xff] %v8591
  %8656 = vst [vmem:[%s7 + $0x148] sm:$0xff] %v8592
  %8657 = vst [vmem:[%s7 + $0x150] sm:$0xff] %v8593
  %8658 = vst [vmem:[%s7 + $0x158] sm:$0xff] %v8594
  %8659 = vst [vmem:[%s7 + $0x160] sm:$0xff] %v8595
  %8660 = vst [vmem:[%s7 + $0x168] sm:$0xff] %v8596
  %8661 = vst [vmem:[%s7 + $0x170] sm:$0xff] %v8597
  %8662 = vst [vmem:[%s7 + $0x178] sm:$0xff] %v8598
  %8663 = vst [vmem:[%s7 + $0x180] sm:$0xff] %v8599
  %8664 = vst [vmem:[%s7 + $0x188] sm:$0xff] %v8600
  %8665 = vst [vmem:[%s7 + $0x190] sm:$0xff] %v8601
  %8666 = vst [vmem:[%s7 + $0x198] sm:$0xff] %v8602
  %8667 = vst [vmem:[%s7 + $0x1a0] sm:$0xff] %v8603
  %8668 = vst [vmem:[%s7 + $0x1a8] sm:$0xff] %v8604
  %8669 = vst [vmem:[%s7 + $0x1b0] sm:$0xff] %v8605
  %8670 = vst [vmem:[%s7 + $0x1b8] sm:$0xff] %v8606
  %8671 = vst [vmem:[%s7 + $0x1c0] sm:$0xff] %v8607
  %8672 = vst [vmem:[%s7 + $0x1c8] sm:$0xff] %v8608
  %8673 = vst [vmem:[%s7 + $0x1d0] sm:$0xff] %v8609
  %8674 = vst [vmem:[%s7 + $0x1d8] sm:$0xff] %v8610
  %8675 = vst [vmem:[%s7 + $0x1e0] sm:$0xff] %v8611
  %8676 = vst [vmem:[%s7 + $0x1e8] sm:$0xff] %v8612
  %8677 = vst [vmem:[%s7 + $0x1f0] sm:$0xff] %v8613
  %8678 = vst [vmem:[%s7 + $0x1f8] sm:$0xff] %v8614
  // Predicated region
  $region30: #{double_conv_forward.1} parent=0 // pred_check
    _
  $region31: #{double_conv_forward.1} parent=0 // pred_check_branch
    %8680 = sbr.rel (0) target = $region33
  $region32: #{double_conv_forward.1} parent=0 // pred_region
    _
  $region33: #{double_conv_forward.1} parent=0 // pred_fallthru
    _
  // Predicated region
  $region34: #{double_conv_forward.1} parent=0 // pred_check
    _
  $region35: #{double_conv_forward.1} parent=0 // pred_check_branch
    %8682 = sbr.rel (0) target = $region37
  $region36: #{double_conv_forward.1} parent=0 // pred_region
    _
  $region37: #{double_conv_forward.1} parent=0 // pred_fallthru
    _

</llo_original>
